<compile_context>
chip_gen: v7x
topology: tpu7x:2x2x1
jax: 0.10.0
libtpu: 0.0.40
codegen_flags: <defaults>
</compile_context>

<pallas_src>
import functools

import jax
import jax.numpy as jnp
from jax import lax
from jax.experimental import pallas as pl
from jax.experimental.pallas import tpu as pltpu

# ----------------------------- module hyperparameters -----------------------
N_EMBD = 384                     # fixed by the module
N_HEAD = 6                       # canonical transformer.py usage
HEAD_SIZE = N_EMBD // N_HEAD     # 64;  num_heads * head_size == n_embd
BLOCK_SIZE = 512                 # max context; T <= BLOCK_SIZE
NEG_INF = -1e30                  # finite additive mask (no inf arithmetic)

# dot_general dimension_numbers (batch dim = head; these are exactly the
# patterns jnp.einsum('h..,h..->h..') generates, i.e. known-good on Mosaic).
_PROJ_DN = (((2,), (1,)), ((0,), (0,)))   # (H,T,C) x (H,C,3D) -> (H,T,3D)
_QK_DN   = (((2,), (2,)), ((0,), (0,)))   # (H,T,D) x (H,T,D)  -> (H,T,T)
_PV_DN   = (((2,), (1,)), ((0,), (0,)))   # (H,T,T) x (H,T,D)  -> (H,T,D)


# ------------------------------------ kernel --------------------------------
def mha_kernel(bias_ref, x_ref, wqkv_ref, wo_ref, bo_ref, out_ref,
               *, n_head, head_size, bb):
    H, D = n_head, head_size
    wqkv = wqkv_ref[...]            # (H, C, 3D) bf16 (query columns pre-scaled)
    wo = wo_ref[...]                # (H*D, C)   bf16
    bo = bo_ref[...]                # (1, C)     f32
    bias = bias_ref[...]            # (T, T)     f32 causal additive mask

    # TODO(synk): for T approaching block_size=512, tile the KV axis
    # (flash-style running max/sum) -- the single-shot (H,T,T) f32 scores do
    # not fit the 16 MiB default scoped VMEM on v5e and are tight on v7x.
    for b in range(bb):             # bb is a small static count (1 or 2)
        x = x_ref[b]                # (T, C) bf16
        dt = x.dtype

        # Fused QKV projection: one batched MXU dot with N = 3*D = 192.
        # (If the head broadcast materializes it is consumed by a single dot.)
        xb = jnp.broadcast_to(x, (H,) + x.shape)                   # (H, T, C)
        qkv = lax.dot_general(xb, wqkv, _PROJ_DN,
                              preferred_element_type=jnp.float32).astype(dt)
        qh = qkv[..., :D]           # (H, T, D); softmax scale already in wq
        kh = qkv[..., D:2 * D]
        vh = qkv[..., 2 * D:]

        # Scores + additive causal bias (bias broadcast over heads).
        s = lax.dot_general(qh, kh, _QK_DN,
                            preferred_element_type=jnp.float32)    # (H, T, T)
        s = s + bias

        # Stable softmax; 1/sum folded into the P@V epilogue (EUP reciprocal).
        s = s - jnp.max(s, axis=-1, keepdims=True)
        p = jnp.exp(s)
        inv = pl.reciprocal(jnp.sum(p, axis=-1, keepdims=True), approx=True)

        pv = lax.dot_general(p.astype(dt), vh, _PV_DN,
                             preferred_element_type=jnp.float32)   # (H, T, D)
        oh = (pv * inv).astype(dt)                                 # (H, T, D)

        # Output projection: lane-concat the heads (torch.cat order) and do a
        # single (T, H*D) @ (H*D, C) matmul -- no (H,T,C) f32 intermediate,
        # one K=384 MXU contraction.
        o_cat = jnp.concatenate([oh[h] for h in range(H)], axis=-1)  # (T, H*D)
        out = jnp.dot(o_cat, wo, preferred_element_type=jnp.float32) + bo

        # TODO(synk): dropout (p=0.2) on attention probs and on the output is
        # identity here (eval mode); training would need pltpu.prng_*.
        out_ref[b] = out.astype(out_ref.dtype)


# ----------------------------------- wrapper ---------------------------------
def multi_head_attention(x, params):
    B, T, C = x.shape
    assert C == N_EMBD and T <= BLOCK_SIZE
    H = params["w_qkv"].shape[0]
    D = params["w_qkv"].shape[2] // 3
    assert H * D == C

    BB = 2 if B % 2 == 0 else 1      # batch elements per grid step
    grid = (B // BB,)

    # Precomputed causal additive bias; constant index_map -> DMA'd once and
    # resident across all grid steps.
    idx = jnp.arange(T, dtype=jnp.int32)
    bias = jnp.where(idx[:, None] >= idx[None, :], 0.0, NEG_INF).astype(jnp.float32)

    kernel = functools.partial(mha_kernel, n_head=H, head_size=D, bb=BB)

    flops = 2 * B * (T * C * (3 * C) + 2 * H * T * T * D + T * C * C)
    transcendentals = B * H * T * T
    bytes_accessed = (2 * B * T * C * 2 + T * T * 4
                      + (H * C * 3 * D + C * C) * 2 + C * 4)

    return pl.pallas_call(
        kernel,
        out_shape=jax.ShapeDtypeStruct((B, T, C), x.dtype),
        grid=grid,
        in_specs=[
            pl.BlockSpec((T, T), lambda b: (0, 0)),                       # bias
            pl.BlockSpec((BB, T, C), lambda b: (b, 0, 0)),                # x
            pl.BlockSpec(params["w_qkv"].shape, lambda b: (0, 0, 0)),     # Wqkv
            pl.BlockSpec(params["w_o"].shape, lambda b: (0, 0)),          # Wo
            pl.BlockSpec(params["b_o"].shape, lambda b: (0, 0)),          # bo
        ],
        out_specs=pl.BlockSpec((BB, T, C), lambda b: (b, 0, 0)),
        compiler_params=pltpu.CompilerParams(dimension_semantics=("parallel",)),
        cost_estimate=pl.CostEstimate(flops=flops,
                                      transcendentals=transcendentals,
                                      bytes_accessed=bytes_accessed),
    )(bias, x, params["w_qkv"], params["w_o"], params["b_o"])


# ------------------------------ parameters (bf16) ----------------------------
def init_params(key):
    C, H, D = N_EMBD, N_HEAD, HEAD_SIZE
    kq, kk, kv, ko, kb = jax.random.split(key, 5)
    std = 0.02
    scale = float(D) ** -0.5          # 0.125 exactly; folded into wq (free)

    def nrm(k, shape):
        return std * jax.random.normal(k, shape, dtype=jnp.float32)

    wq = nrm(kq, (H, C, D)) * scale   # per-head query Linear, scale folded in
    wk = nrm(kk, (H, C, D))           # per-head key Linear (no bias)
    wv = nrm(kv, (H, C, D))           # per-head value Linear (no bias)
    return {
        # packed (H, C, 3D): one batched dot per step does q|k|v for all heads
        "w_qkv": jnp.concatenate([wq, wk, wv], axis=-1).astype(jnp.bfloat16),
        # proj Linear(H*D, n_embd) stored transposed: rows in torch.cat order
        "w_o": nrm(ko, (H * D, C)).astype(jnp.bfloat16),
        "b_o": nrm(kb, (1, C)),       # f32 bias
    }


# ------------------------------ plain-JAX reference --------------------------
def mha_ref(x, params):
    hi = jax.lax.Precision.HIGHEST
    H = params["w_qkv"].shape[0]
    D = params["w_qkv"].shape[2] // 3
    xf = x.astype(jnp.float32)
    wqkv = params["w_qkv"].astype(jnp.float32)
    wq, wk, wv = wqkv[..., :D], wqkv[..., D:2 * D], wqkv[..., 2 * D:]
    wo = params["w_o"].astype(jnp.float32)
    bo = params["b_o"].astype(jnp.float32)
    # NOTE: the 1/sqrt(head_size) softmax scale is already folded into wq,
    # so no explicit score scaling here (mathematically identical to PyTorch).
    q = jnp.einsum("btc,hcd->bhtd", xf, wq, precision=hi)
    k = jnp.einsum("btc,hcd->bhtd", xf, wk, precision=hi)
    v = jnp.einsum("btc,hcd->bhtd", xf, wv, precision=hi)
    s = jnp.einsum("bhtd,bhsd->bhts", q, k, precision=hi)
    B, T = x.shape[0], x.shape[1]
    mask = jnp.tril(jnp.ones((T, T), dtype=bool))
    s = jnp.where(mask, s, -jnp.inf)
    a = jax.nn.softmax(s, axis=-1)
    o = jnp.einsum("bhts,bhsd->bhtd", a, v, precision=hi)
    o_cat = jnp.swapaxes(o, 1, 2).reshape(B, T, H * D)   # torch.cat order
    return jnp.einsum("btk,kc->btc", o_cat, wo, precision=hi) + bo


# ------------------------------------- main -----------------------------------
if __name__ == "__main__":
    root = jax.random.PRNGKey(0)
    k_param, k_x = jax.random.split(root)
    params = init_params(k_param)

    B, T = 4, 128
    x = jax.random.normal(k_x, (B, T, N_EMBD), dtype=jnp.float32).astype(jnp.bfloat16)

    out = jax.block_until_ready(multi_head_attention(x, params))
    ref = jax.block_until_ready(mha_ref(x, params))

    assert out.shape == (B, T, N_EMBD)
    out_f32 = out.astype(jnp.float32)
    assert bool(jnp.all(jnp.isfinite(out_f32)))
    max_err = float(jnp.max(jnp.abs(out_f32 - ref)))
    assert jnp.allclose(out_f32, ref, atol=2e-2, rtol=2e-2), max_err

    print("KERNEL_OK")
</pallas_src>

<mosaic_0001>
module attributes {stable_mosaic.version = 11 : i64} {
  func.func @mha_kernel(%arg0: i32, %arg1: memref<128x128xf32, #tpu.memory_space<vmem>>, %arg2: memref<2x128x384xbf16, #tpu.memory_space<vmem>>, %arg3: memref<6x384x192xbf16, #tpu.memory_space<vmem>>, %arg4: memref<384x384xbf16, #tpu.memory_space<vmem>>, %arg5: memref<1x384xf32, #tpu.memory_space<vmem>>, %arg6: memref<2x128x384xbf16, #tpu.memory_space<vmem>>) attributes {dimension_semantics = [#tpu.dimension_semantics<parallel>], iteration_bounds = array<i64: 2>, scalar_prefetch = 0 : i64, scratch_operands = 0 : i64, tpu.core_type = #tpu.core_type<tc>, window_params = [{pipeline_mode = #tpu.pipeline_mode<synchronous>, transform_indices = @transform_0, window_bounds = array<i64: 128, 128>}, {transform_indices = @transform_1, window_bounds = array<i64: 2, 128, 384>}, {pipeline_mode = #tpu.pipeline_mode<synchronous>, transform_indices = @transform_2, window_bounds = array<i64: 6, 384, 192>}, {pipeline_mode = #tpu.pipeline_mode<synchronous>, transform_indices = @transform_3, window_bounds = array<i64: 384, 384>}, {pipeline_mode = #tpu.pipeline_mode<synchronous>, transform_indices = @transform_4, window_bounds = array<i64: 1, 384>}, {transform_indices = @transform_5, window_bounds = array<i64: 2, 128, 384>}]} {
    %c0 = arith.constant 0 : index
    %c0_0 = arith.constant 0 : index
    %c0_1 = arith.constant 0 : index
    %0 = vector.load %arg3[%c0, %c0_0, %c0_1] : memref<6x384x192xbf16, #tpu.memory_space<vmem>>, vector<6x384x192xbf16>
    %c0_2 = arith.constant 0 : index
    %c0_3 = arith.constant 0 : index
    %1 = vector.load %arg4[%c0_2, %c0_3] : memref<384x384xbf16, #tpu.memory_space<vmem>>, vector<384x384xbf16>
    %c0_4 = arith.constant 0 : index
    %c0_5 = arith.constant 0 : index
    %2 = vector.load %arg5[%c0_4, %c0_5] : memref<1x384xf32, #tpu.memory_space<vmem>>, vector<1x384xf32>
    %c0_6 = arith.constant 0 : index
    %c0_7 = arith.constant 0 : index
    %3 = vector.load %arg1[%c0_6, %c0_7] : memref<128x128xf32, #tpu.memory_space<vmem>>, vector<128x128xf32>
    %c0_8 = arith.constant 0 : index
    %c0_9 = arith.constant 0 : index
    %c0_10 = arith.constant 0 : index
    %4 = vector.load %arg2[%c0_8, %c0_9, %c0_10] : memref<2x128x384xbf16, #tpu.memory_space<vmem>>, vector<1x128x384xbf16>
    %5 = vector.shape_cast %4 : vector<1x128x384xbf16> to vector<128x384xbf16>
    %6 = vector.shape_cast %5 : vector<128x384xbf16> to vector<1x128x384xbf16>
    %7 = vector.broadcast %6 : vector<1x128x384xbf16> to vector<6x128x384xbf16>
    %cst = arith.constant dense<0.000000e+00> : vector<6x128x192xf32>
    %8 = tpu.matmul %7, %0, %cst {dimension_numbers = #tpu.dot_dimension_numbers<[2], [1], [1], [2], [0, 0, 0, 1, 1, 2], [0], [0]>} : vector<6x128x384xbf16>, vector<6x384x192xbf16>, vector<6x128x192xf32> -> vector<6x128x192xf32>
    %9 = arith.truncf %8 : vector<6x128x192xf32> to vector<6x128x192xbf16>
    %10 = vector.extract_strided_slice %9 {offsets = [0, 0, 0], sizes = [6, 128, 64], strides = [1, 1, 1]} : vector<6x128x192xbf16> to vector<6x128x64xbf16>
    %11 = vector.extract_strided_slice %9 {offsets = [0, 0, 64], sizes = [6, 128, 64], strides = [1, 1, 1]} : vector<6x128x192xbf16> to vector<6x128x64xbf16>
    %12 = vector.extract_strided_slice %9 {offsets = [0, 0, 128], sizes = [6, 128, 64], strides = [1, 1, 1]} : vector<6x128x192xbf16> to vector<6x128x64xbf16>
    %cst_11 = arith.constant dense<0.000000e+00> : vector<6x128x128xf32>
    %13 = tpu.matmul %10, %11, %cst_11 {dimension_numbers = #tpu.dot_dimension_numbers<[2], [2], [1], [1], [0, 0, 0, 1, 1, 1], [0], [0]>} : vector<6x128x64xbf16>, vector<6x128x64xbf16>, vector<6x128x128xf32> -> vector<6x128x128xf32>
    %14 = vector.shape_cast %3 : vector<128x128xf32> to vector<1x128x128xf32>
    %15 = vector.broadcast %14 : vector<1x128x128xf32> to vector<6x128x128xf32>
    %16 = arith.addf %13, %15 : vector<6x128x128xf32>
    %cst_12 = arith.constant dense<0xFF800000> : vector<6x128xf32>
    %17 = vector.multi_reduction <maximumf>, %16, %cst_12 [2] : vector<6x128x128xf32> to vector<6x128xf32>
    %18 = vector.shape_cast %17 : vector<6x128xf32> to vector<6x128x1xf32>
    %19 = vector.broadcast %18 : vector<6x128x1xf32> to vector<6x128x128xf32>
    %20 = arith.subf %16, %19 : vector<6x128x128xf32>
    %21 = math.exp %20 : vector<6x128x128xf32>
    %cst_13 = arith.constant dense<0.000000e+00> : vector<6x128xf32>
    %22 = vector.multi_reduction <add>, %21, %cst_13 [2] : vector<6x128x128xf32> to vector<6x128xf32>
    %23 = vector.shape_cast %22 : vector<6x128xf32> to vector<6x128x1xf32>
    %24 = tpu.reciprocal %23 {approx = true} : vector<6x128x1xf32> -> vector<6x128x1xf32>
    %25 = arith.truncf %21 : vector<6x128x128xf32> to vector<6x128x128xbf16>
    %cst_14 = arith.constant dense<0.000000e+00> : vector<6x128x64xf32>
    %26 = tpu.matmul %25, %12, %cst_14 {dimension_numbers = #tpu.dot_dimension_numbers<[2], [1], [1], [2], [0, 0, 0, 1, 1, 2], [0], [0]>} : vector<6x128x128xbf16>, vector<6x128x64xbf16>, vector<6x128x64xf32> -> vector<6x128x64xf32>
    %27 = vector.broadcast %24 : vector<6x128x1xf32> to vector<6x128x64xf32>
    %28 = arith.mulf %26, %27 : vector<6x128x64xf32>
    %29 = arith.truncf %28 : vector<6x128x64xf32> to vector<6x128x64xbf16>
    %30 = vector.extract_strided_slice %29 {offsets = [0, 0, 0], sizes = [1, 128, 64], strides = [1, 1, 1]} : vector<6x128x64xbf16> to vector<1x128x64xbf16>
    %31 = vector.shape_cast %30 : vector<1x128x64xbf16> to vector<128x64xbf16>
    %32 = vector.extract_strided_slice %29 {offsets = [1, 0, 0], sizes = [1, 128, 64], strides = [1, 1, 1]} : vector<6x128x64xbf16> to vector<1x128x64xbf16>
    %33 = vector.shape_cast %32 : vector<1x128x64xbf16> to vector<128x64xbf16>
    %34 = vector.extract_strided_slice %29 {offsets = [2, 0, 0], sizes = [1, 128, 64], strides = [1, 1, 1]} : vector<6x128x64xbf16> to vector<1x128x64xbf16>
    %35 = vector.shape_cast %34 : vector<1x128x64xbf16> to vector<128x64xbf16>
    %36 = vector.extract_strided_slice %29 {offsets = [3, 0, 0], sizes = [1, 128, 64], strides = [1, 1, 1]} : vector<6x128x64xbf16> to vector<1x128x64xbf16>
    %37 = vector.shape_cast %36 : vector<1x128x64xbf16> to vector<128x64xbf16>
    %38 = vector.extract_strided_slice %29 {offsets = [4, 0, 0], sizes = [1, 128, 64], strides = [1, 1, 1]} : vector<6x128x64xbf16> to vector<1x128x64xbf16>
    %39 = vector.shape_cast %38 : vector<1x128x64xbf16> to vector<128x64xbf16>
    %40 = vector.extract_strided_slice %29 {offsets = [5, 0, 0], sizes = [1, 128, 64], strides = [1, 1, 1]} : vector<6x128x64xbf16> to vector<1x128x64xbf16>
    %41 = vector.shape_cast %40 : vector<1x128x64xbf16> to vector<128x64xbf16>
    %42 = tpu.concatenate %31, %33, %35, %37, %39, %41 in 1 : vector<128x64xbf16>, vector<128x64xbf16>, vector<128x64xbf16>, vector<128x64xbf16>, vector<128x64xbf16>, vector<128x64xbf16> -> vector<128x384xbf16>
    %cst_15 = arith.constant dense<0.000000e+00> : vector<128x384xf32>
    %43 = tpu.matmul %42, %1, %cst_15 {dimension_numbers = #tpu.dot_dimension_numbers<[1], [0], [0], [1], [0, 0, 1, 1], [], []>} : vector<128x384xbf16>, vector<384x384xbf16>, vector<128x384xf32> -> vector<128x384xf32>
    %44 = vector.broadcast %2 : vector<1x384xf32> to vector<128x384xf32>
    %45 = arith.addf %43, %44 : vector<128x384xf32>
    %46 = arith.truncf %45 : vector<128x384xf32> to vector<128x384xbf16>
    %c0_16 = arith.constant 0 : index
    %c0_17 = arith.constant 0 : index
    %c0_18 = arith.constant 0 : index
    %47 = vector.load %arg6[%c0_16, %c0_17, %c0_18] : memref<2x128x384xbf16, #tpu.memory_space<vmem>>, vector<1x128x384xbf16>
    %48 = vector.shape_cast %47 : vector<1x128x384xbf16> to vector<128x384xbf16>
    %49 = vector.shape_cast %46 : vector<128x384xbf16> to vector<1x128x384xbf16>
    tpu.vector_store %arg6[%c0_16, %c0_17, %c0_18], %49 {strides = array<i32>} : memref<2x128x384xbf16, #tpu.memory_space<vmem>>, vector<1x128x384xbf16>,
    %c1 = arith.constant 1 : index
    %c0_19 = arith.constant 0 : index
    %c0_20 = arith.constant 0 : index
    %50 = vector.load %arg2[%c1, %c0_19, %c0_20] : memref<2x128x384xbf16, #tpu.memory_space<vmem>>, vector<1x128x384xbf16>
    %51 = vector.shape_cast %50 : vector<1x128x384xbf16> to vector<128x384xbf16>
    %52 = vector.shape_cast %51 : vector<128x384xbf16> to vector<1x128x384xbf16>
    %53 = vector.broadcast %52 : vector<1x128x384xbf16> to vector<6x128x384xbf16>
    %cst_21 = arith.constant dense<0.000000e+00> : vector<6x128x192xf32>
    %54 = tpu.matmul %53, %0, %cst_21 {dimension_numbers = #tpu.dot_dimension_numbers<[2], [1], [1], [2], [0, 0, 0, 1, 1, 2], [0], [0]>} : vector<6x128x384xbf16>, vector<6x384x192xbf16>, vector<6x128x192xf32> -> vector<6x128x192xf32>
    %55 = arith.truncf %54 : vector<6x128x192xf32> to vector<6x128x192xbf16>
    %56 = vector.extract_strided_slice %55 {offsets = [0, 0, 0], sizes = [6, 128, 64], strides = [1, 1, 1]} : vector<6x128x192xbf16> to vector<6x128x64xbf16>
    %57 = vector.extract_strided_slice %55 {offsets = [0, 0, 64], sizes = [6, 128, 64], strides = [1, 1, 1]} : vector<6x128x192xbf16> to vector<6x128x64xbf16>
    %58 = vector.extract_strided_slice %55 {offsets = [0, 0, 128], sizes = [6, 128, 64], strides = [1, 1, 1]} : vector<6x128x192xbf16> to vector<6x128x64xbf16>
    %cst_22 = arith.constant dense<0.000000e+00> : vector<6x128x128xf32>
    %59 = tpu.matmul %56, %57, %cst_22 {dimension_numbers = #tpu.dot_dimension_numbers<[2], [2], [1], [1], [0, 0, 0, 1, 1, 1], [0], [0]>} : vector<6x128x64xbf16>, vector<6x128x64xbf16>, vector<6x128x128xf32> -> vector<6x128x128xf32>
    %60 = vector.shape_cast %3 : vector<128x128xf32> to vector<1x128x128xf32>
    %61 = vector.broadcast %60 : vector<1x128x128xf32> to vector<6x128x128xf32>
    %62 = arith.addf %59, %61 : vector<6x128x128xf32>
    %cst_23 = arith.constant dense<0xFF800000> : vector<6x128xf32>
    %63 = vector.multi_reduction <maximumf>, %62, %cst_23 [2] : vector<6x128x128xf32> to vector<6x128xf32>
    %64 = vector.shape_cast %63 : vector<6x128xf32> to vector<6x128x1xf32>
    %65 = vector.broadcast %64 : vector<6x128x1xf32> to vector<6x128x128xf32>
    %66 = arith.subf %62, %65 : vector<6x128x128xf32>
    %67 = math.exp %66 : vector<6x128x128xf32>
    %cst_24 = arith.constant dense<0.000000e+00> : vector<6x128xf32>
    %68 = vector.multi_reduction <add>, %67, %cst_24 [2] : vector<6x128x128xf32> to vector<6x128xf32>
    %69 = vector.shape_cast %68 : vector<6x128xf32> to vector<6x128x1xf32>
    %70 = tpu.reciprocal %69 {approx = true} : vector<6x128x1xf32> -> vector<6x128x1xf32>
    %71 = arith.truncf %67 : vector<6x128x128xf32> to vector<6x128x128xbf16>
    %cst_25 = arith.constant dense<0.000000e+00> : vector<6x128x64xf32>
    %72 = tpu.matmul %71, %58, %cst_25 {dimension_numbers = #tpu.dot_dimension_numbers<[2], [1], [1], [2], [0, 0, 0, 1, 1, 2], [0], [0]>} : vector<6x128x128xbf16>, vector<6x128x64xbf16>, vector<6x128x64xf32> -> vector<6x128x64xf32>
    %73 = vector.broadcast %70 : vector<6x128x1xf32> to vector<6x128x64xf32>
    %74 = arith.mulf %72, %73 : vector<6x128x64xf32>
    %75 = arith.truncf %74 : vector<6x128x64xf32> to vector<6x128x64xbf16>
    %76 = vector.extract_strided_slice %75 {offsets = [0, 0, 0], sizes = [1, 128, 64], strides = [1, 1, 1]} : vector<6x128x64xbf16> to vector<1x128x64xbf16>
    %77 = vector.shape_cast %76 : vector<1x128x64xbf16> to vector<128x64xbf16>
    %78 = vector.extract_strided_slice %75 {offsets = [1, 0, 0], sizes = [1, 128, 64], strides = [1, 1, 1]} : vector<6x128x64xbf16> to vector<1x128x64xbf16>
    %79 = vector.shape_cast %78 : vector<1x128x64xbf16> to vector<128x64xbf16>
    %80 = vector.extract_strided_slice %75 {offsets = [2, 0, 0], sizes = [1, 128, 64], strides = [1, 1, 1]} : vector<6x128x64xbf16> to vector<1x128x64xbf16>
    %81 = vector.shape_cast %80 : vector<1x128x64xbf16> to vector<128x64xbf16>
    %82 = vector.extract_strided_slice %75 {offsets = [3, 0, 0], sizes = [1, 128, 64], strides = [1, 1, 1]} : vector<6x128x64xbf16> to vector<1x128x64xbf16>
    %83 = vector.shape_cast %82 : vector<1x128x64xbf16> to vector<128x64xbf16>
    %84 = vector.extract_strided_slice %75 {offsets = [4, 0, 0], sizes = [1, 128, 64], strides = [1, 1, 1]} : vector<6x128x64xbf16> to vector<1x128x64xbf16>
    %85 = vector.shape_cast %84 : vector<1x128x64xbf16> to vector<128x64xbf16>
    %86 = vector.extract_strided_slice %75 {offsets = [5, 0, 0], sizes = [1, 128, 64], strides = [1, 1, 1]} : vector<6x128x64xbf16> to vector<1x128x64xbf16>
    %87 = vector.shape_cast %86 : vector<1x128x64xbf16> to vector<128x64xbf16>
    %88 = tpu.concatenate %77, %79, %81, %83, %85, %87 in 1 : vector<128x64xbf16>, vector<128x64xbf16>, vector<128x64xbf16>, vector<128x64xbf16>, vector<128x64xbf16>, vector<128x64xbf16> -> vector<128x384xbf16>
    %cst_26 = arith.constant dense<0.000000e+00> : vector<128x384xf32>
    %89 = tpu.matmul %88, %1, %cst_26 {dimension_numbers = #tpu.dot_dimension_numbers<[1], [0], [0], [1], [0, 0, 1, 1], [], []>} : vector<128x384xbf16>, vector<384x384xbf16>, vector<128x384xf32> -> vector<128x384xf32>
    %90 = vector.broadcast %2 : vector<1x384xf32> to vector<128x384xf32>
    %91 = arith.addf %89, %90 : vector<128x384xf32>
    %92 = arith.truncf %91 : vector<128x384xf32> to vector<128x384xbf16>
    %c1_27 = arith.constant 1 : index
    %c0_28 = arith.constant 0 : index
    %c0_29 = arith.constant 0 : index
    %93 = vector.load %arg6[%c1_27, %c0_28, %c0_29] : memref<2x128x384xbf16, #tpu.memory_space<vmem>>, vector<1x128x384xbf16>
    %94 = vector.shape_cast %93 : vector<1x128x384xbf16> to vector<128x384xbf16>
    %95 = vector.shape_cast %92 : vector<128x384xbf16> to vector<1x128x384xbf16>
    tpu.vector_store %arg6[%c1_27, %c0_28, %c0_29], %95 {strides = array<i32>} : memref<2x128x384xbf16, #tpu.memory_space<vmem>>, vector<1x128x384xbf16>,
    return
  }
  func.func @transform_0(%arg0: i32) -> (i32, i32) {
    %c0_i32 = arith.constant 0 : i32
    %c0_i32_0 = arith.constant 0 : i32
    %c0_i32_1 = arith.constant 0 : i32
    return %c0_i32, %c0_i32_0 : i32, i32
  }
  func.func @transform_1(%arg0: i32) -> (i32, i32, i32) {
    %c0_i32 = arith.constant 0 : i32
    %c0_i32_0 = arith.constant 0 : i32
    %c0_i32_1 = arith.constant 0 : i32
    return %arg0, %c0_i32, %c0_i32_0 : i32, i32, i32
  }
  func.func @transform_2(%arg0: i32) -> (i32, i32, i32) {
    %c0_i32 = arith.constant 0 : i32
    %c0_i32_0 = arith.constant 0 : i32
    %c0_i32_1 = arith.constant 0 : i32
    %c0_i32_2 = arith.constant 0 : i32
    return %c0_i32, %c0_i32_0, %c0_i32_1 : i32, i32, i32
  }
  func.func @transform_3(%arg0: i32) -> (i32, i32) {
    %c0_i32 = arith.constant 0 : i32
    %c0_i32_0 = arith.constant 0 : i32
    %c0_i32_1 = arith.constant 0 : i32
    return %c0_i32, %c0_i32_0 : i32, i32
  }
  func.func @transform_4(%arg0: i32) -> (i32, i32) {
    %c0_i32 = arith.constant 0 : i32
    %c0_i32_0 = arith.constant 0 : i32
    %c0_i32_1 = arith.constant 0 : i32
    return %c0_i32, %c0_i32_0 : i32, i32
  }
  func.func @transform_5(%arg0: i32) -> (i32, i32, i32) {
    %c0_i32 = arith.constant 0 : i32
    %c0_i32_0 = arith.constant 0 : i32
    %c0_i32_1 = arith.constant 0 : i32
    return %arg0, %c0_i32, %c0_i32_0 : i32, i32, i32
  }
}

</mosaic_0001>

<llo_original>
// kernel: tpu_custom_call.1
$region0: #{tpu_custom_call.1}
  #allocation0 [shape = 'u32[]', space=smem, size = 0x4, offset = 0x4, fixed_abs, tag = 'smem constant byte address 0x4 - core index']
  #allocation1 [shape = 'u32[144,128]{1,0:T(1,128)}', space=vmem, size = 0x12000, scoped, tag = 'internal scratch']
  %s0 = inlined_call_operand.vmem [shape: f32[128,128], index: 0, kind: input, shape index: {}]
  %s1 = inlined_call_operand.vmem [shape: bf16[4,128,384], index: 1, kind: input, shape index: {}]
  %s2 = inlined_call_operand.vmem [shape: bf16[6,384,192], index: 2, kind: input, shape index: {}]
  %s3 = inlined_call_operand.vmem [shape: bf16[384,384], index: 3, kind: input, shape index: {}]
  %s4 = inlined_call_operand.vmem [shape: f32[1,384], index: 4, kind: input, shape index: {}]
  %s5 = inlined_call_operand.hbm [shape: bf16[4,128,384], index: 5, kind: output, shape index: {}]
  %s6 = sld [smem:[#allocation0]]
  $region53: #{tpu_custom_call.1} parent=0
    _
  %s8 = ssub.s32 1, %s6
  %s9 = scalar_select 0, %s8, %s6
  $region1: #{tpu_custom_call.1} parent=0
    #allocation2 [shape = 'u8[393216]{0}', space=vmem, size = 0x60000, scoped, tag = 'output window, operand 0']
    #allocation3 [shape = 's32[2]{0}', space=sflag, size = 0x8, scoped, tag = 'scoped memory for tpu_custom_call.1']
    %10 = vsyncpa [#allocation3], 0
    %s11 = scalar_lea.sflag [#allocation3], 1
    %12 = vsyncpa %s11, 0
    loop: start=0, step=1, limit=4
    $region2: #{tpu_custom_call.1} parent=1 // loop_pre_header
      _
    $region3: #{tpu_custom_call.1} parent=1 // loop_header
      %s14 = sphi 0, %s18
      %p15 = scmp.ge.s32.totalorder %s14, 4
      %s22 = sphi 0, %s22
      %s24 = sphi 0, %s22
      %s25 = sphi 0, %s24
      %s39 = sphi 0, %s25
      %s45 = sphi 0, %s47
      %s48 = sphi 0, %s45
      %s49 = sphi 0, %s48
      %s65 = sphi 0, %s49
      %s69 = sphi 0, %s69
      %s71 = sphi 0, %s69
      %s72 = sphi 0, %s71
      %s86 = sphi 0, %s72
      %s90 = sphi 0, %s90
      %s92 = sphi 0, %s90
      %s93 = sphi 0, %s92
      %s107 = sphi 0, %s93
      %s111 = sphi 0, %s111
      %s113 = sphi 0, %s111
      %s114 = sphi 0, %s113
      %s128 = sphi 0, %s114
      %s134 = sphi 0, %s136
      %s137 = sphi 0, %s134
      %s138 = sphi 0, %s137
      %s154 = sphi 0, %s138
    $region4: #{tpu_custom_call.1} parent=1 // loop_header_branch
      %17 = sbr.rel (%p15) target = $region8
    $region5: #{tpu_custom_call.1} parent=1 // loop_body
      %s19 = ssub.s32 %s14, 1
      %s20 = ssub.s32 %s14, 2
      %s21 = sadd.s32 %s14, 1
      %s23 = sadd.s32 %s22, 1
      %p26 = scmp.eq.s32.totalorder %s14, 1
      %p27 = scmp.ne.s32.totalorder %s22, %s24
      %p28 = scmp.eq.s32.totalorder %s14, 0
      %p29 = por %p27, %p28
      %p30 = scmp.ne.s32.totalorder %s22, %s24
      %p31 = scmp.eq.s32.totalorder %s19, 1
      %p32 = por %p30, %p31
      %p33 = scmp.ne.s32.totalorder %s24, %s25
      %p34 = scmp.eq.s32.totalorder %s19, 0
      %p35 = por %p33, %p34
      %p36 = scmp.ne.s32.totalorder %s24, %s25
      %p37 = scmp.eq.s32.totalorder %s20, 1
      %p38 = por %p36, %p37
      %p40 = scmp.ne.s32.totalorder %s25, %s39
      %p41 = scmp.eq.s32.totalorder %s20, 0
      %p42 = por %p40, %p41
      %s43 = ssub.s32 %s14, %s21
      %p44 = scmp.eq.s32.totalorder %s43, 0
      %s46 = sadd.s32 %s45, 1
      %s47 = scalar_select %p44, %s45, %s46
      %p50 = pneg %p44
      %p51 = scmp.eq.s32.totalorder %s14, 1
      %p52 = por %p50, %p51
      %p53 = scmp.ne.s32.totalorder %s45, %s48
      %p54 = scmp.eq.s32.totalorder %s14, 0
      %p55 = por %p53, %p54
      %p56 = scmp.ne.s32.totalorder %s45, %s48
      %p57 = scmp.eq.s32.totalorder %s19, 1
      %p58 = por %p56, %p57
      %p59 = scmp.ne.s32.totalorder %s48, %s49
      %p60 = scmp.eq.s32.totalorder %s19, 0
      %p61 = por %p59, %p60
      %p62 = scmp.ne.s32.totalorder %s48, %s49
      %p63 = scmp.eq.s32.totalorder %s20, 1
      %p64 = por %p62, %p63
      %p66 = scmp.ne.s32.totalorder %s49, %s65
      %p67 = scmp.eq.s32.totalorder %s20, 0
      %p68 = por %p66, %p67
      %s70 = sadd.s32 %s69, 1
      %p73 = scmp.eq.s32.totalorder %s14, 1
      %p74 = scmp.ne.s32.totalorder %s69, %s71
      %p75 = scmp.eq.s32.totalorder %s14, 0
      %p76 = por %p74, %p75
      %p77 = scmp.ne.s32.totalorder %s69, %s71
      %p78 = scmp.eq.s32.totalorder %s19, 1
      %p79 = por %p77, %p78
      %p80 = scmp.ne.s32.totalorder %s71, %s72
      %p81 = scmp.eq.s32.totalorder %s19, 0
      %p82 = por %p80, %p81
      %p83 = scmp.ne.s32.totalorder %s71, %s72
      %p84 = scmp.eq.s32.totalorder %s20, 1
      %p85 = por %p83, %p84
      %p87 = scmp.ne.s32.totalorder %s72, %s86
      %p88 = scmp.eq.s32.totalorder %s20, 0
      %p89 = por %p87, %p88
      %s91 = sadd.s32 %s90, 1
      %p94 = scmp.eq.s32.totalorder %s14, 1
      %p95 = scmp.ne.s32.totalorder %s90, %s92
      %p96 = scmp.eq.s32.totalorder %s14, 0
      %p97 = por %p95, %p96
      %p98 = scmp.ne.s32.totalorder %s90, %s92
      %p99 = scmp.eq.s32.totalorder %s19, 1
      %p100 = por %p98, %p99
      %p101 = scmp.ne.s32.totalorder %s92, %s93
      %p102 = scmp.eq.s32.totalorder %s19, 0
      %p103 = por %p101, %p102
      %p104 = scmp.ne.s32.totalorder %s92, %s93
      %p105 = scmp.eq.s32.totalorder %s20, 1
      %p106 = por %p104, %p105
      %p108 = scmp.ne.s32.totalorder %s93, %s107
      %p109 = scmp.eq.s32.totalorder %s20, 0
      %p110 = por %p108, %p109
      %s112 = sadd.s32 %s111, 1
      %p115 = scmp.eq.s32.totalorder %s14, 1
      %p116 = scmp.ne.s32.totalorder %s111, %s113
      %p117 = scmp.eq.s32.totalorder %s14, 0
      %p118 = por %p116, %p117
      %p119 = scmp.ne.s32.totalorder %s111, %s113
      %p120 = scmp.eq.s32.totalorder %s19, 1
      %p121 = por %p119, %p120
      %p122 = scmp.ne.s32.totalorder %s113, %s114
      %p123 = scmp.eq.s32.totalorder %s19, 0
      %p124 = por %p122, %p123
      %p125 = scmp.ne.s32.totalorder %s113, %s114
      %p126 = scmp.eq.s32.totalorder %s20, 1
      %p127 = por %p125, %p126
      %p129 = scmp.ne.s32.totalorder %s114, %s128
      %p130 = scmp.eq.s32.totalorder %s20, 0
      %p131 = por %p129, %p130
      %s132 = ssub.s32 %s14, %s21
      %p133 = scmp.eq.s32.totalorder %s132, 0
      %s135 = sadd.s32 %s134, 1
      %s136 = scalar_select %p133, %s134, %s135
      %p139 = pneg %p133
      %p140 = scmp.eq.s32.totalorder %s14, 1
      %p141 = por %p139, %p140
      %p142 = scmp.ne.s32.totalorder %s134, %s137
      %p143 = scmp.eq.s32.totalorder %s14, 0
      %p144 = por %p142, %p143
      %p145 = scmp.ne.s32.totalorder %s134, %s137
      %p146 = scmp.eq.s32.totalorder %s19, 1
      %p147 = por %p145, %p146
      %p148 = scmp.ne.s32.totalorder %s137, %s138
      %p149 = scmp.eq.s32.totalorder %s19, 0
      %p150 = por %p148, %p149
      %p151 = scmp.ne.s32.totalorder %s137, %s138
      %p152 = scmp.eq.s32.totalorder %s20, 1
      %p153 = por %p151, %p152
      %p155 = scmp.ne.s32.totalorder %s138, %s154
      %p156 = scmp.eq.s32.totalorder %s20, 0
      %p157 = por %p155, %p156
      %p158 = scmp.le.s32.totalorder 1, %s14
      %p159 = scmp.lt.s32.totalorder %s14, 3
      %p160 = pnand %p158, %p159
      %p161 = pneg %p160
      // Predicated region
      $region9: #{tpu_custom_call.1} parent=5 // pred_check
        _
      $region10: #{tpu_custom_call.1} parent=5 // pred_check_branch
        %163 = sbr.rel (%p160) target = $region12
      $region11: #{tpu_custom_call.1} parent=5 // pred_region
        %s164 = ssub.s32 %s14, 1
        // Predicated region
        $region13: #{tpu_custom_call.1} parent=11 // pred_check
          %p165 = pneg %p35
        $region14: #{tpu_custom_call.1} parent=11 // pred_check_branch
          %167 = sbr.rel (%p165) target = $region16
        $region15: #{tpu_custom_call.1} parent=11 // pred_region
          _
        $region16: #{tpu_custom_call.1} parent=11 // pred_fallthru
          _
        // Predicated region
        $region17: #{tpu_custom_call.1} parent=11 // pred_check
          %p168 = pneg %p82
        $region18: #{tpu_custom_call.1} parent=11 // pred_check_branch
          %170 = sbr.rel (%p168) target = $region20
        $region19: #{tpu_custom_call.1} parent=11 // pred_region
          _
        $region20: #{tpu_custom_call.1} parent=11 // pred_fallthru
          _
        // Predicated region
        $region21: #{tpu_custom_call.1} parent=11 // pred_check
          %p171 = pneg %p103
        $region22: #{tpu_custom_call.1} parent=11 // pred_check_branch
          %173 = sbr.rel (%p171) target = $region24
        $region23: #{tpu_custom_call.1} parent=11 // pred_region
          _
        $region24: #{tpu_custom_call.1} parent=11 // pred_fallthru
          _
        // Predicated region
        $region25: #{tpu_custom_call.1} parent=11 // pred_check
          %p174 = pneg %p124
        $region26: #{tpu_custom_call.1} parent=11 // pred_check_branch
          %176 = sbr.rel (%p174) target = $region28
        $region27: #{tpu_custom_call.1} parent=11 // pred_region
          _
        $region28: #{tpu_custom_call.1} parent=11 // pred_fallthru
          _
      $region12: #{tpu_custom_call.1} parent=5 // pred_fallthru
        _
      %p177 = scmp.lt.s32.totalorder %s14, 2
      // Predicated region
      $region29: #{tpu_custom_call.1} parent=5 // pred_check
        %p178 = pneg %p177
      $region30: #{tpu_custom_call.1} parent=5 // pred_check_branch
        %180 = sbr.rel (%p178) target = $region32
      $region31: #{tpu_custom_call.1} parent=5 // pred_region
        // Predicated region
        $region33: #{tpu_custom_call.1} parent=31 // pred_check
          %p181 = pneg %p55
        $region34: #{tpu_custom_call.1} parent=31 // pred_check_branch
          %183 = sbr.rel (%p181) target = $region36
        $region35: #{tpu_custom_call.1} parent=31 // pred_region
          %s184 = smul.u32 2, %s14
          %p185 = scmp.lt.s32.totalorder %s184, 3
          %s186 = scalar_select %p185, %s184, 3
          %s187 = smul.addr %s186, 48
          %s188 = smul.addr %s187, 4
          %s189 = scalar_lea.vmem %s1, %s188
          %s190 = smul.u32 2, %s14
        $region36: #{tpu_custom_call.1} parent=31 // pred_fallthru
          _
      $region32: #{tpu_custom_call.1} parent=5 // pred_fallthru
        _
      %p191 = scmp.le.s32.totalorder 1, %s14
      %p192 = scmp.lt.s32.totalorder %s14, 3
      %p193 = pnand %p191, %p192
      %p194 = pneg %p193
      // Predicated region
      $region37: #{tpu_custom_call.1} parent=5 // pred_check
        _
      $region38: #{tpu_custom_call.1} parent=5 // pred_check_branch
        %196 = sbr.rel (%p193) target = $region40
      $region39: #{tpu_custom_call.1} parent=5 // pred_region
        %s197 = ssub.s32 %s14, 1
        %p198 = pneg %p35
        %p199 = pneg %p32
        %s200 = smul.u32 2, %s19
        %p201 = scmp.lt.s32.totalorder %s200, 3
        %s202 = scalar_select %p201, %s200, 3
        %s203 = smul.addr %s202, 48
        %s204 = smul.addr %s203, 4
        %s205 = scalar_lea.vmem %s1, %s204
        %p206 = pneg %p61
        %p207 = pneg %p58
        %p208 = pneg %p82
        %p209 = pneg %p79
        %p210 = pneg %p103
        %p211 = pneg %p100
        %p212 = pneg %p124
        %p213 = pneg %p121
        %p214 = pneg %p150
        %p215 = pneg %p147
        %s216 = sand.u32 %s137, 1
        %s217 = scalar_lea.sflag [#allocation3], %s216
        %s218 = sand.u32 %s137, 1
        %s219 = smul.addr %s218, 384
        %s220 = scalar_lea.vmem [#allocation2], %s219
        %s221 = smul.u32 2, %s19
        %p222 = scmp.lt.s32.totalorder %s221, 3
        %s223 = scalar_select %p222, %s221, 3
        %s224 = smul.addr %s223, 48
        %s225 = smul.addr %s224, 4
        %s226 = scalar_lea.vmem %s1, %s225
        %s227 = smul.u32 2, %s19
        %s228 = smul.u32 2, %s19
        %v230 = vld [vmem:[%s2] sm:$0xff]
        %v231 = vld [vmem:[%s2 + $0x8] sm:$0xff]
        %v232 = vld [vmem:[%s2 + $0x10] sm:$0xff]
        %v233 = vld [vmem:[%s2 + $0x18] sm:$0xff]
        %v234 = vld [vmem:[%s2 + $0x20] sm:$0xff]
        %v235 = vld [vmem:[%s2 + $0x28] sm:$0xff]
        %v236 = vld [vmem:[%s2 + $0x30] sm:$0xff]
        %v237 = vld [vmem:[%s2 + $0x38] sm:$0xff]
        %v238 = vld [vmem:[%s2 + $0x40] sm:$0xff]
        %v239 = vld [vmem:[%s2 + $0x48] sm:$0xff]
        %v240 = vld [vmem:[%s2 + $0x50] sm:$0xff]
        %v241 = vld [vmem:[%s2 + $0x58] sm:$0xff]
        %v242 = vld [vmem:[%s2 + $0x60] sm:$0xff]
        %v243 = vld [vmem:[%s2 + $0x68] sm:$0xff]
        %v244 = vld [vmem:[%s2 + $0x70] sm:$0xff]
        %v245 = vld [vmem:[%s2 + $0x78] sm:$0xff]
        %v246 = vld [vmem:[%s2 + $0x80] sm:$0xff]
        %v247 = vld [vmem:[%s2 + $0x88] sm:$0xff]
        %v248 = vld [vmem:[%s2 + $0x90] sm:$0xff]
        %v249 = vld [vmem:[%s2 + $0x98] sm:$0xff]
        %v250 = vld [vmem:[%s2 + $0xa0] sm:$0xff]
        %v251 = vld [vmem:[%s2 + $0xa8] sm:$0xff]
        %v252 = vld [vmem:[%s2 + $0xb0] sm:$0xff]
        %v253 = vld [vmem:[%s2 + $0xb8] sm:$0xff]
        %v254 = vld [vmem:[%s2 + $0xc0] sm:$0xff]
        %v255 = vld [vmem:[%s2 + $0xc8] sm:$0xff]
        %v256 = vld [vmem:[%s2 + $0xd0] sm:$0xff]
        %v257 = vld [vmem:[%s2 + $0xd8] sm:$0xff]
        %v258 = vld [vmem:[%s2 + $0xe0] sm:$0xff]
        %v259 = vld [vmem:[%s2 + $0xe8] sm:$0xff]
        %v260 = vld [vmem:[%s2 + $0xf0] sm:$0xff]
        %v261 = vld [vmem:[%s2 + $0xf8] sm:$0xff]
        %v262 = vld [vmem:[%s2 + $0x100] sm:$0xff]
        %v263 = vld [vmem:[%s2 + $0x108] sm:$0xff]
        %v264 = vld [vmem:[%s2 + $0x110] sm:$0xff]
        %v265 = vld [vmem:[%s2 + $0x118] sm:$0xff]
        %v266 = vld [vmem:[%s2 + $0x120] sm:$0xff]
        %v267 = vld [vmem:[%s2 + $0x128] sm:$0xff]
        %v268 = vld [vmem:[%s2 + $0x130] sm:$0xff]
        %v269 = vld [vmem:[%s2 + $0x138] sm:$0xff]
        %v270 = vld [vmem:[%s2 + $0x140] sm:$0xff]
        %v271 = vld [vmem:[%s2 + $0x148] sm:$0xff]
        %v272 = vld [vmem:[%s2 + $0x150] sm:$0xff]
        %v273 = vld [vmem:[%s2 + $0x158] sm:$0xff]
        %v274 = vld [vmem:[%s2 + $0x160] sm:$0xff]
        %v275 = vld [vmem:[%s2 + $0x168] sm:$0xff]
        %v276 = vld [vmem:[%s2 + $0x170] sm:$0xff]
        %v277 = vld [vmem:[%s2 + $0x178] sm:$0xff]
        %v278 = vld [vmem:[%s2 + $0x180] sm:$0xff]
        %v279 = vld [vmem:[%s2 + $0x188] sm:$0xff]
        %v280 = vld [vmem:[%s2 + $0x190] sm:$0xff]
        %v281 = vld [vmem:[%s2 + $0x198] sm:$0xff]
        %v282 = vld [vmem:[%s2 + $0x1a0] sm:$0xff]
        %v283 = vld [vmem:[%s2 + $0x1a8] sm:$0xff]
        %v284 = vld [vmem:[%s2 + $0x1b0] sm:$0xff]
        %v285 = vld [vmem:[%s2 + $0x1b8] sm:$0xff]
        %v286 = vld [vmem:[%s2 + $0x1c0] sm:$0xff]
        %v287 = vld [vmem:[%s2 + $0x1c8] sm:$0xff]
        %v288 = vld [vmem:[%s2 + $0x1d0] sm:$0xff]
        %v289 = vld [vmem:[%s2 + $0x1d8] sm:$0xff]
        %v290 = vld [vmem:[%s2 + $0x1e0] sm:$0xff]
        %v291 = vld [vmem:[%s2 + $0x1e8] sm:$0xff]
        %v292 = vld [vmem:[%s2 + $0x1f0] sm:$0xff]
        %v293 = vld [vmem:[%s2 + $0x1f8] sm:$0xff]
        %v294 = vld [vmem:[%s2 + $0x200] sm:$0xff]
        %v295 = vld [vmem:[%s2 + $0x208] sm:$0xff]
        %v296 = vld [vmem:[%s2 + $0x210] sm:$0xff]
        %v297 = vld [vmem:[%s2 + $0x218] sm:$0xff]
        %v298 = vld [vmem:[%s2 + $0x220] sm:$0xff]
        %v299 = vld [vmem:[%s2 + $0x228] sm:$0xff]
        %v300 = vld [vmem:[%s2 + $0x230] sm:$0xff]
        %v301 = vld [vmem:[%s2 + $0x238] sm:$0xff]
        %v302 = vld [vmem:[%s2 + $0x240] sm:$0xff]
        %v303 = vld [vmem:[%s2 + $0x248] sm:$0xff]
        %v304 = vld [vmem:[%s2 + $0x250] sm:$0xff]
        %v305 = vld [vmem:[%s2 + $0x258] sm:$0xff]
        %v306 = vld [vmem:[%s2 + $0x260] sm:$0xff]
        %v307 = vld [vmem:[%s2 + $0x268] sm:$0xff]
        %v308 = vld [vmem:[%s2 + $0x270] sm:$0xff]
        %v309 = vld [vmem:[%s2 + $0x278] sm:$0xff]
        %v310 = vld [vmem:[%s2 + $0x280] sm:$0xff]
        %v311 = vld [vmem:[%s2 + $0x288] sm:$0xff]
        %v312 = vld [vmem:[%s2 + $0x290] sm:$0xff]
        %v313 = vld [vmem:[%s2 + $0x298] sm:$0xff]
        %v314 = vld [vmem:[%s2 + $0x2a0] sm:$0xff]
        %v315 = vld [vmem:[%s2 + $0x2a8] sm:$0xff]
        %v316 = vld [vmem:[%s2 + $0x2b0] sm:$0xff]
        %v317 = vld [vmem:[%s2 + $0x2b8] sm:$0xff]
        %v318 = vld [vmem:[%s2 + $0x2c0] sm:$0xff]
        %v319 = vld [vmem:[%s2 + $0x2c8] sm:$0xff]
        %v320 = vld [vmem:[%s2 + $0x2d0] sm:$0xff]
        %v321 = vld [vmem:[%s2 + $0x2d8] sm:$0xff]
        %v322 = vld [vmem:[%s2 + $0x2e0] sm:$0xff]
        %v323 = vld [vmem:[%s2 + $0x2e8] sm:$0xff]
        %v324 = vld [vmem:[%s2 + $0x2f0] sm:$0xff]
        %v325 = vld [vmem:[%s2 + $0x2f8] sm:$0xff]
        %v326 = vld [vmem:[%s2 + $0x300] sm:$0xff]
        %v327 = vld [vmem:[%s2 + $0x308] sm:$0xff]
        %v328 = vld [vmem:[%s2 + $0x310] sm:$0xff]
        %v329 = vld [vmem:[%s2 + $0x318] sm:$0xff]
        %v330 = vld [vmem:[%s2 + $0x320] sm:$0xff]
        %v331 = vld [vmem:[%s2 + $0x328] sm:$0xff]
        %v332 = vld [vmem:[%s2 + $0x330] sm:$0xff]
        %v333 = vld [vmem:[%s2 + $0x338] sm:$0xff]
        %v334 = vld [vmem:[%s2 + $0x340] sm:$0xff]
        %v335 = vld [vmem:[%s2 + $0x348] sm:$0xff]
        %v336 = vld [vmem:[%s2 + $0x350] sm:$0xff]
        %v337 = vld [vmem:[%s2 + $0x358] sm:$0xff]
        %v338 = vld [vmem:[%s2 + $0x360] sm:$0xff]
        %v339 = vld [vmem:[%s2 + $0x368] sm:$0xff]
        %v340 = vld [vmem:[%s2 + $0x370] sm:$0xff]
        %v341 = vld [vmem:[%s2 + $0x378] sm:$0xff]
        %v342 = vld [vmem:[%s2 + $0x380] sm:$0xff]
        %v343 = vld [vmem:[%s2 + $0x388] sm:$0xff]
        %v344 = vld [vmem:[%s2 + $0x390] sm:$0xff]
        %v345 = vld [vmem:[%s2 + $0x398] sm:$0xff]
        %v346 = vld [vmem:[%s2 + $0x3a0] sm:$0xff]
        %v347 = vld [vmem:[%s2 + $0x3a8] sm:$0xff]
        %v348 = vld [vmem:[%s2 + $0x3b0] sm:$0xff]
        %v349 = vld [vmem:[%s2 + $0x3b8] sm:$0xff]
        %v350 = vld [vmem:[%s2 + $0x3c0] sm:$0xff]
        %v351 = vld [vmem:[%s2 + $0x3c8] sm:$0xff]
        %v352 = vld [vmem:[%s2 + $0x3d0] sm:$0xff]
        %v353 = vld [vmem:[%s2 + $0x3d8] sm:$0xff]
        %v354 = vld [vmem:[%s2 + $0x3e0] sm:$0xff]
        %v355 = vld [vmem:[%s2 + $0x3e8] sm:$0xff]
        %v356 = vld [vmem:[%s2 + $0x3f0] sm:$0xff]
        %v357 = vld [vmem:[%s2 + $0x3f8] sm:$0xff]
        %v358 = vld [vmem:[%s2 + $0x400] sm:$0xff]
        %v359 = vld [vmem:[%s2 + $0x408] sm:$0xff]
        %v360 = vld [vmem:[%s2 + $0x410] sm:$0xff]
        %v361 = vld [vmem:[%s2 + $0x418] sm:$0xff]
        %v362 = vld [vmem:[%s2 + $0x420] sm:$0xff]
        %v363 = vld [vmem:[%s2 + $0x428] sm:$0xff]
        %v364 = vld [vmem:[%s2 + $0x430] sm:$0xff]
        %v365 = vld [vmem:[%s2 + $0x438] sm:$0xff]
        %v366 = vld [vmem:[%s2 + $0x440] sm:$0xff]
        %v367 = vld [vmem:[%s2 + $0x448] sm:$0xff]
        %v368 = vld [vmem:[%s2 + $0x450] sm:$0xff]
        %v369 = vld [vmem:[%s2 + $0x458] sm:$0xff]
        %v370 = vld [vmem:[%s2 + $0x460] sm:$0xff]
        %v371 = vld [vmem:[%s2 + $0x468] sm:$0xff]
        %v372 = vld [vmem:[%s2 + $0x470] sm:$0xff]
        %v373 = vld [vmem:[%s2 + $0x478] sm:$0xff]
        %v374 = vld [vmem:[%s2 + $0x480] sm:$0xff]
        %v375 = vld [vmem:[%s2 + $0x488] sm:$0xff]
        %v376 = vld [vmem:[%s2 + $0x490] sm:$0xff]
        %v377 = vld [vmem:[%s2 + $0x498] sm:$0xff]
        %v378 = vld [vmem:[%s2 + $0x4a0] sm:$0xff]
        %v379 = vld [vmem:[%s2 + $0x4a8] sm:$0xff]
        %v380 = vld [vmem:[%s2 + $0x4b0] sm:$0xff]
        %v381 = vld [vmem:[%s2 + $0x4b8] sm:$0xff]
        %v382 = vld [vmem:[%s2 + $0x4c0] sm:$0xff]
        %v383 = vld [vmem:[%s2 + $0x4c8] sm:$0xff]
        %v384 = vld [vmem:[%s2 + $0x4d0] sm:$0xff]
        %v385 = vld [vmem:[%s2 + $0x4d8] sm:$0xff]
        %v386 = vld [vmem:[%s2 + $0x4e0] sm:$0xff]
        %v387 = vld [vmem:[%s2 + $0x4e8] sm:$0xff]
        %v388 = vld [vmem:[%s2 + $0x4f0] sm:$0xff]
        %v389 = vld [vmem:[%s2 + $0x4f8] sm:$0xff]
        %v390 = vld [vmem:[%s2 + $0x500] sm:$0xff]
        %v391 = vld [vmem:[%s2 + $0x508] sm:$0xff]
        %v392 = vld [vmem:[%s2 + $0x510] sm:$0xff]
        %v393 = vld [vmem:[%s2 + $0x518] sm:$0xff]
        %v394 = vld [vmem:[%s2 + $0x520] sm:$0xff]
        %v395 = vld [vmem:[%s2 + $0x528] sm:$0xff]
        %v396 = vld [vmem:[%s2 + $0x530] sm:$0xff]
        %v397 = vld [vmem:[%s2 + $0x538] sm:$0xff]
        %v398 = vld [vmem:[%s2 + $0x540] sm:$0xff]
        %v399 = vld [vmem:[%s2 + $0x548] sm:$0xff]
        %v400 = vld [vmem:[%s2 + $0x550] sm:$0xff]
        %v401 = vld [vmem:[%s2 + $0x558] sm:$0xff]
        %v402 = vld [vmem:[%s2 + $0x560] sm:$0xff]
        %v403 = vld [vmem:[%s2 + $0x568] sm:$0xff]
        %v404 = vld [vmem:[%s2 + $0x570] sm:$0xff]
        %v405 = vld [vmem:[%s2 + $0x578] sm:$0xff]
        %v406 = vld [vmem:[%s2 + $0x580] sm:$0xff]
        %v407 = vld [vmem:[%s2 + $0x588] sm:$0xff]
        %v408 = vld [vmem:[%s2 + $0x590] sm:$0xff]
        %v409 = vld [vmem:[%s2 + $0x598] sm:$0xff]
        %v410 = vld [vmem:[%s2 + $0x5a0] sm:$0xff]
        %v411 = vld [vmem:[%s2 + $0x5a8] sm:$0xff]
        %v412 = vld [vmem:[%s2 + $0x5b0] sm:$0xff]
        %v413 = vld [vmem:[%s2 + $0x5b8] sm:$0xff]
        %v414 = vld [vmem:[%s2 + $0x5c0] sm:$0xff]
        %v415 = vld [vmem:[%s2 + $0x5c8] sm:$0xff]
        %v416 = vld [vmem:[%s2 + $0x5d0] sm:$0xff]
        %v417 = vld [vmem:[%s2 + $0x5d8] sm:$0xff]
        %v418 = vld [vmem:[%s2 + $0x5e0] sm:$0xff]
        %v419 = vld [vmem:[%s2 + $0x5e8] sm:$0xff]
        %v420 = vld [vmem:[%s2 + $0x5f0] sm:$0xff]
        %v421 = vld [vmem:[%s2 + $0x5f8] sm:$0xff]
        %v422 = vld [vmem:[%s2 + $0x600] sm:$0xff]
        %v423 = vld [vmem:[%s2 + $0x608] sm:$0xff]
        %v424 = vld [vmem:[%s2 + $0x610] sm:$0xff]
        %v425 = vld [vmem:[%s2 + $0x618] sm:$0xff]
        %v426 = vld [vmem:[%s2 + $0x620] sm:$0xff]
        %v427 = vld [vmem:[%s2 + $0x628] sm:$0xff]
        %v428 = vld [vmem:[%s2 + $0x630] sm:$0xff]
        %v429 = vld [vmem:[%s2 + $0x638] sm:$0xff]
        %v430 = vld [vmem:[%s2 + $0x640] sm:$0xff]
        %v431 = vld [vmem:[%s2 + $0x648] sm:$0xff]
        %v432 = vld [vmem:[%s2 + $0x650] sm:$0xff]
        %v433 = vld [vmem:[%s2 + $0x658] sm:$0xff]
        %v434 = vld [vmem:[%s2 + $0x660] sm:$0xff]
        %v435 = vld [vmem:[%s2 + $0x668] sm:$0xff]
        %v436 = vld [vmem:[%s2 + $0x670] sm:$0xff]
        %v437 = vld [vmem:[%s2 + $0x678] sm:$0xff]
        %v438 = vld [vmem:[%s2 + $0x680] sm:$0xff]
        %v439 = vld [vmem:[%s2 + $0x688] sm:$0xff]
        %v440 = vld [vmem:[%s2 + $0x690] sm:$0xff]
        %v441 = vld [vmem:[%s2 + $0x698] sm:$0xff]
        %v442 = vld [vmem:[%s2 + $0x6a0] sm:$0xff]
        %v443 = vld [vmem:[%s2 + $0x6a8] sm:$0xff]
        %v444 = vld [vmem:[%s2 + $0x6b0] sm:$0xff]
        %v445 = vld [vmem:[%s2 + $0x6b8] sm:$0xff]
        %v446 = vld [vmem:[%s2 + $0x6c0] sm:$0xff]
        %v447 = vld [vmem:[%s2 + $0x6c8] sm:$0xff]
        %v448 = vld [vmem:[%s2 + $0x6d0] sm:$0xff]
        %v449 = vld [vmem:[%s2 + $0x6d8] sm:$0xff]
        %v450 = vld [vmem:[%s2 + $0x6e0] sm:$0xff]
        %v451 = vld [vmem:[%s2 + $0x6e8] sm:$0xff]
        %v452 = vld [vmem:[%s2 + $0x6f0] sm:$0xff]
        %v453 = vld [vmem:[%s2 + $0x6f8] sm:$0xff]
        %v454 = vld [vmem:[%s2 + $0x700] sm:$0xff]
        %v455 = vld [vmem:[%s2 + $0x708] sm:$0xff]
        %v456 = vld [vmem:[%s2 + $0x710] sm:$0xff]
        %v457 = vld [vmem:[%s2 + $0x718] sm:$0xff]
        %v458 = vld [vmem:[%s2 + $0x720] sm:$0xff]
        %v459 = vld [vmem:[%s2 + $0x728] sm:$0xff]
        %v460 = vld [vmem:[%s2 + $0x730] sm:$0xff]
        %v461 = vld [vmem:[%s2 + $0x738] sm:$0xff]
        %v462 = vld [vmem:[%s2 + $0x740] sm:$0xff]
        %v463 = vld [vmem:[%s2 + $0x748] sm:$0xff]
        %v464 = vld [vmem:[%s2 + $0x750] sm:$0xff]
        %v465 = vld [vmem:[%s2 + $0x758] sm:$0xff]
        %v466 = vld [vmem:[%s2 + $0x760] sm:$0xff]
        %v467 = vld [vmem:[%s2 + $0x768] sm:$0xff]
        %v468 = vld [vmem:[%s2 + $0x770] sm:$0xff]
        %v469 = vld [vmem:[%s2 + $0x778] sm:$0xff]
        %v470 = vld [vmem:[%s2 + $0x780] sm:$0xff]
        %v471 = vld [vmem:[%s2 + $0x788] sm:$0xff]
        %v472 = vld [vmem:[%s2 + $0x790] sm:$0xff]
        %v473 = vld [vmem:[%s2 + $0x798] sm:$0xff]
        %v474 = vld [vmem:[%s2 + $0x7a0] sm:$0xff]
        %v475 = vld [vmem:[%s2 + $0x7a8] sm:$0xff]
        %v476 = vld [vmem:[%s2 + $0x7b0] sm:$0xff]
        %v477 = vld [vmem:[%s2 + $0x7b8] sm:$0xff]
        %v478 = vld [vmem:[%s2 + $0x7c0] sm:$0xff]
        %v479 = vld [vmem:[%s2 + $0x7c8] sm:$0xff]
        %v480 = vld [vmem:[%s2 + $0x7d0] sm:$0xff]
        %v481 = vld [vmem:[%s2 + $0x7d8] sm:$0xff]
        %v482 = vld [vmem:[%s2 + $0x7e0] sm:$0xff]
        %v483 = vld [vmem:[%s2 + $0x7e8] sm:$0xff]
        %v484 = vld [vmem:[%s2 + $0x7f0] sm:$0xff]
        %v485 = vld [vmem:[%s2 + $0x7f8] sm:$0xff]
        %v486 = vld [vmem:[%s2 + $0x800] sm:$0xff]
        %v487 = vld [vmem:[%s2 + $0x808] sm:$0xff]
        %v488 = vld [vmem:[%s2 + $0x810] sm:$0xff]
        %v489 = vld [vmem:[%s2 + $0x818] sm:$0xff]
        %v490 = vld [vmem:[%s2 + $0x820] sm:$0xff]
        %v491 = vld [vmem:[%s2 + $0x828] sm:$0xff]
        %v492 = vld [vmem:[%s2 + $0x830] sm:$0xff]
        %v493 = vld [vmem:[%s2 + $0x838] sm:$0xff]
        %v494 = vld [vmem:[%s2 + $0x840] sm:$0xff]
        %v495 = vld [vmem:[%s2 + $0x848] sm:$0xff]
        %v496 = vld [vmem:[%s2 + $0x850] sm:$0xff]
        %v497 = vld [vmem:[%s2 + $0x858] sm:$0xff]
        %v498 = vld [vmem:[%s2 + $0x860] sm:$0xff]
        %v499 = vld [vmem:[%s2 + $0x868] sm:$0xff]
        %v500 = vld [vmem:[%s2 + $0x870] sm:$0xff]
        %v501 = vld [vmem:[%s2 + $0x878] sm:$0xff]
        %v502 = vld [vmem:[%s2 + $0x880] sm:$0xff]
        %v503 = vld [vmem:[%s2 + $0x888] sm:$0xff]
        %v504 = vld [vmem:[%s2 + $0x890] sm:$0xff]
        %v505 = vld [vmem:[%s2 + $0x898] sm:$0xff]
        %v506 = vld [vmem:[%s2 + $0x8a0] sm:$0xff]
        %v507 = vld [vmem:[%s2 + $0x8a8] sm:$0xff]
        %v508 = vld [vmem:[%s2 + $0x8b0] sm:$0xff]
        %v509 = vld [vmem:[%s2 + $0x8b8] sm:$0xff]
        %v510 = vld [vmem:[%s2 + $0x8c0] sm:$0xff]
        %v511 = vld [vmem:[%s2 + $0x8c8] sm:$0xff]
        %v512 = vld [vmem:[%s2 + $0x8d0] sm:$0xff]
        %v513 = vld [vmem:[%s2 + $0x8d8] sm:$0xff]
        %v514 = vld [vmem:[%s2 + $0x8e0] sm:$0xff]
        %v515 = vld [vmem:[%s2 + $0x8e8] sm:$0xff]
        %v516 = vld [vmem:[%s2 + $0x8f0] sm:$0xff]
        %v517 = vld [vmem:[%s2 + $0x8f8] sm:$0xff]
        %v518 = vld [vmem:[%s3] sm:$0xff]
        %v519 = vld [vmem:[%s3 + $0x8] sm:$0xf]
        %v520 = vld [vmem:[%s3 + $0xc] sm:$0xff]
        %v521 = vld [vmem:[%s3 + $0x14] sm:$0xf]
        %v522 = vld [vmem:[%s3 + $0x18] sm:$0xff]
        %v523 = vld [vmem:[%s3 + $0x20] sm:$0xf]
        %v524 = vld [vmem:[%s3 + $0x24] sm:$0xff]
        %v525 = vld [vmem:[%s3 + $0x2c] sm:$0xf]
        %v526 = vld [vmem:[%s3 + $0x30] sm:$0xff]
        %v527 = vld [vmem:[%s3 + $0x38] sm:$0xf]
        %v528 = vld [vmem:[%s3 + $0x3c] sm:$0xff]
        %v529 = vld [vmem:[%s3 + $0x44] sm:$0xf]
        %v530 = vld [vmem:[%s3 + $0x48] sm:$0xff]
        %v531 = vld [vmem:[%s3 + $0x50] sm:$0xf]
        %v532 = vld [vmem:[%s3 + $0x54] sm:$0xff]
        %v533 = vld [vmem:[%s3 + $0x5c] sm:$0xf]
        %v534 = vld [vmem:[%s3 + $0x60] sm:$0xff]
        %v535 = vld [vmem:[%s3 + $0x68] sm:$0xf]
        %v536 = vld [vmem:[%s3 + $0x6c] sm:$0xff]
        %v537 = vld [vmem:[%s3 + $0x74] sm:$0xf]
        %v538 = vld [vmem:[%s3 + $0x78] sm:$0xff]
        %v539 = vld [vmem:[%s3 + $0x80] sm:$0xf]
        %v540 = vld [vmem:[%s3 + $0x84] sm:$0xff]
        %v541 = vld [vmem:[%s3 + $0x8c] sm:$0xf]
        %v542 = vld [vmem:[%s3 + $0x90] sm:$0xff]
        %v543 = vld [vmem:[%s3 + $0x98] sm:$0xf]
        %v544 = vld [vmem:[%s3 + $0x9c] sm:$0xff]
        %v545 = vld [vmem:[%s3 + $0xa4] sm:$0xf]
        %v546 = vld [vmem:[%s3 + $0xa8] sm:$0xff]
        %v547 = vld [vmem:[%s3 + $0xb0] sm:$0xf]
        %v548 = vld [vmem:[%s3 + $0xb4] sm:$0xff]
        %v549 = vld [vmem:[%s3 + $0xbc] sm:$0xf]
        %v550 = vld [vmem:[%s3 + $0xc0] sm:$0xff]
        %v551 = vld [vmem:[%s3 + $0xc8] sm:$0xf]
        %v552 = vld [vmem:[%s3 + $0xcc] sm:$0xff]
        %v553 = vld [vmem:[%s3 + $0xd4] sm:$0xf]
        %v554 = vld [vmem:[%s3 + $0xd8] sm:$0xff]
        %v555 = vld [vmem:[%s3 + $0xe0] sm:$0xf]
        %v556 = vld [vmem:[%s3 + $0xe4] sm:$0xff]
        %v557 = vld [vmem:[%s3 + $0xec] sm:$0xf]
        %v558 = vld [vmem:[%s3 + $0xf0] sm:$0xff]
        %v559 = vld [vmem:[%s3 + $0xf8] sm:$0xf]
        %v560 = vld [vmem:[%s3 + $0xfc] sm:$0xff]
        %v561 = vld [vmem:[%s3 + $0x104] sm:$0xf]
        %v562 = vld [vmem:[%s3 + $0x108] sm:$0xff]
        %v563 = vld [vmem:[%s3 + $0x110] sm:$0xf]
        %v564 = vld [vmem:[%s3 + $0x114] sm:$0xff]
        %v565 = vld [vmem:[%s3 + $0x11c] sm:$0xf]
        %v566 = vld [vmem:[%s3 + $0x120] sm:$0xff]
        %v567 = vld [vmem:[%s3 + $0x128] sm:$0xf]
        %v568 = vld [vmem:[%s3 + $0x12c] sm:$0xff]
        %v569 = vld [vmem:[%s3 + $0x134] sm:$0xf]
        %v570 = vld [vmem:[%s3 + $0x138] sm:$0xff]
        %v571 = vld [vmem:[%s3 + $0x140] sm:$0xf]
        %v572 = vld [vmem:[%s3 + $0x144] sm:$0xff]
        %v573 = vld [vmem:[%s3 + $0x14c] sm:$0xf]
        %v574 = vld [vmem:[%s3 + $0x150] sm:$0xff]
        %v575 = vld [vmem:[%s3 + $0x158] sm:$0xf]
        %v576 = vld [vmem:[%s3 + $0x15c] sm:$0xff]
        %v577 = vld [vmem:[%s3 + $0x164] sm:$0xf]
        %v578 = vld [vmem:[%s3 + $0x168] sm:$0xff]
        %v579 = vld [vmem:[%s3 + $0x170] sm:$0xf]
        %v580 = vld [vmem:[%s3 + $0x174] sm:$0xff]
        %v581 = vld [vmem:[%s3 + $0x17c] sm:$0xf]
        %v582 = vld [vmem:[%s3 + $0x180] sm:$0xff]
        %v583 = vld [vmem:[%s3 + $0x188] sm:$0xf]
        %v584 = vld [vmem:[%s3 + $0x18c] sm:$0xff]
        %v585 = vld [vmem:[%s3 + $0x194] sm:$0xf]
        %v586 = vld [vmem:[%s3 + $0x198] sm:$0xff]
        %v587 = vld [vmem:[%s3 + $0x1a0] sm:$0xf]
        %v588 = vld [vmem:[%s3 + $0x1a4] sm:$0xff]
        %v589 = vld [vmem:[%s3 + $0x1ac] sm:$0xf]
        %v590 = vld [vmem:[%s3 + $0x1b0] sm:$0xff]
        %v591 = vld [vmem:[%s3 + $0x1b8] sm:$0xf]
        %v592 = vld [vmem:[%s3 + $0x1bc] sm:$0xff]
        %v593 = vld [vmem:[%s3 + $0x1c4] sm:$0xf]
        %v594 = vld [vmem:[%s3 + $0x1c8] sm:$0xff]
        %v595 = vld [vmem:[%s3 + $0x1d0] sm:$0xf]
        %v596 = vld [vmem:[%s3 + $0x1d4] sm:$0xff]
        %v597 = vld [vmem:[%s3 + $0x1dc] sm:$0xf]
        %v598 = vld [vmem:[%s3 + $0x1e0] sm:$0xff]
        %v599 = vld [vmem:[%s3 + $0x1e8] sm:$0xf]
        %v600 = vld [vmem:[%s3 + $0x1ec] sm:$0xff]
        %v601 = vld [vmem:[%s3 + $0x1f4] sm:$0xf]
        %v602 = vld [vmem:[%s3 + $0x1f8] sm:$0xff]
        %v603 = vld [vmem:[%s3 + $0x200] sm:$0xf]
        %v604 = vld [vmem:[%s3 + $0x204] sm:$0xff]
        %v605 = vld [vmem:[%s3 + $0x20c] sm:$0xf]
        %v606 = vld [vmem:[%s3 + $0x210] sm:$0xff]
        %v607 = vld [vmem:[%s3 + $0x218] sm:$0xf]
        %v608 = vld [vmem:[%s3 + $0x21c] sm:$0xff]
        %v609 = vld [vmem:[%s3 + $0x224] sm:$0xf]
        %v610 = vld [vmem:[%s3 + $0x228] sm:$0xff]
        %v611 = vld [vmem:[%s3 + $0x230] sm:$0xf]
        %v612 = vld [vmem:[%s3 + $0x234] sm:$0xff]
        %v613 = vld [vmem:[%s3 + $0x23c] sm:$0xf]
        %v614 = vld [vmem:[%s4] sm:$0x7]
        %v615 = vld [vmem:[%s0] sm:$0xff]
        %v616 = vld [vmem:[%s0 + $0x8] sm:$0xff]
        %v617 = vld [vmem:[%s0 + $0x10] sm:$0xff]
        %v618 = vld [vmem:[%s0 + $0x18] sm:$0xff]
        %v619 = vld [vmem:[%s0 + $0x20] sm:$0xff]
        %v620 = vld [vmem:[%s0 + $0x28] sm:$0xff]
        %v621 = vld [vmem:[%s0 + $0x30] sm:$0xff]
        %v622 = vld [vmem:[%s0 + $0x38] sm:$0xff]
        %v623 = vld [vmem:[%s0 + $0x40] sm:$0xff]
        %v624 = vld [vmem:[%s0 + $0x48] sm:$0xff]
        %v625 = vld [vmem:[%s0 + $0x50] sm:$0xff]
        %v626 = vld [vmem:[%s0 + $0x58] sm:$0xff]
        %v627 = vld [vmem:[%s0 + $0x60] sm:$0xff]
        %v628 = vld [vmem:[%s0 + $0x68] sm:$0xff]
        %v629 = vld [vmem:[%s0 + $0x70] sm:$0xff]
        %v630 = vld [vmem:[%s0 + $0x78] sm:$0xff]
        %v631 = vld [vmem:[%s226] sm:$0xff]
        %v632 = vld [vmem:[%s226 + $0x8] sm:$0xf]
        %v633 = vld [vmem:[%s226 + $0xc] sm:$0xff]
        %v634 = vld [vmem:[%s226 + $0x14] sm:$0xf]
        %v635 = vld [vmem:[%s226 + $0x18] sm:$0xff]
        %v636 = vld [vmem:[%s226 + $0x20] sm:$0xf]
        %v637 = vld [vmem:[%s226 + $0x24] sm:$0xff]
        %v638 = vld [vmem:[%s226 + $0x2c] sm:$0xf]
        %v639 = vld [vmem:[%s226 + $0x30] sm:$0xff]
        %v640 = vld [vmem:[%s226 + $0x38] sm:$0xf]
        %v641 = vld [vmem:[%s226 + $0x3c] sm:$0xff]
        %v642 = vld [vmem:[%s226 + $0x44] sm:$0xf]
        %v643 = vld [vmem:[%s226 + $0x48] sm:$0xff]
        %v644 = vld [vmem:[%s226 + $0x50] sm:$0xf]
        %v645 = vld [vmem:[%s226 + $0x54] sm:$0xff]
        %v646 = vld [vmem:[%s226 + $0x5c] sm:$0xf]
        %v647 = vld [vmem:[%s226 + $0x60] sm:$0xff]
        %v648 = vld [vmem:[%s226 + $0x68] sm:$0xf]
        %v649 = vld [vmem:[%s226 + $0x6c] sm:$0xff]
        %v650 = vld [vmem:[%s226 + $0x74] sm:$0xf]
        %v651 = vld [vmem:[%s226 + $0x78] sm:$0xff]
        %v652 = vld [vmem:[%s226 + $0x80] sm:$0xf]
        %v653 = vld [vmem:[%s226 + $0x84] sm:$0xff]
        %v654 = vld [vmem:[%s226 + $0x8c] sm:$0xf]
        %v655 = vld [vmem:[%s226 + $0x90] sm:$0xff]
        %v656 = vld [vmem:[%s226 + $0x98] sm:$0xf]
        %v657 = vld [vmem:[%s226 + $0x9c] sm:$0xff]
        %v658 = vld [vmem:[%s226 + $0xa4] sm:$0xf]
        %v659 = vld [vmem:[%s226 + $0xa8] sm:$0xff]
        %v660 = vld [vmem:[%s226 + $0xb0] sm:$0xf]
        %v661 = vld [vmem:[%s226 + $0xb4] sm:$0xff]
        %v662 = vld [vmem:[%s226 + $0xbc] sm:$0xf]
        %v695 = vunpack.c.l.b16 %v631
        %v696 = vunpack.c.h.b16 %v631
        %v697 = vunpack.c.l.b16 %v632
        %v698 = vunpack.c.l.b16 %v633
        %v699 = vunpack.c.h.b16 %v633
        %v700 = vunpack.c.l.b16 %v634
        %v701 = vunpack.c.l.b16 %v635
        %v702 = vunpack.c.h.b16 %v635
        %v703 = vunpack.c.l.b16 %v636
        %v704 = vunpack.c.l.b16 %v637
        %v705 = vunpack.c.h.b16 %v637
        %v706 = vunpack.c.l.b16 %v638
        %v707 = vunpack.c.l.b16 %v639
        %v708 = vunpack.c.h.b16 %v639
        %v709 = vunpack.c.l.b16 %v640
        %v710 = vunpack.c.l.b16 %v641
        %v711 = vunpack.c.h.b16 %v641
        %v712 = vunpack.c.l.b16 %v642
        %v713 = vunpack.c.l.b16 %v643
        %v714 = vunpack.c.h.b16 %v643
        %v715 = vunpack.c.l.b16 %v644
        %v716 = vunpack.c.l.b16 %v645
        %v717 = vunpack.c.h.b16 %v645
        %v718 = vunpack.c.l.b16 %v646
        %v719 = vunpack.c.l.b16 %v647
        %v720 = vunpack.c.h.b16 %v647
        %v721 = vunpack.c.l.b16 %v648
        %v722 = vunpack.c.l.b16 %v649
        %v723 = vunpack.c.h.b16 %v649
        %v724 = vunpack.c.l.b16 %v650
        %v725 = vunpack.c.l.b16 %v651
        %v726 = vunpack.c.h.b16 %v651
        %v727 = vunpack.c.l.b16 %v652
        %v728 = vunpack.c.l.b16 %v653
        %v729 = vunpack.c.h.b16 %v653
        %v730 = vunpack.c.l.b16 %v654
        %v731 = vunpack.c.l.b16 %v655
        %v732 = vunpack.c.h.b16 %v655
        %v733 = vunpack.c.l.b16 %v656
        %v734 = vunpack.c.l.b16 %v657
        %v735 = vunpack.c.h.b16 %v657
        %v736 = vunpack.c.l.b16 %v658
        %v737 = vunpack.c.l.b16 %v659
        %v738 = vunpack.c.h.b16 %v659
        %v739 = vunpack.c.l.b16 %v660
        %v740 = vunpack.c.l.b16 %v661
        %v741 = vunpack.c.h.b16 %v661
        %v742 = vunpack.c.l.b16 %v662
        %v743 = vpack.c.b16 %v698, %v695
        %v744 = vpack.c.b16 %v699, %v696
        %v745 = vpack.c.b16 %v700, %v697
        %v746 = vpack.c.b16 %v704, %v701
        %v747 = vpack.c.b16 %v705, %v702
        %v748 = vpack.c.b16 %v706, %v703
        %v749 = vpack.c.b16 %v710, %v707
        %v750 = vpack.c.b16 %v711, %v708
        %v751 = vpack.c.b16 %v712, %v709
        %v752 = vpack.c.b16 %v716, %v713
        %v753 = vpack.c.b16 %v717, %v714
        %v754 = vpack.c.b16 %v718, %v715
        %v755 = vpack.c.b16 %v722, %v719
        %v756 = vpack.c.b16 %v723, %v720
        %v757 = vpack.c.b16 %v724, %v721
        %v758 = vpack.c.b16 %v728, %v725
        %v759 = vpack.c.b16 %v729, %v726
        %v760 = vpack.c.b16 %v730, %v727
        %v761 = vpack.c.b16 %v734, %v731
        %v762 = vpack.c.b16 %v735, %v732
        %v763 = vpack.c.b16 %v736, %v733
        %v764 = vpack.c.b16 %v740, %v737
        %v765 = vpack.c.b16 %v741, %v738
        %v766 = vpack.c.b16 %v742, %v739
        %v839 = vunpack.c.l.b16 %v230
        %v840 = vunpack.c.h.b16 %v230
        %v841 = vunpack.c.l.b16 %v231
        %v842 = vunpack.c.h.b16 %v231
        %v843 = vunpack.c.l.b16 %v232
        %v844 = vunpack.c.h.b16 %v232
        %v845 = vunpack.c.l.b16 %v233
        %v846 = vunpack.c.h.b16 %v233
        %v847 = vunpack.c.l.b16 %v234
        %v848 = vunpack.c.h.b16 %v234
        %v849 = vunpack.c.l.b16 %v235
        %v850 = vunpack.c.h.b16 %v235
        %v851 = vunpack.c.l.b16 %v236
        %v852 = vunpack.c.h.b16 %v236
        %v853 = vunpack.c.l.b16 %v237
        %v854 = vunpack.c.h.b16 %v237
        %v855 = vunpack.c.l.b16 %v238
        %v856 = vunpack.c.h.b16 %v238
        %v857 = vunpack.c.l.b16 %v239
        %v858 = vunpack.c.h.b16 %v239
        %v859 = vunpack.c.l.b16 %v240
        %v860 = vunpack.c.h.b16 %v240
        %v861 = vunpack.c.l.b16 %v241
        %v862 = vunpack.c.h.b16 %v241
        %v863 = vunpack.c.l.b16 %v242
        %v864 = vunpack.c.h.b16 %v242
        %v865 = vunpack.c.l.b16 %v243
        %v866 = vunpack.c.h.b16 %v243
        %v867 = vunpack.c.l.b16 %v244
        %v868 = vunpack.c.h.b16 %v244
        %v869 = vunpack.c.l.b16 %v245
        %v870 = vunpack.c.h.b16 %v245
        %v871 = vunpack.c.l.b16 %v246
        %v872 = vunpack.c.h.b16 %v246
        %v873 = vunpack.c.l.b16 %v247
        %v874 = vunpack.c.h.b16 %v247
        %v875 = vunpack.c.l.b16 %v248
        %v876 = vunpack.c.h.b16 %v248
        %v877 = vunpack.c.l.b16 %v249
        %v878 = vunpack.c.h.b16 %v249
        %v879 = vunpack.c.l.b16 %v250
        %v880 = vunpack.c.h.b16 %v250
        %v881 = vunpack.c.l.b16 %v251
        %v882 = vunpack.c.h.b16 %v251
        %v883 = vunpack.c.l.b16 %v252
        %v884 = vunpack.c.h.b16 %v252
        %v885 = vunpack.c.l.b16 %v253
        %v886 = vunpack.c.h.b16 %v253
        %v887 = vunpack.c.l.b16 %v254
        %v888 = vunpack.c.h.b16 %v254
        %v889 = vunpack.c.l.b16 %v255
        %v890 = vunpack.c.h.b16 %v255
        %v891 = vunpack.c.l.b16 %v256
        %v892 = vunpack.c.h.b16 %v256
        %v893 = vunpack.c.l.b16 %v257
        %v894 = vunpack.c.h.b16 %v257
        %v895 = vunpack.c.l.b16 %v258
        %v896 = vunpack.c.h.b16 %v258
        %v897 = vunpack.c.l.b16 %v259
        %v898 = vunpack.c.h.b16 %v259
        %v899 = vunpack.c.l.b16 %v260
        %v900 = vunpack.c.h.b16 %v260
        %v901 = vunpack.c.l.b16 %v261
        %v902 = vunpack.c.h.b16 %v261
        %v903 = vunpack.c.l.b16 %v262
        %v904 = vunpack.c.h.b16 %v262
        %v905 = vunpack.c.l.b16 %v263
        %v906 = vunpack.c.h.b16 %v263
        %v907 = vunpack.c.l.b16 %v264
        %v908 = vunpack.c.h.b16 %v264
        %v909 = vunpack.c.l.b16 %v265
        %v910 = vunpack.c.h.b16 %v265
        %v911 = vunpack.c.l.b16 %v266
        %v912 = vunpack.c.h.b16 %v266
        %v913 = vunpack.c.l.b16 %v267
        %v914 = vunpack.c.h.b16 %v267
        %v915 = vunpack.c.l.b16 %v268
        %v916 = vunpack.c.h.b16 %v268
        %v917 = vunpack.c.l.b16 %v269
        %v918 = vunpack.c.h.b16 %v269
        %v919 = vunpack.c.l.b16 %v270
        %v920 = vunpack.c.h.b16 %v270
        %v921 = vunpack.c.l.b16 %v271
        %v922 = vunpack.c.h.b16 %v271
        %v923 = vunpack.c.l.b16 %v272
        %v924 = vunpack.c.h.b16 %v272
        %v925 = vunpack.c.l.b16 %v273
        %v926 = vunpack.c.h.b16 %v273
        %v927 = vunpack.c.l.b16 %v274
        %v928 = vunpack.c.h.b16 %v274
        %v929 = vunpack.c.l.b16 %v275
        %v930 = vunpack.c.h.b16 %v275
        %v931 = vunpack.c.l.b16 %v276
        %v932 = vunpack.c.h.b16 %v276
        %v933 = vunpack.c.l.b16 %v277
        %v934 = vunpack.c.h.b16 %v277
        %v935 = vpack.c.b16 %v841, %v839
        %v936 = vpack.c.b16 %v842, %v840
        %v937 = vpack.c.b16 %v845, %v843
        %v938 = vpack.c.b16 %v846, %v844
        %v939 = vpack.c.b16 %v849, %v847
        %v940 = vpack.c.b16 %v850, %v848
        %v941 = vpack.c.b16 %v853, %v851
        %v942 = vpack.c.b16 %v854, %v852
        %v943 = vpack.c.b16 %v857, %v855
        %v944 = vpack.c.b16 %v858, %v856
        %v945 = vpack.c.b16 %v861, %v859
        %v946 = vpack.c.b16 %v862, %v860
        %v947 = vpack.c.b16 %v865, %v863
        %v948 = vpack.c.b16 %v866, %v864
        %v949 = vpack.c.b16 %v869, %v867
        %v950 = vpack.c.b16 %v870, %v868
        %v951 = vpack.c.b16 %v873, %v871
        %v952 = vpack.c.b16 %v874, %v872
        %v953 = vpack.c.b16 %v877, %v875
        %v954 = vpack.c.b16 %v878, %v876
        %v955 = vpack.c.b16 %v881, %v879
        %v956 = vpack.c.b16 %v882, %v880
        %v957 = vpack.c.b16 %v885, %v883
        %v958 = vpack.c.b16 %v886, %v884
        %v959 = vpack.c.b16 %v889, %v887
        %v960 = vpack.c.b16 %v890, %v888
        %v961 = vpack.c.b16 %v893, %v891
        %v962 = vpack.c.b16 %v894, %v892
        %v963 = vpack.c.b16 %v897, %v895
        %v964 = vpack.c.b16 %v898, %v896
        %v965 = vpack.c.b16 %v901, %v899
        %v966 = vpack.c.b16 %v902, %v900
        %v967 = vpack.c.b16 %v905, %v903
        %v968 = vpack.c.b16 %v906, %v904
        %v969 = vpack.c.b16 %v909, %v907
        %v970 = vpack.c.b16 %v910, %v908
        %v971 = vpack.c.b16 %v913, %v911
        %v972 = vpack.c.b16 %v914, %v912
        %v973 = vpack.c.b16 %v917, %v915
        %v974 = vpack.c.b16 %v918, %v916
        %v975 = vpack.c.b16 %v921, %v919
        %v976 = vpack.c.b16 %v922, %v920
        %v977 = vpack.c.b16 %v925, %v923
        %v978 = vpack.c.b16 %v926, %v924
        %v979 = vpack.c.b16 %v929, %v927
        %v980 = vpack.c.b16 %v930, %v928
        %v981 = vpack.c.b16 %v933, %v931
        %v982 = vpack.c.b16 %v934, %v932
        %1031 = vmatprep.subr.bf16.mxu0 %v936
        %1032 = vmatpush1.bf16.msra.mxu0 %v935
        %1033 = vmatprep.subr.bf16.mxu0 %v938
        %1034 = vmatpush1.bf16.msra.mxu0 %v937
        %1035 = vmatprep.subr.bf16.mxu0 %v940
        %1036 = vmatpush1.bf16.msra.mxu0 %v939
        %1037 = vmatprep.subr.bf16.mxu0 %v942
        %1038 = vmatpush1.bf16.msra.mxu0 %v941
        %1039 = vmatprep.subr.bf16.mxu0 %v944
        %1040 = vmatpush1.bf16.msra.mxu0 %v943
        %1041 = vmatprep.subr.bf16.mxu0 %v946
        %1042 = vmatpush1.bf16.msra.mxu0 %v945
        %1043 = vmatprep.subr.bf16.mxu0 %v948
        %1044 = vmatpush1.bf16.msra.mxu0 %v947
        %1045 = vmatprep.subr.bf16.mxu0 %v950
        %1046 = vmatpush1.bf16.msra.mxu0 %v949
        %1047 = vmatprep.subr.bf16.mxu0 %v952
        %1048 = vmatpush1.bf16.msra.mxu0 %v951
        %1049 = vmatprep.subr.bf16.mxu0 %v954
        %1050 = vmatpush1.bf16.msra.mxu0 %v953
        %1051 = vmatprep.subr.bf16.mxu0 %v956
        %1052 = vmatpush1.bf16.msra.mxu0 %v955
        %1053 = vmatprep.subr.bf16.mxu0 %v958
        %1054 = vmatpush1.bf16.msra.mxu0 %v957
        %1055 = vmatprep.subr.bf16.mxu0 %v960
        %1056 = vmatpush1.bf16.msra.mxu0 %v959
        %1057 = vmatprep.subr.bf16.mxu0 %v962
        %1058 = vmatpush1.bf16.msra.mxu0 %v961
        %1059 = vmatprep.subr.bf16.mxu0 %v964
        %1060 = vmatpush1.bf16.msra.mxu0 %v963
        %1061 = vmatprep.subr.bf16.mxu0 %v966
        %1062 = vmatpush1.bf16.msra.mxu0 %v965
        %1063 = vmatprep.mubr.bf16.mxu0 %v744
        %1064 = vmatmul.mubr.bf16.gmra.mrb[0].mxu0 %v743
        %v1065 = vpop.f32.mrb[0].mxu0
        %v1066 = vadd.f32 0.0, %v1065
        %v1067 = vpop.f32.mrb[0].mxu0
        %v1068 = vadd.f32 0.0, %v1067
        %v1069 = vpop.f32.mrb[0].mxu0
        %v1070 = vadd.f32 0.0, %v1069
        %v1071 = vpop.f32.mrb[0].mxu0
        %v1072 = vadd.f32 0.0, %v1071
        %1073 = vmatprep.mubr.bf16.mxu0 %v747
        %1074 = vmatmul.mubr.bf16.gmra.mrb[0].mxu0 %v746
        %v1075 = vpop.f32.mrb[0].mxu0
        %v1076 = vadd.f32 0.0, %v1075
        %v1077 = vpop.f32.mrb[0].mxu0
        %v1078 = vadd.f32 0.0, %v1077
        %v1079 = vpop.f32.mrb[0].mxu0
        %v1080 = vadd.f32 0.0, %v1079
        %v1081 = vpop.f32.mrb[0].mxu0
        %v1082 = vadd.f32 0.0, %v1081
        %1083 = vmatprep.mubr.bf16.mxu0 %v750
        %1084 = vmatmul.mubr.bf16.gmra.mrb[0].mxu0 %v749
        %v1085 = vpop.f32.mrb[0].mxu0
        %v1086 = vadd.f32 0.0, %v1085
        %v1087 = vpop.f32.mrb[0].mxu0
        %v1088 = vadd.f32 0.0, %v1087
        %v1089 = vpop.f32.mrb[0].mxu0
        %v1090 = vadd.f32 0.0, %v1089
        %v1091 = vpop.f32.mrb[0].mxu0
        %v1092 = vadd.f32 0.0, %v1091
        %1093 = vmatprep.mubr.bf16.mxu0 %v753
        %1094 = vmatmul.mubr.bf16.gmra.mrb[0].mxu0 %v752
        %v1095 = vpop.f32.mrb[0].mxu0
        %v1096 = vadd.f32 0.0, %v1095
        %v1097 = vpop.f32.mrb[0].mxu0
        %v1098 = vadd.f32 0.0, %v1097
        %v1099 = vpop.f32.mrb[0].mxu0
        %v1100 = vadd.f32 0.0, %v1099
        %v1101 = vpop.f32.mrb[0].mxu0
        %v1102 = vadd.f32 0.0, %v1101
        %1103 = vmatprep.mubr.bf16.mxu0 %v756
        %1104 = vmatmul.mubr.bf16.gmra.mrb[0].mxu0 %v755
        %v1105 = vpop.f32.mrb[0].mxu0
        %v1106 = vadd.f32 0.0, %v1105
        %v1107 = vpop.f32.mrb[0].mxu0
        %v1108 = vadd.f32 0.0, %v1107
        %v1109 = vpop.f32.mrb[0].mxu0
        %v1110 = vadd.f32 0.0, %v1109
        %v1111 = vpop.f32.mrb[0].mxu0
        %v1112 = vadd.f32 0.0, %v1111
        %1113 = vmatprep.mubr.bf16.mxu0 %v759
        %1114 = vmatmul.mubr.bf16.gmra.mrb[0].mxu0 %v758
        %v1115 = vpop.f32.mrb[0].mxu0
        %v1116 = vadd.f32 0.0, %v1115
        %v1117 = vpop.f32.mrb[0].mxu0
        %v1118 = vadd.f32 0.0, %v1117
        %v1119 = vpop.f32.mrb[0].mxu0
        %v1120 = vadd.f32 0.0, %v1119
        %v1121 = vpop.f32.mrb[0].mxu0
        %v1122 = vadd.f32 0.0, %v1121
        %1123 = vmatprep.mubr.bf16.mxu0 %v762
        %1124 = vmatmul.mubr.bf16.gmra.mrb[0].mxu0 %v761
        %v1125 = vpop.f32.mrb[0].mxu0
        %v1126 = vadd.f32 0.0, %v1125
        %v1127 = vpop.f32.mrb[0].mxu0
        %v1128 = vadd.f32 0.0, %v1127
        %v1129 = vpop.f32.mrb[0].mxu0
        %v1130 = vadd.f32 0.0, %v1129
        %v1131 = vpop.f32.mrb[0].mxu0
        %v1132 = vadd.f32 0.0, %v1131
        %1133 = vmatprep.mubr.bf16.mxu0 %v765
        %1134 = vmatmul.mubr.bf16.gmra.mrb[0].mxu0 %v764
        %v1135 = vpop.f32.mrb[0].mxu0
        %v1136 = vadd.f32 0.0, %v1135
        %v1137 = vpop.f32.mrb[0].mxu0
        %v1138 = vadd.f32 0.0, %v1137
        %v1139 = vpop.f32.mrb[0].mxu0
        %v1140 = vadd.f32 0.0, %v1139
        %v1141 = vpop.f32.mrb[0].mxu0
        %v1142 = vadd.f32 0.0, %v1141
        %1143 = vdwg.mxu0
        %1144 = vmatprep.subr.bf16.mxu0 %v968
        %1145 = vmatpush1.bf16.msra.mxu0 %v967
        %1146 = vmatprep.subr.bf16.mxu0 %v970
        %1147 = vmatpush1.bf16.msra.mxu0 %v969
        %1148 = vmatprep.subr.bf16.mxu0 %v972
        %1149 = vmatpush1.bf16.msra.mxu0 %v971
        %1150 = vmatprep.subr.bf16.mxu0 %v974
        %1151 = vmatpush1.bf16.msra.mxu0 %v973
        %1152 = vmatprep.subr.bf16.mxu0 %v976
        %1153 = vmatpush1.bf16.msra.mxu0 %v975
        %1154 = vmatprep.subr.bf16.mxu0 %v978
        %1155 = vmatpush1.bf16.msra.mxu0 %v977
        %1156 = vmatprep.subr.bf16.mxu0 %v980
        %1157 = vmatpush1.bf16.msra.mxu0 %v979
        %1158 = vmatprep.subr.bf16.mxu0 %v982
        %1159 = vmatpush1.bf16.msra.mxu0 %v981
        %1160 = vmatprep.subr.bf16.mxu0 0
        %1161 = vmatpush1.bf16.msra.mxu0 0
        %1162 = vmatprep.subr.bf16.mxu0 0
        %1163 = vmatpush1.bf16.msra.mxu0 0
        %1164 = vmatprep.subr.bf16.mxu0 0
        %1165 = vmatpush1.bf16.msra.mxu0 0
        %1166 = vmatprep.subr.bf16.mxu0 0
        %1167 = vmatpush1.bf16.msra.mxu0 0
        %1168 = vmatprep.subr.bf16.mxu0 0
        %1169 = vmatpush1.bf16.msra.mxu0 0
        %1170 = vmatprep.subr.bf16.mxu0 0
        %1171 = vmatpush1.bf16.msra.mxu0 0
        %1172 = vmatprep.subr.bf16.mxu0 0
        %1173 = vmatpush1.bf16.msra.mxu0 0
        %1174 = vmatprep.subr.bf16.mxu0 0
        %1175 = vmatpush1.bf16.msra.mxu0 0
        %1176 = vmatprep.mubr.bf16.mxu0 0
        %1177 = vmatmul.mubr.bf16.gmra.mrb[0].mxu0 %v745
        %v1178 = vpop.f32.mrb[0].mxu0
        %v1179 = vadd.f32 %v1066, %v1178
        %v1180 = vpop.f32.mrb[0].mxu0
        %v1181 = vadd.f32 %v1068, %v1180
        %v1182 = vpop.f32.mrb[0].mxu0
        %v1183 = vadd.f32 %v1070, %v1182
        %v1184 = vpop.f32.mrb[0].mxu0
        %v1185 = vadd.f32 %v1072, %v1184
        %1186 = vmatprep.mubr.bf16.mxu0 0
        %1187 = vmatmul.mubr.bf16.gmra.mrb[0].mxu0 %v748
        %v1188 = vpop.f32.mrb[0].mxu0
        %v1189 = vadd.f32 %v1076, %v1188
        %v1190 = vpop.f32.mrb[0].mxu0
        %v1191 = vadd.f32 %v1078, %v1190
        %v1192 = vpop.f32.mrb[0].mxu0
        %v1193 = vadd.f32 %v1080, %v1192
        %v1194 = vpop.f32.mrb[0].mxu0
        %v1195 = vadd.f32 %v1082, %v1194
        %1196 = vmatprep.mubr.bf16.mxu0 0
        %1197 = vmatmul.mubr.bf16.gmra.mrb[0].mxu0 %v751
        %v1198 = vpop.f32.mrb[0].mxu0
        %v1199 = vadd.f32 %v1086, %v1198
        %v1200 = vpop.f32.mrb[0].mxu0
        %v1201 = vadd.f32 %v1088, %v1200
        %v1202 = vpop.f32.mrb[0].mxu0
        %v1203 = vadd.f32 %v1090, %v1202
        %v1204 = vpop.f32.mrb[0].mxu0
        %v1205 = vadd.f32 %v1092, %v1204
        %1206 = vmatprep.mubr.bf16.mxu0 0
        %1207 = vmatmul.mubr.bf16.gmra.mrb[0].mxu0 %v754
        %v1208 = vpop.f32.mrb[0].mxu0
        %v1209 = vadd.f32 %v1096, %v1208
        %v1210 = vpop.f32.mrb[0].mxu0
        %v1211 = vadd.f32 %v1098, %v1210
        %v1212 = vpop.f32.mrb[0].mxu0
        %v1213 = vadd.f32 %v1100, %v1212
        %v1214 = vpop.f32.mrb[0].mxu0
        %v1215 = vadd.f32 %v1102, %v1214
        %1216 = vmatprep.mubr.bf16.mxu0 0
        %1217 = vmatmul.mubr.bf16.gmra.mrb[0].mxu0 %v757
        %v1218 = vpop.f32.mrb[0].mxu0
        %v1219 = vadd.f32 %v1106, %v1218
        %v1220 = vpop.f32.mrb[0].mxu0
        %v1221 = vadd.f32 %v1108, %v1220
        %v1222 = vpop.f32.mrb[0].mxu0
        %v1223 = vadd.f32 %v1110, %v1222
        %v1224 = vpop.f32.mrb[0].mxu0
        %v1225 = vadd.f32 %v1112, %v1224
        %1226 = vmatprep.mubr.bf16.mxu0 0
        %1227 = vmatmul.mubr.bf16.gmra.mrb[0].mxu0 %v760
        %v1228 = vpop.f32.mrb[0].mxu0
        %v1229 = vadd.f32 %v1116, %v1228
        %v1230 = vpop.f32.mrb[0].mxu0
        %v1231 = vadd.f32 %v1118, %v1230
        %v1232 = vpop.f32.mrb[0].mxu0
        %v1233 = vadd.f32 %v1120, %v1232
        %v1234 = vpop.f32.mrb[0].mxu0
        %v1235 = vadd.f32 %v1122, %v1234
        %1236 = vmatprep.mubr.bf16.mxu0 0
        %1237 = vmatmul.mubr.bf16.gmra.mrb[0].mxu0 %v763
        %v1238 = vpop.f32.mrb[0].mxu0
        %v1239 = vadd.f32 %v1126, %v1238
        %v1240 = vpop.f32.mrb[0].mxu0
        %v1241 = vadd.f32 %v1128, %v1240
        %v1242 = vpop.f32.mrb[0].mxu0
        %v1243 = vadd.f32 %v1130, %v1242
        %v1244 = vpop.f32.mrb[0].mxu0
        %v1245 = vadd.f32 %v1132, %v1244
        %1246 = vmatprep.mubr.bf16.mxu0 0
        %1247 = vmatmul.mubr.bf16.gmra.mrb[0].mxu0 %v766
        %v1248 = vpop.f32.mrb[0].mxu0
        %v1249 = vadd.f32 %v1136, %v1248
        %v1250 = vpop.f32.mrb[0].mxu0
        %v1251 = vadd.f32 %v1138, %v1250
        %v1252 = vpop.f32.mrb[0].mxu0
        %v1253 = vadd.f32 %v1140, %v1252
        %v1254 = vpop.f32.mrb[0].mxu0
        %v1255 = vadd.f32 %v1142, %v1254
        %1256 = vdwg.mxu0
        %v1305 = vunpack.c.l.b16 %v278
        %v1306 = vunpack.c.h.b16 %v278
        %v1307 = vunpack.c.l.b16 %v279
        %v1308 = vunpack.c.h.b16 %v279
        %v1309 = vunpack.c.l.b16 %v280
        %v1310 = vunpack.c.h.b16 %v280
        %v1311 = vunpack.c.l.b16 %v281
        %v1312 = vunpack.c.h.b16 %v281
        %v1313 = vunpack.c.l.b16 %v282
        %v1314 = vunpack.c.h.b16 %v282
        %v1315 = vunpack.c.l.b16 %v283
        %v1316 = vunpack.c.h.b16 %v283
        %v1317 = vunpack.c.l.b16 %v284
        %v1318 = vunpack.c.h.b16 %v284
        %v1319 = vunpack.c.l.b16 %v285
        %v1320 = vunpack.c.h.b16 %v285
        %v1321 = vunpack.c.l.b16 %v286
        %v1322 = vunpack.c.h.b16 %v286
        %v1323 = vunpack.c.l.b16 %v287
        %v1324 = vunpack.c.h.b16 %v287
        %v1325 = vunpack.c.l.b16 %v288
        %v1326 = vunpack.c.h.b16 %v288
        %v1327 = vunpack.c.l.b16 %v289
        %v1328 = vunpack.c.h.b16 %v289
        %v1329 = vunpack.c.l.b16 %v290
        %v1330 = vunpack.c.h.b16 %v290
        %v1331 = vunpack.c.l.b16 %v291
        %v1332 = vunpack.c.h.b16 %v291
        %v1333 = vunpack.c.l.b16 %v292
        %v1334 = vunpack.c.h.b16 %v292
        %v1335 = vunpack.c.l.b16 %v293
        %v1336 = vunpack.c.h.b16 %v293
        %v1337 = vunpack.c.l.b16 %v294
        %v1338 = vunpack.c.h.b16 %v294
        %v1339 = vunpack.c.l.b16 %v295
        %v1340 = vunpack.c.h.b16 %v295
        %v1341 = vunpack.c.l.b16 %v296
        %v1342 = vunpack.c.h.b16 %v296
        %v1343 = vunpack.c.l.b16 %v297
        %v1344 = vunpack.c.h.b16 %v297
        %v1345 = vunpack.c.l.b16 %v298
        %v1346 = vunpack.c.h.b16 %v298
        %v1347 = vunpack.c.l.b16 %v299
        %v1348 = vunpack.c.h.b16 %v299
        %v1349 = vunpack.c.l.b16 %v300
        %v1350 = vunpack.c.h.b16 %v300
        %v1351 = vunpack.c.l.b16 %v301
        %v1352 = vunpack.c.h.b16 %v301
        %v1353 = vunpack.c.l.b16 %v302
        %v1354 = vunpack.c.h.b16 %v302
        %v1355 = vunpack.c.l.b16 %v303
        %v1356 = vunpack.c.h.b16 %v303
        %v1357 = vunpack.c.l.b16 %v304
        %v1358 = vunpack.c.h.b16 %v304
        %v1359 = vunpack.c.l.b16 %v305
        %v1360 = vunpack.c.h.b16 %v305
        %v1361 = vunpack.c.l.b16 %v306
        %v1362 = vunpack.c.h.b16 %v306
        %v1363 = vunpack.c.l.b16 %v307
        %v1364 = vunpack.c.h.b16 %v307
        %v1365 = vunpack.c.l.b16 %v308
        %v1366 = vunpack.c.h.b16 %v308
        %v1367 = vunpack.c.l.b16 %v309
        %v1368 = vunpack.c.h.b16 %v309
        %v1369 = vunpack.c.l.b16 %v310
        %v1370 = vunpack.c.h.b16 %v310
        %v1371 = vunpack.c.l.b16 %v311
        %v1372 = vunpack.c.h.b16 %v311
        %v1373 = vunpack.c.l.b16 %v312
        %v1374 = vunpack.c.h.b16 %v312
        %v1375 = vunpack.c.l.b16 %v313
        %v1376 = vunpack.c.h.b16 %v313
        %v1377 = vunpack.c.l.b16 %v314
        %v1378 = vunpack.c.h.b16 %v314
        %v1379 = vunpack.c.l.b16 %v315
        %v1380 = vunpack.c.h.b16 %v315
        %v1381 = vunpack.c.l.b16 %v316
        %v1382 = vunpack.c.h.b16 %v316
        %v1383 = vunpack.c.l.b16 %v317
        %v1384 = vunpack.c.h.b16 %v317
        %v1385 = vunpack.c.l.b16 %v318
        %v1386 = vunpack.c.h.b16 %v318
        %v1387 = vunpack.c.l.b16 %v319
        %v1388 = vunpack.c.h.b16 %v319
        %v1389 = vunpack.c.l.b16 %v320
        %v1390 = vunpack.c.h.b16 %v320
        %v1391 = vunpack.c.l.b16 %v321
        %v1392 = vunpack.c.h.b16 %v321
        %v1393 = vunpack.c.l.b16 %v322
        %v1394 = vunpack.c.h.b16 %v322
        %v1395 = vunpack.c.l.b16 %v323
        %v1396 = vunpack.c.h.b16 %v323
        %v1397 = vunpack.c.l.b16 %v324
        %v1398 = vunpack.c.h.b16 %v324
        %v1399 = vunpack.c.l.b16 %v325
        %v1400 = vunpack.c.h.b16 %v325
        %v1401 = vpack.c.b16 %v1307, %v1305
        %v1402 = vpack.c.b16 %v1308, %v1306
        %v1403 = vpack.c.b16 %v1311, %v1309
        %v1404 = vpack.c.b16 %v1312, %v1310
        %v1405 = vpack.c.b16 %v1315, %v1313
        %v1406 = vpack.c.b16 %v1316, %v1314
        %v1407 = vpack.c.b16 %v1319, %v1317
        %v1408 = vpack.c.b16 %v1320, %v1318
        %v1409 = vpack.c.b16 %v1323, %v1321
        %v1410 = vpack.c.b16 %v1324, %v1322
        %v1411 = vpack.c.b16 %v1327, %v1325
        %v1412 = vpack.c.b16 %v1328, %v1326
        %v1413 = vpack.c.b16 %v1331, %v1329
        %v1414 = vpack.c.b16 %v1332, %v1330
        %v1415 = vpack.c.b16 %v1335, %v1333
        %v1416 = vpack.c.b16 %v1336, %v1334
        %v1417 = vpack.c.b16 %v1339, %v1337
        %v1418 = vpack.c.b16 %v1340, %v1338
        %v1419 = vpack.c.b16 %v1343, %v1341
        %v1420 = vpack.c.b16 %v1344, %v1342
        %v1421 = vpack.c.b16 %v1347, %v1345
        %v1422 = vpack.c.b16 %v1348, %v1346
        %v1423 = vpack.c.b16 %v1351, %v1349
        %v1424 = vpack.c.b16 %v1352, %v1350
        %v1425 = vpack.c.b16 %v1355, %v1353
        %v1426 = vpack.c.b16 %v1356, %v1354
        %v1427 = vpack.c.b16 %v1359, %v1357
        %v1428 = vpack.c.b16 %v1360, %v1358
        %v1429 = vpack.c.b16 %v1363, %v1361
        %v1430 = vpack.c.b16 %v1364, %v1362
        %v1431 = vpack.c.b16 %v1367, %v1365
        %v1432 = vpack.c.b16 %v1368, %v1366
        %v1433 = vpack.c.b16 %v1371, %v1369
        %v1434 = vpack.c.b16 %v1372, %v1370
        %v1435 = vpack.c.b16 %v1375, %v1373
        %v1436 = vpack.c.b16 %v1376, %v1374
        %v1437 = vpack.c.b16 %v1379, %v1377
        %v1438 = vpack.c.b16 %v1380, %v1378
        %v1439 = vpack.c.b16 %v1383, %v1381
        %v1440 = vpack.c.b16 %v1384, %v1382
        %v1441 = vpack.c.b16 %v1387, %v1385
        %v1442 = vpack.c.b16 %v1388, %v1386
        %v1443 = vpack.c.b16 %v1391, %v1389
        %v1444 = vpack.c.b16 %v1392, %v1390
        %v1445 = vpack.c.b16 %v1395, %v1393
        %v1446 = vpack.c.b16 %v1396, %v1394
        %v1447 = vpack.c.b16 %v1399, %v1397
        %v1448 = vpack.c.b16 %v1400, %v1398
        %1497 = vmatprep.subr.bf16.mxu0 %v1402
        %1498 = vmatpush1.bf16.msra.mxu0 %v1401
        %1499 = vmatprep.subr.bf16.mxu0 %v1404
        %1500 = vmatpush1.bf16.msra.mxu0 %v1403
        %1501 = vmatprep.subr.bf16.mxu0 %v1406
        %1502 = vmatpush1.bf16.msra.mxu0 %v1405
        %1503 = vmatprep.subr.bf16.mxu0 %v1408
        %1504 = vmatpush1.bf16.msra.mxu0 %v1407
        %1505 = vmatprep.subr.bf16.mxu0 %v1410
        %1506 = vmatpush1.bf16.msra.mxu0 %v1409
        %1507 = vmatprep.subr.bf16.mxu0 %v1412
        %1508 = vmatpush1.bf16.msra.mxu0 %v1411
        %1509 = vmatprep.subr.bf16.mxu0 %v1414
        %1510 = vmatpush1.bf16.msra.mxu0 %v1413
        %1511 = vmatprep.subr.bf16.mxu0 %v1416
        %1512 = vmatpush1.bf16.msra.mxu0 %v1415
        %1513 = vmatprep.subr.bf16.mxu0 %v1418
        %1514 = vmatpush1.bf16.msra.mxu0 %v1417
        %1515 = vmatprep.subr.bf16.mxu0 %v1420
        %1516 = vmatpush1.bf16.msra.mxu0 %v1419
        %1517 = vmatprep.subr.bf16.mxu0 %v1422
        %1518 = vmatpush1.bf16.msra.mxu0 %v1421
        %1519 = vmatprep.subr.bf16.mxu0 %v1424
        %1520 = vmatpush1.bf16.msra.mxu0 %v1423
        %1521 = vmatprep.subr.bf16.mxu0 %v1426
        %1522 = vmatpush1.bf16.msra.mxu0 %v1425
        %1523 = vmatprep.subr.bf16.mxu0 %v1428
        %1524 = vmatpush1.bf16.msra.mxu0 %v1427
        %1525 = vmatprep.subr.bf16.mxu0 %v1430
        %1526 = vmatpush1.bf16.msra.mxu0 %v1429
        %1527 = vmatprep.subr.bf16.mxu0 %v1432
        %1528 = vmatpush1.bf16.msra.mxu0 %v1431
        %1529 = vmatprep.mubr.bf16.mxu0 %v744
        %1530 = vmatmul.mubr.bf16.gmra.mrb[0].mxu0 %v743
        %v1531 = vpop.f32.mrb[0].mxu0
        %v1532 = vadd.f32 0.0, %v1531
        %v1533 = vpop.f32.mrb[0].mxu0
        %v1534 = vadd.f32 0.0, %v1533
        %v1535 = vpop.f32.mrb[0].mxu0
        %v1536 = vadd.f32 0.0, %v1535
        %v1537 = vpop.f32.mrb[0].mxu0
        %v1538 = vadd.f32 0.0, %v1537
        %1539 = vmatprep.mubr.bf16.mxu0 %v747
        %1540 = vmatmul.mubr.bf16.gmra.mrb[0].mxu0 %v746
        %v1541 = vpop.f32.mrb[0].mxu0
        %v1542 = vadd.f32 0.0, %v1541
        %v1543 = vpop.f32.mrb[0].mxu0
        %v1544 = vadd.f32 0.0, %v1543
        %v1545 = vpop.f32.mrb[0].mxu0
        %v1546 = vadd.f32 0.0, %v1545
        %v1547 = vpop.f32.mrb[0].mxu0
        %v1548 = vadd.f32 0.0, %v1547
        %1549 = vmatprep.mubr.bf16.mxu0 %v750
        %1550 = vmatmul.mubr.bf16.gmra.mrb[0].mxu0 %v749
        %v1551 = vpop.f32.mrb[0].mxu0
        %v1552 = vadd.f32 0.0, %v1551
        %v1553 = vpop.f32.mrb[0].mxu0
        %v1554 = vadd.f32 0.0, %v1553
        %v1555 = vpop.f32.mrb[0].mxu0
        %v1556 = vadd.f32 0.0, %v1555
        %v1557 = vpop.f32.mrb[0].mxu0
        %v1558 = vadd.f32 0.0, %v1557
        %1559 = vmatprep.mubr.bf16.mxu0 %v753
        %1560 = vmatmul.mubr.bf16.gmra.mrb[0].mxu0 %v752
        %v1561 = vpop.f32.mrb[0].mxu0
        %v1562 = vadd.f32 0.0, %v1561
        %v1563 = vpop.f32.mrb[0].mxu0
        %v1564 = vadd.f32 0.0, %v1563
        %v1565 = vpop.f32.mrb[0].mxu0
        %v1566 = vadd.f32 0.0, %v1565
        %v1567 = vpop.f32.mrb[0].mxu0
        %v1568 = vadd.f32 0.0, %v1567
        %1569 = vmatprep.mubr.bf16.mxu0 %v756
        %1570 = vmatmul.mubr.bf16.gmra.mrb[0].mxu0 %v755
        %v1571 = vpop.f32.mrb[0].mxu0
        %v1572 = vadd.f32 0.0, %v1571
        %v1573 = vpop.f32.mrb[0].mxu0
        %v1574 = vadd.f32 0.0, %v1573
        %v1575 = vpop.f32.mrb[0].mxu0
        %v1576 = vadd.f32 0.0, %v1575
        %v1577 = vpop.f32.mrb[0].mxu0
        %v1578 = vadd.f32 0.0, %v1577
        %1579 = vmatprep.mubr.bf16.mxu0 %v759
        %1580 = vmatmul.mubr.bf16.gmra.mrb[0].mxu0 %v758
        %v1581 = vpop.f32.mrb[0].mxu0
        %v1582 = vadd.f32 0.0, %v1581
        %v1583 = vpop.f32.mrb[0].mxu0
        %v1584 = vadd.f32 0.0, %v1583
        %v1585 = vpop.f32.mrb[0].mxu0
        %v1586 = vadd.f32 0.0, %v1585
        %v1587 = vpop.f32.mrb[0].mxu0
        %v1588 = vadd.f32 0.0, %v1587
        %1589 = vmatprep.mubr.bf16.mxu0 %v762
        %1590 = vmatmul.mubr.bf16.gmra.mrb[0].mxu0 %v761
        %v1591 = vpop.f32.mrb[0].mxu0
        %v1592 = vadd.f32 0.0, %v1591
        %v1593 = vpop.f32.mrb[0].mxu0
        %v1594 = vadd.f32 0.0, %v1593
        %v1595 = vpop.f32.mrb[0].mxu0
        %v1596 = vadd.f32 0.0, %v1595
        %v1597 = vpop.f32.mrb[0].mxu0
        %v1598 = vadd.f32 0.0, %v1597
        %1599 = vmatprep.mubr.bf16.mxu0 %v765
        %1600 = vmatmul.mubr.bf16.gmra.mrb[0].mxu0 %v764
        %v1601 = vpop.f32.mrb[0].mxu0
        %v1602 = vadd.f32 0.0, %v1601
        %v1603 = vpop.f32.mrb[0].mxu0
        %v1604 = vadd.f32 0.0, %v1603
        %v1605 = vpop.f32.mrb[0].mxu0
        %v1606 = vadd.f32 0.0, %v1605
        %v1607 = vpop.f32.mrb[0].mxu0
        %v1608 = vadd.f32 0.0, %v1607
        %1609 = vdwg.mxu0
        %1610 = vmatprep.subr.bf16.mxu0 %v1434
        %1611 = vmatpush1.bf16.msra.mxu0 %v1433
        %1612 = vmatprep.subr.bf16.mxu0 %v1436
        %1613 = vmatpush1.bf16.msra.mxu0 %v1435
        %1614 = vmatprep.subr.bf16.mxu0 %v1438
        %1615 = vmatpush1.bf16.msra.mxu0 %v1437
        %1616 = vmatprep.subr.bf16.mxu0 %v1440
        %1617 = vmatpush1.bf16.msra.mxu0 %v1439
        %1618 = vmatprep.subr.bf16.mxu0 %v1442
        %1619 = vmatpush1.bf16.msra.mxu0 %v1441
        %1620 = vmatprep.subr.bf16.mxu0 %v1444
        %1621 = vmatpush1.bf16.msra.mxu0 %v1443
        %1622 = vmatprep.subr.bf16.mxu0 %v1446
        %1623 = vmatpush1.bf16.msra.mxu0 %v1445
        %1624 = vmatprep.subr.bf16.mxu0 %v1448
        %1625 = vmatpush1.bf16.msra.mxu0 %v1447
        %1626 = vmatprep.subr.bf16.mxu0 0
        %1627 = vmatpush1.bf16.msra.mxu0 0
        %1628 = vmatprep.subr.bf16.mxu0 0
        %1629 = vmatpush1.bf16.msra.mxu0 0
        %1630 = vmatprep.subr.bf16.mxu0 0
        %1631 = vmatpush1.bf16.msra.mxu0 0
        %1632 = vmatprep.subr.bf16.mxu0 0
        %1633 = vmatpush1.bf16.msra.mxu0 0
        %1634 = vmatprep.subr.bf16.mxu0 0
        %1635 = vmatpush1.bf16.msra.mxu0 0
        %1636 = vmatprep.subr.bf16.mxu0 0
        %1637 = vmatpush1.bf16.msra.mxu0 0
        %1638 = vmatprep.subr.bf16.mxu0 0
        %1639 = vmatpush1.bf16.msra.mxu0 0
        %1640 = vmatprep.subr.bf16.mxu0 0
        %1641 = vmatpush1.bf16.msra.mxu0 0
        %1642 = vmatprep.mubr.bf16.mxu0 0
        %1643 = vmatmul.mubr.bf16.gmra.mrb[0].mxu0 %v745
        %v1644 = vpop.f32.mrb[0].mxu0
        %v1645 = vadd.f32 %v1532, %v1644
        %v1646 = vpop.f32.mrb[0].mxu0
        %v1647 = vadd.f32 %v1534, %v1646
        %v1648 = vpop.f32.mrb[0].mxu0
        %v1649 = vadd.f32 %v1536, %v1648
        %v1650 = vpop.f32.mrb[0].mxu0
        %v1651 = vadd.f32 %v1538, %v1650
        %1652 = vmatprep.mubr.bf16.mxu0 0
        %1653 = vmatmul.mubr.bf16.gmra.mrb[0].mxu0 %v748
        %v1654 = vpop.f32.mrb[0].mxu0
        %v1655 = vadd.f32 %v1542, %v1654
        %v1656 = vpop.f32.mrb[0].mxu0
        %v1657 = vadd.f32 %v1544, %v1656
        %v1658 = vpop.f32.mrb[0].mxu0
        %v1659 = vadd.f32 %v1546, %v1658
        %v1660 = vpop.f32.mrb[0].mxu0
        %v1661 = vadd.f32 %v1548, %v1660
        %1662 = vmatprep.mubr.bf16.mxu0 0
        %1663 = vmatmul.mubr.bf16.gmra.mrb[0].mxu0 %v751
        %v1664 = vpop.f32.mrb[0].mxu0
        %v1665 = vadd.f32 %v1552, %v1664
        %v1666 = vpop.f32.mrb[0].mxu0
        %v1667 = vadd.f32 %v1554, %v1666
        %v1668 = vpop.f32.mrb[0].mxu0
        %v1669 = vadd.f32 %v1556, %v1668
        %v1670 = vpop.f32.mrb[0].mxu0
        %v1671 = vadd.f32 %v1558, %v1670
        %1672 = vmatprep.mubr.bf16.mxu0 0
        %1673 = vmatmul.mubr.bf16.gmra.mrb[0].mxu0 %v754
        %v1674 = vpop.f32.mrb[0].mxu0
        %v1675 = vadd.f32 %v1562, %v1674
        %v1676 = vpop.f32.mrb[0].mxu0
        %v1677 = vadd.f32 %v1564, %v1676
        %v1678 = vpop.f32.mrb[0].mxu0
        %v1679 = vadd.f32 %v1566, %v1678
        %v1680 = vpop.f32.mrb[0].mxu0
        %v1681 = vadd.f32 %v1568, %v1680
        %1682 = vmatprep.mubr.bf16.mxu0 0
        %1683 = vmatmul.mubr.bf16.gmra.mrb[0].mxu0 %v757
        %v1684 = vpop.f32.mrb[0].mxu0
        %v1685 = vadd.f32 %v1572, %v1684
        %v1686 = vpop.f32.mrb[0].mxu0
        %v1687 = vadd.f32 %v1574, %v1686
        %v1688 = vpop.f32.mrb[0].mxu0
        %v1689 = vadd.f32 %v1576, %v1688
        %v1690 = vpop.f32.mrb[0].mxu0
        %v1691 = vadd.f32 %v1578, %v1690
        %1692 = vmatprep.mubr.bf16.mxu0 0
        %1693 = vmatmul.mubr.bf16.gmra.mrb[0].mxu0 %v760
        %v1694 = vpop.f32.mrb[0].mxu0
        %v1695 = vadd.f32 %v1582, %v1694
        %v1696 = vpop.f32.mrb[0].mxu0
        %v1697 = vadd.f32 %v1584, %v1696
        %v1698 = vpop.f32.mrb[0].mxu0
        %v1699 = vadd.f32 %v1586, %v1698
        %v1700 = vpop.f32.mrb[0].mxu0
        %v1701 = vadd.f32 %v1588, %v1700
        %1702 = vmatprep.mubr.bf16.mxu0 0
        %1703 = vmatmul.mubr.bf16.gmra.mrb[0].mxu0 %v763
        %v1704 = vpop.f32.mrb[0].mxu0
        %v1705 = vadd.f32 %v1592, %v1704
        %v1706 = vpop.f32.mrb[0].mxu0
        %v1707 = vadd.f32 %v1594, %v1706
        %v1708 = vpop.f32.mrb[0].mxu0
        %v1709 = vadd.f32 %v1596, %v1708
        %v1710 = vpop.f32.mrb[0].mxu0
        %v1711 = vadd.f32 %v1598, %v1710
        %1712 = vmatprep.mubr.bf16.mxu0 0
        %1713 = vmatmul.mubr.bf16.gmra.mrb[0].mxu0 %v766
        %v1714 = vpop.f32.mrb[0].mxu0
        %v1715 = vadd.f32 %v1602, %v1714
        %v1716 = vpop.f32.mrb[0].mxu0
        %v1717 = vadd.f32 %v1604, %v1716
        %v1718 = vpop.f32.mrb[0].mxu0
        %v1719 = vadd.f32 %v1606, %v1718
        %v1720 = vpop.f32.mrb[0].mxu0
        %v1721 = vadd.f32 %v1608, %v1720
        %1722 = vdwg.mxu0
        %v1771 = vunpack.c.l.b16 %v326
        %v1772 = vunpack.c.h.b16 %v326
        %v1773 = vunpack.c.l.b16 %v327
        %v1774 = vunpack.c.h.b16 %v327
        %v1775 = vunpack.c.l.b16 %v328
        %v1776 = vunpack.c.h.b16 %v328
        %v1777 = vunpack.c.l.b16 %v329
        %v1778 = vunpack.c.h.b16 %v329
        %v1779 = vunpack.c.l.b16 %v330
        %v1780 = vunpack.c.h.b16 %v330
        %v1781 = vunpack.c.l.b16 %v331
        %v1782 = vunpack.c.h.b16 %v331
        %v1783 = vunpack.c.l.b16 %v332
        %v1784 = vunpack.c.h.b16 %v332
        %v1785 = vunpack.c.l.b16 %v333
        %v1786 = vunpack.c.h.b16 %v333
        %v1787 = vunpack.c.l.b16 %v334
        %v1788 = vunpack.c.h.b16 %v334
        %v1789 = vunpack.c.l.b16 %v335
        %v1790 = vunpack.c.h.b16 %v335
        %v1791 = vunpack.c.l.b16 %v336
        %v1792 = vunpack.c.h.b16 %v336
        %v1793 = vunpack.c.l.b16 %v337
        %v1794 = vunpack.c.h.b16 %v337
        %v1795 = vunpack.c.l.b16 %v338
        %v1796 = vunpack.c.h.b16 %v338
        %v1797 = vunpack.c.l.b16 %v339
        %v1798 = vunpack.c.h.b16 %v339
        %v1799 = vunpack.c.l.b16 %v340
        %v1800 = vunpack.c.h.b16 %v340
        %v1801 = vunpack.c.l.b16 %v341
        %v1802 = vunpack.c.h.b16 %v341
        %v1803 = vunpack.c.l.b16 %v342
        %v1804 = vunpack.c.h.b16 %v342
        %v1805 = vunpack.c.l.b16 %v343
        %v1806 = vunpack.c.h.b16 %v343
        %v1807 = vunpack.c.l.b16 %v344
        %v1808 = vunpack.c.h.b16 %v344
        %v1809 = vunpack.c.l.b16 %v345
        %v1810 = vunpack.c.h.b16 %v345
        %v1811 = vunpack.c.l.b16 %v346
        %v1812 = vunpack.c.h.b16 %v346
        %v1813 = vunpack.c.l.b16 %v347
        %v1814 = vunpack.c.h.b16 %v347
        %v1815 = vunpack.c.l.b16 %v348
        %v1816 = vunpack.c.h.b16 %v348
        %v1817 = vunpack.c.l.b16 %v349
        %v1818 = vunpack.c.h.b16 %v349
        %v1819 = vunpack.c.l.b16 %v350
        %v1820 = vunpack.c.h.b16 %v350
        %v1821 = vunpack.c.l.b16 %v351
        %v1822 = vunpack.c.h.b16 %v351
        %v1823 = vunpack.c.l.b16 %v352
        %v1824 = vunpack.c.h.b16 %v352
        %v1825 = vunpack.c.l.b16 %v353
        %v1826 = vunpack.c.h.b16 %v353
        %v1827 = vunpack.c.l.b16 %v354
        %v1828 = vunpack.c.h.b16 %v354
        %v1829 = vunpack.c.l.b16 %v355
        %v1830 = vunpack.c.h.b16 %v355
        %v1831 = vunpack.c.l.b16 %v356
        %v1832 = vunpack.c.h.b16 %v356
        %v1833 = vunpack.c.l.b16 %v357
        %v1834 = vunpack.c.h.b16 %v357
        %v1835 = vunpack.c.l.b16 %v358
        %v1836 = vunpack.c.h.b16 %v358
        %v1837 = vunpack.c.l.b16 %v359
        %v1838 = vunpack.c.h.b16 %v359
        %v1839 = vunpack.c.l.b16 %v360
        %v1840 = vunpack.c.h.b16 %v360
        %v1841 = vunpack.c.l.b16 %v361
        %v1842 = vunpack.c.h.b16 %v361
        %v1843 = vunpack.c.l.b16 %v362
        %v1844 = vunpack.c.h.b16 %v362
        %v1845 = vunpack.c.l.b16 %v363
        %v1846 = vunpack.c.h.b16 %v363
        %v1847 = vunpack.c.l.b16 %v364
        %v1848 = vunpack.c.h.b16 %v364
        %v1849 = vunpack.c.l.b16 %v365
        %v1850 = vunpack.c.h.b16 %v365
        %v1851 = vunpack.c.l.b16 %v366
        %v1852 = vunpack.c.h.b16 %v366
        %v1853 = vunpack.c.l.b16 %v367
        %v1854 = vunpack.c.h.b16 %v367
        %v1855 = vunpack.c.l.b16 %v368
        %v1856 = vunpack.c.h.b16 %v368
        %v1857 = vunpack.c.l.b16 %v369
        %v1858 = vunpack.c.h.b16 %v369
        %v1859 = vunpack.c.l.b16 %v370
        %v1860 = vunpack.c.h.b16 %v370
        %v1861 = vunpack.c.l.b16 %v371
        %v1862 = vunpack.c.h.b16 %v371
        %v1863 = vunpack.c.l.b16 %v372
        %v1864 = vunpack.c.h.b16 %v372
        %v1865 = vunpack.c.l.b16 %v373
        %v1866 = vunpack.c.h.b16 %v373
        %v1867 = vpack.c.b16 %v1773, %v1771
        %v1868 = vpack.c.b16 %v1774, %v1772
        %v1869 = vpack.c.b16 %v1777, %v1775
        %v1870 = vpack.c.b16 %v1778, %v1776
        %v1871 = vpack.c.b16 %v1781, %v1779
        %v1872 = vpack.c.b16 %v1782, %v1780
        %v1873 = vpack.c.b16 %v1785, %v1783
        %v1874 = vpack.c.b16 %v1786, %v1784
        %v1875 = vpack.c.b16 %v1789, %v1787
        %v1876 = vpack.c.b16 %v1790, %v1788
        %v1877 = vpack.c.b16 %v1793, %v1791
        %v1878 = vpack.c.b16 %v1794, %v1792
        %v1879 = vpack.c.b16 %v1797, %v1795
        %v1880 = vpack.c.b16 %v1798, %v1796
        %v1881 = vpack.c.b16 %v1801, %v1799
        %v1882 = vpack.c.b16 %v1802, %v1800
        %v1883 = vpack.c.b16 %v1805, %v1803
        %v1884 = vpack.c.b16 %v1806, %v1804
        %v1885 = vpack.c.b16 %v1809, %v1807
        %v1886 = vpack.c.b16 %v1810, %v1808
        %v1887 = vpack.c.b16 %v1813, %v1811
        %v1888 = vpack.c.b16 %v1814, %v1812
        %v1889 = vpack.c.b16 %v1817, %v1815
        %v1890 = vpack.c.b16 %v1818, %v1816
        %v1891 = vpack.c.b16 %v1821, %v1819
        %v1892 = vpack.c.b16 %v1822, %v1820
        %v1893 = vpack.c.b16 %v1825, %v1823
        %v1894 = vpack.c.b16 %v1826, %v1824
        %v1895 = vpack.c.b16 %v1829, %v1827
        %v1896 = vpack.c.b16 %v1830, %v1828
        %v1897 = vpack.c.b16 %v1833, %v1831
        %v1898 = vpack.c.b16 %v1834, %v1832
        %v1899 = vpack.c.b16 %v1837, %v1835
        %v1900 = vpack.c.b16 %v1838, %v1836
        %v1901 = vpack.c.b16 %v1841, %v1839
        %v1902 = vpack.c.b16 %v1842, %v1840
        %v1903 = vpack.c.b16 %v1845, %v1843
        %v1904 = vpack.c.b16 %v1846, %v1844
        %v1905 = vpack.c.b16 %v1849, %v1847
        %v1906 = vpack.c.b16 %v1850, %v1848
        %v1907 = vpack.c.b16 %v1853, %v1851
        %v1908 = vpack.c.b16 %v1854, %v1852
        %v1909 = vpack.c.b16 %v1857, %v1855
        %v1910 = vpack.c.b16 %v1858, %v1856
        %v1911 = vpack.c.b16 %v1861, %v1859
        %v1912 = vpack.c.b16 %v1862, %v1860
        %v1913 = vpack.c.b16 %v1865, %v1863
        %v1914 = vpack.c.b16 %v1866, %v1864
        %1963 = vmatprep.subr.bf16.mxu0 %v1868
        %1964 = vmatpush1.bf16.msra.mxu0 %v1867
        %1965 = vmatprep.subr.bf16.mxu0 %v1870
        %1966 = vmatpush1.bf16.msra.mxu0 %v1869
        %1967 = vmatprep.subr.bf16.mxu0 %v1872
        %1968 = vmatpush1.bf16.msra.mxu0 %v1871
        %1969 = vmatprep.subr.bf16.mxu0 %v1874
        %1970 = vmatpush1.bf16.msra.mxu0 %v1873
        %1971 = vmatprep.subr.bf16.mxu0 %v1876
        %1972 = vmatpush1.bf16.msra.mxu0 %v1875
        %1973 = vmatprep.subr.bf16.mxu0 %v1878
        %1974 = vmatpush1.bf16.msra.mxu0 %v1877
        %1975 = vmatprep.subr.bf16.mxu0 %v1880
        %1976 = vmatpush1.bf16.msra.mxu0 %v1879
        %1977 = vmatprep.subr.bf16.mxu0 %v1882
        %1978 = vmatpush1.bf16.msra.mxu0 %v1881
        %1979 = vmatprep.subr.bf16.mxu0 %v1884
        %1980 = vmatpush1.bf16.msra.mxu0 %v1883
        %1981 = vmatprep.subr.bf16.mxu0 %v1886
        %1982 = vmatpush1.bf16.msra.mxu0 %v1885
        %1983 = vmatprep.subr.bf16.mxu0 %v1888
        %1984 = vmatpush1.bf16.msra.mxu0 %v1887
        %1985 = vmatprep.subr.bf16.mxu0 %v1890
        %1986 = vmatpush1.bf16.msra.mxu0 %v1889
        %1987 = vmatprep.subr.bf16.mxu0 %v1892
        %1988 = vmatpush1.bf16.msra.mxu0 %v1891
        %1989 = vmatprep.subr.bf16.mxu0 %v1894
        %1990 = vmatpush1.bf16.msra.mxu0 %v1893
        %1991 = vmatprep.subr.bf16.mxu0 %v1896
        %1992 = vmatpush1.bf16.msra.mxu0 %v1895
        %1993 = vmatprep.subr.bf16.mxu0 %v1898
        %1994 = vmatpush1.bf16.msra.mxu0 %v1897
        %1995 = vmatprep.mubr.bf16.mxu0 %v744
        %1996 = vmatmul.mubr.bf16.gmra.mrb[0].mxu0 %v743
        %v1997 = vpop.f32.mrb[0].mxu0
        %v1998 = vadd.f32 0.0, %v1997
        %v1999 = vpop.f32.mrb[0].mxu0
        %v2000 = vadd.f32 0.0, %v1999
        %v2001 = vpop.f32.mrb[0].mxu0
        %v2002 = vadd.f32 0.0, %v2001
        %v2003 = vpop.f32.mrb[0].mxu0
        %v2004 = vadd.f32 0.0, %v2003
        %2005 = vmatprep.mubr.bf16.mxu0 %v747
        %2006 = vmatmul.mubr.bf16.gmra.mrb[0].mxu0 %v746
        %v2007 = vpop.f32.mrb[0].mxu0
        %v2008 = vadd.f32 0.0, %v2007
        %v2009 = vpop.f32.mrb[0].mxu0
        %v2010 = vadd.f32 0.0, %v2009
        %v2011 = vpop.f32.mrb[0].mxu0
        %v2012 = vadd.f32 0.0, %v2011
        %v2013 = vpop.f32.mrb[0].mxu0
        %v2014 = vadd.f32 0.0, %v2013
        %2015 = vmatprep.mubr.bf16.mxu0 %v750
        %2016 = vmatmul.mubr.bf16.gmra.mrb[0].mxu0 %v749
        %v2017 = vpop.f32.mrb[0].mxu0
        %v2018 = vadd.f32 0.0, %v2017
        %v2019 = vpop.f32.mrb[0].mxu0
        %v2020 = vadd.f32 0.0, %v2019
        %v2021 = vpop.f32.mrb[0].mxu0
        %v2022 = vadd.f32 0.0, %v2021
        %v2023 = vpop.f32.mrb[0].mxu0
        %v2024 = vadd.f32 0.0, %v2023
        %2025 = vmatprep.mubr.bf16.mxu0 %v753
        %2026 = vmatmul.mubr.bf16.gmra.mrb[0].mxu0 %v752
        %v2027 = vpop.f32.mrb[0].mxu0
        %v2028 = vadd.f32 0.0, %v2027
        %v2029 = vpop.f32.mrb[0].mxu0
        %v2030 = vadd.f32 0.0, %v2029
        %v2031 = vpop.f32.mrb[0].mxu0
        %v2032 = vadd.f32 0.0, %v2031
        %v2033 = vpop.f32.mrb[0].mxu0
        %v2034 = vadd.f32 0.0, %v2033
        %2035 = vmatprep.mubr.bf16.mxu0 %v756
        %2036 = vmatmul.mubr.bf16.gmra.mrb[0].mxu0 %v755
        %v2037 = vpop.f32.mrb[0].mxu0
        %v2038 = vadd.f32 0.0, %v2037
        %v2039 = vpop.f32.mrb[0].mxu0
        %v2040 = vadd.f32 0.0, %v2039
        %v2041 = vpop.f32.mrb[0].mxu0
        %v2042 = vadd.f32 0.0, %v2041
        %v2043 = vpop.f32.mrb[0].mxu0
        %v2044 = vadd.f32 0.0, %v2043
        %2045 = vmatprep.mubr.bf16.mxu0 %v759
        %2046 = vmatmul.mubr.bf16.gmra.mrb[0].mxu0 %v758
        %v2047 = vpop.f32.mrb[0].mxu0
        %v2048 = vadd.f32 0.0, %v2047
        %v2049 = vpop.f32.mrb[0].mxu0
        %v2050 = vadd.f32 0.0, %v2049
        %v2051 = vpop.f32.mrb[0].mxu0
        %v2052 = vadd.f32 0.0, %v2051
        %v2053 = vpop.f32.mrb[0].mxu0
        %v2054 = vadd.f32 0.0, %v2053
        %2055 = vmatprep.mubr.bf16.mxu0 %v762
        %2056 = vmatmul.mubr.bf16.gmra.mrb[0].mxu0 %v761
        %v2057 = vpop.f32.mrb[0].mxu0
        %v2058 = vadd.f32 0.0, %v2057
        %v2059 = vpop.f32.mrb[0].mxu0
        %v2060 = vadd.f32 0.0, %v2059
        %v2061 = vpop.f32.mrb[0].mxu0
        %v2062 = vadd.f32 0.0, %v2061
        %v2063 = vpop.f32.mrb[0].mxu0
        %v2064 = vadd.f32 0.0, %v2063
        %2065 = vmatprep.mubr.bf16.mxu0 %v765
        %2066 = vmatmul.mubr.bf16.gmra.mrb[0].mxu0 %v764
        %v2067 = vpop.f32.mrb[0].mxu0
        %v2068 = vadd.f32 0.0, %v2067
        %v2069 = vpop.f32.mrb[0].mxu0
        %v2070 = vadd.f32 0.0, %v2069
        %v2071 = vpop.f32.mrb[0].mxu0
        %v2072 = vadd.f32 0.0, %v2071
        %v2073 = vpop.f32.mrb[0].mxu0
        %v2074 = vadd.f32 0.0, %v2073
        %2075 = vdwg.mxu0
        %2076 = vmatprep.subr.bf16.mxu0 %v1900
        %2077 = vmatpush1.bf16.msra.mxu0 %v1899
        %2078 = vmatprep.subr.bf16.mxu0 %v1902
        %2079 = vmatpush1.bf16.msra.mxu0 %v1901
        %2080 = vmatprep.subr.bf16.mxu0 %v1904
        %2081 = vmatpush1.bf16.msra.mxu0 %v1903
        %2082 = vmatprep.subr.bf16.mxu0 %v1906
        %2083 = vmatpush1.bf16.msra.mxu0 %v1905
        %2084 = vmatprep.subr.bf16.mxu0 %v1908
        %2085 = vmatpush1.bf16.msra.mxu0 %v1907
        %2086 = vmatprep.subr.bf16.mxu0 %v1910
        %2087 = vmatpush1.bf16.msra.mxu0 %v1909
        %2088 = vmatprep.subr.bf16.mxu0 %v1912
        %2089 = vmatpush1.bf16.msra.mxu0 %v1911
        %2090 = vmatprep.subr.bf16.mxu0 %v1914
        %2091 = vmatpush1.bf16.msra.mxu0 %v1913
        %2092 = vmatprep.subr.bf16.mxu0 0
        %2093 = vmatpush1.bf16.msra.mxu0 0
        %2094 = vmatprep.subr.bf16.mxu0 0
        %2095 = vmatpush1.bf16.msra.mxu0 0
        %2096 = vmatprep.subr.bf16.mxu0 0
        %2097 = vmatpush1.bf16.msra.mxu0 0
        %2098 = vmatprep.subr.bf16.mxu0 0
        %2099 = vmatpush1.bf16.msra.mxu0 0
        %2100 = vmatprep.subr.bf16.mxu0 0
        %2101 = vmatpush1.bf16.msra.mxu0 0
        %2102 = vmatprep.subr.bf16.mxu0 0
        %2103 = vmatpush1.bf16.msra.mxu0 0
        %2104 = vmatprep.subr.bf16.mxu0 0
        %2105 = vmatpush1.bf16.msra.mxu0 0
        %2106 = vmatprep.subr.bf16.mxu0 0
        %2107 = vmatpush1.bf16.msra.mxu0 0
        %2108 = vmatprep.mubr.bf16.mxu0 0
        %2109 = vmatmul.mubr.bf16.gmra.mrb[0].mxu0 %v745
        %v2110 = vpop.f32.mrb[0].mxu0
        %v2111 = vadd.f32 %v1998, %v2110
        %v2112 = vpop.f32.mrb[0].mxu0
        %v2113 = vadd.f32 %v2000, %v2112
        %v2114 = vpop.f32.mrb[0].mxu0
        %v2115 = vadd.f32 %v2002, %v2114
        %v2116 = vpop.f32.mrb[0].mxu0
        %v2117 = vadd.f32 %v2004, %v2116
        %2118 = vmatprep.mubr.bf16.mxu0 0
        %2119 = vmatmul.mubr.bf16.gmra.mrb[0].mxu0 %v748
        %v2120 = vpop.f32.mrb[0].mxu0
        %v2121 = vadd.f32 %v2008, %v2120
        %v2122 = vpop.f32.mrb[0].mxu0
        %v2123 = vadd.f32 %v2010, %v2122
        %v2124 = vpop.f32.mrb[0].mxu0
        %v2125 = vadd.f32 %v2012, %v2124
        %v2126 = vpop.f32.mrb[0].mxu0
        %v2127 = vadd.f32 %v2014, %v2126
        %2128 = vmatprep.mubr.bf16.mxu0 0
        %2129 = vmatmul.mubr.bf16.gmra.mrb[0].mxu0 %v751
        %v2130 = vpop.f32.mrb[0].mxu0
        %v2131 = vadd.f32 %v2018, %v2130
        %v2132 = vpop.f32.mrb[0].mxu0
        %v2133 = vadd.f32 %v2020, %v2132
        %v2134 = vpop.f32.mrb[0].mxu0
        %v2135 = vadd.f32 %v2022, %v2134
        %v2136 = vpop.f32.mrb[0].mxu0
        %v2137 = vadd.f32 %v2024, %v2136
        %2138 = vmatprep.mubr.bf16.mxu0 0
        %2139 = vmatmul.mubr.bf16.gmra.mrb[0].mxu0 %v754
        %v2140 = vpop.f32.mrb[0].mxu0
        %v2141 = vadd.f32 %v2028, %v2140
        %v2142 = vpop.f32.mrb[0].mxu0
        %v2143 = vadd.f32 %v2030, %v2142
        %v2144 = vpop.f32.mrb[0].mxu0
        %v2145 = vadd.f32 %v2032, %v2144
        %v2146 = vpop.f32.mrb[0].mxu0
        %v2147 = vadd.f32 %v2034, %v2146
        %2148 = vmatprep.mubr.bf16.mxu0 0
        %2149 = vmatmul.mubr.bf16.gmra.mrb[0].mxu0 %v757
        %v2150 = vpop.f32.mrb[0].mxu0
        %v2151 = vadd.f32 %v2038, %v2150
        %v2152 = vpop.f32.mrb[0].mxu0
        %v2153 = vadd.f32 %v2040, %v2152
        %v2154 = vpop.f32.mrb[0].mxu0
        %v2155 = vadd.f32 %v2042, %v2154
        %v2156 = vpop.f32.mrb[0].mxu0
        %v2157 = vadd.f32 %v2044, %v2156
        %2158 = vmatprep.mubr.bf16.mxu0 0
        %2159 = vmatmul.mubr.bf16.gmra.mrb[0].mxu0 %v760
        %v2160 = vpop.f32.mrb[0].mxu0
        %v2161 = vadd.f32 %v2048, %v2160
        %v2162 = vpop.f32.mrb[0].mxu0
        %v2163 = vadd.f32 %v2050, %v2162
        %v2164 = vpop.f32.mrb[0].mxu0
        %v2165 = vadd.f32 %v2052, %v2164
        %v2166 = vpop.f32.mrb[0].mxu0
        %v2167 = vadd.f32 %v2054, %v2166
        %2168 = vmatprep.mubr.bf16.mxu0 0
        %2169 = vmatmul.mubr.bf16.gmra.mrb[0].mxu0 %v763
        %v2170 = vpop.f32.mrb[0].mxu0
        %v2171 = vadd.f32 %v2058, %v2170
        %v2172 = vpop.f32.mrb[0].mxu0
        %v2173 = vadd.f32 %v2060, %v2172
        %v2174 = vpop.f32.mrb[0].mxu0
        %v2175 = vadd.f32 %v2062, %v2174
        %v2176 = vpop.f32.mrb[0].mxu0
        %v2177 = vadd.f32 %v2064, %v2176
        %2178 = vmatprep.mubr.bf16.mxu0 0
        %2179 = vmatmul.mubr.bf16.gmra.mrb[0].mxu0 %v766
        %v2180 = vpop.f32.mrb[0].mxu0
        %v2181 = vadd.f32 %v2068, %v2180
        %v2182 = vpop.f32.mrb[0].mxu0
        %v2183 = vadd.f32 %v2070, %v2182
        %v2184 = vpop.f32.mrb[0].mxu0
        %v2185 = vadd.f32 %v2072, %v2184
        %v2186 = vpop.f32.mrb[0].mxu0
        %v2187 = vadd.f32 %v2074, %v2186
        %2188 = vdwg.mxu0
        %v2237 = vunpack.c.l.b16 %v374
        %v2238 = vunpack.c.h.b16 %v374
        %v2239 = vunpack.c.l.b16 %v375
        %v2240 = vunpack.c.h.b16 %v375
        %v2241 = vunpack.c.l.b16 %v376
        %v2242 = vunpack.c.h.b16 %v376
        %v2243 = vunpack.c.l.b16 %v377
        %v2244 = vunpack.c.h.b16 %v377
        %v2245 = vunpack.c.l.b16 %v378
        %v2246 = vunpack.c.h.b16 %v378
        %v2247 = vunpack.c.l.b16 %v379
        %v2248 = vunpack.c.h.b16 %v379
        %v2249 = vunpack.c.l.b16 %v380
        %v2250 = vunpack.c.h.b16 %v380
        %v2251 = vunpack.c.l.b16 %v381
        %v2252 = vunpack.c.h.b16 %v381
        %v2253 = vunpack.c.l.b16 %v382
        %v2254 = vunpack.c.h.b16 %v382
        %v2255 = vunpack.c.l.b16 %v383
        %v2256 = vunpack.c.h.b16 %v383
        %v2257 = vunpack.c.l.b16 %v384
        %v2258 = vunpack.c.h.b16 %v384
        %v2259 = vunpack.c.l.b16 %v385
        %v2260 = vunpack.c.h.b16 %v385
        %v2261 = vunpack.c.l.b16 %v386
        %v2262 = vunpack.c.h.b16 %v386
        %v2263 = vunpack.c.l.b16 %v387
        %v2264 = vunpack.c.h.b16 %v387
        %v2265 = vunpack.c.l.b16 %v388
        %v2266 = vunpack.c.h.b16 %v388
        %v2267 = vunpack.c.l.b16 %v389
        %v2268 = vunpack.c.h.b16 %v389
        %v2269 = vunpack.c.l.b16 %v390
        %v2270 = vunpack.c.h.b16 %v390
        %v2271 = vunpack.c.l.b16 %v391
        %v2272 = vunpack.c.h.b16 %v391
        %v2273 = vunpack.c.l.b16 %v392
        %v2274 = vunpack.c.h.b16 %v392
        %v2275 = vunpack.c.l.b16 %v393
        %v2276 = vunpack.c.h.b16 %v393
        %v2277 = vunpack.c.l.b16 %v394
        %v2278 = vunpack.c.h.b16 %v394
        %v2279 = vunpack.c.l.b16 %v395
        %v2280 = vunpack.c.h.b16 %v395
        %v2281 = vunpack.c.l.b16 %v396
        %v2282 = vunpack.c.h.b16 %v396
        %v2283 = vunpack.c.l.b16 %v397
        %v2284 = vunpack.c.h.b16 %v397
        %v2285 = vunpack.c.l.b16 %v398
        %v2286 = vunpack.c.h.b16 %v398
        %v2287 = vunpack.c.l.b16 %v399
        %v2288 = vunpack.c.h.b16 %v399
        %v2289 = vunpack.c.l.b16 %v400
        %v2290 = vunpack.c.h.b16 %v400
        %v2291 = vunpack.c.l.b16 %v401
        %v2292 = vunpack.c.h.b16 %v401
        %v2293 = vunpack.c.l.b16 %v402
        %v2294 = vunpack.c.h.b16 %v402
        %v2295 = vunpack.c.l.b16 %v403
        %v2296 = vunpack.c.h.b16 %v403
        %v2297 = vunpack.c.l.b16 %v404
        %v2298 = vunpack.c.h.b16 %v404
        %v2299 = vunpack.c.l.b16 %v405
        %v2300 = vunpack.c.h.b16 %v405
        %v2301 = vunpack.c.l.b16 %v406
        %v2302 = vunpack.c.h.b16 %v406
        %v2303 = vunpack.c.l.b16 %v407
        %v2304 = vunpack.c.h.b16 %v407
        %v2305 = vunpack.c.l.b16 %v408
        %v2306 = vunpack.c.h.b16 %v408
        %v2307 = vunpack.c.l.b16 %v409
        %v2308 = vunpack.c.h.b16 %v409
        %v2309 = vunpack.c.l.b16 %v410
        %v2310 = vunpack.c.h.b16 %v410
        %v2311 = vunpack.c.l.b16 %v411
        %v2312 = vunpack.c.h.b16 %v411
        %v2313 = vunpack.c.l.b16 %v412
        %v2314 = vunpack.c.h.b16 %v412
        %v2315 = vunpack.c.l.b16 %v413
        %v2316 = vunpack.c.h.b16 %v413
        %v2317 = vunpack.c.l.b16 %v414
        %v2318 = vunpack.c.h.b16 %v414
        %v2319 = vunpack.c.l.b16 %v415
        %v2320 = vunpack.c.h.b16 %v415
        %v2321 = vunpack.c.l.b16 %v416
        %v2322 = vunpack.c.h.b16 %v416
        %v2323 = vunpack.c.l.b16 %v417
        %v2324 = vunpack.c.h.b16 %v417
        %v2325 = vunpack.c.l.b16 %v418
        %v2326 = vunpack.c.h.b16 %v418
        %v2327 = vunpack.c.l.b16 %v419
        %v2328 = vunpack.c.h.b16 %v419
        %v2329 = vunpack.c.l.b16 %v420
        %v2330 = vunpack.c.h.b16 %v420
        %v2331 = vunpack.c.l.b16 %v421
        %v2332 = vunpack.c.h.b16 %v421
        %v2333 = vpack.c.b16 %v2239, %v2237
        %v2334 = vpack.c.b16 %v2240, %v2238
        %v2335 = vpack.c.b16 %v2243, %v2241
        %v2336 = vpack.c.b16 %v2244, %v2242
        %v2337 = vpack.c.b16 %v2247, %v2245
        %v2338 = vpack.c.b16 %v2248, %v2246
        %v2339 = vpack.c.b16 %v2251, %v2249
        %v2340 = vpack.c.b16 %v2252, %v2250
        %v2341 = vpack.c.b16 %v2255, %v2253
        %v2342 = vpack.c.b16 %v2256, %v2254
        %v2343 = vpack.c.b16 %v2259, %v2257
        %v2344 = vpack.c.b16 %v2260, %v2258
        %v2345 = vpack.c.b16 %v2263, %v2261
        %v2346 = vpack.c.b16 %v2264, %v2262
        %v2347 = vpack.c.b16 %v2267, %v2265
        %v2348 = vpack.c.b16 %v2268, %v2266
        %v2349 = vpack.c.b16 %v2271, %v2269
        %v2350 = vpack.c.b16 %v2272, %v2270
        %v2351 = vpack.c.b16 %v2275, %v2273
        %v2352 = vpack.c.b16 %v2276, %v2274
        %v2353 = vpack.c.b16 %v2279, %v2277
        %v2354 = vpack.c.b16 %v2280, %v2278
        %v2355 = vpack.c.b16 %v2283, %v2281
        %v2356 = vpack.c.b16 %v2284, %v2282
        %v2357 = vpack.c.b16 %v2287, %v2285
        %v2358 = vpack.c.b16 %v2288, %v2286
        %v2359 = vpack.c.b16 %v2291, %v2289
        %v2360 = vpack.c.b16 %v2292, %v2290
        %v2361 = vpack.c.b16 %v2295, %v2293
        %v2362 = vpack.c.b16 %v2296, %v2294
        %v2363 = vpack.c.b16 %v2299, %v2297
        %v2364 = vpack.c.b16 %v2300, %v2298
        %v2365 = vpack.c.b16 %v2303, %v2301
        %v2366 = vpack.c.b16 %v2304, %v2302
        %v2367 = vpack.c.b16 %v2307, %v2305
        %v2368 = vpack.c.b16 %v2308, %v2306
        %v2369 = vpack.c.b16 %v2311, %v2309
        %v2370 = vpack.c.b16 %v2312, %v2310
        %v2371 = vpack.c.b16 %v2315, %v2313
        %v2372 = vpack.c.b16 %v2316, %v2314
        %v2373 = vpack.c.b16 %v2319, %v2317
        %v2374 = vpack.c.b16 %v2320, %v2318
        %v2375 = vpack.c.b16 %v2323, %v2321
        %v2376 = vpack.c.b16 %v2324, %v2322
        %v2377 = vpack.c.b16 %v2327, %v2325
        %v2378 = vpack.c.b16 %v2328, %v2326
        %v2379 = vpack.c.b16 %v2331, %v2329
        %v2380 = vpack.c.b16 %v2332, %v2330
        %2429 = vmatprep.subr.bf16.mxu0 %v2334
        %2430 = vmatpush1.bf16.msra.mxu0 %v2333
        %2431 = vmatprep.subr.bf16.mxu0 %v2336
        %2432 = vmatpush1.bf16.msra.mxu0 %v2335
        %2433 = vmatprep.subr.bf16.mxu0 %v2338
        %2434 = vmatpush1.bf16.msra.mxu0 %v2337
        %2435 = vmatprep.subr.bf16.mxu0 %v2340
        %2436 = vmatpush1.bf16.msra.mxu0 %v2339
        %2437 = vmatprep.subr.bf16.mxu0 %v2342
        %2438 = vmatpush1.bf16.msra.mxu0 %v2341
        %2439 = vmatprep.subr.bf16.mxu0 %v2344
        %2440 = vmatpush1.bf16.msra.mxu0 %v2343
        %2441 = vmatprep.subr.bf16.mxu0 %v2346
        %2442 = vmatpush1.bf16.msra.mxu0 %v2345
        %2443 = vmatprep.subr.bf16.mxu0 %v2348
        %2444 = vmatpush1.bf16.msra.mxu0 %v2347
        %2445 = vmatprep.subr.bf16.mxu0 %v2350
        %2446 = vmatpush1.bf16.msra.mxu0 %v2349
        %2447 = vmatprep.subr.bf16.mxu0 %v2352
        %2448 = vmatpush1.bf16.msra.mxu0 %v2351
        %2449 = vmatprep.subr.bf16.mxu0 %v2354
        %2450 = vmatpush1.bf16.msra.mxu0 %v2353
        %2451 = vmatprep.subr.bf16.mxu0 %v2356
        %2452 = vmatpush1.bf16.msra.mxu0 %v2355
        %2453 = vmatprep.subr.bf16.mxu0 %v2358
        %2454 = vmatpush1.bf16.msra.mxu0 %v2357
        %2455 = vmatprep.subr.bf16.mxu0 %v2360
        %2456 = vmatpush1.bf16.msra.mxu0 %v2359
        %2457 = vmatprep.subr.bf16.mxu0 %v2362
        %2458 = vmatpush1.bf16.msra.mxu0 %v2361
        %2459 = vmatprep.subr.bf16.mxu0 %v2364
        %2460 = vmatpush1.bf16.msra.mxu0 %v2363
        %2461 = vmatprep.mubr.bf16.mxu0 %v744
        %2462 = vmatmul.mubr.bf16.gmra.mrb[0].mxu0 %v743
        %v2463 = vpop.f32.mrb[0].mxu0
        %v2464 = vadd.f32 0.0, %v2463
        %v2465 = vpop.f32.mrb[0].mxu0
        %v2466 = vadd.f32 0.0, %v2465
        %v2467 = vpop.f32.mrb[0].mxu0
        %v2468 = vadd.f32 0.0, %v2467
        %v2469 = vpop.f32.mrb[0].mxu0
        %v2470 = vadd.f32 0.0, %v2469
        %2471 = vmatprep.mubr.bf16.mxu0 %v747
        %2472 = vmatmul.mubr.bf16.gmra.mrb[0].mxu0 %v746
        %v2473 = vpop.f32.mrb[0].mxu0
        %v2474 = vadd.f32 0.0, %v2473
        %v2475 = vpop.f32.mrb[0].mxu0
        %v2476 = vadd.f32 0.0, %v2475
        %v2477 = vpop.f32.mrb[0].mxu0
        %v2478 = vadd.f32 0.0, %v2477
        %v2479 = vpop.f32.mrb[0].mxu0
        %v2480 = vadd.f32 0.0, %v2479
        %2481 = vmatprep.mubr.bf16.mxu0 %v750
        %2482 = vmatmul.mubr.bf16.gmra.mrb[0].mxu0 %v749
        %v2483 = vpop.f32.mrb[0].mxu0
        %v2484 = vadd.f32 0.0, %v2483
        %v2485 = vpop.f32.mrb[0].mxu0
        %v2486 = vadd.f32 0.0, %v2485
        %v2487 = vpop.f32.mrb[0].mxu0
        %v2488 = vadd.f32 0.0, %v2487
        %v2489 = vpop.f32.mrb[0].mxu0
        %v2490 = vadd.f32 0.0, %v2489
        %2491 = vmatprep.mubr.bf16.mxu0 %v753
        %2492 = vmatmul.mubr.bf16.gmra.mrb[0].mxu0 %v752
        %v2493 = vpop.f32.mrb[0].mxu0
        %v2494 = vadd.f32 0.0, %v2493
        %v2495 = vpop.f32.mrb[0].mxu0
        %v2496 = vadd.f32 0.0, %v2495
        %v2497 = vpop.f32.mrb[0].mxu0
        %v2498 = vadd.f32 0.0, %v2497
        %v2499 = vpop.f32.mrb[0].mxu0
        %v2500 = vadd.f32 0.0, %v2499
        %2501 = vmatprep.mubr.bf16.mxu0 %v756
        %2502 = vmatmul.mubr.bf16.gmra.mrb[0].mxu0 %v755
        %v2503 = vpop.f32.mrb[0].mxu0
        %v2504 = vadd.f32 0.0, %v2503
        %v2505 = vpop.f32.mrb[0].mxu0
        %v2506 = vadd.f32 0.0, %v2505
        %v2507 = vpop.f32.mrb[0].mxu0
        %v2508 = vadd.f32 0.0, %v2507
        %v2509 = vpop.f32.mrb[0].mxu0
        %v2510 = vadd.f32 0.0, %v2509
        %2511 = vmatprep.mubr.bf16.mxu0 %v759
        %2512 = vmatmul.mubr.bf16.gmra.mrb[0].mxu0 %v758
        %v2513 = vpop.f32.mrb[0].mxu0
        %v2514 = vadd.f32 0.0, %v2513
        %v2515 = vpop.f32.mrb[0].mxu0
        %v2516 = vadd.f32 0.0, %v2515
        %v2517 = vpop.f32.mrb[0].mxu0
        %v2518 = vadd.f32 0.0, %v2517
        %v2519 = vpop.f32.mrb[0].mxu0
        %v2520 = vadd.f32 0.0, %v2519
        %2521 = vmatprep.mubr.bf16.mxu0 %v762
        %2522 = vmatmul.mubr.bf16.gmra.mrb[0].mxu0 %v761
        %v2523 = vpop.f32.mrb[0].mxu0
        %v2524 = vadd.f32 0.0, %v2523
        %v2525 = vpop.f32.mrb[0].mxu0
        %v2526 = vadd.f32 0.0, %v2525
        %v2527 = vpop.f32.mrb[0].mxu0
        %v2528 = vadd.f32 0.0, %v2527
        %v2529 = vpop.f32.mrb[0].mxu0
        %v2530 = vadd.f32 0.0, %v2529
        %2531 = vmatprep.mubr.bf16.mxu0 %v765
        %2532 = vmatmul.mubr.bf16.gmra.mrb[0].mxu0 %v764
        %v2533 = vpop.f32.mrb[0].mxu0
        %v2534 = vadd.f32 0.0, %v2533
        %v2535 = vpop.f32.mrb[0].mxu0
        %v2536 = vadd.f32 0.0, %v2535
        %v2537 = vpop.f32.mrb[0].mxu0
        %v2538 = vadd.f32 0.0, %v2537
        %v2539 = vpop.f32.mrb[0].mxu0
        %v2540 = vadd.f32 0.0, %v2539
        %2541 = vdwg.mxu0
        %2542 = vmatprep.subr.bf16.mxu0 %v2366
        %2543 = vmatpush1.bf16.msra.mxu0 %v2365
        %2544 = vmatprep.subr.bf16.mxu0 %v2368
        %2545 = vmatpush1.bf16.msra.mxu0 %v2367
        %2546 = vmatprep.subr.bf16.mxu0 %v2370
        %2547 = vmatpush1.bf16.msra.mxu0 %v2369
        %2548 = vmatprep.subr.bf16.mxu0 %v2372
        %2549 = vmatpush1.bf16.msra.mxu0 %v2371
        %2550 = vmatprep.subr.bf16.mxu0 %v2374
        %2551 = vmatpush1.bf16.msra.mxu0 %v2373
        %2552 = vmatprep.subr.bf16.mxu0 %v2376
        %2553 = vmatpush1.bf16.msra.mxu0 %v2375
        %2554 = vmatprep.subr.bf16.mxu0 %v2378
        %2555 = vmatpush1.bf16.msra.mxu0 %v2377
        %2556 = vmatprep.subr.bf16.mxu0 %v2380
        %2557 = vmatpush1.bf16.msra.mxu0 %v2379
        %2558 = vmatprep.subr.bf16.mxu0 0
        %2559 = vmatpush1.bf16.msra.mxu0 0
        %2560 = vmatprep.subr.bf16.mxu0 0
        %2561 = vmatpush1.bf16.msra.mxu0 0
        %2562 = vmatprep.subr.bf16.mxu0 0
        %2563 = vmatpush1.bf16.msra.mxu0 0
        %2564 = vmatprep.subr.bf16.mxu0 0
        %2565 = vmatpush1.bf16.msra.mxu0 0
        %2566 = vmatprep.subr.bf16.mxu0 0
        %2567 = vmatpush1.bf16.msra.mxu0 0
        %2568 = vmatprep.subr.bf16.mxu0 0
        %2569 = vmatpush1.bf16.msra.mxu0 0
        %2570 = vmatprep.subr.bf16.mxu0 0
        %2571 = vmatpush1.bf16.msra.mxu0 0
        %2572 = vmatprep.subr.bf16.mxu0 0
        %2573 = vmatpush1.bf16.msra.mxu0 0
        %2574 = vmatprep.mubr.bf16.mxu0 0
        %2575 = vmatmul.mubr.bf16.gmra.mrb[0].mxu0 %v745
        %v2576 = vpop.f32.mrb[0].mxu0
        %v2577 = vadd.f32 %v2464, %v2576
        %v2578 = vpop.f32.mrb[0].mxu0
        %v2579 = vadd.f32 %v2466, %v2578
        %v2580 = vpop.f32.mrb[0].mxu0
        %v2581 = vadd.f32 %v2468, %v2580
        %v2582 = vpop.f32.mrb[0].mxu0
        %v2583 = vadd.f32 %v2470, %v2582
        %2584 = vmatprep.mubr.bf16.mxu0 0
        %2585 = vmatmul.mubr.bf16.gmra.mrb[0].mxu0 %v748
        %v2586 = vpop.f32.mrb[0].mxu0
        %v2587 = vadd.f32 %v2474, %v2586
        %v2588 = vpop.f32.mrb[0].mxu0
        %v2589 = vadd.f32 %v2476, %v2588
        %v2590 = vpop.f32.mrb[0].mxu0
        %v2591 = vadd.f32 %v2478, %v2590
        %v2592 = vpop.f32.mrb[0].mxu0
        %v2593 = vadd.f32 %v2480, %v2592
        %2594 = vmatprep.mubr.bf16.mxu0 0
        %2595 = vmatmul.mubr.bf16.gmra.mrb[0].mxu0 %v751
        %v2596 = vpop.f32.mrb[0].mxu0
        %v2597 = vadd.f32 %v2484, %v2596
        %v2598 = vpop.f32.mrb[0].mxu0
        %v2599 = vadd.f32 %v2486, %v2598
        %v2600 = vpop.f32.mrb[0].mxu0
        %v2601 = vadd.f32 %v2488, %v2600
        %v2602 = vpop.f32.mrb[0].mxu0
        %v2603 = vadd.f32 %v2490, %v2602
        %2604 = vmatprep.mubr.bf16.mxu0 0
        %2605 = vmatmul.mubr.bf16.gmra.mrb[0].mxu0 %v754
        %v2606 = vpop.f32.mrb[0].mxu0
        %v2607 = vadd.f32 %v2494, %v2606
        %v2608 = vpop.f32.mrb[0].mxu0
        %v2609 = vadd.f32 %v2496, %v2608
        %v2610 = vpop.f32.mrb[0].mxu0
        %v2611 = vadd.f32 %v2498, %v2610
        %v2612 = vpop.f32.mrb[0].mxu0
        %v2613 = vadd.f32 %v2500, %v2612
        %2614 = vmatprep.mubr.bf16.mxu0 0
        %2615 = vmatmul.mubr.bf16.gmra.mrb[0].mxu0 %v757
        %v2616 = vpop.f32.mrb[0].mxu0
        %v2617 = vadd.f32 %v2504, %v2616
        %v2618 = vpop.f32.mrb[0].mxu0
        %v2619 = vadd.f32 %v2506, %v2618
        %v2620 = vpop.f32.mrb[0].mxu0
        %v2621 = vadd.f32 %v2508, %v2620
        %v2622 = vpop.f32.mrb[0].mxu0
        %v2623 = vadd.f32 %v2510, %v2622
        %2624 = vmatprep.mubr.bf16.mxu0 0
        %2625 = vmatmul.mubr.bf16.gmra.mrb[0].mxu0 %v760
        %v2626 = vpop.f32.mrb[0].mxu0
        %v2627 = vadd.f32 %v2514, %v2626
        %v2628 = vpop.f32.mrb[0].mxu0
        %v2629 = vadd.f32 %v2516, %v2628
        %v2630 = vpop.f32.mrb[0].mxu0
        %v2631 = vadd.f32 %v2518, %v2630
        %v2632 = vpop.f32.mrb[0].mxu0
        %v2633 = vadd.f32 %v2520, %v2632
        %2634 = vmatprep.mubr.bf16.mxu0 0
        %2635 = vmatmul.mubr.bf16.gmra.mrb[0].mxu0 %v763
        %v2636 = vpop.f32.mrb[0].mxu0
        %v2637 = vadd.f32 %v2524, %v2636
        %v2638 = vpop.f32.mrb[0].mxu0
        %v2639 = vadd.f32 %v2526, %v2638
        %v2640 = vpop.f32.mrb[0].mxu0
        %v2641 = vadd.f32 %v2528, %v2640
        %v2642 = vpop.f32.mrb[0].mxu0
        %v2643 = vadd.f32 %v2530, %v2642
        %2644 = vmatprep.mubr.bf16.mxu0 0
        %2645 = vmatmul.mubr.bf16.gmra.mrb[0].mxu0 %v766
        %v2646 = vpop.f32.mrb[0].mxu0
        %v2647 = vadd.f32 %v2534, %v2646
        %v2648 = vpop.f32.mrb[0].mxu0
        %v2649 = vadd.f32 %v2536, %v2648
        %v2650 = vpop.f32.mrb[0].mxu0
        %v2651 = vadd.f32 %v2538, %v2650
        %v2652 = vpop.f32.mrb[0].mxu0
        %v2653 = vadd.f32 %v2540, %v2652
        %2654 = vdwg.mxu0
        %v2703 = vunpack.c.l.b16 %v422
        %v2704 = vunpack.c.h.b16 %v422
        %v2705 = vunpack.c.l.b16 %v423
        %v2706 = vunpack.c.h.b16 %v423
        %v2707 = vunpack.c.l.b16 %v424
        %v2708 = vunpack.c.h.b16 %v424
        %v2709 = vunpack.c.l.b16 %v425
        %v2710 = vunpack.c.h.b16 %v425
        %v2711 = vunpack.c.l.b16 %v426
        %v2712 = vunpack.c.h.b16 %v426
        %v2713 = vunpack.c.l.b16 %v427
        %v2714 = vunpack.c.h.b16 %v427
        %v2715 = vunpack.c.l.b16 %v428
        %v2716 = vunpack.c.h.b16 %v428
        %v2717 = vunpack.c.l.b16 %v429
        %v2718 = vunpack.c.h.b16 %v429
        %v2719 = vunpack.c.l.b16 %v430
        %v2720 = vunpack.c.h.b16 %v430
        %v2721 = vunpack.c.l.b16 %v431
        %v2722 = vunpack.c.h.b16 %v431
        %v2723 = vunpack.c.l.b16 %v432
        %v2724 = vunpack.c.h.b16 %v432
        %v2725 = vunpack.c.l.b16 %v433
        %v2726 = vunpack.c.h.b16 %v433
        %v2727 = vunpack.c.l.b16 %v434
        %v2728 = vunpack.c.h.b16 %v434
        %v2729 = vunpack.c.l.b16 %v435
        %v2730 = vunpack.c.h.b16 %v435
        %v2731 = vunpack.c.l.b16 %v436
        %v2732 = vunpack.c.h.b16 %v436
        %v2733 = vunpack.c.l.b16 %v437
        %v2734 = vunpack.c.h.b16 %v437
        %v2735 = vunpack.c.l.b16 %v438
        %v2736 = vunpack.c.h.b16 %v438
        %v2737 = vunpack.c.l.b16 %v439
        %v2738 = vunpack.c.h.b16 %v439
        %v2739 = vunpack.c.l.b16 %v440
        %v2740 = vunpack.c.h.b16 %v440
        %v2741 = vunpack.c.l.b16 %v441
        %v2742 = vunpack.c.h.b16 %v441
        %v2743 = vunpack.c.l.b16 %v442
        %v2744 = vunpack.c.h.b16 %v442
        %v2745 = vunpack.c.l.b16 %v443
        %v2746 = vunpack.c.h.b16 %v443
        %v2747 = vunpack.c.l.b16 %v444
        %v2748 = vunpack.c.h.b16 %v444
        %v2749 = vunpack.c.l.b16 %v445
        %v2750 = vunpack.c.h.b16 %v445
        %v2751 = vunpack.c.l.b16 %v446
        %v2752 = vunpack.c.h.b16 %v446
        %v2753 = vunpack.c.l.b16 %v447
        %v2754 = vunpack.c.h.b16 %v447
        %v2755 = vunpack.c.l.b16 %v448
        %v2756 = vunpack.c.h.b16 %v448
        %v2757 = vunpack.c.l.b16 %v449
        %v2758 = vunpack.c.h.b16 %v449
        %v2759 = vunpack.c.l.b16 %v450
        %v2760 = vunpack.c.h.b16 %v450
        %v2761 = vunpack.c.l.b16 %v451
        %v2762 = vunpack.c.h.b16 %v451
        %v2763 = vunpack.c.l.b16 %v452
        %v2764 = vunpack.c.h.b16 %v452
        %v2765 = vunpack.c.l.b16 %v453
        %v2766 = vunpack.c.h.b16 %v453
        %v2767 = vunpack.c.l.b16 %v454
        %v2768 = vunpack.c.h.b16 %v454
        %v2769 = vunpack.c.l.b16 %v455
        %v2770 = vunpack.c.h.b16 %v455
        %v2771 = vunpack.c.l.b16 %v456
        %v2772 = vunpack.c.h.b16 %v456
        %v2773 = vunpack.c.l.b16 %v457
        %v2774 = vunpack.c.h.b16 %v457
        %v2775 = vunpack.c.l.b16 %v458
        %v2776 = vunpack.c.h.b16 %v458
        %v2777 = vunpack.c.l.b16 %v459
        %v2778 = vunpack.c.h.b16 %v459
        %v2779 = vunpack.c.l.b16 %v460
        %v2780 = vunpack.c.h.b16 %v460
        %v2781 = vunpack.c.l.b16 %v461
        %v2782 = vunpack.c.h.b16 %v461
        %v2783 = vunpack.c.l.b16 %v462
        %v2784 = vunpack.c.h.b16 %v462
        %v2785 = vunpack.c.l.b16 %v463
        %v2786 = vunpack.c.h.b16 %v463
        %v2787 = vunpack.c.l.b16 %v464
        %v2788 = vunpack.c.h.b16 %v464
        %v2789 = vunpack.c.l.b16 %v465
        %v2790 = vunpack.c.h.b16 %v465
        %v2791 = vunpack.c.l.b16 %v466
        %v2792 = vunpack.c.h.b16 %v466
        %v2793 = vunpack.c.l.b16 %v467
        %v2794 = vunpack.c.h.b16 %v467
        %v2795 = vunpack.c.l.b16 %v468
        %v2796 = vunpack.c.h.b16 %v468
        %v2797 = vunpack.c.l.b16 %v469
        %v2798 = vunpack.c.h.b16 %v469
        %v2799 = vpack.c.b16 %v2705, %v2703
        %v2800 = vpack.c.b16 %v2706, %v2704
        %v2801 = vpack.c.b16 %v2709, %v2707
        %v2802 = vpack.c.b16 %v2710, %v2708
        %v2803 = vpack.c.b16 %v2713, %v2711
        %v2804 = vpack.c.b16 %v2714, %v2712
        %v2805 = vpack.c.b16 %v2717, %v2715
        %v2806 = vpack.c.b16 %v2718, %v2716
        %v2807 = vpack.c.b16 %v2721, %v2719
        %v2808 = vpack.c.b16 %v2722, %v2720
        %v2809 = vpack.c.b16 %v2725, %v2723
        %v2810 = vpack.c.b16 %v2726, %v2724
        %v2811 = vpack.c.b16 %v2729, %v2727
        %v2812 = vpack.c.b16 %v2730, %v2728
        %v2813 = vpack.c.b16 %v2733, %v2731
        %v2814 = vpack.c.b16 %v2734, %v2732
        %v2815 = vpack.c.b16 %v2737, %v2735
        %v2816 = vpack.c.b16 %v2738, %v2736
        %v2817 = vpack.c.b16 %v2741, %v2739
        %v2818 = vpack.c.b16 %v2742, %v2740
        %v2819 = vpack.c.b16 %v2745, %v2743
        %v2820 = vpack.c.b16 %v2746, %v2744
        %v2821 = vpack.c.b16 %v2749, %v2747
        %v2822 = vpack.c.b16 %v2750, %v2748
        %v2823 = vpack.c.b16 %v2753, %v2751
        %v2824 = vpack.c.b16 %v2754, %v2752
        %v2825 = vpack.c.b16 %v2757, %v2755
        %v2826 = vpack.c.b16 %v2758, %v2756
        %v2827 = vpack.c.b16 %v2761, %v2759
        %v2828 = vpack.c.b16 %v2762, %v2760
        %v2829 = vpack.c.b16 %v2765, %v2763
        %v2830 = vpack.c.b16 %v2766, %v2764
        %v2831 = vpack.c.b16 %v2769, %v2767
        %v2832 = vpack.c.b16 %v2770, %v2768
        %v2833 = vpack.c.b16 %v2773, %v2771
        %v2834 = vpack.c.b16 %v2774, %v2772
        %v2835 = vpack.c.b16 %v2777, %v2775
        %v2836 = vpack.c.b16 %v2778, %v2776
        %v2837 = vpack.c.b16 %v2781, %v2779
        %v2838 = vpack.c.b16 %v2782, %v2780
        %v2839 = vpack.c.b16 %v2785, %v2783
        %v2840 = vpack.c.b16 %v2786, %v2784
        %v2841 = vpack.c.b16 %v2789, %v2787
        %v2842 = vpack.c.b16 %v2790, %v2788
        %v2843 = vpack.c.b16 %v2793, %v2791
        %v2844 = vpack.c.b16 %v2794, %v2792
        %v2845 = vpack.c.b16 %v2797, %v2795
        %v2846 = vpack.c.b16 %v2798, %v2796
        %2895 = vmatprep.subr.bf16.mxu0 %v2800
        %2896 = vmatpush1.bf16.msra.mxu0 %v2799
        %2897 = vmatprep.subr.bf16.mxu0 %v2802
        %2898 = vmatpush1.bf16.msra.mxu0 %v2801
        %2899 = vmatprep.subr.bf16.mxu0 %v2804
        %2900 = vmatpush1.bf16.msra.mxu0 %v2803
        %2901 = vmatprep.subr.bf16.mxu0 %v2806
        %2902 = vmatpush1.bf16.msra.mxu0 %v2805
        %2903 = vmatprep.subr.bf16.mxu0 %v2808
        %2904 = vmatpush1.bf16.msra.mxu0 %v2807
        %2905 = vmatprep.subr.bf16.mxu0 %v2810
        %2906 = vmatpush1.bf16.msra.mxu0 %v2809
        %2907 = vmatprep.subr.bf16.mxu0 %v2812
        %2908 = vmatpush1.bf16.msra.mxu0 %v2811
        %2909 = vmatprep.subr.bf16.mxu0 %v2814
        %2910 = vmatpush1.bf16.msra.mxu0 %v2813
        %2911 = vmatprep.subr.bf16.mxu0 %v2816
        %2912 = vmatpush1.bf16.msra.mxu0 %v2815
        %2913 = vmatprep.subr.bf16.mxu0 %v2818
        %2914 = vmatpush1.bf16.msra.mxu0 %v2817
        %2915 = vmatprep.subr.bf16.mxu0 %v2820
        %2916 = vmatpush1.bf16.msra.mxu0 %v2819
        %2917 = vmatprep.subr.bf16.mxu0 %v2822
        %2918 = vmatpush1.bf16.msra.mxu0 %v2821
        %2919 = vmatprep.subr.bf16.mxu0 %v2824
        %2920 = vmatpush1.bf16.msra.mxu0 %v2823
        %2921 = vmatprep.subr.bf16.mxu0 %v2826
        %2922 = vmatpush1.bf16.msra.mxu0 %v2825
        %2923 = vmatprep.subr.bf16.mxu0 %v2828
        %2924 = vmatpush1.bf16.msra.mxu0 %v2827
        %2925 = vmatprep.subr.bf16.mxu0 %v2830
        %2926 = vmatpush1.bf16.msra.mxu0 %v2829
        %2927 = vmatprep.mubr.bf16.mxu0 %v744
        %2928 = vmatmul.mubr.bf16.gmra.mrb[0].mxu0 %v743
        %v2929 = vpop.f32.mrb[0].mxu0
        %v2930 = vadd.f32 0.0, %v2929
        %v2931 = vpop.f32.mrb[0].mxu0
        %v2932 = vadd.f32 0.0, %v2931
        %v2933 = vpop.f32.mrb[0].mxu0
        %v2934 = vadd.f32 0.0, %v2933
        %v2935 = vpop.f32.mrb[0].mxu0
        %v2936 = vadd.f32 0.0, %v2935
        %2937 = vmatprep.mubr.bf16.mxu0 %v747
        %2938 = vmatmul.mubr.bf16.gmra.mrb[0].mxu0 %v746
        %v2939 = vpop.f32.mrb[0].mxu0
        %v2940 = vadd.f32 0.0, %v2939
        %v2941 = vpop.f32.mrb[0].mxu0
        %v2942 = vadd.f32 0.0, %v2941
        %v2943 = vpop.f32.mrb[0].mxu0
        %v2944 = vadd.f32 0.0, %v2943
        %v2945 = vpop.f32.mrb[0].mxu0
        %v2946 = vadd.f32 0.0, %v2945
        %2947 = vmatprep.mubr.bf16.mxu0 %v750
        %2948 = vmatmul.mubr.bf16.gmra.mrb[0].mxu0 %v749
        %v2949 = vpop.f32.mrb[0].mxu0
        %v2950 = vadd.f32 0.0, %v2949
        %v2951 = vpop.f32.mrb[0].mxu0
        %v2952 = vadd.f32 0.0, %v2951
        %v2953 = vpop.f32.mrb[0].mxu0
        %v2954 = vadd.f32 0.0, %v2953
        %v2955 = vpop.f32.mrb[0].mxu0
        %v2956 = vadd.f32 0.0, %v2955
        %2957 = vmatprep.mubr.bf16.mxu0 %v753
        %2958 = vmatmul.mubr.bf16.gmra.mrb[0].mxu0 %v752
        %v2959 = vpop.f32.mrb[0].mxu0
        %v2960 = vadd.f32 0.0, %v2959
        %v2961 = vpop.f32.mrb[0].mxu0
        %v2962 = vadd.f32 0.0, %v2961
        %v2963 = vpop.f32.mrb[0].mxu0
        %v2964 = vadd.f32 0.0, %v2963
        %v2965 = vpop.f32.mrb[0].mxu0
        %v2966 = vadd.f32 0.0, %v2965
        %2967 = vmatprep.mubr.bf16.mxu0 %v756
        %2968 = vmatmul.mubr.bf16.gmra.mrb[0].mxu0 %v755
        %v2969 = vpop.f32.mrb[0].mxu0
        %v2970 = vadd.f32 0.0, %v2969
        %v2971 = vpop.f32.mrb[0].mxu0
        %v2972 = vadd.f32 0.0, %v2971
        %v2973 = vpop.f32.mrb[0].mxu0
        %v2974 = vadd.f32 0.0, %v2973
        %v2975 = vpop.f32.mrb[0].mxu0
        %v2976 = vadd.f32 0.0, %v2975
        %2977 = vmatprep.mubr.bf16.mxu0 %v759
        %2978 = vmatmul.mubr.bf16.gmra.mrb[0].mxu0 %v758
        %v2979 = vpop.f32.mrb[0].mxu0
        %v2980 = vadd.f32 0.0, %v2979
        %v2981 = vpop.f32.mrb[0].mxu0
        %v2982 = vadd.f32 0.0, %v2981
        %v2983 = vpop.f32.mrb[0].mxu0
        %v2984 = vadd.f32 0.0, %v2983
        %v2985 = vpop.f32.mrb[0].mxu0
        %v2986 = vadd.f32 0.0, %v2985
        %2987 = vmatprep.mubr.bf16.mxu0 %v762
        %2988 = vmatmul.mubr.bf16.gmra.mrb[0].mxu0 %v761
        %v2989 = vpop.f32.mrb[0].mxu0
        %v2990 = vadd.f32 0.0, %v2989
        %v2991 = vpop.f32.mrb[0].mxu0
        %v2992 = vadd.f32 0.0, %v2991
        %v2993 = vpop.f32.mrb[0].mxu0
        %v2994 = vadd.f32 0.0, %v2993
        %v2995 = vpop.f32.mrb[0].mxu0
        %v2996 = vadd.f32 0.0, %v2995
        %2997 = vmatprep.mubr.bf16.mxu0 %v765
        %2998 = vmatmul.mubr.bf16.gmra.mrb[0].mxu0 %v764
        %v2999 = vpop.f32.mrb[0].mxu0
        %v3000 = vadd.f32 0.0, %v2999
        %v3001 = vpop.f32.mrb[0].mxu0
        %v3002 = vadd.f32 0.0, %v3001
        %v3003 = vpop.f32.mrb[0].mxu0
        %v3004 = vadd.f32 0.0, %v3003
        %v3005 = vpop.f32.mrb[0].mxu0
        %v3006 = vadd.f32 0.0, %v3005
        %3007 = vdwg.mxu0
        %3008 = vmatprep.subr.bf16.mxu0 %v2832
        %3009 = vmatpush1.bf16.msra.mxu0 %v2831
        %3010 = vmatprep.subr.bf16.mxu0 %v2834
        %3011 = vmatpush1.bf16.msra.mxu0 %v2833
        %3012 = vmatprep.subr.bf16.mxu0 %v2836
        %3013 = vmatpush1.bf16.msra.mxu0 %v2835
        %3014 = vmatprep.subr.bf16.mxu0 %v2838
        %3015 = vmatpush1.bf16.msra.mxu0 %v2837
        %3016 = vmatprep.subr.bf16.mxu0 %v2840
        %3017 = vmatpush1.bf16.msra.mxu0 %v2839
        %3018 = vmatprep.subr.bf16.mxu0 %v2842
        %3019 = vmatpush1.bf16.msra.mxu0 %v2841
        %3020 = vmatprep.subr.bf16.mxu0 %v2844
        %3021 = vmatpush1.bf16.msra.mxu0 %v2843
        %3022 = vmatprep.subr.bf16.mxu0 %v2846
        %3023 = vmatpush1.bf16.msra.mxu0 %v2845
        %3024 = vmatprep.subr.bf16.mxu0 0
        %3025 = vmatpush1.bf16.msra.mxu0 0
        %3026 = vmatprep.subr.bf16.mxu0 0
        %3027 = vmatpush1.bf16.msra.mxu0 0
        %3028 = vmatprep.subr.bf16.mxu0 0
        %3029 = vmatpush1.bf16.msra.mxu0 0
        %3030 = vmatprep.subr.bf16.mxu0 0
        %3031 = vmatpush1.bf16.msra.mxu0 0
        %3032 = vmatprep.subr.bf16.mxu0 0
        %3033 = vmatpush1.bf16.msra.mxu0 0
        %3034 = vmatprep.subr.bf16.mxu0 0
        %3035 = vmatpush1.bf16.msra.mxu0 0
        %3036 = vmatprep.subr.bf16.mxu0 0
        %3037 = vmatpush1.bf16.msra.mxu0 0
        %3038 = vmatprep.subr.bf16.mxu0 0
        %3039 = vmatpush1.bf16.msra.mxu0 0
        %3040 = vmatprep.mubr.bf16.mxu0 0
        %3041 = vmatmul.mubr.bf16.gmra.mrb[0].mxu0 %v745
        %v3042 = vpop.f32.mrb[0].mxu0
        %v3043 = vadd.f32 %v2930, %v3042
        %v3044 = vpop.f32.mrb[0].mxu0
        %v3045 = vadd.f32 %v2932, %v3044
        %v3046 = vpop.f32.mrb[0].mxu0
        %v3047 = vadd.f32 %v2934, %v3046
        %v3048 = vpop.f32.mrb[0].mxu0
        %v3049 = vadd.f32 %v2936, %v3048
        %3050 = vmatprep.mubr.bf16.mxu0 0
        %3051 = vmatmul.mubr.bf16.gmra.mrb[0].mxu0 %v748
        %v3052 = vpop.f32.mrb[0].mxu0
        %v3053 = vadd.f32 %v2940, %v3052
        %v3054 = vpop.f32.mrb[0].mxu0
        %v3055 = vadd.f32 %v2942, %v3054
        %v3056 = vpop.f32.mrb[0].mxu0
        %v3057 = vadd.f32 %v2944, %v3056
        %v3058 = vpop.f32.mrb[0].mxu0
        %v3059 = vadd.f32 %v2946, %v3058
        %3060 = vmatprep.mubr.bf16.mxu0 0
        %3061 = vmatmul.mubr.bf16.gmra.mrb[0].mxu0 %v751
        %v3062 = vpop.f32.mrb[0].mxu0
        %v3063 = vadd.f32 %v2950, %v3062
        %v3064 = vpop.f32.mrb[0].mxu0
        %v3065 = vadd.f32 %v2952, %v3064
        %v3066 = vpop.f32.mrb[0].mxu0
        %v3067 = vadd.f32 %v2954, %v3066
        %v3068 = vpop.f32.mrb[0].mxu0
        %v3069 = vadd.f32 %v2956, %v3068
        %3070 = vmatprep.mubr.bf16.mxu0 0
        %3071 = vmatmul.mubr.bf16.gmra.mrb[0].mxu0 %v754
        %v3072 = vpop.f32.mrb[0].mxu0
        %v3073 = vadd.f32 %v2960, %v3072
        %v3074 = vpop.f32.mrb[0].mxu0
        %v3075 = vadd.f32 %v2962, %v3074
        %v3076 = vpop.f32.mrb[0].mxu0
        %v3077 = vadd.f32 %v2964, %v3076
        %v3078 = vpop.f32.mrb[0].mxu0
        %v3079 = vadd.f32 %v2966, %v3078
        %3080 = vmatprep.mubr.bf16.mxu0 0
        %3081 = vmatmul.mubr.bf16.gmra.mrb[0].mxu0 %v757
        %v3082 = vpop.f32.mrb[0].mxu0
        %v3083 = vadd.f32 %v2970, %v3082
        %v3084 = vpop.f32.mrb[0].mxu0
        %v3085 = vadd.f32 %v2972, %v3084
        %v3086 = vpop.f32.mrb[0].mxu0
        %v3087 = vadd.f32 %v2974, %v3086
        %v3088 = vpop.f32.mrb[0].mxu0
        %v3089 = vadd.f32 %v2976, %v3088
        %3090 = vmatprep.mubr.bf16.mxu0 0
        %3091 = vmatmul.mubr.bf16.gmra.mrb[0].mxu0 %v760
        %v3092 = vpop.f32.mrb[0].mxu0
        %v3093 = vadd.f32 %v2980, %v3092
        %v3094 = vpop.f32.mrb[0].mxu0
        %v3095 = vadd.f32 %v2982, %v3094
        %v3096 = vpop.f32.mrb[0].mxu0
        %v3097 = vadd.f32 %v2984, %v3096
        %v3098 = vpop.f32.mrb[0].mxu0
        %v3099 = vadd.f32 %v2986, %v3098
        %3100 = vmatprep.mubr.bf16.mxu0 0
        %3101 = vmatmul.mubr.bf16.gmra.mrb[0].mxu0 %v763
        %v3102 = vpop.f32.mrb[0].mxu0
        %v3103 = vadd.f32 %v2990, %v3102
        %v3104 = vpop.f32.mrb[0].mxu0
        %v3105 = vadd.f32 %v2992, %v3104
        %v3106 = vpop.f32.mrb[0].mxu0
        %v3107 = vadd.f32 %v2994, %v3106
        %v3108 = vpop.f32.mrb[0].mxu0
        %v3109 = vadd.f32 %v2996, %v3108
        %3110 = vmatprep.mubr.bf16.mxu0 0
        %3111 = vmatmul.mubr.bf16.gmra.mrb[0].mxu0 %v766
        %v3112 = vpop.f32.mrb[0].mxu0
        %v3113 = vadd.f32 %v3000, %v3112
        %v3114 = vpop.f32.mrb[0].mxu0
        %v3115 = vadd.f32 %v3002, %v3114
        %v3116 = vpop.f32.mrb[0].mxu0
        %v3117 = vadd.f32 %v3004, %v3116
        %v3118 = vpop.f32.mrb[0].mxu0
        %v3119 = vadd.f32 %v3006, %v3118
        %3120 = vdwg.mxu0
        %v3169 = vunpack.c.l.b16 %v470
        %v3170 = vunpack.c.h.b16 %v470
        %v3171 = vunpack.c.l.b16 %v471
        %v3172 = vunpack.c.h.b16 %v471
        %v3173 = vunpack.c.l.b16 %v472
        %v3174 = vunpack.c.h.b16 %v472
        %v3175 = vunpack.c.l.b16 %v473
        %v3176 = vunpack.c.h.b16 %v473
        %v3177 = vunpack.c.l.b16 %v474
        %v3178 = vunpack.c.h.b16 %v474
        %v3179 = vunpack.c.l.b16 %v475
        %v3180 = vunpack.c.h.b16 %v475
        %v3181 = vunpack.c.l.b16 %v476
        %v3182 = vunpack.c.h.b16 %v476
        %v3183 = vunpack.c.l.b16 %v477
        %v3184 = vunpack.c.h.b16 %v477
        %v3185 = vunpack.c.l.b16 %v478
        %v3186 = vunpack.c.h.b16 %v478
        %v3187 = vunpack.c.l.b16 %v479
        %v3188 = vunpack.c.h.b16 %v479
        %v3189 = vunpack.c.l.b16 %v480
        %v3190 = vunpack.c.h.b16 %v480
        %v3191 = vunpack.c.l.b16 %v481
        %v3192 = vunpack.c.h.b16 %v481
        %v3193 = vunpack.c.l.b16 %v482
        %v3194 = vunpack.c.h.b16 %v482
        %v3195 = vunpack.c.l.b16 %v483
        %v3196 = vunpack.c.h.b16 %v483
        %v3197 = vunpack.c.l.b16 %v484
        %v3198 = vunpack.c.h.b16 %v484
        %v3199 = vunpack.c.l.b16 %v485
        %v3200 = vunpack.c.h.b16 %v485
        %v3201 = vunpack.c.l.b16 %v486
        %v3202 = vunpack.c.h.b16 %v486
        %v3203 = vunpack.c.l.b16 %v487
        %v3204 = vunpack.c.h.b16 %v487
        %v3205 = vunpack.c.l.b16 %v488
        %v3206 = vunpack.c.h.b16 %v488
        %v3207 = vunpack.c.l.b16 %v489
        %v3208 = vunpack.c.h.b16 %v489
        %v3209 = vunpack.c.l.b16 %v490
        %v3210 = vunpack.c.h.b16 %v490
        %v3211 = vunpack.c.l.b16 %v491
        %v3212 = vunpack.c.h.b16 %v491
        %v3213 = vunpack.c.l.b16 %v492
        %v3214 = vunpack.c.h.b16 %v492
        %v3215 = vunpack.c.l.b16 %v493
        %v3216 = vunpack.c.h.b16 %v493
        %v3217 = vunpack.c.l.b16 %v494
        %v3218 = vunpack.c.h.b16 %v494
        %v3219 = vunpack.c.l.b16 %v495
        %v3220 = vunpack.c.h.b16 %v495
        %v3221 = vunpack.c.l.b16 %v496
        %v3222 = vunpack.c.h.b16 %v496
        %v3223 = vunpack.c.l.b16 %v497
        %v3224 = vunpack.c.h.b16 %v497
        %v3225 = vunpack.c.l.b16 %v498
        %v3226 = vunpack.c.h.b16 %v498
        %v3227 = vunpack.c.l.b16 %v499
        %v3228 = vunpack.c.h.b16 %v499
        %v3229 = vunpack.c.l.b16 %v500
        %v3230 = vunpack.c.h.b16 %v500
        %v3231 = vunpack.c.l.b16 %v501
        %v3232 = vunpack.c.h.b16 %v501
        %v3233 = vunpack.c.l.b16 %v502
        %v3234 = vunpack.c.h.b16 %v502
        %v3235 = vunpack.c.l.b16 %v503
        %v3236 = vunpack.c.h.b16 %v503
        %v3237 = vunpack.c.l.b16 %v504
        %v3238 = vunpack.c.h.b16 %v504
        %v3239 = vunpack.c.l.b16 %v505
        %v3240 = vunpack.c.h.b16 %v505
        %v3241 = vunpack.c.l.b16 %v506
        %v3242 = vunpack.c.h.b16 %v506
        %v3243 = vunpack.c.l.b16 %v507
        %v3244 = vunpack.c.h.b16 %v507
        %v3245 = vunpack.c.l.b16 %v508
        %v3246 = vunpack.c.h.b16 %v508
        %v3247 = vunpack.c.l.b16 %v509
        %v3248 = vunpack.c.h.b16 %v509
        %v3249 = vunpack.c.l.b16 %v510
        %v3250 = vunpack.c.h.b16 %v510
        %v3251 = vunpack.c.l.b16 %v511
        %v3252 = vunpack.c.h.b16 %v511
        %v3253 = vunpack.c.l.b16 %v512
        %v3254 = vunpack.c.h.b16 %v512
        %v3255 = vunpack.c.l.b16 %v513
        %v3256 = vunpack.c.h.b16 %v513
        %v3257 = vunpack.c.l.b16 %v514
        %v3258 = vunpack.c.h.b16 %v514
        %v3259 = vunpack.c.l.b16 %v515
        %v3260 = vunpack.c.h.b16 %v515
        %v3261 = vunpack.c.l.b16 %v516
        %v3262 = vunpack.c.h.b16 %v516
        %v3263 = vunpack.c.l.b16 %v517
        %v3264 = vunpack.c.h.b16 %v517
        %v3265 = vpack.c.b16 %v3171, %v3169
        %v3266 = vpack.c.b16 %v3172, %v3170
        %v3267 = vpack.c.b16 %v3175, %v3173
        %v3268 = vpack.c.b16 %v3176, %v3174
        %v3269 = vpack.c.b16 %v3179, %v3177
        %v3270 = vpack.c.b16 %v3180, %v3178
        %v3271 = vpack.c.b16 %v3183, %v3181
        %v3272 = vpack.c.b16 %v3184, %v3182
        %v3273 = vpack.c.b16 %v3187, %v3185
        %v3274 = vpack.c.b16 %v3188, %v3186
        %v3275 = vpack.c.b16 %v3191, %v3189
        %v3276 = vpack.c.b16 %v3192, %v3190
        %v3277 = vpack.c.b16 %v3195, %v3193
        %v3278 = vpack.c.b16 %v3196, %v3194
        %v3279 = vpack.c.b16 %v3199, %v3197
        %v3280 = vpack.c.b16 %v3200, %v3198
        %v3281 = vpack.c.b16 %v3203, %v3201
        %v3282 = vpack.c.b16 %v3204, %v3202
        %v3283 = vpack.c.b16 %v3207, %v3205
        %v3284 = vpack.c.b16 %v3208, %v3206
        %v3285 = vpack.c.b16 %v3211, %v3209
        %v3286 = vpack.c.b16 %v3212, %v3210
        %v3287 = vpack.c.b16 %v3215, %v3213
        %v3288 = vpack.c.b16 %v3216, %v3214
        %v3289 = vpack.c.b16 %v3219, %v3217
        %v3290 = vpack.c.b16 %v3220, %v3218
        %v3291 = vpack.c.b16 %v3223, %v3221
        %v3292 = vpack.c.b16 %v3224, %v3222
        %v3293 = vpack.c.b16 %v3227, %v3225
        %v3294 = vpack.c.b16 %v3228, %v3226
        %v3295 = vpack.c.b16 %v3231, %v3229
        %v3296 = vpack.c.b16 %v3232, %v3230
        %v3297 = vpack.c.b16 %v3235, %v3233
        %v3298 = vpack.c.b16 %v3236, %v3234
        %v3299 = vpack.c.b16 %v3239, %v3237
        %v3300 = vpack.c.b16 %v3240, %v3238
        %v3301 = vpack.c.b16 %v3243, %v3241
        %v3302 = vpack.c.b16 %v3244, %v3242
        %v3303 = vpack.c.b16 %v3247, %v3245
        %v3304 = vpack.c.b16 %v3248, %v3246
        %v3305 = vpack.c.b16 %v3251, %v3249
        %v3306 = vpack.c.b16 %v3252, %v3250
        %v3307 = vpack.c.b16 %v3255, %v3253
        %v3308 = vpack.c.b16 %v3256, %v3254
        %v3309 = vpack.c.b16 %v3259, %v3257
        %v3310 = vpack.c.b16 %v3260, %v3258
        %v3311 = vpack.c.b16 %v3263, %v3261
        %v3312 = vpack.c.b16 %v3264, %v3262
        %3361 = vmatprep.subr.bf16.mxu0 %v3266
        %3362 = vmatpush1.bf16.msra.mxu0 %v3265
        %3363 = vmatprep.subr.bf16.mxu0 %v3268
        %3364 = vmatpush1.bf16.msra.mxu0 %v3267
        %3365 = vmatprep.subr.bf16.mxu0 %v3270
        %3366 = vmatpush1.bf16.msra.mxu0 %v3269
        %3367 = vmatprep.subr.bf16.mxu0 %v3272
        %3368 = vmatpush1.bf16.msra.mxu0 %v3271
        %3369 = vmatprep.subr.bf16.mxu0 %v3274
        %3370 = vmatpush1.bf16.msra.mxu0 %v3273
        %3371 = vmatprep.subr.bf16.mxu0 %v3276
        %3372 = vmatpush1.bf16.msra.mxu0 %v3275
        %3373 = vmatprep.subr.bf16.mxu0 %v3278
        %3374 = vmatpush1.bf16.msra.mxu0 %v3277
        %3375 = vmatprep.subr.bf16.mxu0 %v3280
        %3376 = vmatpush1.bf16.msra.mxu0 %v3279
        %3377 = vmatprep.subr.bf16.mxu0 %v3282
        %3378 = vmatpush1.bf16.msra.mxu0 %v3281
        %3379 = vmatprep.subr.bf16.mxu0 %v3284
        %3380 = vmatpush1.bf16.msra.mxu0 %v3283
        %3381 = vmatprep.subr.bf16.mxu0 %v3286
        %3382 = vmatpush1.bf16.msra.mxu0 %v3285
        %3383 = vmatprep.subr.bf16.mxu0 %v3288
        %3384 = vmatpush1.bf16.msra.mxu0 %v3287
        %3385 = vmatprep.subr.bf16.mxu0 %v3290
        %3386 = vmatpush1.bf16.msra.mxu0 %v3289
        %3387 = vmatprep.subr.bf16.mxu0 %v3292
        %3388 = vmatpush1.bf16.msra.mxu0 %v3291
        %3389 = vmatprep.subr.bf16.mxu0 %v3294
        %3390 = vmatpush1.bf16.msra.mxu0 %v3293
        %3391 = vmatprep.subr.bf16.mxu0 %v3296
        %3392 = vmatpush1.bf16.msra.mxu0 %v3295
        %3393 = vmatprep.mubr.bf16.mxu0 %v744
        %3394 = vmatmul.mubr.bf16.gmra.mrb[0].mxu0 %v743
        %v3395 = vpop.f32.mrb[0].mxu0
        %v3396 = vadd.f32 0.0, %v3395
        %v3397 = vpop.f32.mrb[0].mxu0
        %v3398 = vadd.f32 0.0, %v3397
        %v3399 = vpop.f32.mrb[0].mxu0
        %v3400 = vadd.f32 0.0, %v3399
        %v3401 = vpop.f32.mrb[0].mxu0
        %v3402 = vadd.f32 0.0, %v3401
        %3403 = vmatprep.mubr.bf16.mxu0 %v747
        %3404 = vmatmul.mubr.bf16.gmra.mrb[0].mxu0 %v746
        %v3405 = vpop.f32.mrb[0].mxu0
        %v3406 = vadd.f32 0.0, %v3405
        %v3407 = vpop.f32.mrb[0].mxu0
        %v3408 = vadd.f32 0.0, %v3407
        %v3409 = vpop.f32.mrb[0].mxu0
        %v3410 = vadd.f32 0.0, %v3409
        %v3411 = vpop.f32.mrb[0].mxu0
        %v3412 = vadd.f32 0.0, %v3411
        %3413 = vmatprep.mubr.bf16.mxu0 %v750
        %3414 = vmatmul.mubr.bf16.gmra.mrb[0].mxu0 %v749
        %v3415 = vpop.f32.mrb[0].mxu0
        %v3416 = vadd.f32 0.0, %v3415
        %v3417 = vpop.f32.mrb[0].mxu0
        %v3418 = vadd.f32 0.0, %v3417
        %v3419 = vpop.f32.mrb[0].mxu0
        %v3420 = vadd.f32 0.0, %v3419
        %v3421 = vpop.f32.mrb[0].mxu0
        %v3422 = vadd.f32 0.0, %v3421
        %3423 = vmatprep.mubr.bf16.mxu0 %v753
        %3424 = vmatmul.mubr.bf16.gmra.mrb[0].mxu0 %v752
        %v3425 = vpop.f32.mrb[0].mxu0
        %v3426 = vadd.f32 0.0, %v3425
        %v3427 = vpop.f32.mrb[0].mxu0
        %v3428 = vadd.f32 0.0, %v3427
        %v3429 = vpop.f32.mrb[0].mxu0
        %v3430 = vadd.f32 0.0, %v3429
        %v3431 = vpop.f32.mrb[0].mxu0
        %v3432 = vadd.f32 0.0, %v3431
        %3433 = vmatprep.mubr.bf16.mxu0 %v756
        %3434 = vmatmul.mubr.bf16.gmra.mrb[0].mxu0 %v755
        %v3435 = vpop.f32.mrb[0].mxu0
        %v3436 = vadd.f32 0.0, %v3435
        %v3437 = vpop.f32.mrb[0].mxu0
        %v3438 = vadd.f32 0.0, %v3437
        %v3439 = vpop.f32.mrb[0].mxu0
        %v3440 = vadd.f32 0.0, %v3439
        %v3441 = vpop.f32.mrb[0].mxu0
        %v3442 = vadd.f32 0.0, %v3441
        %3443 = vmatprep.mubr.bf16.mxu0 %v759
        %3444 = vmatmul.mubr.bf16.gmra.mrb[0].mxu0 %v758
        %v3445 = vpop.f32.mrb[0].mxu0
        %v3446 = vadd.f32 0.0, %v3445
        %v3447 = vpop.f32.mrb[0].mxu0
        %v3448 = vadd.f32 0.0, %v3447
        %v3449 = vpop.f32.mrb[0].mxu0
        %v3450 = vadd.f32 0.0, %v3449
        %v3451 = vpop.f32.mrb[0].mxu0
        %v3452 = vadd.f32 0.0, %v3451
        %3453 = vmatprep.mubr.bf16.mxu0 %v762
        %3454 = vmatmul.mubr.bf16.gmra.mrb[0].mxu0 %v761
        %v3455 = vpop.f32.mrb[0].mxu0
        %v3456 = vadd.f32 0.0, %v3455
        %v3457 = vpop.f32.mrb[0].mxu0
        %v3458 = vadd.f32 0.0, %v3457
        %v3459 = vpop.f32.mrb[0].mxu0
        %v3460 = vadd.f32 0.0, %v3459
        %v3461 = vpop.f32.mrb[0].mxu0
        %v3462 = vadd.f32 0.0, %v3461
        %3463 = vmatprep.mubr.bf16.mxu0 %v765
        %3464 = vmatmul.mubr.bf16.gmra.mrb[0].mxu0 %v764
        %v3465 = vpop.f32.mrb[0].mxu0
        %v3466 = vadd.f32 0.0, %v3465
        %v3467 = vpop.f32.mrb[0].mxu0
        %v3468 = vadd.f32 0.0, %v3467
        %v3469 = vpop.f32.mrb[0].mxu0
        %v3470 = vadd.f32 0.0, %v3469
        %v3471 = vpop.f32.mrb[0].mxu0
        %v3472 = vadd.f32 0.0, %v3471
        %3473 = vdwg.mxu0
        %3474 = vmatprep.subr.bf16.mxu0 %v3298
        %3475 = vmatpush1.bf16.msra.mxu0 %v3297
        %3476 = vmatprep.subr.bf16.mxu0 %v3300
        %3477 = vmatpush1.bf16.msra.mxu0 %v3299
        %3478 = vmatprep.subr.bf16.mxu0 %v3302
        %3479 = vmatpush1.bf16.msra.mxu0 %v3301
        %3480 = vmatprep.subr.bf16.mxu0 %v3304
        %3481 = vmatpush1.bf16.msra.mxu0 %v3303
        %3482 = vmatprep.subr.bf16.mxu0 %v3306
        %3483 = vmatpush1.bf16.msra.mxu0 %v3305
        %3484 = vmatprep.subr.bf16.mxu0 %v3308
        %3485 = vmatpush1.bf16.msra.mxu0 %v3307
        %3486 = vmatprep.subr.bf16.mxu0 %v3310
        %3487 = vmatpush1.bf16.msra.mxu0 %v3309
        %3488 = vmatprep.subr.bf16.mxu0 %v3312
        %3489 = vmatpush1.bf16.msra.mxu0 %v3311
        %3490 = vmatprep.subr.bf16.mxu0 0
        %3491 = vmatpush1.bf16.msra.mxu0 0
        %3492 = vmatprep.subr.bf16.mxu0 0
        %3493 = vmatpush1.bf16.msra.mxu0 0
        %3494 = vmatprep.subr.bf16.mxu0 0
        %3495 = vmatpush1.bf16.msra.mxu0 0
        %3496 = vmatprep.subr.bf16.mxu0 0
        %3497 = vmatpush1.bf16.msra.mxu0 0
        %3498 = vmatprep.subr.bf16.mxu0 0
        %3499 = vmatpush1.bf16.msra.mxu0 0
        %3500 = vmatprep.subr.bf16.mxu0 0
        %3501 = vmatpush1.bf16.msra.mxu0 0
        %3502 = vmatprep.subr.bf16.mxu0 0
        %3503 = vmatpush1.bf16.msra.mxu0 0
        %3504 = vmatprep.subr.bf16.mxu0 0
        %3505 = vmatpush1.bf16.msra.mxu0 0
        %3506 = vmatprep.mubr.bf16.mxu0 0
        %3507 = vmatmul.mubr.bf16.gmra.mrb[0].mxu0 %v745
        %v3508 = vpop.f32.mrb[0].mxu0
        %v3509 = vadd.f32 %v3396, %v3508
        %v3510 = vpop.f32.mrb[0].mxu0
        %v3511 = vadd.f32 %v3398, %v3510
        %v3512 = vpop.f32.mrb[0].mxu0
        %v3513 = vadd.f32 %v3400, %v3512
        %v3514 = vpop.f32.mrb[0].mxu0
        %v3515 = vadd.f32 %v3402, %v3514
        %3516 = vmatprep.mubr.bf16.mxu0 0
        %3517 = vmatmul.mubr.bf16.gmra.mrb[0].mxu0 %v748
        %v3518 = vpop.f32.mrb[0].mxu0
        %v3519 = vadd.f32 %v3406, %v3518
        %v3520 = vpop.f32.mrb[0].mxu0
        %v3521 = vadd.f32 %v3408, %v3520
        %v3522 = vpop.f32.mrb[0].mxu0
        %v3523 = vadd.f32 %v3410, %v3522
        %v3524 = vpop.f32.mrb[0].mxu0
        %v3525 = vadd.f32 %v3412, %v3524
        %3526 = vmatprep.mubr.bf16.mxu0 0
        %3527 = vmatmul.mubr.bf16.gmra.mrb[0].mxu0 %v751
        %v3528 = vpop.f32.mrb[0].mxu0
        %v3529 = vadd.f32 %v3416, %v3528
        %v3530 = vpop.f32.mrb[0].mxu0
        %v3531 = vadd.f32 %v3418, %v3530
        %v3532 = vpop.f32.mrb[0].mxu0
        %v3533 = vadd.f32 %v3420, %v3532
        %v3534 = vpop.f32.mrb[0].mxu0
        %v3535 = vadd.f32 %v3422, %v3534
        %3536 = vmatprep.mubr.bf16.mxu0 0
        %3537 = vmatmul.mubr.bf16.gmra.mrb[0].mxu0 %v754
        %v3538 = vpop.f32.mrb[0].mxu0
        %v3539 = vadd.f32 %v3426, %v3538
        %v3540 = vpop.f32.mrb[0].mxu0
        %v3541 = vadd.f32 %v3428, %v3540
        %v3542 = vpop.f32.mrb[0].mxu0
        %v3543 = vadd.f32 %v3430, %v3542
        %v3544 = vpop.f32.mrb[0].mxu0
        %v3545 = vadd.f32 %v3432, %v3544
        %3546 = vmatprep.mubr.bf16.mxu0 0
        %3547 = vmatmul.mubr.bf16.gmra.mrb[0].mxu0 %v757
        %v3548 = vpop.f32.mrb[0].mxu0
        %v3549 = vadd.f32 %v3436, %v3548
        %v3550 = vpop.f32.mrb[0].mxu0
        %v3551 = vadd.f32 %v3438, %v3550
        %v3552 = vpop.f32.mrb[0].mxu0
        %v3553 = vadd.f32 %v3440, %v3552
        %v3554 = vpop.f32.mrb[0].mxu0
        %v3555 = vadd.f32 %v3442, %v3554
        %3556 = vmatprep.mubr.bf16.mxu0 0
        %3557 = vmatmul.mubr.bf16.gmra.mrb[0].mxu0 %v760
        %v3558 = vpop.f32.mrb[0].mxu0
        %v3559 = vadd.f32 %v3446, %v3558
        %v3560 = vpop.f32.mrb[0].mxu0
        %v3561 = vadd.f32 %v3448, %v3560
        %v3562 = vpop.f32.mrb[0].mxu0
        %v3563 = vadd.f32 %v3450, %v3562
        %v3564 = vpop.f32.mrb[0].mxu0
        %v3565 = vadd.f32 %v3452, %v3564
        %3566 = vmatprep.mubr.bf16.mxu0 0
        %3567 = vmatmul.mubr.bf16.gmra.mrb[0].mxu0 %v763
        %v3568 = vpop.f32.mrb[0].mxu0
        %v3569 = vadd.f32 %v3456, %v3568
        %v3570 = vpop.f32.mrb[0].mxu0
        %v3571 = vadd.f32 %v3458, %v3570
        %v3572 = vpop.f32.mrb[0].mxu0
        %v3573 = vadd.f32 %v3460, %v3572
        %v3574 = vpop.f32.mrb[0].mxu0
        %v3575 = vadd.f32 %v3462, %v3574
        %3576 = vmatprep.mubr.bf16.mxu0 0
        %3577 = vmatmul.mubr.bf16.gmra.mrb[0].mxu0 %v766
        %v3578 = vpop.f32.mrb[0].mxu0
        %v3579 = vadd.f32 %v3466, %v3578
        %v3580 = vpop.f32.mrb[0].mxu0
        %v3581 = vadd.f32 %v3468, %v3580
        %v3582 = vpop.f32.mrb[0].mxu0
        %v3583 = vadd.f32 %v3470, %v3582
        %v3584 = vpop.f32.mrb[0].mxu0
        %v3585 = vadd.f32 %v3472, %v3584
        %3586 = vdwg.mxu0
        %v3587 = vpack.c.bf16 %v1183, %v1179
        %v3588 = vpack.c.bf16 %v1185, %v1181
        %v3589 = vpack.c.bf16 %v1193, %v1189
        %v3590 = vpack.c.bf16 %v1195, %v1191
        %v3591 = vpack.c.bf16 %v1203, %v1199
        %v3592 = vpack.c.bf16 %v1205, %v1201
        %v3593 = vpack.c.bf16 %v1213, %v1209
        %v3594 = vpack.c.bf16 %v1215, %v1211
        %v3595 = vpack.c.bf16 %v1223, %v1219
        %v3596 = vpack.c.bf16 %v1225, %v1221
        %v3597 = vpack.c.bf16 %v1233, %v1229
        %v3598 = vpack.c.bf16 %v1235, %v1231
        %v3599 = vpack.c.bf16 %v1243, %v1239
        %v3600 = vpack.c.bf16 %v1245, %v1241
        %v3601 = vpack.c.bf16 %v1253, %v1249
        %v3602 = vpack.c.bf16 %v1255, %v1251
        %v3603 = vpack.c.bf16 %v1649, %v1645
        %v3604 = vpack.c.bf16 %v1651, %v1647
        %v3605 = vpack.c.bf16 %v1659, %v1655
        %v3606 = vpack.c.bf16 %v1661, %v1657
        %v3607 = vpack.c.bf16 %v1669, %v1665
        %v3608 = vpack.c.bf16 %v1671, %v1667
        %v3609 = vpack.c.bf16 %v1679, %v1675
        %v3610 = vpack.c.bf16 %v1681, %v1677
        %v3611 = vpack.c.bf16 %v1689, %v1685
        %v3612 = vpack.c.bf16 %v1691, %v1687
        %v3613 = vpack.c.bf16 %v1699, %v1695
        %v3614 = vpack.c.bf16 %v1701, %v1697
        %v3615 = vpack.c.bf16 %v1709, %v1705
        %v3616 = vpack.c.bf16 %v1711, %v1707
        %v3617 = vpack.c.bf16 %v1719, %v1715
        %v3618 = vpack.c.bf16 %v1721, %v1717
        %v3619 = vpack.c.bf16 %v2115, %v2111
        %v3620 = vpack.c.bf16 %v2117, %v2113
        %v3621 = vpack.c.bf16 %v2125, %v2121
        %v3622 = vpack.c.bf16 %v2127, %v2123
        %v3623 = vpack.c.bf16 %v2135, %v2131
        %v3624 = vpack.c.bf16 %v2137, %v2133
        %v3625 = vpack.c.bf16 %v2145, %v2141
        %v3626 = vpack.c.bf16 %v2147, %v2143
        %v3627 = vpack.c.bf16 %v2155, %v2151
        %v3628 = vpack.c.bf16 %v2157, %v2153
        %v3629 = vpack.c.bf16 %v2165, %v2161
        %v3630 = vpack.c.bf16 %v2167, %v2163
        %v3631 = vpack.c.bf16 %v2175, %v2171
        %v3632 = vpack.c.bf16 %v2177, %v2173
        %v3633 = vpack.c.bf16 %v2185, %v2181
        %v3634 = vpack.c.bf16 %v2187, %v2183
        %v3635 = vpack.c.bf16 %v2581, %v2577
        %v3636 = vpack.c.bf16 %v2583, %v2579
        %v3637 = vpack.c.bf16 %v2591, %v2587
        %v3638 = vpack.c.bf16 %v2593, %v2589
        %v3639 = vpack.c.bf16 %v2601, %v2597
        %v3640 = vpack.c.bf16 %v2603, %v2599
        %v3641 = vpack.c.bf16 %v2611, %v2607
        %v3642 = vpack.c.bf16 %v2613, %v2609
        %v3643 = vpack.c.bf16 %v2621, %v2617
        %v3644 = vpack.c.bf16 %v2623, %v2619
        %v3645 = vpack.c.bf16 %v2631, %v2627
        %v3646 = vpack.c.bf16 %v2633, %v2629
        %v3647 = vpack.c.bf16 %v2641, %v2637
        %v3648 = vpack.c.bf16 %v2643, %v2639
        %v3649 = vpack.c.bf16 %v2651, %v2647
        %v3650 = vpack.c.bf16 %v2653, %v2649
        %v3651 = vpack.c.bf16 %v3047, %v3043
        %v3652 = vpack.c.bf16 %v3049, %v3045
        %v3653 = vpack.c.bf16 %v3057, %v3053
        %v3654 = vpack.c.bf16 %v3059, %v3055
        %v3655 = vpack.c.bf16 %v3067, %v3063
        %v3656 = vpack.c.bf16 %v3069, %v3065
        %v3657 = vpack.c.bf16 %v3077, %v3073
        %v3658 = vpack.c.bf16 %v3079, %v3075
        %v3659 = vpack.c.bf16 %v3087, %v3083
        %v3660 = vpack.c.bf16 %v3089, %v3085
        %v3661 = vpack.c.bf16 %v3097, %v3093
        %v3662 = vpack.c.bf16 %v3099, %v3095
        %v3663 = vpack.c.bf16 %v3107, %v3103
        %v3664 = vpack.c.bf16 %v3109, %v3105
        %v3665 = vpack.c.bf16 %v3117, %v3113
        %v3666 = vpack.c.bf16 %v3119, %v3115
        %v3667 = vpack.c.bf16 %v3513, %v3509
        %v3668 = vpack.c.bf16 %v3515, %v3511
        %v3669 = vpack.c.bf16 %v3523, %v3519
        %v3670 = vpack.c.bf16 %v3525, %v3521
        %v3671 = vpack.c.bf16 %v3533, %v3529
        %v3672 = vpack.c.bf16 %v3535, %v3531
        %v3673 = vpack.c.bf16 %v3543, %v3539
        %v3674 = vpack.c.bf16 %v3545, %v3541
        %v3675 = vpack.c.bf16 %v3553, %v3549
        %v3676 = vpack.c.bf16 %v3555, %v3551
        %v3677 = vpack.c.bf16 %v3563, %v3559
        %v3678 = vpack.c.bf16 %v3565, %v3561
        %v3679 = vpack.c.bf16 %v3573, %v3569
        %v3680 = vpack.c.bf16 %v3575, %v3571
        %v3681 = vpack.c.bf16 %v3583, %v3579
        %v3682 = vpack.c.bf16 %v3585, %v3581
        %3691 = vrot.lane.b32.xlu0 %v3587, 64
        %v3692 = vpop.permute.xlu0 %3691
        %3693 = vrot.lane.b32.xlu0 %v3589, 64
        %v3694 = vpop.permute.xlu0 %3693
        %3695 = vrot.lane.b32.xlu0 %v3591, 64
        %v3696 = vpop.permute.xlu0 %3695
        %3697 = vrot.lane.b32.xlu0 %v3593, 64
        %v3698 = vpop.permute.xlu0 %3697
        %3699 = vrot.lane.b32.xlu0 %v3595, 64
        %v3700 = vpop.permute.xlu0 %3699
        %3701 = vrot.lane.b32.xlu0 %v3597, 64
        %v3702 = vpop.permute.xlu0 %3701
        %3703 = vrot.lane.b32.xlu0 %v3599, 64
        %v3704 = vpop.permute.xlu0 %3703
        %3705 = vrot.lane.b32.xlu0 %v3601, 64
        %v3706 = vpop.permute.xlu0 %3705
        %vm3707 = vcmask 523264
        %v3709 = vsel %vm3707, %v3587, 0
        %v3712 = vsel %vm3707, %v3589, 0
        %v3715 = vsel %vm3707, %v3591, 0
        %v3718 = vsel %vm3707, %v3593, 0
        %v3721 = vsel %vm3707, %v3595, 0
        %v3724 = vsel %vm3707, %v3597, 0
        %v3727 = vsel %vm3707, %v3599, 0
        %v3730 = vsel %vm3707, %v3601, 0
        %v3733 = vsel %vm3707, %v3692, 0
        %v3736 = vsel %vm3707, %v3694, 0
        %v3739 = vsel %vm3707, %v3696, 0
        %v3742 = vsel %vm3707, %v3698, 0
        %v3745 = vsel %vm3707, %v3700, 0
        %v3748 = vsel %vm3707, %v3702, 0
        %v3751 = vsel %vm3707, %v3704, 0
        %v3754 = vsel %vm3707, %v3706, 0
        %3756 = vmatprep.subr.bf16.mxu0 0
        %3757 = vmatpush1.bf16.xpose.msra.mxu0 %v3733
        %3758 = vmatprep.subr.bf16.mxu0 0
        %3759 = vmatpush1.bf16.xpose.msra.mxu0 %v3736
        %3760 = vmatprep.subr.bf16.mxu0 0
        %3761 = vmatpush1.bf16.xpose.msra.mxu0 %v3739
        %3762 = vmatprep.subr.bf16.mxu0 0
        %3763 = vmatpush1.bf16.xpose.msra.mxu0 %v3742
        %3764 = vmatprep.subr.bf16.mxu0 0
        %3765 = vmatpush1.bf16.xpose.msra.mxu0 %v3745
        %3766 = vmatprep.subr.bf16.mxu0 0
        %3767 = vmatpush1.bf16.xpose.msra.mxu0 %v3748
        %3768 = vmatprep.subr.bf16.mxu0 0
        %3769 = vmatpush1.bf16.xpose.msra.mxu0 %v3751
        %3770 = vmatprep.subr.bf16.mxu0 0
        %3771 = vmatpush1.bf16.xpose.msra.mxu0 %v3754
        %3772 = vmatprep.subr.bf16.mxu0 0
        %3773 = vmatpush1.bf16.xpose.msra.mxu0 0
        %3774 = vmatprep.subr.bf16.mxu0 0
        %3775 = vmatpush1.bf16.xpose.msra.mxu0 0
        %3776 = vmatprep.subr.bf16.mxu0 0
        %3777 = vmatpush1.bf16.xpose.msra.mxu0 0
        %3778 = vmatprep.subr.bf16.mxu0 0
        %3779 = vmatpush1.bf16.xpose.msra.mxu0 0
        %3780 = vmatprep.subr.bf16.mxu0 0
        %3781 = vmatpush1.bf16.xpose.msra.mxu0 0
        %3782 = vmatprep.subr.bf16.mxu0 0
        %3783 = vmatpush1.bf16.xpose.msra.mxu0 0
        %3784 = vmatprep.subr.bf16.mxu0 0
        %3785 = vmatpush1.bf16.xpose.msra.mxu0 0
        %3786 = vmatprep.subr.bf16.mxu0 0
        %3787 = vmatpush1.bf16.xpose.msra.mxu0 0
        %3788 = vmatprep.mubr.bf16.mxu0 0
        %3789 = vmatmul.mubr.bf16.gmra.mrb[0].mxu0 %v3709
        %v3790 = vpop.f32.mrb[0].mxu0
        %v3791 = vadd.f32 %v615, %v3790
        %v3792 = vpop.f32.mrb[0].mxu0
        %v3793 = vpop.f32.mrb[0].mxu0
        %v3794 = vadd.f32 %v616, %v3793
        %v3795 = vpop.f32.mrb[0].mxu0
        %3796 = vmatprep.mubr.bf16.mxu0 0
        %3797 = vmatmul.mubr.bf16.gmra.mrb[0].mxu0 %v3712
        %v3798 = vpop.f32.mrb[0].mxu0
        %v3799 = vadd.f32 %v617, %v3798
        %v3800 = vpop.f32.mrb[0].mxu0
        %v3801 = vpop.f32.mrb[0].mxu0
        %v3802 = vadd.f32 %v618, %v3801
        %v3803 = vpop.f32.mrb[0].mxu0
        %3804 = vmatprep.mubr.bf16.mxu0 0
        %3805 = vmatmul.mubr.bf16.gmra.mrb[0].mxu0 %v3715
        %v3806 = vpop.f32.mrb[0].mxu0
        %v3807 = vadd.f32 %v619, %v3806
        %v3808 = vpop.f32.mrb[0].mxu0
        %v3809 = vpop.f32.mrb[0].mxu0
        %v3810 = vadd.f32 %v620, %v3809
        %v3811 = vpop.f32.mrb[0].mxu0
        %3812 = vmatprep.mubr.bf16.mxu0 0
        %3813 = vmatmul.mubr.bf16.gmra.mrb[0].mxu0 %v3718
        %v3814 = vpop.f32.mrb[0].mxu0
        %v3815 = vadd.f32 %v621, %v3814
        %v3816 = vpop.f32.mrb[0].mxu0
        %v3817 = vpop.f32.mrb[0].mxu0
        %v3818 = vadd.f32 %v622, %v3817
        %v3819 = vpop.f32.mrb[0].mxu0
        %3820 = vmatprep.mubr.bf16.mxu0 0
        %3821 = vmatmul.mubr.bf16.gmra.mrb[0].mxu0 %v3721
        %v3822 = vpop.f32.mrb[0].mxu0
        %v3823 = vadd.f32 %v623, %v3822
        %v3824 = vpop.f32.mrb[0].mxu0
        %v3825 = vpop.f32.mrb[0].mxu0
        %v3826 = vadd.f32 %v624, %v3825
        %v3827 = vpop.f32.mrb[0].mxu0
        %3828 = vmatprep.mubr.bf16.mxu0 0
        %3829 = vmatmul.mubr.bf16.gmra.mrb[0].mxu0 %v3724
        %v3830 = vpop.f32.mrb[0].mxu0
        %v3831 = vadd.f32 %v625, %v3830
        %v3832 = vpop.f32.mrb[0].mxu0
        %v3833 = vpop.f32.mrb[0].mxu0
        %v3834 = vadd.f32 %v626, %v3833
        %v3835 = vpop.f32.mrb[0].mxu0
        %3836 = vmatprep.mubr.bf16.mxu0 0
        %3837 = vmatmul.mubr.bf16.gmra.mrb[0].mxu0 %v3727
        %v3838 = vpop.f32.mrb[0].mxu0
        %v3839 = vadd.f32 %v627, %v3838
        %v3840 = vpop.f32.mrb[0].mxu0
        %v3841 = vpop.f32.mrb[0].mxu0
        %v3842 = vadd.f32 %v628, %v3841
        %v3843 = vpop.f32.mrb[0].mxu0
        %3844 = vmatprep.mubr.bf16.mxu0 0
        %3845 = vmatmul.mubr.bf16.gmra.mrb[0].mxu0 %v3730
        %v3846 = vpop.f32.mrb[0].mxu0
        %v3847 = vadd.f32 %v629, %v3846
        %v3848 = vpop.f32.mrb[0].mxu0
        %v3849 = vpop.f32.mrb[0].mxu0
        %v3850 = vadd.f32 %v630, %v3849
        %v3851 = vpop.f32.mrb[0].mxu0
        %3852 = vdwg.mxu0
        %3861 = vrot.lane.b32.xlu0 %v3603, 64
        %v3862 = vpop.permute.xlu0 %3861
        %3863 = vrot.lane.b32.xlu0 %v3605, 64
        %v3864 = vpop.permute.xlu0 %3863
        %3865 = vrot.lane.b32.xlu0 %v3607, 64
        %v3866 = vpop.permute.xlu0 %3865
        %3867 = vrot.lane.b32.xlu0 %v3609, 64
        %v3868 = vpop.permute.xlu0 %3867
        %3869 = vrot.lane.b32.xlu0 %v3611, 64
        %v3870 = vpop.permute.xlu0 %3869
        %3871 = vrot.lane.b32.xlu0 %v3613, 64
        %v3872 = vpop.permute.xlu0 %3871
        %3873 = vrot.lane.b32.xlu0 %v3615, 64
        %v3874 = vpop.permute.xlu0 %3873
        %3875 = vrot.lane.b32.xlu0 %v3617, 64
        %v3876 = vpop.permute.xlu0 %3875
        %v3878 = vsel %vm3707, %v3603, 0
        %v3881 = vsel %vm3707, %v3605, 0
        %v3884 = vsel %vm3707, %v3607, 0
        %v3887 = vsel %vm3707, %v3609, 0
        %v3890 = vsel %vm3707, %v3611, 0
        %v3893 = vsel %vm3707, %v3613, 0
        %v3896 = vsel %vm3707, %v3615, 0
        %v3899 = vsel %vm3707, %v3617, 0
        %v3902 = vsel %vm3707, %v3862, 0
        %v3905 = vsel %vm3707, %v3864, 0
        %v3908 = vsel %vm3707, %v3866, 0
        %v3911 = vsel %vm3707, %v3868, 0
        %v3914 = vsel %vm3707, %v3870, 0
        %v3917 = vsel %vm3707, %v3872, 0
        %v3920 = vsel %vm3707, %v3874, 0
        %v3923 = vsel %vm3707, %v3876, 0
        %3925 = vmatprep.subr.bf16.mxu0 0
        %3926 = vmatpush1.bf16.xpose.msra.mxu0 %v3902
        %3927 = vmatprep.subr.bf16.mxu0 0
        %3928 = vmatpush1.bf16.xpose.msra.mxu0 %v3905
        %3929 = vmatprep.subr.bf16.mxu0 0
        %3930 = vmatpush1.bf16.xpose.msra.mxu0 %v3908
        %3931 = vmatprep.subr.bf16.mxu0 0
        %3932 = vmatpush1.bf16.xpose.msra.mxu0 %v3911
        %3933 = vmatprep.subr.bf16.mxu0 0
        %3934 = vmatpush1.bf16.xpose.msra.mxu0 %v3914
        %3935 = vmatprep.subr.bf16.mxu0 0
        %3936 = vmatpush1.bf16.xpose.msra.mxu0 %v3917
        %3937 = vmatprep.subr.bf16.mxu0 0
        %3938 = vmatpush1.bf16.xpose.msra.mxu0 %v3920
        %3939 = vmatprep.subr.bf16.mxu0 0
        %3940 = vmatpush1.bf16.xpose.msra.mxu0 %v3923
        %3941 = vmatprep.subr.bf16.mxu0 0
        %3942 = vmatpush1.bf16.xpose.msra.mxu0 0
        %3943 = vmatprep.subr.bf16.mxu0 0
        %3944 = vmatpush1.bf16.xpose.msra.mxu0 0
        %3945 = vmatprep.subr.bf16.mxu0 0
        %3946 = vmatpush1.bf16.xpose.msra.mxu0 0
        %3947 = vmatprep.subr.bf16.mxu0 0
        %3948 = vmatpush1.bf16.xpose.msra.mxu0 0
        %3949 = vmatprep.subr.bf16.mxu0 0
        %3950 = vmatpush1.bf16.xpose.msra.mxu0 0
        %3951 = vmatprep.subr.bf16.mxu0 0
        %3952 = vmatpush1.bf16.xpose.msra.mxu0 0
        %3953 = vmatprep.subr.bf16.mxu0 0
        %3954 = vmatpush1.bf16.xpose.msra.mxu0 0
        %3955 = vmatprep.subr.bf16.mxu0 0
        %3956 = vmatpush1.bf16.xpose.msra.mxu0 0
        %3957 = vmatprep.mubr.bf16.mxu0 0
        %3958 = vmatmul.mubr.bf16.gmra.mrb[0].mxu0 %v3878
        %v3959 = vpop.f32.mrb[0].mxu0
        %v3960 = vadd.f32 %v615, %v3959
        %v3961 = vpop.f32.mrb[0].mxu0
        %v3962 = vpop.f32.mrb[0].mxu0
        %v3963 = vadd.f32 %v616, %v3962
        %v3964 = vpop.f32.mrb[0].mxu0
        %3965 = vmatprep.mubr.bf16.mxu0 0
        %3966 = vmatmul.mubr.bf16.gmra.mrb[0].mxu0 %v3881
        %v3967 = vpop.f32.mrb[0].mxu0
        %v3968 = vadd.f32 %v617, %v3967
        %v3969 = vpop.f32.mrb[0].mxu0
        %v3970 = vpop.f32.mrb[0].mxu0
        %v3971 = vadd.f32 %v618, %v3970
        %v3972 = vpop.f32.mrb[0].mxu0
        %3973 = vmatprep.mubr.bf16.mxu0 0
        %3974 = vmatmul.mubr.bf16.gmra.mrb[0].mxu0 %v3884
        %v3975 = vpop.f32.mrb[0].mxu0
        %v3976 = vadd.f32 %v619, %v3975
        %v3977 = vpop.f32.mrb[0].mxu0
        %v3978 = vpop.f32.mrb[0].mxu0
        %v3979 = vadd.f32 %v620, %v3978
        %v3980 = vpop.f32.mrb[0].mxu0
        %3981 = vmatprep.mubr.bf16.mxu0 0
        %3982 = vmatmul.mubr.bf16.gmra.mrb[0].mxu0 %v3887
        %v3983 = vpop.f32.mrb[0].mxu0
        %v3984 = vadd.f32 %v621, %v3983
        %v3985 = vpop.f32.mrb[0].mxu0
        %v3986 = vpop.f32.mrb[0].mxu0
        %v3987 = vadd.f32 %v622, %v3986
        %v3988 = vpop.f32.mrb[0].mxu0
        %3989 = vmatprep.mubr.bf16.mxu0 0
        %3990 = vmatmul.mubr.bf16.gmra.mrb[0].mxu0 %v3890
        %v3991 = vpop.f32.mrb[0].mxu0
        %v3992 = vadd.f32 %v623, %v3991
        %v3993 = vpop.f32.mrb[0].mxu0
        %v3994 = vpop.f32.mrb[0].mxu0
        %v3995 = vadd.f32 %v624, %v3994
        %v3996 = vpop.f32.mrb[0].mxu0
        %3997 = vmatprep.mubr.bf16.mxu0 0
        %3998 = vmatmul.mubr.bf16.gmra.mrb[0].mxu0 %v3893
        %v3999 = vpop.f32.mrb[0].mxu0
        %v4000 = vadd.f32 %v625, %v3999
        %v4001 = vpop.f32.mrb[0].mxu0
        %v4002 = vpop.f32.mrb[0].mxu0
        %v4003 = vadd.f32 %v626, %v4002
        %v4004 = vpop.f32.mrb[0].mxu0
        %4005 = vmatprep.mubr.bf16.mxu0 0
        %4006 = vmatmul.mubr.bf16.gmra.mrb[0].mxu0 %v3896
        %v4007 = vpop.f32.mrb[0].mxu0
        %v4008 = vadd.f32 %v627, %v4007
        %v4009 = vpop.f32.mrb[0].mxu0
        %v4010 = vpop.f32.mrb[0].mxu0
        %v4011 = vadd.f32 %v628, %v4010
        %v4012 = vpop.f32.mrb[0].mxu0
        %4013 = vmatprep.mubr.bf16.mxu0 0
        %4014 = vmatmul.mubr.bf16.gmra.mrb[0].mxu0 %v3899
        %v4015 = vpop.f32.mrb[0].mxu0
        %v4016 = vadd.f32 %v629, %v4015
        %v4017 = vpop.f32.mrb[0].mxu0
        %v4018 = vpop.f32.mrb[0].mxu0
        %v4019 = vadd.f32 %v630, %v4018
        %v4020 = vpop.f32.mrb[0].mxu0
        %4021 = vdwg.mxu0
        %4030 = vrot.lane.b32.xlu0 %v3619, 64
        %v4031 = vpop.permute.xlu0 %4030
        %4032 = vrot.lane.b32.xlu0 %v3621, 64
        %v4033 = vpop.permute.xlu0 %4032
        %4034 = vrot.lane.b32.xlu0 %v3623, 64
        %v4035 = vpop.permute.xlu0 %4034
        %4036 = vrot.lane.b32.xlu0 %v3625, 64
        %v4037 = vpop.permute.xlu0 %4036
        %4038 = vrot.lane.b32.xlu0 %v3627, 64
        %v4039 = vpop.permute.xlu0 %4038
        %4040 = vrot.lane.b32.xlu0 %v3629, 64
        %v4041 = vpop.permute.xlu0 %4040
        %4042 = vrot.lane.b32.xlu0 %v3631, 64
        %v4043 = vpop.permute.xlu0 %4042
        %4044 = vrot.lane.b32.xlu0 %v3633, 64
        %v4045 = vpop.permute.xlu0 %4044
        %v4047 = vsel %vm3707, %v3619, 0
        %v4050 = vsel %vm3707, %v3621, 0
        %v4053 = vsel %vm3707, %v3623, 0
        %v4056 = vsel %vm3707, %v3625, 0
        %v4059 = vsel %vm3707, %v3627, 0
        %v4062 = vsel %vm3707, %v3629, 0
        %v4065 = vsel %vm3707, %v3631, 0
        %v4068 = vsel %vm3707, %v3633, 0
        %v4071 = vsel %vm3707, %v4031, 0
        %v4074 = vsel %vm3707, %v4033, 0
        %v4077 = vsel %vm3707, %v4035, 0
        %v4080 = vsel %vm3707, %v4037, 0
        %v4083 = vsel %vm3707, %v4039, 0
        %v4086 = vsel %vm3707, %v4041, 0
        %v4089 = vsel %vm3707, %v4043, 0
        %v4092 = vsel %vm3707, %v4045, 0
        %4094 = vmatprep.subr.bf16.mxu0 0
        %4095 = vmatpush1.bf16.xpose.msra.mxu0 %v4071
        %4096 = vmatprep.subr.bf16.mxu0 0
        %4097 = vmatpush1.bf16.xpose.msra.mxu0 %v4074
        %4098 = vmatprep.subr.bf16.mxu0 0
        %4099 = vmatpush1.bf16.xpose.msra.mxu0 %v4077
        %4100 = vmatprep.subr.bf16.mxu0 0
        %4101 = vmatpush1.bf16.xpose.msra.mxu0 %v4080
        %4102 = vmatprep.subr.bf16.mxu0 0
        %4103 = vmatpush1.bf16.xpose.msra.mxu0 %v4083
        %4104 = vmatprep.subr.bf16.mxu0 0
        %4105 = vmatpush1.bf16.xpose.msra.mxu0 %v4086
        %4106 = vmatprep.subr.bf16.mxu0 0
        %4107 = vmatpush1.bf16.xpose.msra.mxu0 %v4089
        %4108 = vmatprep.subr.bf16.mxu0 0
        %4109 = vmatpush1.bf16.xpose.msra.mxu0 %v4092
        %4110 = vmatprep.subr.bf16.mxu0 0
        %4111 = vmatpush1.bf16.xpose.msra.mxu0 0
        %4112 = vmatprep.subr.bf16.mxu0 0
        %4113 = vmatpush1.bf16.xpose.msra.mxu0 0
        %4114 = vmatprep.subr.bf16.mxu0 0
        %4115 = vmatpush1.bf16.xpose.msra.mxu0 0
        %4116 = vmatprep.subr.bf16.mxu0 0
        %4117 = vmatpush1.bf16.xpose.msra.mxu0 0
        %4118 = vmatprep.subr.bf16.mxu0 0
        %4119 = vmatpush1.bf16.xpose.msra.mxu0 0
        %4120 = vmatprep.subr.bf16.mxu0 0
        %4121 = vmatpush1.bf16.xpose.msra.mxu0 0
        %4122 = vmatprep.subr.bf16.mxu0 0
        %4123 = vmatpush1.bf16.xpose.msra.mxu0 0
        %4124 = vmatprep.subr.bf16.mxu0 0
        %4125 = vmatpush1.bf16.xpose.msra.mxu0 0
        %4126 = vmatprep.mubr.bf16.mxu0 0
        %4127 = vmatmul.mubr.bf16.gmra.mrb[0].mxu0 %v4047
        %v4128 = vpop.f32.mrb[0].mxu0
        %v4129 = vadd.f32 %v615, %v4128
        %v4130 = vpop.f32.mrb[0].mxu0
        %v4131 = vpop.f32.mrb[0].mxu0
        %v4132 = vadd.f32 %v616, %v4131
        %v4133 = vpop.f32.mrb[0].mxu0
        %4134 = vmatprep.mubr.bf16.mxu0 0
        %4135 = vmatmul.mubr.bf16.gmra.mrb[0].mxu0 %v4050
        %v4136 = vpop.f32.mrb[0].mxu0
        %v4137 = vadd.f32 %v617, %v4136
        %v4138 = vpop.f32.mrb[0].mxu0
        %v4139 = vpop.f32.mrb[0].mxu0
        %v4140 = vadd.f32 %v618, %v4139
        %v4141 = vpop.f32.mrb[0].mxu0
        %4142 = vmatprep.mubr.bf16.mxu0 0
        %4143 = vmatmul.mubr.bf16.gmra.mrb[0].mxu0 %v4053
        %v4144 = vpop.f32.mrb[0].mxu0
        %v4145 = vadd.f32 %v619, %v4144
        %v4146 = vpop.f32.mrb[0].mxu0
        %v4147 = vpop.f32.mrb[0].mxu0
        %v4148 = vadd.f32 %v620, %v4147
        %v4149 = vpop.f32.mrb[0].mxu0
        %4150 = vmatprep.mubr.bf16.mxu0 0
        %4151 = vmatmul.mubr.bf16.gmra.mrb[0].mxu0 %v4056
        %v4152 = vpop.f32.mrb[0].mxu0
        %v4153 = vadd.f32 %v621, %v4152
        %v4154 = vpop.f32.mrb[0].mxu0
        %v4155 = vpop.f32.mrb[0].mxu0
        %v4156 = vadd.f32 %v622, %v4155
        %v4157 = vpop.f32.mrb[0].mxu0
        %4158 = vmatprep.mubr.bf16.mxu0 0
        %4159 = vmatmul.mubr.bf16.gmra.mrb[0].mxu0 %v4059
        %v4160 = vpop.f32.mrb[0].mxu0
        %v4161 = vadd.f32 %v623, %v4160
        %v4162 = vpop.f32.mrb[0].mxu0
        %v4163 = vpop.f32.mrb[0].mxu0
        %v4164 = vadd.f32 %v624, %v4163
        %v4165 = vpop.f32.mrb[0].mxu0
        %4166 = vmatprep.mubr.bf16.mxu0 0
        %4167 = vmatmul.mubr.bf16.gmra.mrb[0].mxu0 %v4062
        %v4168 = vpop.f32.mrb[0].mxu0
        %v4169 = vadd.f32 %v625, %v4168
        %v4170 = vpop.f32.mrb[0].mxu0
        %v4171 = vpop.f32.mrb[0].mxu0
        %v4172 = vadd.f32 %v626, %v4171
        %v4173 = vpop.f32.mrb[0].mxu0
        %4174 = vmatprep.mubr.bf16.mxu0 0
        %4175 = vmatmul.mubr.bf16.gmra.mrb[0].mxu0 %v4065
        %v4176 = vpop.f32.mrb[0].mxu0
        %v4177 = vadd.f32 %v627, %v4176
        %v4178 = vpop.f32.mrb[0].mxu0
        %v4179 = vpop.f32.mrb[0].mxu0
        %v4180 = vadd.f32 %v628, %v4179
        %v4181 = vpop.f32.mrb[0].mxu0
        %4182 = vmatprep.mubr.bf16.mxu0 0
        %4183 = vmatmul.mubr.bf16.gmra.mrb[0].mxu0 %v4068
        %v4184 = vpop.f32.mrb[0].mxu0
        %v4185 = vadd.f32 %v629, %v4184
        %v4186 = vpop.f32.mrb[0].mxu0
        %v4187 = vpop.f32.mrb[0].mxu0
        %v4188 = vadd.f32 %v630, %v4187
        %v4189 = vpop.f32.mrb[0].mxu0
        %4190 = vdwg.mxu0
        %4199 = vrot.lane.b32.xlu0 %v3635, 64
        %v4200 = vpop.permute.xlu0 %4199
        %4201 = vrot.lane.b32.xlu0 %v3637, 64
        %v4202 = vpop.permute.xlu0 %4201
        %4203 = vrot.lane.b32.xlu0 %v3639, 64
        %v4204 = vpop.permute.xlu0 %4203
        %4205 = vrot.lane.b32.xlu0 %v3641, 64
        %v4206 = vpop.permute.xlu0 %4205
        %4207 = vrot.lane.b32.xlu0 %v3643, 64
        %v4208 = vpop.permute.xlu0 %4207
        %4209 = vrot.lane.b32.xlu0 %v3645, 64
        %v4210 = vpop.permute.xlu0 %4209
        %4211 = vrot.lane.b32.xlu0 %v3647, 64
        %v4212 = vpop.permute.xlu0 %4211
        %4213 = vrot.lane.b32.xlu0 %v3649, 64
        %v4214 = vpop.permute.xlu0 %4213
        %v4216 = vsel %vm3707, %v3635, 0
        %v4219 = vsel %vm3707, %v3637, 0
        %v4222 = vsel %vm3707, %v3639, 0
        %v4225 = vsel %vm3707, %v3641, 0
        %v4228 = vsel %vm3707, %v3643, 0
        %v4231 = vsel %vm3707, %v3645, 0
        %v4234 = vsel %vm3707, %v3647, 0
        %v4237 = vsel %vm3707, %v3649, 0
        %v4240 = vsel %vm3707, %v4200, 0
        %v4243 = vsel %vm3707, %v4202, 0
        %v4246 = vsel %vm3707, %v4204, 0
        %v4249 = vsel %vm3707, %v4206, 0
        %v4252 = vsel %vm3707, %v4208, 0
        %v4255 = vsel %vm3707, %v4210, 0
        %v4258 = vsel %vm3707, %v4212, 0
        %v4261 = vsel %vm3707, %v4214, 0
        %4263 = vmatprep.subr.bf16.mxu0 0
        %4264 = vmatpush1.bf16.xpose.msra.mxu0 %v4240
        %4265 = vmatprep.subr.bf16.mxu0 0
        %4266 = vmatpush1.bf16.xpose.msra.mxu0 %v4243
        %4267 = vmatprep.subr.bf16.mxu0 0
        %4268 = vmatpush1.bf16.xpose.msra.mxu0 %v4246
        %4269 = vmatprep.subr.bf16.mxu0 0
        %4270 = vmatpush1.bf16.xpose.msra.mxu0 %v4249
        %4271 = vmatprep.subr.bf16.mxu0 0
        %4272 = vmatpush1.bf16.xpose.msra.mxu0 %v4252
        %4273 = vmatprep.subr.bf16.mxu0 0
        %4274 = vmatpush1.bf16.xpose.msra.mxu0 %v4255
        %4275 = vmatprep.subr.bf16.mxu0 0
        %4276 = vmatpush1.bf16.xpose.msra.mxu0 %v4258
        %4277 = vmatprep.subr.bf16.mxu0 0
        %4278 = vmatpush1.bf16.xpose.msra.mxu0 %v4261
        %4279 = vmatprep.subr.bf16.mxu0 0
        %4280 = vmatpush1.bf16.xpose.msra.mxu0 0
        %4281 = vmatprep.subr.bf16.mxu0 0
        %4282 = vmatpush1.bf16.xpose.msra.mxu0 0
        %4283 = vmatprep.subr.bf16.mxu0 0
        %4284 = vmatpush1.bf16.xpose.msra.mxu0 0
        %4285 = vmatprep.subr.bf16.mxu0 0
        %4286 = vmatpush1.bf16.xpose.msra.mxu0 0
        %4287 = vmatprep.subr.bf16.mxu0 0
        %4288 = vmatpush1.bf16.xpose.msra.mxu0 0
        %4289 = vmatprep.subr.bf16.mxu0 0
        %4290 = vmatpush1.bf16.xpose.msra.mxu0 0
        %4291 = vmatprep.subr.bf16.mxu0 0
        %4292 = vmatpush1.bf16.xpose.msra.mxu0 0
        %4293 = vmatprep.subr.bf16.mxu0 0
        %4294 = vmatpush1.bf16.xpose.msra.mxu0 0
        %4295 = vmatprep.mubr.bf16.mxu0 0
        %4296 = vmatmul.mubr.bf16.gmra.mrb[0].mxu0 %v4216
        %v4297 = vpop.f32.mrb[0].mxu0
        %v4298 = vadd.f32 %v615, %v4297
        %v4299 = vpop.f32.mrb[0].mxu0
        %v4300 = vpop.f32.mrb[0].mxu0
        %v4301 = vadd.f32 %v616, %v4300
        %v4302 = vpop.f32.mrb[0].mxu0
        %4303 = vmatprep.mubr.bf16.mxu0 0
        %4304 = vmatmul.mubr.bf16.gmra.mrb[0].mxu0 %v4219
        %v4305 = vpop.f32.mrb[0].mxu0
        %v4306 = vadd.f32 %v617, %v4305
        %v4307 = vpop.f32.mrb[0].mxu0
        %v4308 = vpop.f32.mrb[0].mxu0
        %v4309 = vadd.f32 %v618, %v4308
        %v4310 = vpop.f32.mrb[0].mxu0
        %4311 = vmatprep.mubr.bf16.mxu0 0
        %4312 = vmatmul.mubr.bf16.gmra.mrb[0].mxu0 %v4222
        %v4313 = vpop.f32.mrb[0].mxu0
        %v4314 = vadd.f32 %v619, %v4313
        %v4315 = vpop.f32.mrb[0].mxu0
        %v4316 = vpop.f32.mrb[0].mxu0
        %v4317 = vadd.f32 %v620, %v4316
        %v4318 = vpop.f32.mrb[0].mxu0
        %4319 = vmatprep.mubr.bf16.mxu0 0
        %4320 = vmatmul.mubr.bf16.gmra.mrb[0].mxu0 %v4225
        %v4321 = vpop.f32.mrb[0].mxu0
        %v4322 = vadd.f32 %v621, %v4321
        %v4323 = vpop.f32.mrb[0].mxu0
        %v4324 = vpop.f32.mrb[0].mxu0
        %v4325 = vadd.f32 %v622, %v4324
        %v4326 = vpop.f32.mrb[0].mxu0
        %4327 = vmatprep.mubr.bf16.mxu0 0
        %4328 = vmatmul.mubr.bf16.gmra.mrb[0].mxu0 %v4228
        %v4329 = vpop.f32.mrb[0].mxu0
        %v4330 = vadd.f32 %v623, %v4329
        %v4331 = vpop.f32.mrb[0].mxu0
        %v4332 = vpop.f32.mrb[0].mxu0
        %v4333 = vadd.f32 %v624, %v4332
        %v4334 = vpop.f32.mrb[0].mxu0
        %4335 = vmatprep.mubr.bf16.mxu0 0
        %4336 = vmatmul.mubr.bf16.gmra.mrb[0].mxu0 %v4231
        %v4337 = vpop.f32.mrb[0].mxu0
        %v4338 = vadd.f32 %v625, %v4337
        %v4339 = vpop.f32.mrb[0].mxu0
        %v4340 = vpop.f32.mrb[0].mxu0
        %v4341 = vadd.f32 %v626, %v4340
        %v4342 = vpop.f32.mrb[0].mxu0
        %4343 = vmatprep.mubr.bf16.mxu0 0
        %4344 = vmatmul.mubr.bf16.gmra.mrb[0].mxu0 %v4234
        %v4345 = vpop.f32.mrb[0].mxu0
        %v4346 = vadd.f32 %v627, %v4345
        %v4347 = vpop.f32.mrb[0].mxu0
        %v4348 = vpop.f32.mrb[0].mxu0
        %v4349 = vadd.f32 %v628, %v4348
        %v4350 = vpop.f32.mrb[0].mxu0
        %4351 = vmatprep.mubr.bf16.mxu0 0
        %4352 = vmatmul.mubr.bf16.gmra.mrb[0].mxu0 %v4237
        %v4353 = vpop.f32.mrb[0].mxu0
        %v4354 = vadd.f32 %v629, %v4353
        %v4355 = vpop.f32.mrb[0].mxu0
        %v4356 = vpop.f32.mrb[0].mxu0
        %v4357 = vadd.f32 %v630, %v4356
        %v4358 = vpop.f32.mrb[0].mxu0
        %4359 = vdwg.mxu0
        %4368 = vrot.lane.b32.xlu0 %v3651, 64
        %v4369 = vpop.permute.xlu0 %4368
        %4370 = vrot.lane.b32.xlu0 %v3653, 64
        %v4371 = vpop.permute.xlu0 %4370
        %4372 = vrot.lane.b32.xlu0 %v3655, 64
        %v4373 = vpop.permute.xlu0 %4372
        %4374 = vrot.lane.b32.xlu0 %v3657, 64
        %v4375 = vpop.permute.xlu0 %4374
        %4376 = vrot.lane.b32.xlu0 %v3659, 64
        %v4377 = vpop.permute.xlu0 %4376
        %4378 = vrot.lane.b32.xlu0 %v3661, 64
        %v4379 = vpop.permute.xlu0 %4378
        %4380 = vrot.lane.b32.xlu0 %v3663, 64
        %v4381 = vpop.permute.xlu0 %4380
        %4382 = vrot.lane.b32.xlu0 %v3665, 64
        %v4383 = vpop.permute.xlu0 %4382
        %v4385 = vsel %vm3707, %v3651, 0
        %v4388 = vsel %vm3707, %v3653, 0
        %v4391 = vsel %vm3707, %v3655, 0
        %v4394 = vsel %vm3707, %v3657, 0
        %v4397 = vsel %vm3707, %v3659, 0
        %v4400 = vsel %vm3707, %v3661, 0
        %v4403 = vsel %vm3707, %v3663, 0
        %v4406 = vsel %vm3707, %v3665, 0
        %v4409 = vsel %vm3707, %v4369, 0
        %v4412 = vsel %vm3707, %v4371, 0
        %v4415 = vsel %vm3707, %v4373, 0
        %v4418 = vsel %vm3707, %v4375, 0
        %v4421 = vsel %vm3707, %v4377, 0
        %v4424 = vsel %vm3707, %v4379, 0
        %v4427 = vsel %vm3707, %v4381, 0
        %v4430 = vsel %vm3707, %v4383, 0
        %4432 = vmatprep.subr.bf16.mxu0 0
        %4433 = vmatpush1.bf16.xpose.msra.mxu0 %v4409
        %4434 = vmatprep.subr.bf16.mxu0 0
        %4435 = vmatpush1.bf16.xpose.msra.mxu0 %v4412
        %4436 = vmatprep.subr.bf16.mxu0 0
        %4437 = vmatpush1.bf16.xpose.msra.mxu0 %v4415
        %4438 = vmatprep.subr.bf16.mxu0 0
        %4439 = vmatpush1.bf16.xpose.msra.mxu0 %v4418
        %4440 = vmatprep.subr.bf16.mxu0 0
        %4441 = vmatpush1.bf16.xpose.msra.mxu0 %v4421
        %4442 = vmatprep.subr.bf16.mxu0 0
        %4443 = vmatpush1.bf16.xpose.msra.mxu0 %v4424
        %4444 = vmatprep.subr.bf16.mxu0 0
        %4445 = vmatpush1.bf16.xpose.msra.mxu0 %v4427
        %4446 = vmatprep.subr.bf16.mxu0 0
        %4447 = vmatpush1.bf16.xpose.msra.mxu0 %v4430
        %4448 = vmatprep.subr.bf16.mxu0 0
        %4449 = vmatpush1.bf16.xpose.msra.mxu0 0
        %4450 = vmatprep.subr.bf16.mxu0 0
        %4451 = vmatpush1.bf16.xpose.msra.mxu0 0
        %4452 = vmatprep.subr.bf16.mxu0 0
        %4453 = vmatpush1.bf16.xpose.msra.mxu0 0
        %4454 = vmatprep.subr.bf16.mxu0 0
        %4455 = vmatpush1.bf16.xpose.msra.mxu0 0
        %4456 = vmatprep.subr.bf16.mxu0 0
        %4457 = vmatpush1.bf16.xpose.msra.mxu0 0
        %4458 = vmatprep.subr.bf16.mxu0 0
        %4459 = vmatpush1.bf16.xpose.msra.mxu0 0
        %4460 = vmatprep.subr.bf16.mxu0 0
        %4461 = vmatpush1.bf16.xpose.msra.mxu0 0
        %4462 = vmatprep.subr.bf16.mxu0 0
        %4463 = vmatpush1.bf16.xpose.msra.mxu0 0
        %4464 = vmatprep.mubr.bf16.mxu0 0
        %4465 = vmatmul.mubr.bf16.gmra.mrb[0].mxu0 %v4385
        %v4466 = vpop.f32.mrb[0].mxu0
        %v4467 = vadd.f32 %v615, %v4466
        %v4468 = vpop.f32.mrb[0].mxu0
        %v4469 = vpop.f32.mrb[0].mxu0
        %v4470 = vadd.f32 %v616, %v4469
        %v4471 = vpop.f32.mrb[0].mxu0
        %4472 = vmatprep.mubr.bf16.mxu0 0
        %4473 = vmatmul.mubr.bf16.gmra.mrb[0].mxu0 %v4388
        %v4474 = vpop.f32.mrb[0].mxu0
        %v4475 = vadd.f32 %v617, %v4474
        %v4476 = vpop.f32.mrb[0].mxu0
        %v4477 = vpop.f32.mrb[0].mxu0
        %v4478 = vadd.f32 %v618, %v4477
        %v4479 = vpop.f32.mrb[0].mxu0
        %4480 = vmatprep.mubr.bf16.mxu0 0
        %4481 = vmatmul.mubr.bf16.gmra.mrb[0].mxu0 %v4391
        %v4482 = vpop.f32.mrb[0].mxu0
        %v4483 = vadd.f32 %v619, %v4482
        %v4484 = vpop.f32.mrb[0].mxu0
        %v4485 = vpop.f32.mrb[0].mxu0
        %v4486 = vadd.f32 %v620, %v4485
        %v4487 = vpop.f32.mrb[0].mxu0
        %4488 = vmatprep.mubr.bf16.mxu0 0
        %4489 = vmatmul.mubr.bf16.gmra.mrb[0].mxu0 %v4394
        %v4490 = vpop.f32.mrb[0].mxu0
        %v4491 = vadd.f32 %v621, %v4490
        %v4492 = vpop.f32.mrb[0].mxu0
        %v4493 = vpop.f32.mrb[0].mxu0
        %v4494 = vadd.f32 %v622, %v4493
        %v4495 = vpop.f32.mrb[0].mxu0
        %4496 = vmatprep.mubr.bf16.mxu0 0
        %4497 = vmatmul.mubr.bf16.gmra.mrb[0].mxu0 %v4397
        %v4498 = vpop.f32.mrb[0].mxu0
        %v4499 = vadd.f32 %v623, %v4498
        %v4500 = vpop.f32.mrb[0].mxu0
        %v4501 = vpop.f32.mrb[0].mxu0
        %v4502 = vadd.f32 %v624, %v4501
        %v4503 = vpop.f32.mrb[0].mxu0
        %4504 = vmatprep.mubr.bf16.mxu0 0
        %4505 = vmatmul.mubr.bf16.gmra.mrb[0].mxu0 %v4400
        %v4506 = vpop.f32.mrb[0].mxu0
        %v4507 = vadd.f32 %v625, %v4506
        %v4508 = vpop.f32.mrb[0].mxu0
        %v4509 = vpop.f32.mrb[0].mxu0
        %v4510 = vadd.f32 %v626, %v4509
        %v4511 = vpop.f32.mrb[0].mxu0
        %4512 = vmatprep.mubr.bf16.mxu0 0
        %4513 = vmatmul.mubr.bf16.gmra.mrb[0].mxu0 %v4403
        %v4514 = vpop.f32.mrb[0].mxu0
        %v4515 = vadd.f32 %v627, %v4514
        %v4516 = vpop.f32.mrb[0].mxu0
        %v4517 = vpop.f32.mrb[0].mxu0
        %v4518 = vadd.f32 %v628, %v4517
        %v4519 = vpop.f32.mrb[0].mxu0
        %4520 = vmatprep.mubr.bf16.mxu0 0
        %4521 = vmatmul.mubr.bf16.gmra.mrb[0].mxu0 %v4406
        %v4522 = vpop.f32.mrb[0].mxu0
        %v4523 = vadd.f32 %v629, %v4522
        %v4524 = vpop.f32.mrb[0].mxu0
        %v4525 = vpop.f32.mrb[0].mxu0
        %v4526 = vadd.f32 %v630, %v4525
        %v4527 = vpop.f32.mrb[0].mxu0
        %4528 = vdwg.mxu0
        %4537 = vrot.lane.b32.xlu0 %v3667, 64
        %v4538 = vpop.permute.xlu0 %4537
        %4539 = vrot.lane.b32.xlu0 %v3669, 64
        %v4540 = vpop.permute.xlu0 %4539
        %4541 = vrot.lane.b32.xlu0 %v3671, 64
        %v4542 = vpop.permute.xlu0 %4541
        %4543 = vrot.lane.b32.xlu0 %v3673, 64
        %v4544 = vpop.permute.xlu0 %4543
        %4545 = vrot.lane.b32.xlu0 %v3675, 64
        %v4546 = vpop.permute.xlu0 %4545
        %4547 = vrot.lane.b32.xlu0 %v3677, 64
        %v4548 = vpop.permute.xlu0 %4547
        %4549 = vrot.lane.b32.xlu0 %v3679, 64
        %v4550 = vpop.permute.xlu0 %4549
        %4551 = vrot.lane.b32.xlu0 %v3681, 64
        %v4552 = vpop.permute.xlu0 %4551
        %v4554 = vsel %vm3707, %v3667, 0
        %v4557 = vsel %vm3707, %v3669, 0
        %v4560 = vsel %vm3707, %v3671, 0
        %v4563 = vsel %vm3707, %v3673, 0
        %v4566 = vsel %vm3707, %v3675, 0
        %v4569 = vsel %vm3707, %v3677, 0
        %v4572 = vsel %vm3707, %v3679, 0
        %v4575 = vsel %vm3707, %v3681, 0
        %v4578 = vsel %vm3707, %v4538, 0
        %v4581 = vsel %vm3707, %v4540, 0
        %v4584 = vsel %vm3707, %v4542, 0
        %v4587 = vsel %vm3707, %v4544, 0
        %v4590 = vsel %vm3707, %v4546, 0
        %v4593 = vsel %vm3707, %v4548, 0
        %v4596 = vsel %vm3707, %v4550, 0
        %v4599 = vsel %vm3707, %v4552, 0
        %4601 = vmatprep.subr.bf16.mxu0 0
        %4602 = vmatpush1.bf16.xpose.msra.mxu0 %v4578
        %4603 = vmatprep.subr.bf16.mxu0 0
        %4604 = vmatpush1.bf16.xpose.msra.mxu0 %v4581
        %4605 = vmatprep.subr.bf16.mxu0 0
        %4606 = vmatpush1.bf16.xpose.msra.mxu0 %v4584
        %4607 = vmatprep.subr.bf16.mxu0 0
        %4608 = vmatpush1.bf16.xpose.msra.mxu0 %v4587
        %4609 = vmatprep.subr.bf16.mxu0 0
        %4610 = vmatpush1.bf16.xpose.msra.mxu0 %v4590
        %4611 = vmatprep.subr.bf16.mxu0 0
        %4612 = vmatpush1.bf16.xpose.msra.mxu0 %v4593
        %4613 = vmatprep.subr.bf16.mxu0 0
        %4614 = vmatpush1.bf16.xpose.msra.mxu0 %v4596
        %4615 = vmatprep.subr.bf16.mxu0 0
        %4616 = vmatpush1.bf16.xpose.msra.mxu0 %v4599
        %4617 = vmatprep.subr.bf16.mxu0 0
        %4618 = vmatpush1.bf16.xpose.msra.mxu0 0
        %4619 = vmatprep.subr.bf16.mxu0 0
        %4620 = vmatpush1.bf16.xpose.msra.mxu0 0
        %4621 = vmatprep.subr.bf16.mxu0 0
        %4622 = vmatpush1.bf16.xpose.msra.mxu0 0
        %4623 = vmatprep.subr.bf16.mxu0 0
        %4624 = vmatpush1.bf16.xpose.msra.mxu0 0
        %4625 = vmatprep.subr.bf16.mxu0 0
        %4626 = vmatpush1.bf16.xpose.msra.mxu0 0
        %4627 = vmatprep.subr.bf16.mxu0 0
        %4628 = vmatpush1.bf16.xpose.msra.mxu0 0
        %4629 = vmatprep.subr.bf16.mxu0 0
        %4630 = vmatpush1.bf16.xpose.msra.mxu0 0
        %4631 = vmatprep.subr.bf16.mxu0 0
        %4632 = vmatpush1.bf16.xpose.msra.mxu0 0
        %4633 = vmatprep.mubr.bf16.mxu0 0
        %4634 = vmatmul.mubr.bf16.gmra.mrb[0].mxu0 %v4554
        %v4635 = vpop.f32.mrb[0].mxu0
        %v4636 = vadd.f32 %v615, %v4635
        %v4637 = vpop.f32.mrb[0].mxu0
        %v4638 = vpop.f32.mrb[0].mxu0
        %v4639 = vadd.f32 %v616, %v4638
        %v4640 = vpop.f32.mrb[0].mxu0
        %4641 = vmatprep.mubr.bf16.mxu0 0
        %4642 = vmatmul.mubr.bf16.gmra.mrb[0].mxu0 %v4557
        %v4643 = vpop.f32.mrb[0].mxu0
        %v4644 = vadd.f32 %v617, %v4643
        %v4645 = vpop.f32.mrb[0].mxu0
        %v4646 = vpop.f32.mrb[0].mxu0
        %v4647 = vadd.f32 %v618, %v4646
        %v4648 = vpop.f32.mrb[0].mxu0
        %4649 = vmatprep.mubr.bf16.mxu0 0
        %4650 = vmatmul.mubr.bf16.gmra.mrb[0].mxu0 %v4560
        %v4651 = vpop.f32.mrb[0].mxu0
        %v4652 = vadd.f32 %v619, %v4651
        %v4653 = vpop.f32.mrb[0].mxu0
        %v4654 = vpop.f32.mrb[0].mxu0
        %v4655 = vadd.f32 %v620, %v4654
        %v4656 = vpop.f32.mrb[0].mxu0
        %4657 = vmatprep.mubr.bf16.mxu0 0
        %4658 = vmatmul.mubr.bf16.gmra.mrb[0].mxu0 %v4563
        %v4659 = vpop.f32.mrb[0].mxu0
        %v4660 = vadd.f32 %v621, %v4659
        %v4661 = vpop.f32.mrb[0].mxu0
        %v4662 = vpop.f32.mrb[0].mxu0
        %v4663 = vadd.f32 %v622, %v4662
        %v4664 = vpop.f32.mrb[0].mxu0
        %4665 = vmatprep.mubr.bf16.mxu0 0
        %4666 = vmatmul.mubr.bf16.gmra.mrb[0].mxu0 %v4566
        %v4667 = vpop.f32.mrb[0].mxu0
        %v4668 = vadd.f32 %v623, %v4667
        %v4669 = vpop.f32.mrb[0].mxu0
        %v4670 = vpop.f32.mrb[0].mxu0
        %v4671 = vadd.f32 %v624, %v4670
        %v4672 = vpop.f32.mrb[0].mxu0
        %4673 = vmatprep.mubr.bf16.mxu0 0
        %4674 = vmatmul.mubr.bf16.gmra.mrb[0].mxu0 %v4569
        %v4675 = vpop.f32.mrb[0].mxu0
        %v4676 = vadd.f32 %v625, %v4675
        %v4677 = vpop.f32.mrb[0].mxu0
        %v4678 = vpop.f32.mrb[0].mxu0
        %v4679 = vadd.f32 %v626, %v4678
        %v4680 = vpop.f32.mrb[0].mxu0
        %4681 = vmatprep.mubr.bf16.mxu0 0
        %4682 = vmatmul.mubr.bf16.gmra.mrb[0].mxu0 %v4572
        %v4683 = vpop.f32.mrb[0].mxu0
        %v4684 = vadd.f32 %v627, %v4683
        %v4685 = vpop.f32.mrb[0].mxu0
        %v4686 = vpop.f32.mrb[0].mxu0
        %v4687 = vadd.f32 %v628, %v4686
        %v4688 = vpop.f32.mrb[0].mxu0
        %4689 = vmatprep.mubr.bf16.mxu0 0
        %4690 = vmatmul.mubr.bf16.gmra.mrb[0].mxu0 %v4575
        %v4691 = vpop.f32.mrb[0].mxu0
        %v4692 = vadd.f32 %v629, %v4691
        %v4693 = vpop.f32.mrb[0].mxu0
        %v4694 = vpop.f32.mrb[0].mxu0
        %v4695 = vadd.f32 %v630, %v4694
        %v4696 = vpop.f32.mrb[0].mxu0
        %4697 = vdwg.mxu0
        %4698 = vmax.xlane.f32.xlu0 %v3791
        %v4699 = vpop.xlane.xlu0 %4698
        %4700 = vmax.xlane.f32.xlu0 %v3794
        %v4701 = vpop.xlane.xlu0 %4700
        %4702 = vmax.xlane.f32.xlu0 %v3799
        %v4703 = vpop.xlane.xlu0 %4702
        %4704 = vmax.xlane.f32.xlu0 %v3802
        %v4705 = vpop.xlane.xlu0 %4704
        %4706 = vmax.xlane.f32.xlu0 %v3807
        %v4707 = vpop.xlane.xlu0 %4706
        %4708 = vmax.xlane.f32.xlu0 %v3810
        %v4709 = vpop.xlane.xlu0 %4708
        %4710 = vmax.xlane.f32.xlu0 %v3815
        %v4711 = vpop.xlane.xlu0 %4710
        %4712 = vmax.xlane.f32.xlu0 %v3818
        %v4713 = vpop.xlane.xlu0 %4712
        %4714 = vmax.xlane.f32.xlu0 %v3823
        %v4715 = vpop.xlane.xlu0 %4714
        %4716 = vmax.xlane.f32.xlu0 %v3826
        %v4717 = vpop.xlane.xlu0 %4716
        %4718 = vmax.xlane.f32.xlu0 %v3831
        %v4719 = vpop.xlane.xlu0 %4718
        %4720 = vmax.xlane.f32.xlu0 %v3834
        %v4721 = vpop.xlane.xlu0 %4720
        %4722 = vmax.xlane.f32.xlu0 %v3839
        %v4723 = vpop.xlane.xlu0 %4722
        %4724 = vmax.xlane.f32.xlu0 %v3842
        %v4725 = vpop.xlane.xlu0 %4724
        %4726 = vmax.xlane.f32.xlu0 %v3847
        %v4727 = vpop.xlane.xlu0 %4726
        %4728 = vmax.xlane.f32.xlu0 %v3850
        %v4729 = vpop.xlane.xlu0 %4728
        %4730 = vmax.xlane.f32.xlu0 %v3960
        %v4731 = vpop.xlane.xlu0 %4730
        %4732 = vmax.xlane.f32.xlu0 %v3963
        %v4733 = vpop.xlane.xlu0 %4732
        %4734 = vmax.xlane.f32.xlu0 %v3968
        %v4735 = vpop.xlane.xlu0 %4734
        %4736 = vmax.xlane.f32.xlu0 %v3971
        %v4737 = vpop.xlane.xlu0 %4736
        %4738 = vmax.xlane.f32.xlu0 %v3976
        %v4739 = vpop.xlane.xlu0 %4738
        %4740 = vmax.xlane.f32.xlu0 %v3979
        %v4741 = vpop.xlane.xlu0 %4740
        %4742 = vmax.xlane.f32.xlu0 %v3984
        %v4743 = vpop.xlane.xlu0 %4742
        %4744 = vmax.xlane.f32.xlu0 %v3987
        %v4745 = vpop.xlane.xlu0 %4744
        %4746 = vmax.xlane.f32.xlu0 %v3992
        %v4747 = vpop.xlane.xlu0 %4746
        %4748 = vmax.xlane.f32.xlu0 %v3995
        %v4749 = vpop.xlane.xlu0 %4748
        %4750 = vmax.xlane.f32.xlu0 %v4000
        %v4751 = vpop.xlane.xlu0 %4750
        %4752 = vmax.xlane.f32.xlu0 %v4003
        %v4753 = vpop.xlane.xlu0 %4752
        %4754 = vmax.xlane.f32.xlu0 %v4008
        %v4755 = vpop.xlane.xlu0 %4754
        %4756 = vmax.xlane.f32.xlu0 %v4011
        %v4757 = vpop.xlane.xlu0 %4756
        %4758 = vmax.xlane.f32.xlu0 %v4016
        %v4759 = vpop.xlane.xlu0 %4758
        %4760 = vmax.xlane.f32.xlu0 %v4019
        %v4761 = vpop.xlane.xlu0 %4760
        %4762 = vmax.xlane.f32.xlu0 %v4129
        %v4763 = vpop.xlane.xlu0 %4762
        %4764 = vmax.xlane.f32.xlu0 %v4132
        %v4765 = vpop.xlane.xlu0 %4764
        %4766 = vmax.xlane.f32.xlu0 %v4137
        %v4767 = vpop.xlane.xlu0 %4766
        %4768 = vmax.xlane.f32.xlu0 %v4140
        %v4769 = vpop.xlane.xlu0 %4768
        %4770 = vmax.xlane.f32.xlu0 %v4145
        %v4771 = vpop.xlane.xlu0 %4770
        %4772 = vmax.xlane.f32.xlu0 %v4148
        %v4773 = vpop.xlane.xlu0 %4772
        %4774 = vmax.xlane.f32.xlu0 %v4153
        %v4775 = vpop.xlane.xlu0 %4774
        %4776 = vmax.xlane.f32.xlu0 %v4156
        %v4777 = vpop.xlane.xlu0 %4776
        %4778 = vmax.xlane.f32.xlu0 %v4161
        %v4779 = vpop.xlane.xlu0 %4778
        %4780 = vmax.xlane.f32.xlu0 %v4164
        %v4781 = vpop.xlane.xlu0 %4780
        %4782 = vmax.xlane.f32.xlu0 %v4169
        %v4783 = vpop.xlane.xlu0 %4782
        %4784 = vmax.xlane.f32.xlu0 %v4172
        %v4785 = vpop.xlane.xlu0 %4784
        %4786 = vmax.xlane.f32.xlu0 %v4177
        %v4787 = vpop.xlane.xlu0 %4786
        %4788 = vmax.xlane.f32.xlu0 %v4180
        %v4789 = vpop.xlane.xlu0 %4788
        %4790 = vmax.xlane.f32.xlu0 %v4185
        %v4791 = vpop.xlane.xlu0 %4790
        %4792 = vmax.xlane.f32.xlu0 %v4188
        %v4793 = vpop.xlane.xlu0 %4792
        %4794 = vmax.xlane.f32.xlu0 %v4298
        %v4795 = vpop.xlane.xlu0 %4794
        %4796 = vmax.xlane.f32.xlu0 %v4301
        %v4797 = vpop.xlane.xlu0 %4796
        %4798 = vmax.xlane.f32.xlu0 %v4306
        %v4799 = vpop.xlane.xlu0 %4798
        %4800 = vmax.xlane.f32.xlu0 %v4309
        %v4801 = vpop.xlane.xlu0 %4800
        %4802 = vmax.xlane.f32.xlu0 %v4314
        %v4803 = vpop.xlane.xlu0 %4802
        %4804 = vmax.xlane.f32.xlu0 %v4317
        %v4805 = vpop.xlane.xlu0 %4804
        %4806 = vmax.xlane.f32.xlu0 %v4322
        %v4807 = vpop.xlane.xlu0 %4806
        %4808 = vmax.xlane.f32.xlu0 %v4325
        %v4809 = vpop.xlane.xlu0 %4808
        %4810 = vmax.xlane.f32.xlu0 %v4330
        %v4811 = vpop.xlane.xlu0 %4810
        %4812 = vmax.xlane.f32.xlu0 %v4333
        %v4813 = vpop.xlane.xlu0 %4812
        %4814 = vmax.xlane.f32.xlu0 %v4338
        %v4815 = vpop.xlane.xlu0 %4814
        %4816 = vmax.xlane.f32.xlu0 %v4341
        %v4817 = vpop.xlane.xlu0 %4816
        %4818 = vmax.xlane.f32.xlu0 %v4346
        %v4819 = vpop.xlane.xlu0 %4818
        %4820 = vmax.xlane.f32.xlu0 %v4349
        %v4821 = vpop.xlane.xlu0 %4820
        %4822 = vmax.xlane.f32.xlu0 %v4354
        %v4823 = vpop.xlane.xlu0 %4822
        %4824 = vmax.xlane.f32.xlu0 %v4357
        %v4825 = vpop.xlane.xlu0 %4824
        %4826 = vmax.xlane.f32.xlu0 %v4467
        %v4827 = vpop.xlane.xlu0 %4826
        %4828 = vmax.xlane.f32.xlu0 %v4470
        %v4829 = vpop.xlane.xlu0 %4828
        %4830 = vmax.xlane.f32.xlu0 %v4475
        %v4831 = vpop.xlane.xlu0 %4830
        %4832 = vmax.xlane.f32.xlu0 %v4478
        %v4833 = vpop.xlane.xlu0 %4832
        %4834 = vmax.xlane.f32.xlu0 %v4483
        %v4835 = vpop.xlane.xlu0 %4834
        %4836 = vmax.xlane.f32.xlu0 %v4486
        %v4837 = vpop.xlane.xlu0 %4836
        %4838 = vmax.xlane.f32.xlu0 %v4491
        %v4839 = vpop.xlane.xlu0 %4838
        %4840 = vmax.xlane.f32.xlu0 %v4494
        %v4841 = vpop.xlane.xlu0 %4840
        %4842 = vmax.xlane.f32.xlu0 %v4499
        %v4843 = vpop.xlane.xlu0 %4842
        %4844 = vmax.xlane.f32.xlu0 %v4502
        %v4845 = vpop.xlane.xlu0 %4844
        %4846 = vmax.xlane.f32.xlu0 %v4507
        %v4847 = vpop.xlane.xlu0 %4846
        %4848 = vmax.xlane.f32.xlu0 %v4510
        %v4849 = vpop.xlane.xlu0 %4848
        %4850 = vmax.xlane.f32.xlu0 %v4515
        %v4851 = vpop.xlane.xlu0 %4850
        %4852 = vmax.xlane.f32.xlu0 %v4518
        %v4853 = vpop.xlane.xlu0 %4852
        %4854 = vmax.xlane.f32.xlu0 %v4523
        %v4855 = vpop.xlane.xlu0 %4854
        %4856 = vmax.xlane.f32.xlu0 %v4526
        %v4857 = vpop.xlane.xlu0 %4856
        %4858 = vmax.xlane.f32.xlu0 %v4636
        %v4859 = vpop.xlane.xlu0 %4858
        %4860 = vmax.xlane.f32.xlu0 %v4639
        %v4861 = vpop.xlane.xlu0 %4860
        %4862 = vmax.xlane.f32.xlu0 %v4644
        %v4863 = vpop.xlane.xlu0 %4862
        %4864 = vmax.xlane.f32.xlu0 %v4647
        %v4865 = vpop.xlane.xlu0 %4864
        %4866 = vmax.xlane.f32.xlu0 %v4652
        %v4867 = vpop.xlane.xlu0 %4866
        %4868 = vmax.xlane.f32.xlu0 %v4655
        %v4869 = vpop.xlane.xlu0 %4868
        %4870 = vmax.xlane.f32.xlu0 %v4660
        %v4871 = vpop.xlane.xlu0 %4870
        %4872 = vmax.xlane.f32.xlu0 %v4663
        %v4873 = vpop.xlane.xlu0 %4872
        %4874 = vmax.xlane.f32.xlu0 %v4668
        %v4875 = vpop.xlane.xlu0 %4874
        %4876 = vmax.xlane.f32.xlu0 %v4671
        %v4877 = vpop.xlane.xlu0 %4876
        %4878 = vmax.xlane.f32.xlu0 %v4676
        %v4879 = vpop.xlane.xlu0 %4878
        %4880 = vmax.xlane.f32.xlu0 %v4679
        %v4881 = vpop.xlane.xlu0 %4880
        %4882 = vmax.xlane.f32.xlu0 %v4684
        %v4883 = vpop.xlane.xlu0 %4882
        %4884 = vmax.xlane.f32.xlu0 %v4687
        %v4885 = vpop.xlane.xlu0 %4884
        %4886 = vmax.xlane.f32.xlu0 %v4692
        %v4887 = vpop.xlane.xlu0 %4886
        %4888 = vmax.xlane.f32.xlu0 %v4695
        %v4889 = vpop.xlane.xlu0 %4888
        %v4890 = vsub.f32 %v3791, %v4699
        %v4891 = vsub.f32 %v3794, %v4701
        %v4892 = vsub.f32 %v3799, %v4703
        %v4893 = vsub.f32 %v3802, %v4705
        %v4894 = vsub.f32 %v3807, %v4707
        %v4895 = vsub.f32 %v3810, %v4709
        %v4896 = vsub.f32 %v3815, %v4711
        %v4897 = vsub.f32 %v3818, %v4713
        %v4898 = vsub.f32 %v3823, %v4715
        %v4899 = vsub.f32 %v3826, %v4717
        %v4900 = vsub.f32 %v3831, %v4719
        %v4901 = vsub.f32 %v3834, %v4721
        %v4902 = vsub.f32 %v3839, %v4723
        %v4903 = vsub.f32 %v3842, %v4725
        %v4904 = vsub.f32 %v3847, %v4727
        %v4905 = vsub.f32 %v3850, %v4729
        %v4906 = vsub.f32 %v3960, %v4731
        %v4907 = vsub.f32 %v3963, %v4733
        %v4908 = vsub.f32 %v3968, %v4735
        %v4909 = vsub.f32 %v3971, %v4737
        %v4910 = vsub.f32 %v3976, %v4739
        %v4911 = vsub.f32 %v3979, %v4741
        %v4912 = vsub.f32 %v3984, %v4743
        %v4913 = vsub.f32 %v3987, %v4745
        %v4914 = vsub.f32 %v3992, %v4747
        %v4915 = vsub.f32 %v3995, %v4749
        %v4916 = vsub.f32 %v4000, %v4751
        %v4917 = vsub.f32 %v4003, %v4753
        %v4918 = vsub.f32 %v4008, %v4755
        %v4919 = vsub.f32 %v4011, %v4757
        %v4920 = vsub.f32 %v4016, %v4759
        %v4921 = vsub.f32 %v4019, %v4761
        %v4922 = vsub.f32 %v4129, %v4763
        %v4923 = vsub.f32 %v4132, %v4765
        %v4924 = vsub.f32 %v4137, %v4767
        %v4925 = vsub.f32 %v4140, %v4769
        %v4926 = vsub.f32 %v4145, %v4771
        %v4927 = vsub.f32 %v4148, %v4773
        %v4928 = vsub.f32 %v4153, %v4775
        %v4929 = vsub.f32 %v4156, %v4777
        %v4930 = vsub.f32 %v4161, %v4779
        %v4931 = vsub.f32 %v4164, %v4781
        %v4932 = vsub.f32 %v4169, %v4783
        %v4933 = vsub.f32 %v4172, %v4785
        %v4934 = vsub.f32 %v4177, %v4787
        %v4935 = vsub.f32 %v4180, %v4789
        %v4936 = vsub.f32 %v4185, %v4791
        %v4937 = vsub.f32 %v4188, %v4793
        %v4938 = vsub.f32 %v4298, %v4795
        %v4939 = vsub.f32 %v4301, %v4797
        %v4940 = vsub.f32 %v4306, %v4799
        %v4941 = vsub.f32 %v4309, %v4801
        %v4942 = vsub.f32 %v4314, %v4803
        %v4943 = vsub.f32 %v4317, %v4805
        %v4944 = vsub.f32 %v4322, %v4807
        %v4945 = vsub.f32 %v4325, %v4809
        %v4946 = vsub.f32 %v4330, %v4811
        %v4947 = vsub.f32 %v4333, %v4813
        %v4948 = vsub.f32 %v4338, %v4815
        %v4949 = vsub.f32 %v4341, %v4817
        %v4950 = vsub.f32 %v4346, %v4819
        %v4951 = vsub.f32 %v4349, %v4821
        %v4952 = vsub.f32 %v4354, %v4823
        %v4953 = vsub.f32 %v4357, %v4825
        %v4954 = vsub.f32 %v4467, %v4827
        %v4955 = vsub.f32 %v4470, %v4829
        %v4956 = vsub.f32 %v4475, %v4831
        %v4957 = vsub.f32 %v4478, %v4833
        %v4958 = vsub.f32 %v4483, %v4835
        %v4959 = vsub.f32 %v4486, %v4837
        %v4960 = vsub.f32 %v4491, %v4839
        %v4961 = vsub.f32 %v4494, %v4841
        %v4962 = vsub.f32 %v4499, %v4843
        %v4963 = vsub.f32 %v4502, %v4845
        %v4964 = vsub.f32 %v4507, %v4847
        %v4965 = vsub.f32 %v4510, %v4849
        %v4966 = vsub.f32 %v4515, %v4851
        %v4967 = vsub.f32 %v4518, %v4853
        %v4968 = vsub.f32 %v4523, %v4855
        %v4969 = vsub.f32 %v4526, %v4857
        %v4970 = vsub.f32 %v4636, %v4859
        %v4971 = vsub.f32 %v4639, %v4861
        %v4972 = vsub.f32 %v4644, %v4863
        %v4973 = vsub.f32 %v4647, %v4865
        %v4974 = vsub.f32 %v4652, %v4867
        %v4975 = vsub.f32 %v4655, %v4869
        %v4976 = vsub.f32 %v4660, %v4871
        %v4977 = vsub.f32 %v4663, %v4873
        %v4978 = vsub.f32 %v4668, %v4875
        %v4979 = vsub.f32 %v4671, %v4877
        %v4980 = vsub.f32 %v4676, %v4879
        %v4981 = vsub.f32 %v4679, %v4881
        %v4982 = vsub.f32 %v4684, %v4883
        %v4983 = vsub.f32 %v4687, %v4885
        %v4984 = vsub.f32 %v4692, %v4887
        %v4985 = vsub.f32 %v4695, %v4889
        %v4986 = vmul.f32 %v4890, 1.442695
        %v4987 = vpow.pop %v4986
        %v4988 = vmul.f32 %v4891, 1.442695
        %v4989 = vpow.pop %v4988
        %v4990 = vmul.f32 %v4892, 1.442695
        %v4991 = vpow.pop %v4990
        %v4992 = vmul.f32 %v4893, 1.442695
        %v4993 = vpow.pop %v4992
        %v4994 = vmul.f32 %v4894, 1.442695
        %v4995 = vpow.pop %v4994
        %v4996 = vmul.f32 %v4895, 1.442695
        %v4997 = vpow.pop %v4996
        %v4998 = vmul.f32 %v4896, 1.442695
        %v4999 = vpow.pop %v4998
        %v5000 = vmul.f32 %v4897, 1.442695
        %v5001 = vpow.pop %v5000
        %v5002 = vmul.f32 %v4898, 1.442695
        %v5003 = vpow.pop %v5002
        %v5004 = vmul.f32 %v4899, 1.442695
        %v5005 = vpow.pop %v5004
        %v5006 = vmul.f32 %v4900, 1.442695
        %v5007 = vpow.pop %v5006
        %v5008 = vmul.f32 %v4901, 1.442695
        %v5009 = vpow.pop %v5008
        %v5010 = vmul.f32 %v4902, 1.442695
        %v5011 = vpow.pop %v5010
        %v5012 = vmul.f32 %v4903, 1.442695
        %v5013 = vpow.pop %v5012
        %v5014 = vmul.f32 %v4904, 1.442695
        %v5015 = vpow.pop %v5014
        %v5016 = vmul.f32 %v4905, 1.442695
        %v5017 = vpow.pop %v5016
        %v5018 = vmul.f32 %v4906, 1.442695
        %v5019 = vpow.pop %v5018
        %v5020 = vmul.f32 %v4907, 1.442695
        %v5021 = vpow.pop %v5020
        %v5022 = vmul.f32 %v4908, 1.442695
        %v5023 = vpow.pop %v5022
        %v5024 = vmul.f32 %v4909, 1.442695
        %v5025 = vpow.pop %v5024
        %v5026 = vmul.f32 %v4910, 1.442695
        %v5027 = vpow.pop %v5026
        %v5028 = vmul.f32 %v4911, 1.442695
        %v5029 = vpow.pop %v5028
        %v5030 = vmul.f32 %v4912, 1.442695
        %v5031 = vpow.pop %v5030
        %v5032 = vmul.f32 %v4913, 1.442695
        %v5033 = vpow.pop %v5032
        %v5034 = vmul.f32 %v4914, 1.442695
        %v5035 = vpow.pop %v5034
        %v5036 = vmul.f32 %v4915, 1.442695
        %v5037 = vpow.pop %v5036
        %v5038 = vmul.f32 %v4916, 1.442695
        %v5039 = vpow.pop %v5038
        %v5040 = vmul.f32 %v4917, 1.442695
        %v5041 = vpow.pop %v5040
        %v5042 = vmul.f32 %v4918, 1.442695
        %v5043 = vpow.pop %v5042
        %v5044 = vmul.f32 %v4919, 1.442695
        %v5045 = vpow.pop %v5044
        %v5046 = vmul.f32 %v4920, 1.442695
        %v5047 = vpow.pop %v5046
        %v5048 = vmul.f32 %v4921, 1.442695
        %v5049 = vpow.pop %v5048
        %v5050 = vmul.f32 %v4922, 1.442695
        %v5051 = vpow.pop %v5050
        %v5052 = vmul.f32 %v4923, 1.442695
        %v5053 = vpow.pop %v5052
        %v5054 = vmul.f32 %v4924, 1.442695
        %v5055 = vpow.pop %v5054
        %v5056 = vmul.f32 %v4925, 1.442695
        %v5057 = vpow.pop %v5056
        %v5058 = vmul.f32 %v4926, 1.442695
        %v5059 = vpow.pop %v5058
        %v5060 = vmul.f32 %v4927, 1.442695
        %v5061 = vpow.pop %v5060
        %v5062 = vmul.f32 %v4928, 1.442695
        %v5063 = vpow.pop %v5062
        %v5064 = vmul.f32 %v4929, 1.442695
        %v5065 = vpow.pop %v5064
        %v5066 = vmul.f32 %v4930, 1.442695
        %v5067 = vpow.pop %v5066
        %v5068 = vmul.f32 %v4931, 1.442695
        %v5069 = vpow.pop %v5068
        %v5070 = vmul.f32 %v4932, 1.442695
        %v5071 = vpow.pop %v5070
        %v5072 = vmul.f32 %v4933, 1.442695
        %v5073 = vpow.pop %v5072
        %v5074 = vmul.f32 %v4934, 1.442695
        %v5075 = vpow.pop %v5074
        %v5076 = vmul.f32 %v4935, 1.442695
        %v5077 = vpow.pop %v5076
        %v5078 = vmul.f32 %v4936, 1.442695
        %v5079 = vpow.pop %v5078
        %v5080 = vmul.f32 %v4937, 1.442695
        %v5081 = vpow.pop %v5080
        %v5082 = vmul.f32 %v4938, 1.442695
        %v5083 = vpow.pop %v5082
        %v5084 = vmul.f32 %v4939, 1.442695
        %v5085 = vpow.pop %v5084
        %v5086 = vmul.f32 %v4940, 1.442695
        %v5087 = vpow.pop %v5086
        %v5088 = vmul.f32 %v4941, 1.442695
        %v5089 = vpow.pop %v5088
        %v5090 = vmul.f32 %v4942, 1.442695
        %v5091 = vpow.pop %v5090
        %v5092 = vmul.f32 %v4943, 1.442695
        %v5093 = vpow.pop %v5092
        %v5094 = vmul.f32 %v4944, 1.442695
        %v5095 = vpow.pop %v5094
        %v5096 = vmul.f32 %v4945, 1.442695
        %v5097 = vpow.pop %v5096
        %v5098 = vmul.f32 %v4946, 1.442695
        %v5099 = vpow.pop %v5098
        %v5100 = vmul.f32 %v4947, 1.442695
        %v5101 = vpow.pop %v5100
        %v5102 = vmul.f32 %v4948, 1.442695
        %v5103 = vpow.pop %v5102
        %v5104 = vmul.f32 %v4949, 1.442695
        %v5105 = vpow.pop %v5104
        %v5106 = vmul.f32 %v4950, 1.442695
        %v5107 = vpow.pop %v5106
        %v5108 = vmul.f32 %v4951, 1.442695
        %v5109 = vpow.pop %v5108
        %v5110 = vmul.f32 %v4952, 1.442695
        %v5111 = vpow.pop %v5110
        %v5112 = vmul.f32 %v4953, 1.442695
        %v5113 = vpow.pop %v5112
        %v5114 = vmul.f32 %v4954, 1.442695
        %v5115 = vpow.pop %v5114
        %v5116 = vmul.f32 %v4955, 1.442695
        %v5117 = vpow.pop %v5116
        %v5118 = vmul.f32 %v4956, 1.442695
        %v5119 = vpow.pop %v5118
        %v5120 = vmul.f32 %v4957, 1.442695
        %v5121 = vpow.pop %v5120
        %v5122 = vmul.f32 %v4958, 1.442695
        %v5123 = vpow.pop %v5122
        %v5124 = vmul.f32 %v4959, 1.442695
        %v5125 = vpow.pop %v5124
        %v5126 = vmul.f32 %v4960, 1.442695
        %v5127 = vpow.pop %v5126
        %v5128 = vmul.f32 %v4961, 1.442695
        %v5129 = vpow.pop %v5128
        %v5130 = vmul.f32 %v4962, 1.442695
        %v5131 = vpow.pop %v5130
        %v5132 = vmul.f32 %v4963, 1.442695
        %v5133 = vpow.pop %v5132
        %v5134 = vmul.f32 %v4964, 1.442695
        %v5135 = vpow.pop %v5134
        %v5136 = vmul.f32 %v4965, 1.442695
        %v5137 = vpow.pop %v5136
        %v5138 = vmul.f32 %v4966, 1.442695
        %v5139 = vpow.pop %v5138
        %v5140 = vmul.f32 %v4967, 1.442695
        %v5141 = vpow.pop %v5140
        %v5142 = vmul.f32 %v4968, 1.442695
        %v5143 = vpow.pop %v5142
        %v5144 = vmul.f32 %v4969, 1.442695
        %v5145 = vpow.pop %v5144
        %v5146 = vmul.f32 %v4970, 1.442695
        %v5147 = vpow.pop %v5146
        %v5148 = vmul.f32 %v4971, 1.442695
        %v5149 = vpow.pop %v5148
        %v5150 = vmul.f32 %v4972, 1.442695
        %v5151 = vpow.pop %v5150
        %v5152 = vmul.f32 %v4973, 1.442695
        %v5153 = vpow.pop %v5152
        %v5154 = vmul.f32 %v4974, 1.442695
        %v5155 = vpow.pop %v5154
        %v5156 = vmul.f32 %v4975, 1.442695
        %v5157 = vpow.pop %v5156
        %v5158 = vmul.f32 %v4976, 1.442695
        %v5159 = vpow.pop %v5158
        %v5160 = vmul.f32 %v4977, 1.442695
        %v5161 = vpow.pop %v5160
        %v5162 = vmul.f32 %v4978, 1.442695
        %v5163 = vpow.pop %v5162
        %v5164 = vmul.f32 %v4979, 1.442695
        %v5165 = vpow.pop %v5164
        %v5166 = vmul.f32 %v4980, 1.442695
        %v5167 = vpow.pop %v5166
        %v5168 = vmul.f32 %v4981, 1.442695
        %v5169 = vpow.pop %v5168
        %v5170 = vmul.f32 %v4982, 1.442695
        %v5171 = vpow.pop %v5170
        %v5172 = vmul.f32 %v4983, 1.442695
        %v5173 = vpow.pop %v5172
        %v5174 = vmul.f32 %v4984, 1.442695
        %v5175 = vpow.pop %v5174
        %v5176 = vmul.f32 %v4985, 1.442695
        %v5177 = vpow.pop %v5176
        %5178 = vadd.xlane.f32.xlu0 %v4987
        %v5179 = vpop.xlane.xlu0 %5178
        %5180 = vadd.xlane.f32.xlu0 %v4989
        %v5181 = vpop.xlane.xlu0 %5180
        %5182 = vadd.xlane.f32.xlu0 %v4991
        %v5183 = vpop.xlane.xlu0 %5182
        %5184 = vadd.xlane.f32.xlu0 %v4993
        %v5185 = vpop.xlane.xlu0 %5184
        %5186 = vadd.xlane.f32.xlu0 %v4995
        %v5187 = vpop.xlane.xlu0 %5186
        %5188 = vadd.xlane.f32.xlu0 %v4997
        %v5189 = vpop.xlane.xlu0 %5188
        %5190 = vadd.xlane.f32.xlu0 %v4999
        %v5191 = vpop.xlane.xlu0 %5190
        %5192 = vadd.xlane.f32.xlu0 %v5001
        %v5193 = vpop.xlane.xlu0 %5192
        %5194 = vadd.xlane.f32.xlu0 %v5003
        %v5195 = vpop.xlane.xlu0 %5194
        %5196 = vadd.xlane.f32.xlu0 %v5005
        %v5197 = vpop.xlane.xlu0 %5196
        %5198 = vadd.xlane.f32.xlu0 %v5007
        %v5199 = vpop.xlane.xlu0 %5198
        %5200 = vadd.xlane.f32.xlu0 %v5009
        %v5201 = vpop.xlane.xlu0 %5200
        %5202 = vadd.xlane.f32.xlu0 %v5011
        %v5203 = vpop.xlane.xlu0 %5202
        %5204 = vadd.xlane.f32.xlu0 %v5013
        %v5205 = vpop.xlane.xlu0 %5204
        %5206 = vadd.xlane.f32.xlu0 %v5015
        %v5207 = vpop.xlane.xlu0 %5206
        %5208 = vadd.xlane.f32.xlu0 %v5017
        %v5209 = vpop.xlane.xlu0 %5208
        %5210 = vadd.xlane.f32.xlu0 %v5019
        %v5211 = vpop.xlane.xlu0 %5210
        %5212 = vadd.xlane.f32.xlu0 %v5021
        %v5213 = vpop.xlane.xlu0 %5212
        %5214 = vadd.xlane.f32.xlu0 %v5023
        %v5215 = vpop.xlane.xlu0 %5214
        %5216 = vadd.xlane.f32.xlu0 %v5025
        %v5217 = vpop.xlane.xlu0 %5216
        %5218 = vadd.xlane.f32.xlu0 %v5027
        %v5219 = vpop.xlane.xlu0 %5218
        %5220 = vadd.xlane.f32.xlu0 %v5029
        %v5221 = vpop.xlane.xlu0 %5220
        %5222 = vadd.xlane.f32.xlu0 %v5031
        %v5223 = vpop.xlane.xlu0 %5222
        %5224 = vadd.xlane.f32.xlu0 %v5033
        %v5225 = vpop.xlane.xlu0 %5224
        %5226 = vadd.xlane.f32.xlu0 %v5035
        %v5227 = vpop.xlane.xlu0 %5226
        %5228 = vadd.xlane.f32.xlu0 %v5037
        %v5229 = vpop.xlane.xlu0 %5228
        %5230 = vadd.xlane.f32.xlu0 %v5039
        %v5231 = vpop.xlane.xlu0 %5230
        %5232 = vadd.xlane.f32.xlu0 %v5041
        %v5233 = vpop.xlane.xlu0 %5232
        %5234 = vadd.xlane.f32.xlu0 %v5043
        %v5235 = vpop.xlane.xlu0 %5234
        %5236 = vadd.xlane.f32.xlu0 %v5045
        %v5237 = vpop.xlane.xlu0 %5236
        %5238 = vadd.xlane.f32.xlu0 %v5047
        %v5239 = vpop.xlane.xlu0 %5238
        %5240 = vadd.xlane.f32.xlu0 %v5049
        %v5241 = vpop.xlane.xlu0 %5240
        %5242 = vadd.xlane.f32.xlu0 %v5051
        %v5243 = vpop.xlane.xlu0 %5242
        %5244 = vadd.xlane.f32.xlu0 %v5053
        %v5245 = vpop.xlane.xlu0 %5244
        %5246 = vadd.xlane.f32.xlu0 %v5055
        %v5247 = vpop.xlane.xlu0 %5246
        %5248 = vadd.xlane.f32.xlu0 %v5057
        %v5249 = vpop.xlane.xlu0 %5248
        %5250 = vadd.xlane.f32.xlu0 %v5059
        %v5251 = vpop.xlane.xlu0 %5250
        %5252 = vadd.xlane.f32.xlu0 %v5061
        %v5253 = vpop.xlane.xlu0 %5252
        %5254 = vadd.xlane.f32.xlu0 %v5063
        %v5255 = vpop.xlane.xlu0 %5254
        %5256 = vadd.xlane.f32.xlu0 %v5065
        %v5257 = vpop.xlane.xlu0 %5256
        %5258 = vadd.xlane.f32.xlu0 %v5067
        %v5259 = vpop.xlane.xlu0 %5258
        %5260 = vadd.xlane.f32.xlu0 %v5069
        %v5261 = vpop.xlane.xlu0 %5260
        %5262 = vadd.xlane.f32.xlu0 %v5071
        %v5263 = vpop.xlane.xlu0 %5262
        %5264 = vadd.xlane.f32.xlu0 %v5073
        %v5265 = vpop.xlane.xlu0 %5264
        %5266 = vadd.xlane.f32.xlu0 %v5075
        %v5267 = vpop.xlane.xlu0 %5266
        %5268 = vadd.xlane.f32.xlu0 %v5077
        %v5269 = vpop.xlane.xlu0 %5268
        %5270 = vadd.xlane.f32.xlu0 %v5079
        %v5271 = vpop.xlane.xlu0 %5270
        %5272 = vadd.xlane.f32.xlu0 %v5081
        %v5273 = vpop.xlane.xlu0 %5272
        %5274 = vadd.xlane.f32.xlu0 %v5083
        %v5275 = vpop.xlane.xlu0 %5274
        %5276 = vadd.xlane.f32.xlu0 %v5085
        %v5277 = vpop.xlane.xlu0 %5276
        %5278 = vadd.xlane.f32.xlu0 %v5087
        %v5279 = vpop.xlane.xlu0 %5278
        %5280 = vadd.xlane.f32.xlu0 %v5089
        %v5281 = vpop.xlane.xlu0 %5280
        %5282 = vadd.xlane.f32.xlu0 %v5091
        %v5283 = vpop.xlane.xlu0 %5282
        %5284 = vadd.xlane.f32.xlu0 %v5093
        %v5285 = vpop.xlane.xlu0 %5284
        %5286 = vadd.xlane.f32.xlu0 %v5095
        %v5287 = vpop.xlane.xlu0 %5286
        %5288 = vadd.xlane.f32.xlu0 %v5097
        %v5289 = vpop.xlane.xlu0 %5288
        %5290 = vadd.xlane.f32.xlu0 %v5099
        %v5291 = vpop.xlane.xlu0 %5290
        %5292 = vadd.xlane.f32.xlu0 %v5101
        %v5293 = vpop.xlane.xlu0 %5292
        %5294 = vadd.xlane.f32.xlu0 %v5103
        %v5295 = vpop.xlane.xlu0 %5294
        %5296 = vadd.xlane.f32.xlu0 %v5105
        %v5297 = vpop.xlane.xlu0 %5296
        %5298 = vadd.xlane.f32.xlu0 %v5107
        %v5299 = vpop.xlane.xlu0 %5298
        %5300 = vadd.xlane.f32.xlu0 %v5109
        %v5301 = vpop.xlane.xlu0 %5300
        %5302 = vadd.xlane.f32.xlu0 %v5111
        %v5303 = vpop.xlane.xlu0 %5302
        %5304 = vadd.xlane.f32.xlu0 %v5113
        %v5305 = vpop.xlane.xlu0 %5304
        %5306 = vadd.xlane.f32.xlu0 %v5115
        %v5307 = vpop.xlane.xlu0 %5306
        %5308 = vadd.xlane.f32.xlu0 %v5117
        %v5309 = vpop.xlane.xlu0 %5308
        %5310 = vadd.xlane.f32.xlu0 %v5119
        %v5311 = vpop.xlane.xlu0 %5310
        %5312 = vadd.xlane.f32.xlu0 %v5121
        %v5313 = vpop.xlane.xlu0 %5312
        %5314 = vadd.xlane.f32.xlu0 %v5123
        %v5315 = vpop.xlane.xlu0 %5314
        %5316 = vadd.xlane.f32.xlu0 %v5125
        %v5317 = vpop.xlane.xlu0 %5316
        %5318 = vadd.xlane.f32.xlu0 %v5127
        %v5319 = vpop.xlane.xlu0 %5318
        %5320 = vadd.xlane.f32.xlu0 %v5129
        %v5321 = vpop.xlane.xlu0 %5320
        %5322 = vadd.xlane.f32.xlu0 %v5131
        %v5323 = vpop.xlane.xlu0 %5322
        %5324 = vadd.xlane.f32.xlu0 %v5133
        %v5325 = vpop.xlane.xlu0 %5324
        %5326 = vadd.xlane.f32.xlu0 %v5135
        %v5327 = vpop.xlane.xlu0 %5326
        %5328 = vadd.xlane.f32.xlu0 %v5137
        %v5329 = vpop.xlane.xlu0 %5328
        %5330 = vadd.xlane.f32.xlu0 %v5139
        %v5331 = vpop.xlane.xlu0 %5330
        %5332 = vadd.xlane.f32.xlu0 %v5141
        %v5333 = vpop.xlane.xlu0 %5332
        %5334 = vadd.xlane.f32.xlu0 %v5143
        %v5335 = vpop.xlane.xlu0 %5334
        %5336 = vadd.xlane.f32.xlu0 %v5145
        %v5337 = vpop.xlane.xlu0 %5336
        %5338 = vadd.xlane.f32.xlu0 %v5147
        %v5339 = vpop.xlane.xlu0 %5338
        %5340 = vadd.xlane.f32.xlu0 %v5149
        %v5341 = vpop.xlane.xlu0 %5340
        %5342 = vadd.xlane.f32.xlu0 %v5151
        %v5343 = vpop.xlane.xlu0 %5342
        %5344 = vadd.xlane.f32.xlu0 %v5153
        %v5345 = vpop.xlane.xlu0 %5344
        %5346 = vadd.xlane.f32.xlu0 %v5155
        %v5347 = vpop.xlane.xlu0 %5346
        %5348 = vadd.xlane.f32.xlu0 %v5157
        %v5349 = vpop.xlane.xlu0 %5348
        %5350 = vadd.xlane.f32.xlu0 %v5159
        %v5351 = vpop.xlane.xlu0 %5350
        %5352 = vadd.xlane.f32.xlu0 %v5161
        %v5353 = vpop.xlane.xlu0 %5352
        %5354 = vadd.xlane.f32.xlu0 %v5163
        %v5355 = vpop.xlane.xlu0 %5354
        %5356 = vadd.xlane.f32.xlu0 %v5165
        %v5357 = vpop.xlane.xlu0 %5356
        %5358 = vadd.xlane.f32.xlu0 %v5167
        %v5359 = vpop.xlane.xlu0 %5358
        %5360 = vadd.xlane.f32.xlu0 %v5169
        %v5361 = vpop.xlane.xlu0 %5360
        %5362 = vadd.xlane.f32.xlu0 %v5171
        %v5363 = vpop.xlane.xlu0 %5362
        %5364 = vadd.xlane.f32.xlu0 %v5173
        %v5365 = vpop.xlane.xlu0 %5364
        %5366 = vadd.xlane.f32.xlu0 %v5175
        %v5367 = vpop.xlane.xlu0 %5366
        %5368 = vadd.xlane.f32.xlu0 %v5177
        %v5369 = vpop.xlane.xlu0 %5368
        %v5370 = vrcp.pop %v5179
        %v5371 = vrcp.pop %v5181
        %v5372 = vrcp.pop %v5183
        %v5373 = vrcp.pop %v5185
        %v5374 = vrcp.pop %v5187
        %v5375 = vrcp.pop %v5189
        %v5376 = vrcp.pop %v5191
        %v5377 = vrcp.pop %v5193
        %v5378 = vrcp.pop %v5195
        %v5379 = vrcp.pop %v5197
        %v5380 = vrcp.pop %v5199
        %v5381 = vrcp.pop %v5201
        %v5382 = vrcp.pop %v5203
        %v5383 = vrcp.pop %v5205
        %v5384 = vrcp.pop %v5207
        %v5385 = vrcp.pop %v5209
        %v5386 = vrcp.pop %v5211
        %v5387 = vrcp.pop %v5213
        %v5388 = vrcp.pop %v5215
        %v5389 = vrcp.pop %v5217
        %v5390 = vrcp.pop %v5219
        %v5391 = vrcp.pop %v5221
        %v5392 = vrcp.pop %v5223
        %v5393 = vrcp.pop %v5225
        %v5394 = vrcp.pop %v5227
        %v5395 = vrcp.pop %v5229
        %v5396 = vrcp.pop %v5231
        %v5397 = vrcp.pop %v5233
        %v5398 = vrcp.pop %v5235
        %v5399 = vrcp.pop %v5237
        %v5400 = vrcp.pop %v5239
        %v5401 = vrcp.pop %v5241
        %v5402 = vrcp.pop %v5243
        %v5403 = vrcp.pop %v5245
        %v5404 = vrcp.pop %v5247
        %v5405 = vrcp.pop %v5249
        %v5406 = vrcp.pop %v5251
        %v5407 = vrcp.pop %v5253
        %v5408 = vrcp.pop %v5255
        %v5409 = vrcp.pop %v5257
        %v5410 = vrcp.pop %v5259
        %v5411 = vrcp.pop %v5261
        %v5412 = vrcp.pop %v5263
        %v5413 = vrcp.pop %v5265
        %v5414 = vrcp.pop %v5267
        %v5415 = vrcp.pop %v5269
        %v5416 = vrcp.pop %v5271
        %v5417 = vrcp.pop %v5273
        %v5418 = vrcp.pop %v5275
        %v5419 = vrcp.pop %v5277
        %v5420 = vrcp.pop %v5279
        %v5421 = vrcp.pop %v5281
        %v5422 = vrcp.pop %v5283
        %v5423 = vrcp.pop %v5285
        %v5424 = vrcp.pop %v5287
        %v5425 = vrcp.pop %v5289
        %v5426 = vrcp.pop %v5291
        %v5427 = vrcp.pop %v5293
        %v5428 = vrcp.pop %v5295
        %v5429 = vrcp.pop %v5297
        %v5430 = vrcp.pop %v5299
        %v5431 = vrcp.pop %v5301
        %v5432 = vrcp.pop %v5303
        %v5433 = vrcp.pop %v5305
        %v5434 = vrcp.pop %v5307
        %v5435 = vrcp.pop %v5309
        %v5436 = vrcp.pop %v5311
        %v5437 = vrcp.pop %v5313
        %v5438 = vrcp.pop %v5315
        %v5439 = vrcp.pop %v5317
        %v5440 = vrcp.pop %v5319
        %v5441 = vrcp.pop %v5321
        %v5442 = vrcp.pop %v5323
        %v5443 = vrcp.pop %v5325
        %v5444 = vrcp.pop %v5327
        %v5445 = vrcp.pop %v5329
        %v5446 = vrcp.pop %v5331
        %v5447 = vrcp.pop %v5333
        %v5448 = vrcp.pop %v5335
        %v5449 = vrcp.pop %v5337
        %v5450 = vrcp.pop %v5339
        %v5451 = vrcp.pop %v5341
        %v5452 = vrcp.pop %v5343
        %v5453 = vrcp.pop %v5345
        %v5454 = vrcp.pop %v5347
        %v5455 = vrcp.pop %v5349
        %v5456 = vrcp.pop %v5351
        %v5457 = vrcp.pop %v5353
        %v5458 = vrcp.pop %v5355
        %v5459 = vrcp.pop %v5357
        %v5460 = vrcp.pop %v5359
        %v5461 = vrcp.pop %v5361
        %v5462 = vrcp.pop %v5363
        %v5463 = vrcp.pop %v5365
        %v5464 = vrcp.pop %v5367
        %v5465 = vrcp.pop %v5369
        %v5466 = vpack.c.bf16 %v4989, %v4987
        %v5467 = vpack.c.bf16 %v4993, %v4991
        %v5468 = vpack.c.bf16 %v4997, %v4995
        %v5469 = vpack.c.bf16 %v5001, %v4999
        %v5470 = vpack.c.bf16 %v5005, %v5003
        %v5471 = vpack.c.bf16 %v5009, %v5007
        %v5472 = vpack.c.bf16 %v5013, %v5011
        %v5473 = vpack.c.bf16 %v5017, %v5015
        %v5474 = vpack.c.bf16 %v5021, %v5019
        %v5475 = vpack.c.bf16 %v5025, %v5023
        %v5476 = vpack.c.bf16 %v5029, %v5027
        %v5477 = vpack.c.bf16 %v5033, %v5031
        %v5478 = vpack.c.bf16 %v5037, %v5035
        %v5479 = vpack.c.bf16 %v5041, %v5039
        %v5480 = vpack.c.bf16 %v5045, %v5043
        %v5481 = vpack.c.bf16 %v5049, %v5047
        %v5482 = vpack.c.bf16 %v5053, %v5051
        %v5483 = vpack.c.bf16 %v5057, %v5055
        %v5484 = vpack.c.bf16 %v5061, %v5059
        %v5485 = vpack.c.bf16 %v5065, %v5063
        %v5486 = vpack.c.bf16 %v5069, %v5067
        %v5487 = vpack.c.bf16 %v5073, %v5071
        %v5488 = vpack.c.bf16 %v5077, %v5075
        %v5489 = vpack.c.bf16 %v5081, %v5079
        %v5490 = vpack.c.bf16 %v5085, %v5083
        %v5491 = vpack.c.bf16 %v5089, %v5087
        %v5492 = vpack.c.bf16 %v5093, %v5091
        %v5493 = vpack.c.bf16 %v5097, %v5095
        %v5494 = vpack.c.bf16 %v5101, %v5099
        %v5495 = vpack.c.bf16 %v5105, %v5103
        %v5496 = vpack.c.bf16 %v5109, %v5107
        %v5497 = vpack.c.bf16 %v5113, %v5111
        %v5498 = vpack.c.bf16 %v5117, %v5115
        %v5499 = vpack.c.bf16 %v5121, %v5119
        %v5500 = vpack.c.bf16 %v5125, %v5123
        %v5501 = vpack.c.bf16 %v5129, %v5127
        %v5502 = vpack.c.bf16 %v5133, %v5131
        %v5503 = vpack.c.bf16 %v5137, %v5135
        %v5504 = vpack.c.bf16 %v5141, %v5139
        %v5505 = vpack.c.bf16 %v5145, %v5143
        %v5506 = vpack.c.bf16 %v5149, %v5147
        %v5507 = vpack.c.bf16 %v5153, %v5151
        %v5508 = vpack.c.bf16 %v5157, %v5155
        %v5509 = vpack.c.bf16 %v5161, %v5159
        %v5510 = vpack.c.bf16 %v5165, %v5163
        %v5511 = vpack.c.bf16 %v5169, %v5167
        %v5512 = vpack.c.bf16 %v5173, %v5171
        %v5513 = vpack.c.bf16 %v5177, %v5175
        %5514 = vmatprep.subr.bf16.mxu0 0
        %5515 = vmatpush1.bf16.msra.mxu0 %v3588
        %5516 = vmatprep.subr.bf16.mxu0 0
        %5517 = vmatpush1.bf16.msra.mxu0 %v3590
        %5518 = vmatprep.subr.bf16.mxu0 0
        %5519 = vmatpush1.bf16.msra.mxu0 %v3592
        %5520 = vmatprep.subr.bf16.mxu0 0
        %5521 = vmatpush1.bf16.msra.mxu0 %v3594
        %5522 = vmatprep.subr.bf16.mxu0 0
        %5523 = vmatpush1.bf16.msra.mxu0 %v3596
        %5524 = vmatprep.subr.bf16.mxu0 0
        %5525 = vmatpush1.bf16.msra.mxu0 %v3598
        %5526 = vmatprep.subr.bf16.mxu0 0
        %5527 = vmatpush1.bf16.msra.mxu0 %v3600
        %5528 = vmatprep.subr.bf16.mxu0 0
        %5529 = vmatpush1.bf16.msra.mxu0 %v3602
        %5530 = vmatprep.subr.bf16.mxu0 0
        %5531 = vmatpush1.bf16.msra.mxu0 0
        %5532 = vmatprep.subr.bf16.mxu0 0
        %5533 = vmatpush1.bf16.msra.mxu0 0
        %5534 = vmatprep.subr.bf16.mxu0 0
        %5535 = vmatpush1.bf16.msra.mxu0 0
        %5536 = vmatprep.subr.bf16.mxu0 0
        %5537 = vmatpush1.bf16.msra.mxu0 0
        %5538 = vmatprep.subr.bf16.mxu0 0
        %5539 = vmatpush1.bf16.msra.mxu0 0
        %5540 = vmatprep.subr.bf16.mxu0 0
        %5541 = vmatpush1.bf16.msra.mxu0 0
        %5542 = vmatprep.subr.bf16.mxu0 0
        %5543 = vmatpush1.bf16.msra.mxu0 0
        %5544 = vmatprep.subr.bf16.mxu0 0
        %5545 = vmatpush1.bf16.msra.mxu0 0
        %5546 = vmatprep.mubr.bf16.mxu0 0
        %5547 = vmatmul.mubr.bf16.gmra.mrb[0].mxu0 %v5466
        %v5548 = vpop.f32.mrb[0].mxu0
        %v5549 = vadd.f32 0.0, %v5548
        %v5550 = vpop.f32.mrb[0].mxu0
        %v5551 = vpop.f32.mrb[0].mxu0
        %v5552 = vadd.f32 0.0, %v5551
        %v5553 = vpop.f32.mrb[0].mxu0
        %5554 = vmatprep.mubr.bf16.mxu0 0
        %5555 = vmatmul.mubr.bf16.gmra.mrb[0].mxu0 %v5467
        %v5556 = vpop.f32.mrb[0].mxu0
        %v5557 = vadd.f32 0.0, %v5556
        %v5558 = vpop.f32.mrb[0].mxu0
        %v5559 = vpop.f32.mrb[0].mxu0
        %v5560 = vadd.f32 0.0, %v5559
        %v5561 = vpop.f32.mrb[0].mxu0
        %5562 = vmatprep.mubr.bf16.mxu0 0
        %5563 = vmatmul.mubr.bf16.gmra.mrb[0].mxu0 %v5468
        %v5564 = vpop.f32.mrb[0].mxu0
        %v5565 = vadd.f32 0.0, %v5564
        %v5566 = vpop.f32.mrb[0].mxu0
        %v5567 = vpop.f32.mrb[0].mxu0
        %v5568 = vadd.f32 0.0, %v5567
        %v5569 = vpop.f32.mrb[0].mxu0
        %5570 = vmatprep.mubr.bf16.mxu0 0
        %5571 = vmatmul.mubr.bf16.gmra.mrb[0].mxu0 %v5469
        %v5572 = vpop.f32.mrb[0].mxu0
        %v5573 = vadd.f32 0.0, %v5572
        %v5574 = vpop.f32.mrb[0].mxu0
        %v5575 = vpop.f32.mrb[0].mxu0
        %v5576 = vadd.f32 0.0, %v5575
        %v5577 = vpop.f32.mrb[0].mxu0
        %5578 = vmatprep.mubr.bf16.mxu0 0
        %5579 = vmatmul.mubr.bf16.gmra.mrb[0].mxu0 %v5470
        %v5580 = vpop.f32.mrb[0].mxu0
        %v5581 = vadd.f32 0.0, %v5580
        %v5582 = vpop.f32.mrb[0].mxu0
        %v5583 = vpop.f32.mrb[0].mxu0
        %v5584 = vadd.f32 0.0, %v5583
        %v5585 = vpop.f32.mrb[0].mxu0
        %5586 = vmatprep.mubr.bf16.mxu0 0
        %5587 = vmatmul.mubr.bf16.gmra.mrb[0].mxu0 %v5471
        %v5588 = vpop.f32.mrb[0].mxu0
        %v5589 = vadd.f32 0.0, %v5588
        %v5590 = vpop.f32.mrb[0].mxu0
        %v5591 = vpop.f32.mrb[0].mxu0
        %v5592 = vadd.f32 0.0, %v5591
        %v5593 = vpop.f32.mrb[0].mxu0
        %5594 = vmatprep.mubr.bf16.mxu0 0
        %5595 = vmatmul.mubr.bf16.gmra.mrb[0].mxu0 %v5472
        %v5596 = vpop.f32.mrb[0].mxu0
        %v5597 = vadd.f32 0.0, %v5596
        %v5598 = vpop.f32.mrb[0].mxu0
        %v5599 = vpop.f32.mrb[0].mxu0
        %v5600 = vadd.f32 0.0, %v5599
        %v5601 = vpop.f32.mrb[0].mxu0
        %5602 = vmatprep.mubr.bf16.mxu0 0
        %5603 = vmatmul.mubr.bf16.gmra.mrb[0].mxu0 %v5473
        %v5604 = vpop.f32.mrb[0].mxu0
        %v5605 = vadd.f32 0.0, %v5604
        %v5606 = vpop.f32.mrb[0].mxu0
        %v5607 = vpop.f32.mrb[0].mxu0
        %v5608 = vadd.f32 0.0, %v5607
        %v5609 = vpop.f32.mrb[0].mxu0
        %5610 = vdwg.mxu0
        %5611 = vmatprep.subr.bf16.mxu0 0
        %5612 = vmatpush1.bf16.msra.mxu0 %v3604
        %5613 = vmatprep.subr.bf16.mxu0 0
        %5614 = vmatpush1.bf16.msra.mxu0 %v3606
        %5615 = vmatprep.subr.bf16.mxu0 0
        %5616 = vmatpush1.bf16.msra.mxu0 %v3608
        %5617 = vmatprep.subr.bf16.mxu0 0
        %5618 = vmatpush1.bf16.msra.mxu0 %v3610
        %5619 = vmatprep.subr.bf16.mxu0 0
        %5620 = vmatpush1.bf16.msra.mxu0 %v3612
        %5621 = vmatprep.subr.bf16.mxu0 0
        %5622 = vmatpush1.bf16.msra.mxu0 %v3614
        %5623 = vmatprep.subr.bf16.mxu0 0
        %5624 = vmatpush1.bf16.msra.mxu0 %v3616
        %5625 = vmatprep.subr.bf16.mxu0 0
        %5626 = vmatpush1.bf16.msra.mxu0 %v3618
        %5627 = vmatprep.subr.bf16.mxu0 0
        %5628 = vmatpush1.bf16.msra.mxu0 0
        %5629 = vmatprep.subr.bf16.mxu0 0
        %5630 = vmatpush1.bf16.msra.mxu0 0
        %5631 = vmatprep.subr.bf16.mxu0 0
        %5632 = vmatpush1.bf16.msra.mxu0 0
        %5633 = vmatprep.subr.bf16.mxu0 0
        %5634 = vmatpush1.bf16.msra.mxu0 0
        %5635 = vmatprep.subr.bf16.mxu0 0
        %5636 = vmatpush1.bf16.msra.mxu0 0
        %5637 = vmatprep.subr.bf16.mxu0 0
        %5638 = vmatpush1.bf16.msra.mxu0 0
        %5639 = vmatprep.subr.bf16.mxu0 0
        %5640 = vmatpush1.bf16.msra.mxu0 0
        %5641 = vmatprep.subr.bf16.mxu0 0
        %5642 = vmatpush1.bf16.msra.mxu0 0
        %5643 = vmatprep.mubr.bf16.mxu0 0
        %5644 = vmatmul.mubr.bf16.gmra.mrb[0].mxu0 %v5474
        %v5645 = vpop.f32.mrb[0].mxu0
        %v5646 = vadd.f32 0.0, %v5645
        %v5647 = vpop.f32.mrb[0].mxu0
        %v5648 = vpop.f32.mrb[0].mxu0
        %v5649 = vadd.f32 0.0, %v5648
        %v5650 = vpop.f32.mrb[0].mxu0
        %5651 = vmatprep.mubr.bf16.mxu0 0
        %5652 = vmatmul.mubr.bf16.gmra.mrb[0].mxu0 %v5475
        %v5653 = vpop.f32.mrb[0].mxu0
        %v5654 = vadd.f32 0.0, %v5653
        %v5655 = vpop.f32.mrb[0].mxu0
        %v5656 = vpop.f32.mrb[0].mxu0
        %v5657 = vadd.f32 0.0, %v5656
        %v5658 = vpop.f32.mrb[0].mxu0
        %5659 = vmatprep.mubr.bf16.mxu0 0
        %5660 = vmatmul.mubr.bf16.gmra.mrb[0].mxu0 %v5476
        %v5661 = vpop.f32.mrb[0].mxu0
        %v5662 = vadd.f32 0.0, %v5661
        %v5663 = vpop.f32.mrb[0].mxu0
        %v5664 = vpop.f32.mrb[0].mxu0
        %v5665 = vadd.f32 0.0, %v5664
        %v5666 = vpop.f32.mrb[0].mxu0
        %5667 = vmatprep.mubr.bf16.mxu0 0
        %5668 = vmatmul.mubr.bf16.gmra.mrb[0].mxu0 %v5477
        %v5669 = vpop.f32.mrb[0].mxu0
        %v5670 = vadd.f32 0.0, %v5669
        %v5671 = vpop.f32.mrb[0].mxu0
        %v5672 = vpop.f32.mrb[0].mxu0
        %v5673 = vadd.f32 0.0, %v5672
        %v5674 = vpop.f32.mrb[0].mxu0
        %5675 = vmatprep.mubr.bf16.mxu0 0
        %5676 = vmatmul.mubr.bf16.gmra.mrb[0].mxu0 %v5478
        %v5677 = vpop.f32.mrb[0].mxu0
        %v5678 = vadd.f32 0.0, %v5677
        %v5679 = vpop.f32.mrb[0].mxu0
        %v5680 = vpop.f32.mrb[0].mxu0
        %v5681 = vadd.f32 0.0, %v5680
        %v5682 = vpop.f32.mrb[0].mxu0
        %5683 = vmatprep.mubr.bf16.mxu0 0
        %5684 = vmatmul.mubr.bf16.gmra.mrb[0].mxu0 %v5479
        %v5685 = vpop.f32.mrb[0].mxu0
        %v5686 = vadd.f32 0.0, %v5685
        %v5687 = vpop.f32.mrb[0].mxu0
        %v5688 = vpop.f32.mrb[0].mxu0
        %v5689 = vadd.f32 0.0, %v5688
        %v5690 = vpop.f32.mrb[0].mxu0
        %5691 = vmatprep.mubr.bf16.mxu0 0
        %5692 = vmatmul.mubr.bf16.gmra.mrb[0].mxu0 %v5480
        %v5693 = vpop.f32.mrb[0].mxu0
        %v5694 = vadd.f32 0.0, %v5693
        %v5695 = vpop.f32.mrb[0].mxu0
        %v5696 = vpop.f32.mrb[0].mxu0
        %v5697 = vadd.f32 0.0, %v5696
        %v5698 = vpop.f32.mrb[0].mxu0
        %5699 = vmatprep.mubr.bf16.mxu0 0
        %5700 = vmatmul.mubr.bf16.gmra.mrb[0].mxu0 %v5481
        %v5701 = vpop.f32.mrb[0].mxu0
        %v5702 = vadd.f32 0.0, %v5701
        %v5703 = vpop.f32.mrb[0].mxu0
        %v5704 = vpop.f32.mrb[0].mxu0
        %v5705 = vadd.f32 0.0, %v5704
        %v5706 = vpop.f32.mrb[0].mxu0
        %5707 = vdwg.mxu0
        %5708 = vmatprep.subr.bf16.mxu0 0
        %5709 = vmatpush1.bf16.msra.mxu0 %v3620
        %5710 = vmatprep.subr.bf16.mxu0 0
        %5711 = vmatpush1.bf16.msra.mxu0 %v3622
        %5712 = vmatprep.subr.bf16.mxu0 0
        %5713 = vmatpush1.bf16.msra.mxu0 %v3624
        %5714 = vmatprep.subr.bf16.mxu0 0
        %5715 = vmatpush1.bf16.msra.mxu0 %v3626
        %5716 = vmatprep.subr.bf16.mxu0 0
        %5717 = vmatpush1.bf16.msra.mxu0 %v3628
        %5718 = vmatprep.subr.bf16.mxu0 0
        %5719 = vmatpush1.bf16.msra.mxu0 %v3630
        %5720 = vmatprep.subr.bf16.mxu0 0
        %5721 = vmatpush1.bf16.msra.mxu0 %v3632
        %5722 = vmatprep.subr.bf16.mxu0 0
        %5723 = vmatpush1.bf16.msra.mxu0 %v3634
        %5724 = vmatprep.subr.bf16.mxu0 0
        %5725 = vmatpush1.bf16.msra.mxu0 0
        %5726 = vmatprep.subr.bf16.mxu0 0
        %5727 = vmatpush1.bf16.msra.mxu0 0
        %5728 = vmatprep.subr.bf16.mxu0 0
        %5729 = vmatpush1.bf16.msra.mxu0 0
        %5730 = vmatprep.subr.bf16.mxu0 0
        %5731 = vmatpush1.bf16.msra.mxu0 0
        %5732 = vmatprep.subr.bf16.mxu0 0
        %5733 = vmatpush1.bf16.msra.mxu0 0
        %5734 = vmatprep.subr.bf16.mxu0 0
        %5735 = vmatpush1.bf16.msra.mxu0 0
        %5736 = vmatprep.subr.bf16.mxu0 0
        %5737 = vmatpush1.bf16.msra.mxu0 0
        %5738 = vmatprep.subr.bf16.mxu0 0
        %5739 = vmatpush1.bf16.msra.mxu0 0
        %5740 = vmatprep.mubr.bf16.mxu0 0
        %5741 = vmatmul.mubr.bf16.gmra.mrb[0].mxu0 %v5482
        %v5742 = vpop.f32.mrb[0].mxu0
        %v5743 = vadd.f32 0.0, %v5742
        %v5744 = vpop.f32.mrb[0].mxu0
        %v5745 = vpop.f32.mrb[0].mxu0
        %v5746 = vadd.f32 0.0, %v5745
        %v5747 = vpop.f32.mrb[0].mxu0
        %5748 = vmatprep.mubr.bf16.mxu0 0
        %5749 = vmatmul.mubr.bf16.gmra.mrb[0].mxu0 %v5483
        %v5750 = vpop.f32.mrb[0].mxu0
        %v5751 = vadd.f32 0.0, %v5750
        %v5752 = vpop.f32.mrb[0].mxu0
        %v5753 = vpop.f32.mrb[0].mxu0
        %v5754 = vadd.f32 0.0, %v5753
        %v5755 = vpop.f32.mrb[0].mxu0
        %5756 = vmatprep.mubr.bf16.mxu0 0
        %5757 = vmatmul.mubr.bf16.gmra.mrb[0].mxu0 %v5484
        %v5758 = vpop.f32.mrb[0].mxu0
        %v5759 = vadd.f32 0.0, %v5758
        %v5760 = vpop.f32.mrb[0].mxu0
        %v5761 = vpop.f32.mrb[0].mxu0
        %v5762 = vadd.f32 0.0, %v5761
        %v5763 = vpop.f32.mrb[0].mxu0
        %5764 = vmatprep.mubr.bf16.mxu0 0
        %5765 = vmatmul.mubr.bf16.gmra.mrb[0].mxu0 %v5485
        %v5766 = vpop.f32.mrb[0].mxu0
        %v5767 = vadd.f32 0.0, %v5766
        %v5768 = vpop.f32.mrb[0].mxu0
        %v5769 = vpop.f32.mrb[0].mxu0
        %v5770 = vadd.f32 0.0, %v5769
        %v5771 = vpop.f32.mrb[0].mxu0
        %5772 = vmatprep.mubr.bf16.mxu0 0
        %5773 = vmatmul.mubr.bf16.gmra.mrb[0].mxu0 %v5486
        %v5774 = vpop.f32.mrb[0].mxu0
        %v5775 = vadd.f32 0.0, %v5774
        %v5776 = vpop.f32.mrb[0].mxu0
        %v5777 = vpop.f32.mrb[0].mxu0
        %v5778 = vadd.f32 0.0, %v5777
        %v5779 = vpop.f32.mrb[0].mxu0
        %5780 = vmatprep.mubr.bf16.mxu0 0
        %5781 = vmatmul.mubr.bf16.gmra.mrb[0].mxu0 %v5487
        %v5782 = vpop.f32.mrb[0].mxu0
        %v5783 = vadd.f32 0.0, %v5782
        %v5784 = vpop.f32.mrb[0].mxu0
        %v5785 = vpop.f32.mrb[0].mxu0
        %v5786 = vadd.f32 0.0, %v5785
        %v5787 = vpop.f32.mrb[0].mxu0
        %5788 = vmatprep.mubr.bf16.mxu0 0
        %5789 = vmatmul.mubr.bf16.gmra.mrb[0].mxu0 %v5488
        %v5790 = vpop.f32.mrb[0].mxu0
        %v5791 = vadd.f32 0.0, %v5790
        %v5792 = vpop.f32.mrb[0].mxu0
        %v5793 = vpop.f32.mrb[0].mxu0
        %v5794 = vadd.f32 0.0, %v5793
        %v5795 = vpop.f32.mrb[0].mxu0
        %5796 = vmatprep.mubr.bf16.mxu0 0
        %5797 = vmatmul.mubr.bf16.gmra.mrb[0].mxu0 %v5489
        %v5798 = vpop.f32.mrb[0].mxu0
        %v5799 = vadd.f32 0.0, %v5798
        %v5800 = vpop.f32.mrb[0].mxu0
        %v5801 = vpop.f32.mrb[0].mxu0
        %v5802 = vadd.f32 0.0, %v5801
        %v5803 = vpop.f32.mrb[0].mxu0
        %5804 = vdwg.mxu0
        %5805 = vmatprep.subr.bf16.mxu0 0
        %5806 = vmatpush1.bf16.msra.mxu0 %v3636
        %5807 = vmatprep.subr.bf16.mxu0 0
        %5808 = vmatpush1.bf16.msra.mxu0 %v3638
        %5809 = vmatprep.subr.bf16.mxu0 0
        %5810 = vmatpush1.bf16.msra.mxu0 %v3640
        %5811 = vmatprep.subr.bf16.mxu0 0
        %5812 = vmatpush1.bf16.msra.mxu0 %v3642
        %5813 = vmatprep.subr.bf16.mxu0 0
        %5814 = vmatpush1.bf16.msra.mxu0 %v3644
        %5815 = vmatprep.subr.bf16.mxu0 0
        %5816 = vmatpush1.bf16.msra.mxu0 %v3646
        %5817 = vmatprep.subr.bf16.mxu0 0
        %5818 = vmatpush1.bf16.msra.mxu0 %v3648
        %5819 = vmatprep.subr.bf16.mxu0 0
        %5820 = vmatpush1.bf16.msra.mxu0 %v3650
        %5821 = vmatprep.subr.bf16.mxu0 0
        %5822 = vmatpush1.bf16.msra.mxu0 0
        %5823 = vmatprep.subr.bf16.mxu0 0
        %5824 = vmatpush1.bf16.msra.mxu0 0
        %5825 = vmatprep.subr.bf16.mxu0 0
        %5826 = vmatpush1.bf16.msra.mxu0 0
        %5827 = vmatprep.subr.bf16.mxu0 0
        %5828 = vmatpush1.bf16.msra.mxu0 0
        %5829 = vmatprep.subr.bf16.mxu0 0
        %5830 = vmatpush1.bf16.msra.mxu0 0
        %5831 = vmatprep.subr.bf16.mxu0 0
        %5832 = vmatpush1.bf16.msra.mxu0 0
        %5833 = vmatprep.subr.bf16.mxu0 0
        %5834 = vmatpush1.bf16.msra.mxu0 0
        %5835 = vmatprep.subr.bf16.mxu0 0
        %5836 = vmatpush1.bf16.msra.mxu0 0
        %5837 = vmatprep.mubr.bf16.mxu0 0
        %5838 = vmatmul.mubr.bf16.gmra.mrb[0].mxu0 %v5490
        %v5839 = vpop.f32.mrb[0].mxu0
        %v5840 = vadd.f32 0.0, %v5839
        %v5841 = vpop.f32.mrb[0].mxu0
        %v5842 = vpop.f32.mrb[0].mxu0
        %v5843 = vadd.f32 0.0, %v5842
        %v5844 = vpop.f32.mrb[0].mxu0
        %5845 = vmatprep.mubr.bf16.mxu0 0
        %5846 = vmatmul.mubr.bf16.gmra.mrb[0].mxu0 %v5491
        %v5847 = vpop.f32.mrb[0].mxu0
        %v5848 = vadd.f32 0.0, %v5847
        %v5849 = vpop.f32.mrb[0].mxu0
        %v5850 = vpop.f32.mrb[0].mxu0
        %v5851 = vadd.f32 0.0, %v5850
        %v5852 = vpop.f32.mrb[0].mxu0
        %5853 = vmatprep.mubr.bf16.mxu0 0
        %5854 = vmatmul.mubr.bf16.gmra.mrb[0].mxu0 %v5492
        %v5855 = vpop.f32.mrb[0].mxu0
        %v5856 = vadd.f32 0.0, %v5855
        %v5857 = vpop.f32.mrb[0].mxu0
        %v5858 = vpop.f32.mrb[0].mxu0
        %v5859 = vadd.f32 0.0, %v5858
        %v5860 = vpop.f32.mrb[0].mxu0
        %5861 = vmatprep.mubr.bf16.mxu0 0
        %5862 = vmatmul.mubr.bf16.gmra.mrb[0].mxu0 %v5493
        %v5863 = vpop.f32.mrb[0].mxu0
        %v5864 = vadd.f32 0.0, %v5863
        %v5865 = vpop.f32.mrb[0].mxu0
        %v5866 = vpop.f32.mrb[0].mxu0
        %v5867 = vadd.f32 0.0, %v5866
        %v5868 = vpop.f32.mrb[0].mxu0
        %5869 = vmatprep.mubr.bf16.mxu0 0
        %5870 = vmatmul.mubr.bf16.gmra.mrb[0].mxu0 %v5494
        %v5871 = vpop.f32.mrb[0].mxu0
        %v5872 = vadd.f32 0.0, %v5871
        %v5873 = vpop.f32.mrb[0].mxu0
        %v5874 = vpop.f32.mrb[0].mxu0
        %v5875 = vadd.f32 0.0, %v5874
        %v5876 = vpop.f32.mrb[0].mxu0
        %5877 = vmatprep.mubr.bf16.mxu0 0
        %5878 = vmatmul.mubr.bf16.gmra.mrb[0].mxu0 %v5495
        %v5879 = vpop.f32.mrb[0].mxu0
        %v5880 = vadd.f32 0.0, %v5879
        %v5881 = vpop.f32.mrb[0].mxu0
        %v5882 = vpop.f32.mrb[0].mxu0
        %v5883 = vadd.f32 0.0, %v5882
        %v5884 = vpop.f32.mrb[0].mxu0
        %5885 = vmatprep.mubr.bf16.mxu0 0
        %5886 = vmatmul.mubr.bf16.gmra.mrb[0].mxu0 %v5496
        %v5887 = vpop.f32.mrb[0].mxu0
        %v5888 = vadd.f32 0.0, %v5887
        %v5889 = vpop.f32.mrb[0].mxu0
        %v5890 = vpop.f32.mrb[0].mxu0
        %v5891 = vadd.f32 0.0, %v5890
        %v5892 = vpop.f32.mrb[0].mxu0
        %5893 = vmatprep.mubr.bf16.mxu0 0
        %5894 = vmatmul.mubr.bf16.gmra.mrb[0].mxu0 %v5497
        %v5895 = vpop.f32.mrb[0].mxu0
        %v5896 = vadd.f32 0.0, %v5895
        %v5897 = vpop.f32.mrb[0].mxu0
        %v5898 = vpop.f32.mrb[0].mxu0
        %v5899 = vadd.f32 0.0, %v5898
        %v5900 = vpop.f32.mrb[0].mxu0
        %5901 = vdwg.mxu0
        %5902 = vmatprep.subr.bf16.mxu0 0
        %5903 = vmatpush1.bf16.msra.mxu0 %v3652
        %5904 = vmatprep.subr.bf16.mxu0 0
        %5905 = vmatpush1.bf16.msra.mxu0 %v3654
        %5906 = vmatprep.subr.bf16.mxu0 0
        %5907 = vmatpush1.bf16.msra.mxu0 %v3656
        %5908 = vmatprep.subr.bf16.mxu0 0
        %5909 = vmatpush1.bf16.msra.mxu0 %v3658
        %5910 = vmatprep.subr.bf16.mxu0 0
        %5911 = vmatpush1.bf16.msra.mxu0 %v3660
        %5912 = vmatprep.subr.bf16.mxu0 0
        %5913 = vmatpush1.bf16.msra.mxu0 %v3662
        %5914 = vmatprep.subr.bf16.mxu0 0
        %5915 = vmatpush1.bf16.msra.mxu0 %v3664
        %5916 = vmatprep.subr.bf16.mxu0 0
        %5917 = vmatpush1.bf16.msra.mxu0 %v3666
        %5918 = vmatprep.subr.bf16.mxu0 0
        %5919 = vmatpush1.bf16.msra.mxu0 0
        %5920 = vmatprep.subr.bf16.mxu0 0
        %5921 = vmatpush1.bf16.msra.mxu0 0
        %5922 = vmatprep.subr.bf16.mxu0 0
        %5923 = vmatpush1.bf16.msra.mxu0 0
        %5924 = vmatprep.subr.bf16.mxu0 0
        %5925 = vmatpush1.bf16.msra.mxu0 0
        %5926 = vmatprep.subr.bf16.mxu0 0
        %5927 = vmatpush1.bf16.msra.mxu0 0
        %5928 = vmatprep.subr.bf16.mxu0 0
        %5929 = vmatpush1.bf16.msra.mxu0 0
        %5930 = vmatprep.subr.bf16.mxu0 0
        %5931 = vmatpush1.bf16.msra.mxu0 0
        %5932 = vmatprep.subr.bf16.mxu0 0
        %5933 = vmatpush1.bf16.msra.mxu0 0
        %5934 = vmatprep.mubr.bf16.mxu0 0
        %5935 = vmatmul.mubr.bf16.gmra.mrb[0].mxu0 %v5498
        %v5936 = vpop.f32.mrb[0].mxu0
        %v5937 = vadd.f32 0.0, %v5936
        %v5938 = vpop.f32.mrb[0].mxu0
        %v5939 = vpop.f32.mrb[0].mxu0
        %v5940 = vadd.f32 0.0, %v5939
        %v5941 = vpop.f32.mrb[0].mxu0
        %5942 = vmatprep.mubr.bf16.mxu0 0
        %5943 = vmatmul.mubr.bf16.gmra.mrb[0].mxu0 %v5499
        %v5944 = vpop.f32.mrb[0].mxu0
        %v5945 = vadd.f32 0.0, %v5944
        %v5946 = vpop.f32.mrb[0].mxu0
        %v5947 = vpop.f32.mrb[0].mxu0
        %v5948 = vadd.f32 0.0, %v5947
        %v5949 = vpop.f32.mrb[0].mxu0
        %5950 = vmatprep.mubr.bf16.mxu0 0
        %5951 = vmatmul.mubr.bf16.gmra.mrb[0].mxu0 %v5500
        %v5952 = vpop.f32.mrb[0].mxu0
        %v5953 = vadd.f32 0.0, %v5952
        %v5954 = vpop.f32.mrb[0].mxu0
        %v5955 = vpop.f32.mrb[0].mxu0
        %v5956 = vadd.f32 0.0, %v5955
        %v5957 = vpop.f32.mrb[0].mxu0
        %5958 = vmatprep.mubr.bf16.mxu0 0
        %5959 = vmatmul.mubr.bf16.gmra.mrb[0].mxu0 %v5501
        %v5960 = vpop.f32.mrb[0].mxu0
        %v5961 = vadd.f32 0.0, %v5960
        %v5962 = vpop.f32.mrb[0].mxu0
        %v5963 = vpop.f32.mrb[0].mxu0
        %v5964 = vadd.f32 0.0, %v5963
        %v5965 = vpop.f32.mrb[0].mxu0
        %5966 = vmatprep.mubr.bf16.mxu0 0
        %5967 = vmatmul.mubr.bf16.gmra.mrb[0].mxu0 %v5502
        %v5968 = vpop.f32.mrb[0].mxu0
        %v5969 = vadd.f32 0.0, %v5968
        %v5970 = vpop.f32.mrb[0].mxu0
        %v5971 = vpop.f32.mrb[0].mxu0
        %v5972 = vadd.f32 0.0, %v5971
        %v5973 = vpop.f32.mrb[0].mxu0
        %5974 = vmatprep.mubr.bf16.mxu0 0
        %5975 = vmatmul.mubr.bf16.gmra.mrb[0].mxu0 %v5503
        %v5976 = vpop.f32.mrb[0].mxu0
        %v5977 = vadd.f32 0.0, %v5976
        %v5978 = vpop.f32.mrb[0].mxu0
        %v5979 = vpop.f32.mrb[0].mxu0
        %v5980 = vadd.f32 0.0, %v5979
        %v5981 = vpop.f32.mrb[0].mxu0
        %5982 = vmatprep.mubr.bf16.mxu0 0
        %5983 = vmatmul.mubr.bf16.gmra.mrb[0].mxu0 %v5504
        %v5984 = vpop.f32.mrb[0].mxu0
        %v5985 = vadd.f32 0.0, %v5984
        %v5986 = vpop.f32.mrb[0].mxu0
        %v5987 = vpop.f32.mrb[0].mxu0
        %v5988 = vadd.f32 0.0, %v5987
        %v5989 = vpop.f32.mrb[0].mxu0
        %5990 = vmatprep.mubr.bf16.mxu0 0
        %5991 = vmatmul.mubr.bf16.gmra.mrb[0].mxu0 %v5505
        %v5992 = vpop.f32.mrb[0].mxu0
        %v5993 = vadd.f32 0.0, %v5992
        %v5994 = vpop.f32.mrb[0].mxu0
        %v5995 = vpop.f32.mrb[0].mxu0
        %v5996 = vadd.f32 0.0, %v5995
        %v5997 = vpop.f32.mrb[0].mxu0
        %5998 = vdwg.mxu0
        %5999 = vmatprep.subr.bf16.mxu0 0
        %6000 = vmatpush1.bf16.msra.mxu0 %v3668
        %6001 = vmatprep.subr.bf16.mxu0 0
        %6002 = vmatpush1.bf16.msra.mxu0 %v3670
        %6003 = vmatprep.subr.bf16.mxu0 0
        %6004 = vmatpush1.bf16.msra.mxu0 %v3672
        %6005 = vmatprep.subr.bf16.mxu0 0
        %6006 = vmatpush1.bf16.msra.mxu0 %v3674
        %6007 = vmatprep.subr.bf16.mxu0 0
        %6008 = vmatpush1.bf16.msra.mxu0 %v3676
        %6009 = vmatprep.subr.bf16.mxu0 0
        %6010 = vmatpush1.bf16.msra.mxu0 %v3678
        %6011 = vmatprep.subr.bf16.mxu0 0
        %6012 = vmatpush1.bf16.msra.mxu0 %v3680
        %6013 = vmatprep.subr.bf16.mxu0 0
        %6014 = vmatpush1.bf16.msra.mxu0 %v3682
        %6015 = vmatprep.subr.bf16.mxu0 0
        %6016 = vmatpush1.bf16.msra.mxu0 0
        %6017 = vmatprep.subr.bf16.mxu0 0
        %6018 = vmatpush1.bf16.msra.mxu0 0
        %6019 = vmatprep.subr.bf16.mxu0 0
        %6020 = vmatpush1.bf16.msra.mxu0 0
        %6021 = vmatprep.subr.bf16.mxu0 0
        %6022 = vmatpush1.bf16.msra.mxu0 0
        %6023 = vmatprep.subr.bf16.mxu0 0
        %6024 = vmatpush1.bf16.msra.mxu0 0
        %6025 = vmatprep.subr.bf16.mxu0 0
        %6026 = vmatpush1.bf16.msra.mxu0 0
        %6027 = vmatprep.subr.bf16.mxu0 0
        %6028 = vmatpush1.bf16.msra.mxu0 0
        %6029 = vmatprep.subr.bf16.mxu0 0
        %6030 = vmatpush1.bf16.msra.mxu0 0
        %6031 = vmatprep.mubr.bf16.mxu0 0
        %6032 = vmatmul.mubr.bf16.gmra.mrb[0].mxu0 %v5506
        %v6033 = vpop.f32.mrb[0].mxu0
        %v6034 = vadd.f32 0.0, %v6033
        %v6035 = vpop.f32.mrb[0].mxu0
        %v6036 = vpop.f32.mrb[0].mxu0
        %v6037 = vadd.f32 0.0, %v6036
        %v6038 = vpop.f32.mrb[0].mxu0
        %6039 = vmatprep.mubr.bf16.mxu0 0
        %6040 = vmatmul.mubr.bf16.gmra.mrb[0].mxu0 %v5507
        %v6041 = vpop.f32.mrb[0].mxu0
        %v6042 = vadd.f32 0.0, %v6041
        %v6043 = vpop.f32.mrb[0].mxu0
        %v6044 = vpop.f32.mrb[0].mxu0
        %v6045 = vadd.f32 0.0, %v6044
        %v6046 = vpop.f32.mrb[0].mxu0
        %6047 = vmatprep.mubr.bf16.mxu0 0
        %6048 = vmatmul.mubr.bf16.gmra.mrb[0].mxu0 %v5508
        %v6049 = vpop.f32.mrb[0].mxu0
        %v6050 = vadd.f32 0.0, %v6049
        %v6051 = vpop.f32.mrb[0].mxu0
        %v6052 = vpop.f32.mrb[0].mxu0
        %v6053 = vadd.f32 0.0, %v6052
        %v6054 = vpop.f32.mrb[0].mxu0
        %6055 = vmatprep.mubr.bf16.mxu0 0
        %6056 = vmatmul.mubr.bf16.gmra.mrb[0].mxu0 %v5509
        %v6057 = vpop.f32.mrb[0].mxu0
        %v6058 = vadd.f32 0.0, %v6057
        %v6059 = vpop.f32.mrb[0].mxu0
        %v6060 = vpop.f32.mrb[0].mxu0
        %v6061 = vadd.f32 0.0, %v6060
        %v6062 = vpop.f32.mrb[0].mxu0
        %6063 = vmatprep.mubr.bf16.mxu0 0
        %6064 = vmatmul.mubr.bf16.gmra.mrb[0].mxu0 %v5510
        %v6065 = vpop.f32.mrb[0].mxu0
        %v6066 = vadd.f32 0.0, %v6065
        %v6067 = vpop.f32.mrb[0].mxu0
        %v6068 = vpop.f32.mrb[0].mxu0
        %v6069 = vadd.f32 0.0, %v6068
        %v6070 = vpop.f32.mrb[0].mxu0
        %6071 = vmatprep.mubr.bf16.mxu0 0
        %6072 = vmatmul.mubr.bf16.gmra.mrb[0].mxu0 %v5511
        %v6073 = vpop.f32.mrb[0].mxu0
        %v6074 = vadd.f32 0.0, %v6073
        %v6075 = vpop.f32.mrb[0].mxu0
        %v6076 = vpop.f32.mrb[0].mxu0
        %v6077 = vadd.f32 0.0, %v6076
        %v6078 = vpop.f32.mrb[0].mxu0
        %6079 = vmatprep.mubr.bf16.mxu0 0
        %6080 = vmatmul.mubr.bf16.gmra.mrb[0].mxu0 %v5512
        %v6081 = vpop.f32.mrb[0].mxu0
        %v6082 = vadd.f32 0.0, %v6081
        %v6083 = vpop.f32.mrb[0].mxu0
        %v6084 = vpop.f32.mrb[0].mxu0
        %v6085 = vadd.f32 0.0, %v6084
        %v6086 = vpop.f32.mrb[0].mxu0
        %6087 = vmatprep.mubr.bf16.mxu0 0
        %6088 = vmatmul.mubr.bf16.gmra.mrb[0].mxu0 %v5513
        %v6089 = vpop.f32.mrb[0].mxu0
        %v6090 = vadd.f32 0.0, %v6089
        %v6091 = vpop.f32.mrb[0].mxu0
        %v6092 = vpop.f32.mrb[0].mxu0
        %v6093 = vadd.f32 0.0, %v6092
        %v6094 = vpop.f32.mrb[0].mxu0
        %6095 = vdwg.mxu0
        %v6096 = vmul.f32 %v5549, %v5370
        %v6097 = vmul.f32 %v5552, %v5371
        %v6098 = vmul.f32 %v5557, %v5372
        %v6099 = vmul.f32 %v5560, %v5373
        %v6100 = vmul.f32 %v5565, %v5374
        %v6101 = vmul.f32 %v5568, %v5375
        %v6102 = vmul.f32 %v5573, %v5376
        %v6103 = vmul.f32 %v5576, %v5377
        %v6104 = vmul.f32 %v5581, %v5378
        %v6105 = vmul.f32 %v5584, %v5379
        %v6106 = vmul.f32 %v5589, %v5380
        %v6107 = vmul.f32 %v5592, %v5381
        %v6108 = vmul.f32 %v5597, %v5382
        %v6109 = vmul.f32 %v5600, %v5383
        %v6110 = vmul.f32 %v5605, %v5384
        %v6111 = vmul.f32 %v5608, %v5385
        %v6112 = vmul.f32 %v5646, %v5386
        %v6113 = vmul.f32 %v5649, %v5387
        %v6114 = vmul.f32 %v5654, %v5388
        %v6115 = vmul.f32 %v5657, %v5389
        %v6116 = vmul.f32 %v5662, %v5390
        %v6117 = vmul.f32 %v5665, %v5391
        %v6118 = vmul.f32 %v5670, %v5392
        %v6119 = vmul.f32 %v5673, %v5393
        %v6120 = vmul.f32 %v5678, %v5394
        %v6121 = vmul.f32 %v5681, %v5395
        %v6122 = vmul.f32 %v5686, %v5396
        %v6123 = vmul.f32 %v5689, %v5397
        %v6124 = vmul.f32 %v5694, %v5398
        %v6125 = vmul.f32 %v5697, %v5399
        %v6126 = vmul.f32 %v5702, %v5400
        %v6127 = vmul.f32 %v5705, %v5401
        %v6128 = vmul.f32 %v5743, %v5402
        %v6129 = vmul.f32 %v5746, %v5403
        %v6130 = vmul.f32 %v5751, %v5404
        %v6131 = vmul.f32 %v5754, %v5405
        %v6132 = vmul.f32 %v5759, %v5406
        %v6133 = vmul.f32 %v5762, %v5407
        %v6134 = vmul.f32 %v5767, %v5408
        %v6135 = vmul.f32 %v5770, %v5409
        %v6136 = vmul.f32 %v5775, %v5410
        %v6137 = vmul.f32 %v5778, %v5411
        %v6138 = vmul.f32 %v5783, %v5412
        %v6139 = vmul.f32 %v5786, %v5413
        %v6140 = vmul.f32 %v5791, %v5414
        %v6141 = vmul.f32 %v5794, %v5415
        %v6142 = vmul.f32 %v5799, %v5416
        %v6143 = vmul.f32 %v5802, %v5417
        %v6144 = vmul.f32 %v5840, %v5418
        %v6145 = vmul.f32 %v5843, %v5419
        %v6146 = vmul.f32 %v5848, %v5420
        %v6147 = vmul.f32 %v5851, %v5421
        %v6148 = vmul.f32 %v5856, %v5422
        %v6149 = vmul.f32 %v5859, %v5423
        %v6150 = vmul.f32 %v5864, %v5424
        %v6151 = vmul.f32 %v5867, %v5425
        %v6152 = vmul.f32 %v5872, %v5426
        %v6153 = vmul.f32 %v5875, %v5427
        %v6154 = vmul.f32 %v5880, %v5428
        %v6155 = vmul.f32 %v5883, %v5429
        %v6156 = vmul.f32 %v5888, %v5430
        %v6157 = vmul.f32 %v5891, %v5431
        %v6158 = vmul.f32 %v5896, %v5432
        %v6159 = vmul.f32 %v5899, %v5433
        %v6160 = vmul.f32 %v5937, %v5434
        %v6161 = vmul.f32 %v5940, %v5435
        %v6162 = vmul.f32 %v5945, %v5436
        %v6163 = vmul.f32 %v5948, %v5437
        %v6164 = vmul.f32 %v5953, %v5438
        %v6165 = vmul.f32 %v5956, %v5439
        %v6166 = vmul.f32 %v5961, %v5440
        %v6167 = vmul.f32 %v5964, %v5441
        %v6168 = vmul.f32 %v5969, %v5442
        %v6169 = vmul.f32 %v5972, %v5443
        %v6170 = vmul.f32 %v5977, %v5444
        %v6171 = vmul.f32 %v5980, %v5445
        %v6172 = vmul.f32 %v5985, %v5446
        %v6173 = vmul.f32 %v5988, %v5447
        %v6174 = vmul.f32 %v5993, %v5448
        %v6175 = vmul.f32 %v5996, %v5449
        %v6176 = vmul.f32 %v6034, %v5450
        %v6177 = vmul.f32 %v6037, %v5451
        %v6178 = vmul.f32 %v6042, %v5452
        %v6179 = vmul.f32 %v6045, %v5453
        %v6180 = vmul.f32 %v6050, %v5454
        %v6181 = vmul.f32 %v6053, %v5455
        %v6182 = vmul.f32 %v6058, %v5456
        %v6183 = vmul.f32 %v6061, %v5457
        %v6184 = vmul.f32 %v6066, %v5458
        %v6185 = vmul.f32 %v6069, %v5459
        %v6186 = vmul.f32 %v6074, %v5460
        %v6187 = vmul.f32 %v6077, %v5461
        %v6188 = vmul.f32 %v6082, %v5462
        %v6189 = vmul.f32 %v6085, %v5463
        %v6190 = vmul.f32 %v6090, %v5464
        %v6191 = vmul.f32 %v6093, %v5465
        %v6192 = vpack.c.bf16 %v6097, %v6096
        %v6193 = vpack.c.bf16 %v6099, %v6098
        %v6194 = vpack.c.bf16 %v6101, %v6100
        %v6195 = vpack.c.bf16 %v6103, %v6102
        %v6196 = vpack.c.bf16 %v6105, %v6104
        %v6197 = vpack.c.bf16 %v6107, %v6106
        %v6198 = vpack.c.bf16 %v6109, %v6108
        %v6199 = vpack.c.bf16 %v6111, %v6110
        %v6200 = vpack.c.bf16 %v6113, %v6112
        %v6201 = vpack.c.bf16 %v6115, %v6114
        %v6202 = vpack.c.bf16 %v6117, %v6116
        %v6203 = vpack.c.bf16 %v6119, %v6118
        %v6204 = vpack.c.bf16 %v6121, %v6120
        %v6205 = vpack.c.bf16 %v6123, %v6122
        %v6206 = vpack.c.bf16 %v6125, %v6124
        %v6207 = vpack.c.bf16 %v6127, %v6126
        %v6208 = vpack.c.bf16 %v6129, %v6128
        %v6209 = vpack.c.bf16 %v6131, %v6130
        %v6210 = vpack.c.bf16 %v6133, %v6132
        %v6211 = vpack.c.bf16 %v6135, %v6134
        %v6212 = vpack.c.bf16 %v6137, %v6136
        %v6213 = vpack.c.bf16 %v6139, %v6138
        %v6214 = vpack.c.bf16 %v6141, %v6140
        %v6215 = vpack.c.bf16 %v6143, %v6142
        %v6216 = vpack.c.bf16 %v6145, %v6144
        %v6217 = vpack.c.bf16 %v6147, %v6146
        %v6218 = vpack.c.bf16 %v6149, %v6148
        %v6219 = vpack.c.bf16 %v6151, %v6150
        %v6220 = vpack.c.bf16 %v6153, %v6152
        %v6221 = vpack.c.bf16 %v6155, %v6154
        %v6222 = vpack.c.bf16 %v6157, %v6156
        %v6223 = vpack.c.bf16 %v6159, %v6158
        %v6224 = vpack.c.bf16 %v6161, %v6160
        %v6225 = vpack.c.bf16 %v6163, %v6162
        %v6226 = vpack.c.bf16 %v6165, %v6164
        %v6227 = vpack.c.bf16 %v6167, %v6166
        %v6228 = vpack.c.bf16 %v6169, %v6168
        %v6229 = vpack.c.bf16 %v6171, %v6170
        %v6230 = vpack.c.bf16 %v6173, %v6172
        %v6231 = vpack.c.bf16 %v6175, %v6174
        %v6232 = vpack.c.bf16 %v6177, %v6176
        %v6233 = vpack.c.bf16 %v6179, %v6178
        %v6234 = vpack.c.bf16 %v6181, %v6180
        %v6235 = vpack.c.bf16 %v6183, %v6182
        %v6236 = vpack.c.bf16 %v6185, %v6184
        %v6237 = vpack.c.bf16 %v6187, %v6186
        %v6238 = vpack.c.bf16 %v6189, %v6188
        %v6239 = vpack.c.bf16 %v6191, %v6190
        %6248 = vrot.lane.b32.xlu0 %v6200, 64
        %v6249 = vpop.permute.xlu0 %6248
        %6250 = vrot.lane.b32.xlu0 %v6201, 64
        %v6251 = vpop.permute.xlu0 %6250
        %6252 = vrot.lane.b32.xlu0 %v6202, 64
        %v6253 = vpop.permute.xlu0 %6252
        %6254 = vrot.lane.b32.xlu0 %v6203, 64
        %v6255 = vpop.permute.xlu0 %6254
        %6256 = vrot.lane.b32.xlu0 %v6204, 64
        %v6257 = vpop.permute.xlu0 %6256
        %6258 = vrot.lane.b32.xlu0 %v6205, 64
        %v6259 = vpop.permute.xlu0 %6258
        %6260 = vrot.lane.b32.xlu0 %v6206, 64
        %v6261 = vpop.permute.xlu0 %6260
        %6262 = vrot.lane.b32.xlu0 %v6207, 64
        %v6263 = vpop.permute.xlu0 %6262
        %6272 = vrot.lane.b32.xlu0 %v6216, 64
        %v6273 = vpop.permute.xlu0 %6272
        %6274 = vrot.lane.b32.xlu0 %v6217, 64
        %v6275 = vpop.permute.xlu0 %6274
        %6276 = vrot.lane.b32.xlu0 %v6218, 64
        %v6277 = vpop.permute.xlu0 %6276
        %6278 = vrot.lane.b32.xlu0 %v6219, 64
        %v6279 = vpop.permute.xlu0 %6278
        %6280 = vrot.lane.b32.xlu0 %v6220, 64
        %v6281 = vpop.permute.xlu0 %6280
        %6282 = vrot.lane.b32.xlu0 %v6221, 64
        %v6283 = vpop.permute.xlu0 %6282
        %6284 = vrot.lane.b32.xlu0 %v6222, 64
        %v6285 = vpop.permute.xlu0 %6284
        %6286 = vrot.lane.b32.xlu0 %v6223, 64
        %v6287 = vpop.permute.xlu0 %6286
        %6296 = vrot.lane.b32.xlu0 %v6232, 64
        %v6297 = vpop.permute.xlu0 %6296
        %6298 = vrot.lane.b32.xlu0 %v6233, 64
        %v6299 = vpop.permute.xlu0 %6298
        %6300 = vrot.lane.b32.xlu0 %v6234, 64
        %v6301 = vpop.permute.xlu0 %6300
        %6302 = vrot.lane.b32.xlu0 %v6235, 64
        %v6303 = vpop.permute.xlu0 %6302
        %6304 = vrot.lane.b32.xlu0 %v6236, 64
        %v6305 = vpop.permute.xlu0 %6304
        %6306 = vrot.lane.b32.xlu0 %v6237, 64
        %v6307 = vpop.permute.xlu0 %6306
        %6308 = vrot.lane.b32.xlu0 %v6238, 64
        %v6309 = vpop.permute.xlu0 %6308
        %6310 = vrot.lane.b32.xlu0 %v6239, 64
        %v6311 = vpop.permute.xlu0 %6310
        %v6314 = vsel %vm3707, %v6192, %v6249
        %v6318 = vsel %vm3707, %v6193, %v6251
        %v6322 = vsel %vm3707, %v6194, %v6253
        %v6326 = vsel %vm3707, %v6195, %v6255
        %v6330 = vsel %vm3707, %v6196, %v6257
        %v6334 = vsel %vm3707, %v6197, %v6259
        %v6338 = vsel %vm3707, %v6198, %v6261
        %v6342 = vsel %vm3707, %v6199, %v6263
        %v6346 = vsel %vm3707, %v6208, %v6273
        %v6350 = vsel %vm3707, %v6209, %v6275
        %v6354 = vsel %vm3707, %v6210, %v6277
        %v6358 = vsel %vm3707, %v6211, %v6279
        %v6362 = vsel %vm3707, %v6212, %v6281
        %v6366 = vsel %vm3707, %v6213, %v6283
        %v6370 = vsel %vm3707, %v6214, %v6285
        %v6374 = vsel %vm3707, %v6215, %v6287
        %v6378 = vsel %vm3707, %v6224, %v6297
        %v6382 = vsel %vm3707, %v6225, %v6299
        %v6386 = vsel %vm3707, %v6226, %v6301
        %v6390 = vsel %vm3707, %v6227, %v6303
        %v6394 = vsel %vm3707, %v6228, %v6305
        %v6398 = vsel %vm3707, %v6229, %v6307
        %v6402 = vsel %vm3707, %v6230, %v6309
        %v6406 = vsel %vm3707, %v6231, %v6311
        %v6409 = vlaneseq
        %v6410 = vshrl.u32 %v6409, 7
        %v6411 = vsub.s32 0, %v6410
        %v6412 = vrot.slane %v614, %v6411
        %v6413 = vlaneseq
        %v6414 = vshrl.u32 %v6413, 7
        %v6415 = vsub.s32 1, %v6414
        %v6416 = vrot.slane %v614, %v6415
        %v6417 = vlaneseq
        %v6418 = vshrl.u32 %v6417, 7
        %v6419 = vsub.s32 2, %v6418
        %v6420 = vrot.slane %v614, %v6419
        %v6520 = vunpack.c.l.b16 %v518
        %v6521 = vunpack.c.h.b16 %v518
        %v6522 = vunpack.c.l.b16 %v519
        %v6523 = vunpack.c.l.b16 %v520
        %v6524 = vunpack.c.h.b16 %v520
        %v6525 = vunpack.c.l.b16 %v521
        %v6526 = vunpack.c.l.b16 %v522
        %v6527 = vunpack.c.h.b16 %v522
        %v6528 = vunpack.c.l.b16 %v523
        %v6529 = vunpack.c.l.b16 %v524
        %v6530 = vunpack.c.h.b16 %v524
        %v6531 = vunpack.c.l.b16 %v525
        %v6532 = vunpack.c.l.b16 %v526
        %v6533 = vunpack.c.h.b16 %v526
        %v6534 = vunpack.c.l.b16 %v527
        %v6535 = vunpack.c.l.b16 %v528
        %v6536 = vunpack.c.h.b16 %v528
        %v6537 = vunpack.c.l.b16 %v529
        %v6538 = vunpack.c.l.b16 %v530
        %v6539 = vunpack.c.h.b16 %v530
        %v6540 = vunpack.c.l.b16 %v531
        %v6541 = vunpack.c.l.b16 %v532
        %v6542 = vunpack.c.h.b16 %v532
        %v6543 = vunpack.c.l.b16 %v533
        %v6544 = vunpack.c.l.b16 %v534
        %v6545 = vunpack.c.h.b16 %v534
        %v6546 = vunpack.c.l.b16 %v535
        %v6547 = vunpack.c.l.b16 %v536
        %v6548 = vunpack.c.h.b16 %v536
        %v6549 = vunpack.c.l.b16 %v537
        %v6550 = vunpack.c.l.b16 %v538
        %v6551 = vunpack.c.h.b16 %v538
        %v6552 = vunpack.c.l.b16 %v539
        %v6553 = vunpack.c.l.b16 %v540
        %v6554 = vunpack.c.h.b16 %v540
        %v6555 = vunpack.c.l.b16 %v541
        %v6556 = vunpack.c.l.b16 %v542
        %v6557 = vunpack.c.h.b16 %v542
        %v6558 = vunpack.c.l.b16 %v543
        %v6559 = vunpack.c.l.b16 %v544
        %v6560 = vunpack.c.h.b16 %v544
        %v6561 = vunpack.c.l.b16 %v545
        %v6562 = vunpack.c.l.b16 %v546
        %v6563 = vunpack.c.h.b16 %v546
        %v6564 = vunpack.c.l.b16 %v547
        %v6565 = vunpack.c.l.b16 %v548
        %v6566 = vunpack.c.h.b16 %v548
        %v6567 = vunpack.c.l.b16 %v549
        %v6568 = vunpack.c.l.b16 %v550
        %v6569 = vunpack.c.h.b16 %v550
        %v6570 = vunpack.c.l.b16 %v551
        %v6571 = vunpack.c.l.b16 %v552
        %v6572 = vunpack.c.h.b16 %v552
        %v6573 = vunpack.c.l.b16 %v553
        %v6574 = vunpack.c.l.b16 %v554
        %v6575 = vunpack.c.h.b16 %v554
        %v6576 = vunpack.c.l.b16 %v555
        %v6577 = vunpack.c.l.b16 %v556
        %v6578 = vunpack.c.h.b16 %v556
        %v6579 = vunpack.c.l.b16 %v557
        %v6580 = vunpack.c.l.b16 %v558
        %v6581 = vunpack.c.h.b16 %v558
        %v6582 = vunpack.c.l.b16 %v559
        %v6583 = vunpack.c.l.b16 %v560
        %v6584 = vunpack.c.h.b16 %v560
        %v6585 = vunpack.c.l.b16 %v561
        %v6586 = vunpack.c.l.b16 %v562
        %v6587 = vunpack.c.h.b16 %v562
        %v6588 = vunpack.c.l.b16 %v563
        %v6589 = vunpack.c.l.b16 %v564
        %v6590 = vunpack.c.h.b16 %v564
        %v6591 = vunpack.c.l.b16 %v565
        %v6592 = vunpack.c.l.b16 %v566
        %v6593 = vunpack.c.h.b16 %v566
        %v6594 = vunpack.c.l.b16 %v567
        %v6595 = vunpack.c.l.b16 %v568
        %v6596 = vunpack.c.h.b16 %v568
        %v6597 = vunpack.c.l.b16 %v569
        %v6598 = vunpack.c.l.b16 %v570
        %v6599 = vunpack.c.h.b16 %v570
        %v6600 = vunpack.c.l.b16 %v571
        %v6601 = vunpack.c.l.b16 %v572
        %v6602 = vunpack.c.h.b16 %v572
        %v6603 = vunpack.c.l.b16 %v573
        %v6604 = vunpack.c.l.b16 %v574
        %v6605 = vunpack.c.h.b16 %v574
        %v6606 = vunpack.c.l.b16 %v575
        %v6607 = vunpack.c.l.b16 %v576
        %v6608 = vunpack.c.h.b16 %v576
        %v6609 = vunpack.c.l.b16 %v577
        %v6610 = vunpack.c.l.b16 %v578
        %v6611 = vunpack.c.h.b16 %v578
        %v6612 = vunpack.c.l.b16 %v579
        %v6613 = vunpack.c.l.b16 %v580
        %v6614 = vunpack.c.h.b16 %v580
        %v6615 = vunpack.c.l.b16 %v581
        %v6616 = vunpack.c.l.b16 %v582
        %v6617 = vunpack.c.h.b16 %v582
        %v6618 = vunpack.c.l.b16 %v583
        %v6619 = vunpack.c.l.b16 %v584
        %v6620 = vunpack.c.h.b16 %v584
        %v6621 = vunpack.c.l.b16 %v585
        %v6622 = vunpack.c.l.b16 %v586
        %v6623 = vunpack.c.h.b16 %v586
        %v6624 = vunpack.c.l.b16 %v587
        %v6625 = vunpack.c.l.b16 %v588
        %v6626 = vunpack.c.h.b16 %v588
        %v6627 = vunpack.c.l.b16 %v589
        %v6628 = vunpack.c.l.b16 %v590
        %v6629 = vunpack.c.h.b16 %v590
        %v6630 = vunpack.c.l.b16 %v591
        %v6631 = vunpack.c.l.b16 %v592
        %v6632 = vunpack.c.h.b16 %v592
        %v6633 = vunpack.c.l.b16 %v593
        %v6634 = vunpack.c.l.b16 %v594
        %v6635 = vunpack.c.h.b16 %v594
        %v6636 = vunpack.c.l.b16 %v595
        %v6637 = vunpack.c.l.b16 %v596
        %v6638 = vunpack.c.h.b16 %v596
        %v6639 = vunpack.c.l.b16 %v597
        %v6640 = vunpack.c.l.b16 %v598
        %v6641 = vunpack.c.h.b16 %v598
        %v6642 = vunpack.c.l.b16 %v599
        %v6643 = vunpack.c.l.b16 %v600
        %v6644 = vunpack.c.h.b16 %v600
        %v6645 = vunpack.c.l.b16 %v601
        %v6646 = vunpack.c.l.b16 %v602
        %v6647 = vunpack.c.h.b16 %v602
        %v6648 = vunpack.c.l.b16 %v603
        %v6649 = vunpack.c.l.b16 %v604
        %v6650 = vunpack.c.h.b16 %v604
        %v6651 = vunpack.c.l.b16 %v605
        %v6652 = vunpack.c.l.b16 %v606
        %v6653 = vunpack.c.h.b16 %v606
        %v6654 = vunpack.c.l.b16 %v607
        %v6655 = vunpack.c.l.b16 %v608
        %v6656 = vunpack.c.h.b16 %v608
        %v6657 = vunpack.c.l.b16 %v609
        %v6658 = vunpack.c.l.b16 %v610
        %v6659 = vunpack.c.h.b16 %v610
        %v6660 = vunpack.c.l.b16 %v611
        %v6661 = vunpack.c.l.b16 %v612
        %v6662 = vunpack.c.h.b16 %v612
        %v6663 = vunpack.c.l.b16 %v613
        %v6664 = vpack.c.b16 %v6523, %v6520
        %v6665 = vpack.c.b16 %v6524, %v6521
        %v6666 = vpack.c.b16 %v6525, %v6522
        %v6667 = vpack.c.b16 %v6529, %v6526
        %v6668 = vpack.c.b16 %v6530, %v6527
        %v6669 = vpack.c.b16 %v6531, %v6528
        %v6670 = vpack.c.b16 %v6535, %v6532
        %v6671 = vpack.c.b16 %v6536, %v6533
        %v6672 = vpack.c.b16 %v6537, %v6534
        %v6673 = vpack.c.b16 %v6541, %v6538
        %v6674 = vpack.c.b16 %v6542, %v6539
        %v6675 = vpack.c.b16 %v6543, %v6540
        %v6676 = vpack.c.b16 %v6547, %v6544
        %v6677 = vpack.c.b16 %v6548, %v6545
        %v6678 = vpack.c.b16 %v6549, %v6546
        %v6679 = vpack.c.b16 %v6553, %v6550
        %v6680 = vpack.c.b16 %v6554, %v6551
        %v6681 = vpack.c.b16 %v6555, %v6552
        %v6682 = vpack.c.b16 %v6559, %v6556
        %v6683 = vpack.c.b16 %v6560, %v6557
        %v6684 = vpack.c.b16 %v6561, %v6558
        %v6685 = vpack.c.b16 %v6565, %v6562
        %v6686 = vpack.c.b16 %v6566, %v6563
        %v6687 = vpack.c.b16 %v6567, %v6564
        %v6688 = vpack.c.b16 %v6571, %v6568
        %v6689 = vpack.c.b16 %v6572, %v6569
        %v6690 = vpack.c.b16 %v6573, %v6570
        %v6691 = vpack.c.b16 %v6577, %v6574
        %v6692 = vpack.c.b16 %v6578, %v6575
        %v6693 = vpack.c.b16 %v6579, %v6576
        %v6694 = vpack.c.b16 %v6583, %v6580
        %v6695 = vpack.c.b16 %v6584, %v6581
        %v6696 = vpack.c.b16 %v6585, %v6582
        %v6697 = vpack.c.b16 %v6589, %v6586
        %v6698 = vpack.c.b16 %v6590, %v6587
        %v6699 = vpack.c.b16 %v6591, %v6588
        %v6700 = vpack.c.b16 %v6595, %v6592
        %v6701 = vpack.c.b16 %v6596, %v6593
        %v6702 = vpack.c.b16 %v6597, %v6594
        %v6703 = vpack.c.b16 %v6601, %v6598
        %v6704 = vpack.c.b16 %v6602, %v6599
        %v6705 = vpack.c.b16 %v6603, %v6600
        %v6706 = vpack.c.b16 %v6607, %v6604
        %v6707 = vpack.c.b16 %v6608, %v6605
        %v6708 = vpack.c.b16 %v6609, %v6606
        %v6709 = vpack.c.b16 %v6613, %v6610
        %v6710 = vpack.c.b16 %v6614, %v6611
        %v6711 = vpack.c.b16 %v6615, %v6612
        %v6712 = vpack.c.b16 %v6619, %v6616
        %v6713 = vpack.c.b16 %v6620, %v6617
        %v6714 = vpack.c.b16 %v6621, %v6618
        %v6715 = vpack.c.b16 %v6625, %v6622
        %v6716 = vpack.c.b16 %v6626, %v6623
        %v6717 = vpack.c.b16 %v6627, %v6624
        %v6718 = vpack.c.b16 %v6631, %v6628
        %v6719 = vpack.c.b16 %v6632, %v6629
        %v6720 = vpack.c.b16 %v6633, %v6630
        %v6721 = vpack.c.b16 %v6637, %v6634
        %v6722 = vpack.c.b16 %v6638, %v6635
        %v6723 = vpack.c.b16 %v6639, %v6636
        %v6724 = vpack.c.b16 %v6643, %v6640
        %v6725 = vpack.c.b16 %v6644, %v6641
        %v6726 = vpack.c.b16 %v6645, %v6642
        %v6727 = vpack.c.b16 %v6649, %v6646
        %v6728 = vpack.c.b16 %v6650, %v6647
        %v6729 = vpack.c.b16 %v6651, %v6648
        %v6730 = vpack.c.b16 %v6655, %v6652
        %v6731 = vpack.c.b16 %v6656, %v6653
        %v6732 = vpack.c.b16 %v6657, %v6654
        %v6733 = vpack.c.b16 %v6661, %v6658
        %v6734 = vpack.c.b16 %v6662, %v6659
        %v6735 = vpack.c.b16 %v6663, %v6660
        %6808 = vmatprep.subr.bf16.mxu0 %v6665
        %6809 = vmatpush1.bf16.msra.mxu0 %v6664
        %6810 = vmatprep.subr.bf16.mxu0 %v6668
        %6811 = vmatpush1.bf16.msra.mxu0 %v6667
        %6812 = vmatprep.subr.bf16.mxu0 %v6671
        %6813 = vmatpush1.bf16.msra.mxu0 %v6670
        %6814 = vmatprep.subr.bf16.mxu0 %v6674
        %6815 = vmatpush1.bf16.msra.mxu0 %v6673
        %6816 = vmatprep.subr.bf16.mxu0 %v6677
        %6817 = vmatpush1.bf16.msra.mxu0 %v6676
        %6818 = vmatprep.subr.bf16.mxu0 %v6680
        %6819 = vmatpush1.bf16.msra.mxu0 %v6679
        %6820 = vmatprep.subr.bf16.mxu0 %v6683
        %6821 = vmatpush1.bf16.msra.mxu0 %v6682
        %6822 = vmatprep.subr.bf16.mxu0 %v6686
        %6823 = vmatpush1.bf16.msra.mxu0 %v6685
        %6824 = vmatprep.subr.bf16.mxu0 %v6689
        %6825 = vmatpush1.bf16.msra.mxu0 %v6688
        %6826 = vmatprep.subr.bf16.mxu0 %v6692
        %6827 = vmatpush1.bf16.msra.mxu0 %v6691
        %6828 = vmatprep.subr.bf16.mxu0 %v6695
        %6829 = vmatpush1.bf16.msra.mxu0 %v6694
        %6830 = vmatprep.subr.bf16.mxu0 %v6698
        %6831 = vmatpush1.bf16.msra.mxu0 %v6697
        %6832 = vmatprep.subr.bf16.mxu0 %v6701
        %6833 = vmatpush1.bf16.msra.mxu0 %v6700
        %6834 = vmatprep.subr.bf16.mxu0 %v6704
        %6835 = vmatpush1.bf16.msra.mxu0 %v6703
        %6836 = vmatprep.subr.bf16.mxu0 %v6707
        %6837 = vmatpush1.bf16.msra.mxu0 %v6706
        %6838 = vmatprep.subr.bf16.mxu0 %v6710
        %6839 = vmatpush1.bf16.msra.mxu0 %v6709
        %6840 = vmatprep.mubr.bf16.mxu0 %v6346
        %6841 = vmatmul.mubr.bf16.gmra.mrb[0].mxu0 %v6314
        %v6842 = vpop.f32.mrb[0].mxu0
        %v6843 = vadd.f32 %v6412, %v6842
        %v6844 = vpop.f32.mrb[0].mxu0
        %v6845 = vadd.f32 %v6416, %v6844
        %v6846 = vpop.f32.mrb[0].mxu0
        %v6847 = vadd.f32 %v6412, %v6846
        %v6848 = vpop.f32.mrb[0].mxu0
        %v6849 = vadd.f32 %v6416, %v6848
        %6850 = vmatprep.mubr.bf16.mxu0 %v6350
        %6851 = vmatmul.mubr.bf16.gmra.mrb[0].mxu0 %v6318
        %v6852 = vpop.f32.mrb[0].mxu0
        %v6853 = vadd.f32 %v6412, %v6852
        %v6854 = vpop.f32.mrb[0].mxu0
        %v6855 = vadd.f32 %v6416, %v6854
        %v6856 = vpop.f32.mrb[0].mxu0
        %v6857 = vadd.f32 %v6412, %v6856
        %v6858 = vpop.f32.mrb[0].mxu0
        %v6859 = vadd.f32 %v6416, %v6858
        %6860 = vmatprep.mubr.bf16.mxu0 %v6354
        %6861 = vmatmul.mubr.bf16.gmra.mrb[0].mxu0 %v6322
        %v6862 = vpop.f32.mrb[0].mxu0
        %v6863 = vadd.f32 %v6412, %v6862
        %v6864 = vpop.f32.mrb[0].mxu0
        %v6865 = vadd.f32 %v6416, %v6864
        %v6866 = vpop.f32.mrb[0].mxu0
        %v6867 = vadd.f32 %v6412, %v6866
        %v6868 = vpop.f32.mrb[0].mxu0
        %v6869 = vadd.f32 %v6416, %v6868
        %6870 = vmatprep.mubr.bf16.mxu0 %v6358
        %6871 = vmatmul.mubr.bf16.gmra.mrb[0].mxu0 %v6326
        %v6872 = vpop.f32.mrb[0].mxu0
        %v6873 = vadd.f32 %v6412, %v6872
        %v6874 = vpop.f32.mrb[0].mxu0
        %v6875 = vadd.f32 %v6416, %v6874
        %v6876 = vpop.f32.mrb[0].mxu0
        %v6877 = vadd.f32 %v6412, %v6876
        %v6878 = vpop.f32.mrb[0].mxu0
        %v6879 = vadd.f32 %v6416, %v6878
        %6880 = vmatprep.mubr.bf16.mxu0 %v6362
        %6881 = vmatmul.mubr.bf16.gmra.mrb[0].mxu0 %v6330
        %v6882 = vpop.f32.mrb[0].mxu0
        %v6883 = vadd.f32 %v6412, %v6882
        %v6884 = vpop.f32.mrb[0].mxu0
        %v6885 = vadd.f32 %v6416, %v6884
        %v6886 = vpop.f32.mrb[0].mxu0
        %v6887 = vadd.f32 %v6412, %v6886
        %v6888 = vpop.f32.mrb[0].mxu0
        %v6889 = vadd.f32 %v6416, %v6888
        %6890 = vmatprep.mubr.bf16.mxu0 %v6366
        %6891 = vmatmul.mubr.bf16.gmra.mrb[0].mxu0 %v6334
        %v6892 = vpop.f32.mrb[0].mxu0
        %v6893 = vadd.f32 %v6412, %v6892
        %v6894 = vpop.f32.mrb[0].mxu0
        %v6895 = vadd.f32 %v6416, %v6894
        %v6896 = vpop.f32.mrb[0].mxu0
        %v6897 = vadd.f32 %v6412, %v6896
        %v6898 = vpop.f32.mrb[0].mxu0
        %v6899 = vadd.f32 %v6416, %v6898
        %6900 = vmatprep.mubr.bf16.mxu0 %v6370
        %6901 = vmatmul.mubr.bf16.gmra.mrb[0].mxu0 %v6338
        %v6902 = vpop.f32.mrb[0].mxu0
        %v6903 = vadd.f32 %v6412, %v6902
        %v6904 = vpop.f32.mrb[0].mxu0
        %v6905 = vadd.f32 %v6416, %v6904
        %v6906 = vpop.f32.mrb[0].mxu0
        %v6907 = vadd.f32 %v6412, %v6906
        %v6908 = vpop.f32.mrb[0].mxu0
        %v6909 = vadd.f32 %v6416, %v6908
        %6910 = vmatprep.mubr.bf16.mxu0 %v6374
        %6911 = vmatmul.mubr.bf16.gmra.mrb[0].mxu0 %v6342
        %v6912 = vpop.f32.mrb[0].mxu0
        %v6913 = vadd.f32 %v6412, %v6912
        %v6914 = vpop.f32.mrb[0].mxu0
        %v6915 = vadd.f32 %v6416, %v6914
        %v6916 = vpop.f32.mrb[0].mxu0
        %v6917 = vadd.f32 %v6412, %v6916
        %v6918 = vpop.f32.mrb[0].mxu0
        %v6919 = vadd.f32 %v6416, %v6918
        %6920 = vdwg.mxu0
        %6921 = vmatprep.subr.bf16.mxu0 %v6713
        %6922 = vmatpush1.bf16.msra.mxu0 %v6712
        %6923 = vmatprep.subr.bf16.mxu0 %v6716
        %6924 = vmatpush1.bf16.msra.mxu0 %v6715
        %6925 = vmatprep.subr.bf16.mxu0 %v6719
        %6926 = vmatpush1.bf16.msra.mxu0 %v6718
        %6927 = vmatprep.subr.bf16.mxu0 %v6722
        %6928 = vmatpush1.bf16.msra.mxu0 %v6721
        %6929 = vmatprep.subr.bf16.mxu0 %v6725
        %6930 = vmatpush1.bf16.msra.mxu0 %v6724
        %6931 = vmatprep.subr.bf16.mxu0 %v6728
        %6932 = vmatpush1.bf16.msra.mxu0 %v6727
        %6933 = vmatprep.subr.bf16.mxu0 %v6731
        %6934 = vmatpush1.bf16.msra.mxu0 %v6730
        %6935 = vmatprep.subr.bf16.mxu0 %v6734
        %6936 = vmatpush1.bf16.msra.mxu0 %v6733
        %6937 = vmatprep.subr.bf16.mxu0 0
        %6938 = vmatpush1.bf16.msra.mxu0 0
        %6939 = vmatprep.subr.bf16.mxu0 0
        %6940 = vmatpush1.bf16.msra.mxu0 0
        %6941 = vmatprep.subr.bf16.mxu0 0
        %6942 = vmatpush1.bf16.msra.mxu0 0
        %6943 = vmatprep.subr.bf16.mxu0 0
        %6944 = vmatpush1.bf16.msra.mxu0 0
        %6945 = vmatprep.subr.bf16.mxu0 0
        %6946 = vmatpush1.bf16.msra.mxu0 0
        %6947 = vmatprep.subr.bf16.mxu0 0
        %6948 = vmatpush1.bf16.msra.mxu0 0
        %6949 = vmatprep.subr.bf16.mxu0 0
        %6950 = vmatpush1.bf16.msra.mxu0 0
        %6951 = vmatprep.subr.bf16.mxu0 0
        %6952 = vmatpush1.bf16.msra.mxu0 0
        %6953 = vmatprep.mubr.bf16.mxu0 0
        %6954 = vmatmul.mubr.bf16.gmra.mrb[0].mxu0 %v6378
        %v6955 = vpop.f32.mrb[0].mxu0
        %v6956 = vadd.f32 %v6843, %v6955
        %v6957 = vpop.f32.mrb[0].mxu0
        %v6958 = vadd.f32 %v6845, %v6957
        %v6959 = vpop.f32.mrb[0].mxu0
        %v6960 = vadd.f32 %v6847, %v6959
        %v6961 = vpop.f32.mrb[0].mxu0
        %v6962 = vadd.f32 %v6849, %v6961
        %6963 = vmatprep.mubr.bf16.mxu0 0
        %6964 = vmatmul.mubr.bf16.gmra.mrb[0].mxu0 %v6382
        %v6965 = vpop.f32.mrb[0].mxu0
        %v6966 = vadd.f32 %v6853, %v6965
        %v6967 = vpop.f32.mrb[0].mxu0
        %v6968 = vadd.f32 %v6855, %v6967
        %v6969 = vpop.f32.mrb[0].mxu0
        %v6970 = vadd.f32 %v6857, %v6969
        %v6971 = vpop.f32.mrb[0].mxu0
        %v6972 = vadd.f32 %v6859, %v6971
        %6973 = vmatprep.mubr.bf16.mxu0 0
        %6974 = vmatmul.mubr.bf16.gmra.mrb[0].mxu0 %v6386
        %v6975 = vpop.f32.mrb[0].mxu0
        %v6976 = vadd.f32 %v6863, %v6975
        %v6977 = vpop.f32.mrb[0].mxu0
        %v6978 = vadd.f32 %v6865, %v6977
        %v6979 = vpop.f32.mrb[0].mxu0
        %v6980 = vadd.f32 %v6867, %v6979
        %v6981 = vpop.f32.mrb[0].mxu0
        %v6982 = vadd.f32 %v6869, %v6981
        %6983 = vmatprep.mubr.bf16.mxu0 0
        %6984 = vmatmul.mubr.bf16.gmra.mrb[0].mxu0 %v6390
        %v6985 = vpop.f32.mrb[0].mxu0
        %v6986 = vadd.f32 %v6873, %v6985
        %v6987 = vpop.f32.mrb[0].mxu0
        %v6988 = vadd.f32 %v6875, %v6987
        %v6989 = vpop.f32.mrb[0].mxu0
        %v6990 = vadd.f32 %v6877, %v6989
        %v6991 = vpop.f32.mrb[0].mxu0
        %v6992 = vadd.f32 %v6879, %v6991
        %6993 = vmatprep.mubr.bf16.mxu0 0
        %6994 = vmatmul.mubr.bf16.gmra.mrb[0].mxu0 %v6394
        %v6995 = vpop.f32.mrb[0].mxu0
        %v6996 = vadd.f32 %v6883, %v6995
        %v6997 = vpop.f32.mrb[0].mxu0
        %v6998 = vadd.f32 %v6885, %v6997
        %v6999 = vpop.f32.mrb[0].mxu0
        %v7000 = vadd.f32 %v6887, %v6999
        %v7001 = vpop.f32.mrb[0].mxu0
        %v7002 = vadd.f32 %v6889, %v7001
        %7003 = vmatprep.mubr.bf16.mxu0 0
        %7004 = vmatmul.mubr.bf16.gmra.mrb[0].mxu0 %v6398
        %v7005 = vpop.f32.mrb[0].mxu0
        %v7006 = vadd.f32 %v6893, %v7005
        %v7007 = vpop.f32.mrb[0].mxu0
        %v7008 = vadd.f32 %v6895, %v7007
        %v7009 = vpop.f32.mrb[0].mxu0
        %v7010 = vadd.f32 %v6897, %v7009
        %v7011 = vpop.f32.mrb[0].mxu0
        %v7012 = vadd.f32 %v6899, %v7011
        %7013 = vmatprep.mubr.bf16.mxu0 0
        %7014 = vmatmul.mubr.bf16.gmra.mrb[0].mxu0 %v6402
        %v7015 = vpop.f32.mrb[0].mxu0
        %v7016 = vadd.f32 %v6903, %v7015
        %v7017 = vpop.f32.mrb[0].mxu0
        %v7018 = vadd.f32 %v6905, %v7017
        %v7019 = vpop.f32.mrb[0].mxu0
        %v7020 = vadd.f32 %v6907, %v7019
        %v7021 = vpop.f32.mrb[0].mxu0
        %v7022 = vadd.f32 %v6909, %v7021
        %7023 = vmatprep.mubr.bf16.mxu0 0
        %7024 = vmatmul.mubr.bf16.gmra.mrb[0].mxu0 %v6406
        %v7025 = vpop.f32.mrb[0].mxu0
        %v7026 = vadd.f32 %v6913, %v7025
        %v7027 = vpop.f32.mrb[0].mxu0
        %v7028 = vadd.f32 %v6915, %v7027
        %v7029 = vpop.f32.mrb[0].mxu0
        %v7030 = vadd.f32 %v6917, %v7029
        %v7031 = vpop.f32.mrb[0].mxu0
        %v7032 = vadd.f32 %v6919, %v7031
        %7033 = vdwg.mxu0
        %7034 = vmatprep.subr.bf16.mxu0 0
        %7035 = vmatpush1.bf16.msra.mxu0 %v6666
        %7036 = vmatprep.subr.bf16.mxu0 0
        %7037 = vmatpush1.bf16.msra.mxu0 %v6669
        %7038 = vmatprep.subr.bf16.mxu0 0
        %7039 = vmatpush1.bf16.msra.mxu0 %v6672
        %7040 = vmatprep.subr.bf16.mxu0 0
        %7041 = vmatpush1.bf16.msra.mxu0 %v6675
        %7042 = vmatprep.subr.bf16.mxu0 0
        %7043 = vmatpush1.bf16.msra.mxu0 %v6678
        %7044 = vmatprep.subr.bf16.mxu0 0
        %7045 = vmatpush1.bf16.msra.mxu0 %v6681
        %7046 = vmatprep.subr.bf16.mxu0 0
        %7047 = vmatpush1.bf16.msra.mxu0 %v6684
        %7048 = vmatprep.subr.bf16.mxu0 0
        %7049 = vmatpush1.bf16.msra.mxu0 %v6687
        %7050 = vmatprep.subr.bf16.mxu0 0
        %7051 = vmatpush1.bf16.msra.mxu0 %v6690
        %7052 = vmatprep.subr.bf16.mxu0 0
        %7053 = vmatpush1.bf16.msra.mxu0 %v6693
        %7054 = vmatprep.subr.bf16.mxu0 0
        %7055 = vmatpush1.bf16.msra.mxu0 %v6696
        %7056 = vmatprep.subr.bf16.mxu0 0
        %7057 = vmatpush1.bf16.msra.mxu0 %v6699
        %7058 = vmatprep.subr.bf16.mxu0 0
        %7059 = vmatpush1.bf16.msra.mxu0 %v6702
        %7060 = vmatprep.subr.bf16.mxu0 0
        %7061 = vmatpush1.bf16.msra.mxu0 %v6705
        %7062 = vmatprep.subr.bf16.mxu0 0
        %7063 = vmatpush1.bf16.msra.mxu0 %v6708
        %7064 = vmatprep.subr.bf16.mxu0 0
        %7065 = vmatpush1.bf16.msra.mxu0 %v6711
        %7066 = vmatprep.mubr.bf16.mxu0 %v6346
        %7067 = vmatmul.mubr.bf16.gmra.mrb[0].mxu0 %v6314
        %v7068 = vpop.f32.mrb[0].mxu0
        %v7069 = vadd.f32 %v6420, %v7068
        %v7070 = vpop.f32.mrb[0].mxu0
        %v7071 = vpop.f32.mrb[0].mxu0
        %v7072 = vadd.f32 %v6420, %v7071
        %v7073 = vpop.f32.mrb[0].mxu0
        %7074 = vmatprep.mubr.bf16.mxu0 %v6350
        %7075 = vmatmul.mubr.bf16.gmra.mrb[0].mxu0 %v6318
        %v7076 = vpop.f32.mrb[0].mxu0
        %v7077 = vadd.f32 %v6420, %v7076
        %v7078 = vpop.f32.mrb[0].mxu0
        %v7079 = vpop.f32.mrb[0].mxu0
        %v7080 = vadd.f32 %v6420, %v7079
        %v7081 = vpop.f32.mrb[0].mxu0
        %7082 = vmatprep.mubr.bf16.mxu0 %v6354
        %7083 = vmatmul.mubr.bf16.gmra.mrb[0].mxu0 %v6322
        %v7084 = vpop.f32.mrb[0].mxu0
        %v7085 = vadd.f32 %v6420, %v7084
        %v7086 = vpop.f32.mrb[0].mxu0
        %v7087 = vpop.f32.mrb[0].mxu0
        %v7088 = vadd.f32 %v6420, %v7087
        %v7089 = vpop.f32.mrb[0].mxu0
        %7090 = vmatprep.mubr.bf16.mxu0 %v6358
        %7091 = vmatmul.mubr.bf16.gmra.mrb[0].mxu0 %v6326
        %v7092 = vpop.f32.mrb[0].mxu0
        %v7093 = vadd.f32 %v6420, %v7092
        %v7094 = vpop.f32.mrb[0].mxu0
        %v7095 = vpop.f32.mrb[0].mxu0
        %v7096 = vadd.f32 %v6420, %v7095
        %v7097 = vpop.f32.mrb[0].mxu0
        %7098 = vmatprep.mubr.bf16.mxu0 %v6362
        %7099 = vmatmul.mubr.bf16.gmra.mrb[0].mxu0 %v6330
        %v7100 = vpop.f32.mrb[0].mxu0
        %v7101 = vadd.f32 %v6420, %v7100
        %v7102 = vpop.f32.mrb[0].mxu0
        %v7103 = vpop.f32.mrb[0].mxu0
        %v7104 = vadd.f32 %v6420, %v7103
        %v7105 = vpop.f32.mrb[0].mxu0
        %7106 = vmatprep.mubr.bf16.mxu0 %v6366
        %7107 = vmatmul.mubr.bf16.gmra.mrb[0].mxu0 %v6334
        %v7108 = vpop.f32.mrb[0].mxu0
        %v7109 = vadd.f32 %v6420, %v7108
        %v7110 = vpop.f32.mrb[0].mxu0
        %v7111 = vpop.f32.mrb[0].mxu0
        %v7112 = vadd.f32 %v6420, %v7111
        %v7113 = vpop.f32.mrb[0].mxu0
        %7114 = vmatprep.mubr.bf16.mxu0 %v6370
        %7115 = vmatmul.mubr.bf16.gmra.mrb[0].mxu0 %v6338
        %v7116 = vpop.f32.mrb[0].mxu0
        %v7117 = vadd.f32 %v6420, %v7116
        %v7118 = vpop.f32.mrb[0].mxu0
        %v7119 = vpop.f32.mrb[0].mxu0
        %v7120 = vadd.f32 %v6420, %v7119
        %v7121 = vpop.f32.mrb[0].mxu0
        %7122 = vmatprep.mubr.bf16.mxu0 %v6374
        %7123 = vmatmul.mubr.bf16.gmra.mrb[0].mxu0 %v6342
        %v7124 = vpop.f32.mrb[0].mxu0
        %v7125 = vadd.f32 %v6420, %v7124
        %v7126 = vpop.f32.mrb[0].mxu0
        %v7127 = vpop.f32.mrb[0].mxu0
        %v7128 = vadd.f32 %v6420, %v7127
        %v7129 = vpop.f32.mrb[0].mxu0
        %7130 = vdwg.mxu0
        %7131 = vmatprep.subr.bf16.mxu0 0
        %7132 = vmatpush1.bf16.msra.mxu0 %v6714
        %7133 = vmatprep.subr.bf16.mxu0 0
        %7134 = vmatpush1.bf16.msra.mxu0 %v6717
        %7135 = vmatprep.subr.bf16.mxu0 0
        %7136 = vmatpush1.bf16.msra.mxu0 %v6720
        %7137 = vmatprep.subr.bf16.mxu0 0
        %7138 = vmatpush1.bf16.msra.mxu0 %v6723
        %7139 = vmatprep.subr.bf16.mxu0 0
        %7140 = vmatpush1.bf16.msra.mxu0 %v6726
        %7141 = vmatprep.subr.bf16.mxu0 0
        %7142 = vmatpush1.bf16.msra.mxu0 %v6729
        %7143 = vmatprep.subr.bf16.mxu0 0
        %7144 = vmatpush1.bf16.msra.mxu0 %v6732
        %7145 = vmatprep.subr.bf16.mxu0 0
        %7146 = vmatpush1.bf16.msra.mxu0 %v6735
        %7147 = vmatprep.subr.bf16.mxu0 0
        %7148 = vmatpush1.bf16.msra.mxu0 0
        %7149 = vmatprep.subr.bf16.mxu0 0
        %7150 = vmatpush1.bf16.msra.mxu0 0
        %7151 = vmatprep.subr.bf16.mxu0 0
        %7152 = vmatpush1.bf16.msra.mxu0 0
        %7153 = vmatprep.subr.bf16.mxu0 0
        %7154 = vmatpush1.bf16.msra.mxu0 0
        %7155 = vmatprep.subr.bf16.mxu0 0
        %7156 = vmatpush1.bf16.msra.mxu0 0
        %7157 = vmatprep.subr.bf16.mxu0 0
        %7158 = vmatpush1.bf16.msra.mxu0 0
        %7159 = vmatprep.subr.bf16.mxu0 0
        %7160 = vmatpush1.bf16.msra.mxu0 0
        %7161 = vmatprep.subr.bf16.mxu0 0
        %7162 = vmatpush1.bf16.msra.mxu0 0
        %7163 = vmatprep.mubr.bf16.mxu0 0
        %7164 = vmatmul.mubr.bf16.gmra.mrb[0].mxu0 %v6378
        %v7165 = vpop.f32.mrb[0].mxu0
        %v7166 = vadd.f32 %v7069, %v7165
        %v7167 = vpop.f32.mrb[0].mxu0
        %v7168 = vpop.f32.mrb[0].mxu0
        %v7169 = vadd.f32 %v7072, %v7168
        %v7170 = vpop.f32.mrb[0].mxu0
        %7171 = vmatprep.mubr.bf16.mxu0 0
        %7172 = vmatmul.mubr.bf16.gmra.mrb[0].mxu0 %v6382
        %v7173 = vpop.f32.mrb[0].mxu0
        %v7174 = vadd.f32 %v7077, %v7173
        %v7175 = vpop.f32.mrb[0].mxu0
        %v7176 = vpop.f32.mrb[0].mxu0
        %v7177 = vadd.f32 %v7080, %v7176
        %v7178 = vpop.f32.mrb[0].mxu0
        %7179 = vmatprep.mubr.bf16.mxu0 0
        %7180 = vmatmul.mubr.bf16.gmra.mrb[0].mxu0 %v6386
        %v7181 = vpop.f32.mrb[0].mxu0
        %v7182 = vadd.f32 %v7085, %v7181
        %v7183 = vpop.f32.mrb[0].mxu0
        %v7184 = vpop.f32.mrb[0].mxu0
        %v7185 = vadd.f32 %v7088, %v7184
        %v7186 = vpop.f32.mrb[0].mxu0
        %7187 = vmatprep.mubr.bf16.mxu0 0
        %7188 = vmatmul.mubr.bf16.gmra.mrb[0].mxu0 %v6390
        %v7189 = vpop.f32.mrb[0].mxu0
        %v7190 = vadd.f32 %v7093, %v7189
        %v7191 = vpop.f32.mrb[0].mxu0
        %v7192 = vpop.f32.mrb[0].mxu0
        %v7193 = vadd.f32 %v7096, %v7192
        %v7194 = vpop.f32.mrb[0].mxu0
        %7195 = vmatprep.mubr.bf16.mxu0 0
        %7196 = vmatmul.mubr.bf16.gmra.mrb[0].mxu0 %v6394
        %v7197 = vpop.f32.mrb[0].mxu0
        %v7198 = vadd.f32 %v7101, %v7197
        %v7199 = vpop.f32.mrb[0].mxu0
        %v7200 = vpop.f32.mrb[0].mxu0
        %v7201 = vadd.f32 %v7104, %v7200
        %v7202 = vpop.f32.mrb[0].mxu0
        %7203 = vmatprep.mubr.bf16.mxu0 0
        %7204 = vmatmul.mubr.bf16.gmra.mrb[0].mxu0 %v6398
        %v7205 = vpop.f32.mrb[0].mxu0
        %v7206 = vadd.f32 %v7109, %v7205
        %v7207 = vpop.f32.mrb[0].mxu0
        %v7208 = vpop.f32.mrb[0].mxu0
        %v7209 = vadd.f32 %v7112, %v7208
        %v7210 = vpop.f32.mrb[0].mxu0
        %7211 = vmatprep.mubr.bf16.mxu0 0
        %7212 = vmatmul.mubr.bf16.gmra.mrb[0].mxu0 %v6402
        %v7213 = vpop.f32.mrb[0].mxu0
        %v7214 = vadd.f32 %v7117, %v7213
        %v7215 = vpop.f32.mrb[0].mxu0
        %v7216 = vpop.f32.mrb[0].mxu0
        %v7217 = vadd.f32 %v7120, %v7216
        %v7218 = vpop.f32.mrb[0].mxu0
        %7219 = vmatprep.mubr.bf16.mxu0 0
        %7220 = vmatmul.mubr.bf16.gmra.mrb[0].mxu0 %v6406
        %v7221 = vpop.f32.mrb[0].mxu0
        %v7222 = vadd.f32 %v7125, %v7221
        %v7223 = vpop.f32.mrb[0].mxu0
        %v7224 = vpop.f32.mrb[0].mxu0
        %v7225 = vadd.f32 %v7128, %v7224
        %v7226 = vpop.f32.mrb[0].mxu0
        %7227 = vdwg.mxu0
        %v7228 = vpack.c.bf16 %v6960, %v6956
        %v7229 = vpack.c.bf16 %v6962, %v6958
        %v7230 = vpack.c.bf16 %v7169, %v7166
        %v7231 = vpack.c.bf16 %v6970, %v6966
        %v7232 = vpack.c.bf16 %v6972, %v6968
        %v7233 = vpack.c.bf16 %v7177, %v7174
        %v7234 = vpack.c.bf16 %v6980, %v6976
        %v7235 = vpack.c.bf16 %v6982, %v6978
        %v7236 = vpack.c.bf16 %v7185, %v7182
        %v7237 = vpack.c.bf16 %v6990, %v6986
        %v7238 = vpack.c.bf16 %v6992, %v6988
        %v7239 = vpack.c.bf16 %v7193, %v7190
        %v7240 = vpack.c.bf16 %v7000, %v6996
        %v7241 = vpack.c.bf16 %v7002, %v6998
        %v7242 = vpack.c.bf16 %v7201, %v7198
        %v7243 = vpack.c.bf16 %v7010, %v7006
        %v7244 = vpack.c.bf16 %v7012, %v7008
        %v7245 = vpack.c.bf16 %v7209, %v7206
        %v7246 = vpack.c.bf16 %v7020, %v7016
        %v7247 = vpack.c.bf16 %v7022, %v7018
        %v7248 = vpack.c.bf16 %v7217, %v7214
        %v7249 = vpack.c.bf16 %v7030, %v7026
        %v7250 = vpack.c.bf16 %v7032, %v7028
        %v7251 = vpack.c.bf16 %v7225, %v7222
        %v7276 = vunpack.c.l.b16 %v7228
        %v7277 = vunpack.c.l.b16 %v7229
        %v7278 = vunpack.c.l.b16 %v7230
        %v7279 = vunpack.c.h.b16 %v7228
        %v7280 = vunpack.c.h.b16 %v7229
        %v7281 = vunpack.c.h.b16 %v7230
        %v7282 = vunpack.c.l.b16 %v7231
        %v7283 = vunpack.c.l.b16 %v7232
        %v7284 = vunpack.c.l.b16 %v7233
        %v7285 = vunpack.c.h.b16 %v7231
        %v7286 = vunpack.c.h.b16 %v7232
        %v7287 = vunpack.c.h.b16 %v7233
        %v7288 = vunpack.c.l.b16 %v7234
        %v7289 = vunpack.c.l.b16 %v7235
        %v7290 = vunpack.c.l.b16 %v7236
        %v7291 = vunpack.c.h.b16 %v7234
        %v7292 = vunpack.c.h.b16 %v7235
        %v7293 = vunpack.c.h.b16 %v7236
        %v7294 = vunpack.c.l.b16 %v7237
        %v7295 = vunpack.c.l.b16 %v7238
        %v7296 = vunpack.c.l.b16 %v7239
        %v7297 = vunpack.c.h.b16 %v7237
        %v7298 = vunpack.c.h.b16 %v7238
        %v7299 = vunpack.c.h.b16 %v7239
        %v7300 = vunpack.c.l.b16 %v7240
        %v7301 = vunpack.c.l.b16 %v7241
        %v7302 = vunpack.c.l.b16 %v7242
        %v7303 = vunpack.c.h.b16 %v7240
        %v7304 = vunpack.c.h.b16 %v7241
        %v7305 = vunpack.c.h.b16 %v7242
        %v7306 = vunpack.c.l.b16 %v7243
        %v7307 = vunpack.c.l.b16 %v7244
        %v7308 = vunpack.c.l.b16 %v7245
        %v7309 = vunpack.c.h.b16 %v7243
        %v7310 = vunpack.c.h.b16 %v7244
        %v7311 = vunpack.c.h.b16 %v7245
        %v7312 = vunpack.c.l.b16 %v7246
        %v7313 = vunpack.c.l.b16 %v7247
        %v7314 = vunpack.c.l.b16 %v7248
        %v7315 = vunpack.c.h.b16 %v7246
        %v7316 = vunpack.c.h.b16 %v7247
        %v7317 = vunpack.c.h.b16 %v7248
        %v7318 = vunpack.c.l.b16 %v7249
        %v7319 = vunpack.c.l.b16 %v7250
        %v7320 = vunpack.c.l.b16 %v7251
        %v7321 = vunpack.c.h.b16 %v7249
        %v7322 = vunpack.c.h.b16 %v7250
        %v7323 = vunpack.c.h.b16 %v7251
        %v7324 = vpack.c.b16 %v7277, %v7276
        %v7325 = vpack.c.b16 %v7278, %v7278
        %v7326 = vpack.c.b16 %v7280, %v7279
        %v7327 = vpack.c.b16 %v7281, %v7281
        %v7328 = vpack.c.b16 %v7283, %v7282
        %v7329 = vpack.c.b16 %v7284, %v7284
        %v7330 = vpack.c.b16 %v7286, %v7285
        %v7331 = vpack.c.b16 %v7287, %v7287
        %v7332 = vpack.c.b16 %v7289, %v7288
        %v7333 = vpack.c.b16 %v7290, %v7290
        %v7334 = vpack.c.b16 %v7292, %v7291
        %v7335 = vpack.c.b16 %v7293, %v7293
        %v7336 = vpack.c.b16 %v7295, %v7294
        %v7337 = vpack.c.b16 %v7296, %v7296
        %v7338 = vpack.c.b16 %v7298, %v7297
        %v7339 = vpack.c.b16 %v7299, %v7299
        %v7340 = vpack.c.b16 %v7301, %v7300
        %v7341 = vpack.c.b16 %v7302, %v7302
        %v7342 = vpack.c.b16 %v7304, %v7303
        %v7343 = vpack.c.b16 %v7305, %v7305
        %v7344 = vpack.c.b16 %v7307, %v7306
        %v7345 = vpack.c.b16 %v7308, %v7308
        %v7346 = vpack.c.b16 %v7310, %v7309
        %v7347 = vpack.c.b16 %v7311, %v7311
        %v7348 = vpack.c.b16 %v7313, %v7312
        %v7349 = vpack.c.b16 %v7314, %v7314
        %v7350 = vpack.c.b16 %v7316, %v7315
        %v7351 = vpack.c.b16 %v7317, %v7317
        %v7352 = vpack.c.b16 %v7319, %v7318
        %v7353 = vpack.c.b16 %v7320, %v7320
        %v7354 = vpack.c.b16 %v7322, %v7321
        %v7355 = vpack.c.b16 %v7323, %v7323
        %7388 = vst [vmem:[%s220] sm:$0xff] %v7324
        %7389 = vst [vmem:[%s220 + $0x8] sm:$0xf] %v7325
        %7390 = vst [vmem:[%s220 + $0xc] sm:$0xff] %v7326
        %7391 = vst [vmem:[%s220 + $0x14] sm:$0xf] %v7327
        %7392 = vst [vmem:[%s220 + $0x18] sm:$0xff] %v7328
        %7393 = vst [vmem:[%s220 + $0x20] sm:$0xf] %v7329
        %7394 = vst [vmem:[%s220 + $0x24] sm:$0xff] %v7330
        %7395 = vst [vmem:[%s220 + $0x2c] sm:$0xf] %v7331
        %7396 = vst [vmem:[%s220 + $0x30] sm:$0xff] %v7332
        %7397 = vst [vmem:[%s220 + $0x38] sm:$0xf] %v7333
        %7398 = vst [vmem:[%s220 + $0x3c] sm:$0xff] %v7334
        %7399 = vst [vmem:[%s220 + $0x44] sm:$0xf] %v7335
        %7400 = vst [vmem:[%s220 + $0x48] sm:$0xff] %v7336
        %7401 = vst [vmem:[%s220 + $0x50] sm:$0xf] %v7337
        %7402 = vst [vmem:[%s220 + $0x54] sm:$0xff] %v7338
        %7403 = vst [vmem:[%s220 + $0x5c] sm:$0xf] %v7339
        %7404 = vst [vmem:[%s220 + $0x60] sm:$0xff] %v7340
        %7405 = vst [vmem:[%s220 + $0x68] sm:$0xf] %v7341
        %7406 = vst [vmem:[%s220 + $0x6c] sm:$0xff] %v7342
        %7407 = vst [vmem:[%s220 + $0x74] sm:$0xf] %v7343
        %7408 = vst [vmem:[%s220 + $0x78] sm:$0xff] %v7344
        %7409 = vst [vmem:[%s220 + $0x80] sm:$0xf] %v7345
        %7410 = vst [vmem:[%s220 + $0x84] sm:$0xff] %v7346
        %7411 = vst [vmem:[%s220 + $0x8c] sm:$0xf] %v7347
        %7412 = vst [vmem:[%s220 + $0x90] sm:$0xff] %v7348
        %7413 = vst [vmem:[%s220 + $0x98] sm:$0xf] %v7349
        %7414 = vst [vmem:[%s220 + $0x9c] sm:$0xff] %v7350
        %7415 = vst [vmem:[%s220 + $0xa4] sm:$0xf] %v7351
        %7416 = vst [vmem:[%s220 + $0xa8] sm:$0xff] %v7352
        %7417 = vst [vmem:[%s220 + $0xb0] sm:$0xf] %v7353
        %7418 = vst [vmem:[%s220 + $0xb4] sm:$0xff] %v7354
        %7419 = vst [vmem:[%s220 + $0xbc] sm:$0xf] %v7355
        %s7420 = scalar_lea.vmem %s226, 192
        %v7421 = vld [vmem:[%s7420] sm:$0xff]
        %v7422 = vld [vmem:[%s7420 + $0x8] sm:$0xf]
        %v7423 = vld [vmem:[%s7420 + $0xc] sm:$0xff]
        %v7424 = vld [vmem:[%s7420 + $0x14] sm:$0xf]
        %v7425 = vld [vmem:[%s7420 + $0x18] sm:$0xff]
        %v7426 = vld [vmem:[%s7420 + $0x20] sm:$0xf]
        %v7427 = vld [vmem:[%s7420 + $0x24] sm:$0xff]
        %v7428 = vld [vmem:[%s7420 + $0x2c] sm:$0xf]
        %v7429 = vld [vmem:[%s7420 + $0x30] sm:$0xff]
        %v7430 = vld [vmem:[%s7420 + $0x38] sm:$0xf]
        %v7431 = vld [vmem:[%s7420 + $0x3c] sm:$0xff]
        %v7432 = vld [vmem:[%s7420 + $0x44] sm:$0xf]
        %v7433 = vld [vmem:[%s7420 + $0x48] sm:$0xff]
        %v7434 = vld [vmem:[%s7420 + $0x50] sm:$0xf]
        %v7435 = vld [vmem:[%s7420 + $0x54] sm:$0xff]
        %v7436 = vld [vmem:[%s7420 + $0x5c] sm:$0xf]
        %v7437 = vld [vmem:[%s7420 + $0x60] sm:$0xff]
        %v7438 = vld [vmem:[%s7420 + $0x68] sm:$0xf]
        %v7439 = vld [vmem:[%s7420 + $0x6c] sm:$0xff]
        %v7440 = vld [vmem:[%s7420 + $0x74] sm:$0xf]
        %v7441 = vld [vmem:[%s7420 + $0x78] sm:$0xff]
        %v7442 = vld [vmem:[%s7420 + $0x80] sm:$0xf]
        %v7443 = vld [vmem:[%s7420 + $0x84] sm:$0xff]
        %v7444 = vld [vmem:[%s7420 + $0x8c] sm:$0xf]
        %v7445 = vld [vmem:[%s7420 + $0x90] sm:$0xff]
        %v7446 = vld [vmem:[%s7420 + $0x98] sm:$0xf]
        %v7447 = vld [vmem:[%s7420 + $0x9c] sm:$0xff]
        %v7448 = vld [vmem:[%s7420 + $0xa4] sm:$0xf]
        %v7449 = vld [vmem:[%s7420 + $0xa8] sm:$0xff]
        %v7450 = vld [vmem:[%s7420 + $0xb0] sm:$0xf]
        %v7451 = vld [vmem:[%s7420 + $0xb4] sm:$0xff]
        %v7452 = vld [vmem:[%s7420 + $0xbc] sm:$0xf]
        %v7485 = vunpack.c.l.b16 %v7421
        %v7486 = vunpack.c.h.b16 %v7421
        %v7487 = vunpack.c.l.b16 %v7422
        %v7488 = vunpack.c.l.b16 %v7423
        %v7489 = vunpack.c.h.b16 %v7423
        %v7490 = vunpack.c.l.b16 %v7424
        %v7491 = vunpack.c.l.b16 %v7425
        %v7492 = vunpack.c.h.b16 %v7425
        %v7493 = vunpack.c.l.b16 %v7426
        %v7494 = vunpack.c.l.b16 %v7427
        %v7495 = vunpack.c.h.b16 %v7427
        %v7496 = vunpack.c.l.b16 %v7428
        %v7497 = vunpack.c.l.b16 %v7429
        %v7498 = vunpack.c.h.b16 %v7429
        %v7499 = vunpack.c.l.b16 %v7430
        %v7500 = vunpack.c.l.b16 %v7431
        %v7501 = vunpack.c.h.b16 %v7431
        %v7502 = vunpack.c.l.b16 %v7432
        %v7503 = vunpack.c.l.b16 %v7433
        %v7504 = vunpack.c.h.b16 %v7433
        %v7505 = vunpack.c.l.b16 %v7434
        %v7506 = vunpack.c.l.b16 %v7435
        %v7507 = vunpack.c.h.b16 %v7435
        %v7508 = vunpack.c.l.b16 %v7436
        %v7509 = vunpack.c.l.b16 %v7437
        %v7510 = vunpack.c.h.b16 %v7437
        %v7511 = vunpack.c.l.b16 %v7438
        %v7512 = vunpack.c.l.b16 %v7439
        %v7513 = vunpack.c.h.b16 %v7439
        %v7514 = vunpack.c.l.b16 %v7440
        %v7515 = vunpack.c.l.b16 %v7441
        %v7516 = vunpack.c.h.b16 %v7441
        %v7517 = vunpack.c.l.b16 %v7442
        %v7518 = vunpack.c.l.b16 %v7443
        %v7519 = vunpack.c.h.b16 %v7443
        %v7520 = vunpack.c.l.b16 %v7444
        %v7521 = vunpack.c.l.b16 %v7445
        %v7522 = vunpack.c.h.b16 %v7445
        %v7523 = vunpack.c.l.b16 %v7446
        %v7524 = vunpack.c.l.b16 %v7447
        %v7525 = vunpack.c.h.b16 %v7447
        %v7526 = vunpack.c.l.b16 %v7448
        %v7527 = vunpack.c.l.b16 %v7449
        %v7528 = vunpack.c.h.b16 %v7449
        %v7529 = vunpack.c.l.b16 %v7450
        %v7530 = vunpack.c.l.b16 %v7451
        %v7531 = vunpack.c.h.b16 %v7451
        %v7532 = vunpack.c.l.b16 %v7452
        %v7533 = vpack.c.b16 %v7488, %v7485
        %v7534 = vpack.c.b16 %v7489, %v7486
        %v7535 = vpack.c.b16 %v7490, %v7487
        %v7536 = vpack.c.b16 %v7494, %v7491
        %v7537 = vpack.c.b16 %v7495, %v7492
        %v7538 = vpack.c.b16 %v7496, %v7493
        %v7539 = vpack.c.b16 %v7500, %v7497
        %v7540 = vpack.c.b16 %v7501, %v7498
        %v7541 = vpack.c.b16 %v7502, %v7499
        %v7542 = vpack.c.b16 %v7506, %v7503
        %v7543 = vpack.c.b16 %v7507, %v7504
        %v7544 = vpack.c.b16 %v7508, %v7505
        %v7545 = vpack.c.b16 %v7512, %v7509
        %v7546 = vpack.c.b16 %v7513, %v7510
        %v7547 = vpack.c.b16 %v7514, %v7511
        %v7548 = vpack.c.b16 %v7518, %v7515
        %v7549 = vpack.c.b16 %v7519, %v7516
        %v7550 = vpack.c.b16 %v7520, %v7517
        %v7551 = vpack.c.b16 %v7524, %v7521
        %v7552 = vpack.c.b16 %v7525, %v7522
        %v7553 = vpack.c.b16 %v7526, %v7523
        %v7554 = vpack.c.b16 %v7530, %v7527
        %v7555 = vpack.c.b16 %v7531, %v7528
        %v7556 = vpack.c.b16 %v7532, %v7529
        %7581 = vmatprep.subr.bf16.mxu0 %v936
        %7582 = vmatpush1.bf16.msra.mxu0 %v935
        %7583 = vmatprep.subr.bf16.mxu0 %v938
        %7584 = vmatpush1.bf16.msra.mxu0 %v937
        %7585 = vmatprep.subr.bf16.mxu0 %v940
        %7586 = vmatpush1.bf16.msra.mxu0 %v939
        %7587 = vmatprep.subr.bf16.mxu0 %v942
        %7588 = vmatpush1.bf16.msra.mxu0 %v941
        %7589 = vmatprep.subr.bf16.mxu0 %v944
        %7590 = vmatpush1.bf16.msra.mxu0 %v943
        %7591 = vmatprep.subr.bf16.mxu0 %v946
        %7592 = vmatpush1.bf16.msra.mxu0 %v945
        %7593 = vmatprep.subr.bf16.mxu0 %v948
        %7594 = vmatpush1.bf16.msra.mxu0 %v947
        %7595 = vmatprep.subr.bf16.mxu0 %v950
        %7596 = vmatpush1.bf16.msra.mxu0 %v949
        %7597 = vmatprep.subr.bf16.mxu0 %v952
        %7598 = vmatpush1.bf16.msra.mxu0 %v951
        %7599 = vmatprep.subr.bf16.mxu0 %v954
        %7600 = vmatpush1.bf16.msra.mxu0 %v953
        %7601 = vmatprep.subr.bf16.mxu0 %v956
        %7602 = vmatpush1.bf16.msra.mxu0 %v955
        %7603 = vmatprep.subr.bf16.mxu0 %v958
        %7604 = vmatpush1.bf16.msra.mxu0 %v957
        %7605 = vmatprep.subr.bf16.mxu0 %v960
        %7606 = vmatpush1.bf16.msra.mxu0 %v959
        %7607 = vmatprep.subr.bf16.mxu0 %v962
        %7608 = vmatpush1.bf16.msra.mxu0 %v961
        %7609 = vmatprep.subr.bf16.mxu0 %v964
        %7610 = vmatpush1.bf16.msra.mxu0 %v963
        %7611 = vmatprep.subr.bf16.mxu0 %v966
        %7612 = vmatpush1.bf16.msra.mxu0 %v965
        %7613 = vmatprep.mubr.bf16.mxu0 %v7534
        %7614 = vmatmul.mubr.bf16.gmra.mrb[0].mxu0 %v7533
        %v7615 = vpop.f32.mrb[0].mxu0
        %v7616 = vadd.f32 0.0, %v7615
        %v7617 = vpop.f32.mrb[0].mxu0
        %v7618 = vadd.f32 0.0, %v7617
        %v7619 = vpop.f32.mrb[0].mxu0
        %v7620 = vadd.f32 0.0, %v7619
        %v7621 = vpop.f32.mrb[0].mxu0
        %v7622 = vadd.f32 0.0, %v7621
        %7623 = vmatprep.mubr.bf16.mxu0 %v7537
        %7624 = vmatmul.mubr.bf16.gmra.mrb[0].mxu0 %v7536
        %v7625 = vpop.f32.mrb[0].mxu0
        %v7626 = vadd.f32 0.0, %v7625
        %v7627 = vpop.f32.mrb[0].mxu0
        %v7628 = vadd.f32 0.0, %v7627
        %v7629 = vpop.f32.mrb[0].mxu0
        %v7630 = vadd.f32 0.0, %v7629
        %v7631 = vpop.f32.mrb[0].mxu0
        %v7632 = vadd.f32 0.0, %v7631
        %7633 = vmatprep.mubr.bf16.mxu0 %v7540
        %7634 = vmatmul.mubr.bf16.gmra.mrb[0].mxu0 %v7539
        %v7635 = vpop.f32.mrb[0].mxu0
        %v7636 = vadd.f32 0.0, %v7635
        %v7637 = vpop.f32.mrb[0].mxu0
        %v7638 = vadd.f32 0.0, %v7637
        %v7639 = vpop.f32.mrb[0].mxu0
        %v7640 = vadd.f32 0.0, %v7639
        %v7641 = vpop.f32.mrb[0].mxu0
        %v7642 = vadd.f32 0.0, %v7641
        %7643 = vmatprep.mubr.bf16.mxu0 %v7543
        %7644 = vmatmul.mubr.bf16.gmra.mrb[0].mxu0 %v7542
        %v7645 = vpop.f32.mrb[0].mxu0
        %v7646 = vadd.f32 0.0, %v7645
        %v7647 = vpop.f32.mrb[0].mxu0
        %v7648 = vadd.f32 0.0, %v7647
        %v7649 = vpop.f32.mrb[0].mxu0
        %v7650 = vadd.f32 0.0, %v7649
        %v7651 = vpop.f32.mrb[0].mxu0
        %v7652 = vadd.f32 0.0, %v7651
        %7653 = vmatprep.mubr.bf16.mxu0 %v7546
        %7654 = vmatmul.mubr.bf16.gmra.mrb[0].mxu0 %v7545
        %v7655 = vpop.f32.mrb[0].mxu0
        %v7656 = vadd.f32 0.0, %v7655
        %v7657 = vpop.f32.mrb[0].mxu0
        %v7658 = vadd.f32 0.0, %v7657
        %v7659 = vpop.f32.mrb[0].mxu0
        %v7660 = vadd.f32 0.0, %v7659
        %v7661 = vpop.f32.mrb[0].mxu0
        %v7662 = vadd.f32 0.0, %v7661
        %7663 = vmatprep.mubr.bf16.mxu0 %v7549
        %7664 = vmatmul.mubr.bf16.gmra.mrb[0].mxu0 %v7548
        %v7665 = vpop.f32.mrb[0].mxu0
        %v7666 = vadd.f32 0.0, %v7665
        %v7667 = vpop.f32.mrb[0].mxu0
        %v7668 = vadd.f32 0.0, %v7667
        %v7669 = vpop.f32.mrb[0].mxu0
        %v7670 = vadd.f32 0.0, %v7669
        %v7671 = vpop.f32.mrb[0].mxu0
        %v7672 = vadd.f32 0.0, %v7671
        %7673 = vmatprep.mubr.bf16.mxu0 %v7552
        %7674 = vmatmul.mubr.bf16.gmra.mrb[0].mxu0 %v7551
        %v7675 = vpop.f32.mrb[0].mxu0
        %v7676 = vadd.f32 0.0, %v7675
        %v7677 = vpop.f32.mrb[0].mxu0
        %v7678 = vadd.f32 0.0, %v7677
        %v7679 = vpop.f32.mrb[0].mxu0
        %v7680 = vadd.f32 0.0, %v7679
        %v7681 = vpop.f32.mrb[0].mxu0
        %v7682 = vadd.f32 0.0, %v7681
        %7683 = vmatprep.mubr.bf16.mxu0 %v7555
        %7684 = vmatmul.mubr.bf16.gmra.mrb[0].mxu0 %v7554
        %v7685 = vpop.f32.mrb[0].mxu0
        %v7686 = vadd.f32 0.0, %v7685
        %v7687 = vpop.f32.mrb[0].mxu0
        %v7688 = vadd.f32 0.0, %v7687
        %v7689 = vpop.f32.mrb[0].mxu0
        %v7690 = vadd.f32 0.0, %v7689
        %v7691 = vpop.f32.mrb[0].mxu0
        %v7692 = vadd.f32 0.0, %v7691
        %7693 = vdwg.mxu0
        %7694 = vmatprep.subr.bf16.mxu0 %v968
        %7695 = vmatpush1.bf16.msra.mxu0 %v967
        %7696 = vmatprep.subr.bf16.mxu0 %v970
        %7697 = vmatpush1.bf16.msra.mxu0 %v969
        %7698 = vmatprep.subr.bf16.mxu0 %v972
        %7699 = vmatpush1.bf16.msra.mxu0 %v971
        %7700 = vmatprep.subr.bf16.mxu0 %v974
        %7701 = vmatpush1.bf16.msra.mxu0 %v973
        %7702 = vmatprep.subr.bf16.mxu0 %v976
        %7703 = vmatpush1.bf16.msra.mxu0 %v975
        %7704 = vmatprep.subr.bf16.mxu0 %v978
        %7705 = vmatpush1.bf16.msra.mxu0 %v977
        %7706 = vmatprep.subr.bf16.mxu0 %v980
        %7707 = vmatpush1.bf16.msra.mxu0 %v979
        %7708 = vmatprep.subr.bf16.mxu0 %v982
        %7709 = vmatpush1.bf16.msra.mxu0 %v981
        %7710 = vmatprep.subr.bf16.mxu0 0
        %7711 = vmatpush1.bf16.msra.mxu0 0
        %7712 = vmatprep.subr.bf16.mxu0 0
        %7713 = vmatpush1.bf16.msra.mxu0 0
        %7714 = vmatprep.subr.bf16.mxu0 0
        %7715 = vmatpush1.bf16.msra.mxu0 0
        %7716 = vmatprep.subr.bf16.mxu0 0
        %7717 = vmatpush1.bf16.msra.mxu0 0
        %7718 = vmatprep.subr.bf16.mxu0 0
        %7719 = vmatpush1.bf16.msra.mxu0 0
        %7720 = vmatprep.subr.bf16.mxu0 0
        %7721 = vmatpush1.bf16.msra.mxu0 0
        %7722 = vmatprep.subr.bf16.mxu0 0
        %7723 = vmatpush1.bf16.msra.mxu0 0
        %7724 = vmatprep.subr.bf16.mxu0 0
        %7725 = vmatpush1.bf16.msra.mxu0 0
        %7726 = vmatprep.mubr.bf16.mxu0 0
        %7727 = vmatmul.mubr.bf16.gmra.mrb[0].mxu0 %v7535
        %v7728 = vpop.f32.mrb[0].mxu0
        %v7729 = vadd.f32 %v7616, %v7728
        %v7730 = vpop.f32.mrb[0].mxu0
        %v7731 = vadd.f32 %v7618, %v7730
        %v7732 = vpop.f32.mrb[0].mxu0
        %v7733 = vadd.f32 %v7620, %v7732
        %v7734 = vpop.f32.mrb[0].mxu0
        %v7735 = vadd.f32 %v7622, %v7734
        %7736 = vmatprep.mubr.bf16.mxu0 0
        %7737 = vmatmul.mubr.bf16.gmra.mrb[0].mxu0 %v7538
        %v7738 = vpop.f32.mrb[0].mxu0
        %v7739 = vadd.f32 %v7626, %v7738
        %v7740 = vpop.f32.mrb[0].mxu0
        %v7741 = vadd.f32 %v7628, %v7740
        %v7742 = vpop.f32.mrb[0].mxu0
        %v7743 = vadd.f32 %v7630, %v7742
        %v7744 = vpop.f32.mrb[0].mxu0
        %v7745 = vadd.f32 %v7632, %v7744
        %7746 = vmatprep.mubr.bf16.mxu0 0
        %7747 = vmatmul.mubr.bf16.gmra.mrb[0].mxu0 %v7541
        %v7748 = vpop.f32.mrb[0].mxu0
        %v7749 = vadd.f32 %v7636, %v7748
        %v7750 = vpop.f32.mrb[0].mxu0
        %v7751 = vadd.f32 %v7638, %v7750
        %v7752 = vpop.f32.mrb[0].mxu0
        %v7753 = vadd.f32 %v7640, %v7752
        %v7754 = vpop.f32.mrb[0].mxu0
        %v7755 = vadd.f32 %v7642, %v7754
        %7756 = vmatprep.mubr.bf16.mxu0 0
        %7757 = vmatmul.mubr.bf16.gmra.mrb[0].mxu0 %v7544
        %v7758 = vpop.f32.mrb[0].mxu0
        %v7759 = vadd.f32 %v7646, %v7758
        %v7760 = vpop.f32.mrb[0].mxu0
        %v7761 = vadd.f32 %v7648, %v7760
        %v7762 = vpop.f32.mrb[0].mxu0
        %v7763 = vadd.f32 %v7650, %v7762
        %v7764 = vpop.f32.mrb[0].mxu0
        %v7765 = vadd.f32 %v7652, %v7764
        %7766 = vmatprep.mubr.bf16.mxu0 0
        %7767 = vmatmul.mubr.bf16.gmra.mrb[0].mxu0 %v7547
        %v7768 = vpop.f32.mrb[0].mxu0
        %v7769 = vadd.f32 %v7656, %v7768
        %v7770 = vpop.f32.mrb[0].mxu0
        %v7771 = vadd.f32 %v7658, %v7770
        %v7772 = vpop.f32.mrb[0].mxu0
        %v7773 = vadd.f32 %v7660, %v7772
        %v7774 = vpop.f32.mrb[0].mxu0
        %v7775 = vadd.f32 %v7662, %v7774
        %7776 = vmatprep.mubr.bf16.mxu0 0
        %7777 = vmatmul.mubr.bf16.gmra.mrb[0].mxu0 %v7550
        %v7778 = vpop.f32.mrb[0].mxu0
        %v7779 = vadd.f32 %v7666, %v7778
        %v7780 = vpop.f32.mrb[0].mxu0
        %v7781 = vadd.f32 %v7668, %v7780
        %v7782 = vpop.f32.mrb[0].mxu0
        %v7783 = vadd.f32 %v7670, %v7782
        %v7784 = vpop.f32.mrb[0].mxu0
        %v7785 = vadd.f32 %v7672, %v7784
        %7786 = vmatprep.mubr.bf16.mxu0 0
        %7787 = vmatmul.mubr.bf16.gmra.mrb[0].mxu0 %v7553
        %v7788 = vpop.f32.mrb[0].mxu0
        %v7789 = vadd.f32 %v7676, %v7788
        %v7790 = vpop.f32.mrb[0].mxu0
        %v7791 = vadd.f32 %v7678, %v7790
        %v7792 = vpop.f32.mrb[0].mxu0
        %v7793 = vadd.f32 %v7680, %v7792
        %v7794 = vpop.f32.mrb[0].mxu0
        %v7795 = vadd.f32 %v7682, %v7794
        %7796 = vmatprep.mubr.bf16.mxu0 0
        %7797 = vmatmul.mubr.bf16.gmra.mrb[0].mxu0 %v7556
        %v7798 = vpop.f32.mrb[0].mxu0
        %v7799 = vadd.f32 %v7686, %v7798
        %v7800 = vpop.f32.mrb[0].mxu0
        %v7801 = vadd.f32 %v7688, %v7800
        %v7802 = vpop.f32.mrb[0].mxu0
        %v7803 = vadd.f32 %v7690, %v7802
        %v7804 = vpop.f32.mrb[0].mxu0
        %v7805 = vadd.f32 %v7692, %v7804
        %7806 = vdwg.mxu0
        %7807 = vmatprep.subr.bf16.mxu0 %v1402
        %7808 = vmatpush1.bf16.msra.mxu0 %v1401
        %7809 = vmatprep.subr.bf16.mxu0 %v1404
        %7810 = vmatpush1.bf16.msra.mxu0 %v1403
        %7811 = vmatprep.subr.bf16.mxu0 %v1406
        %7812 = vmatpush1.bf16.msra.mxu0 %v1405
        %7813 = vmatprep.subr.bf16.mxu0 %v1408
        %7814 = vmatpush1.bf16.msra.mxu0 %v1407
        %7815 = vmatprep.subr.bf16.mxu0 %v1410
        %7816 = vmatpush1.bf16.msra.mxu0 %v1409
        %7817 = vmatprep.subr.bf16.mxu0 %v1412
        %7818 = vmatpush1.bf16.msra.mxu0 %v1411
        %7819 = vmatprep.subr.bf16.mxu0 %v1414
        %7820 = vmatpush1.bf16.msra.mxu0 %v1413
        %7821 = vmatprep.subr.bf16.mxu0 %v1416
        %7822 = vmatpush1.bf16.msra.mxu0 %v1415
        %7823 = vmatprep.subr.bf16.mxu0 %v1418
        %7824 = vmatpush1.bf16.msra.mxu0 %v1417
        %7825 = vmatprep.subr.bf16.mxu0 %v1420
        %7826 = vmatpush1.bf16.msra.mxu0 %v1419
        %7827 = vmatprep.subr.bf16.mxu0 %v1422
        %7828 = vmatpush1.bf16.msra.mxu0 %v1421
        %7829 = vmatprep.subr.bf16.mxu0 %v1424
        %7830 = vmatpush1.bf16.msra.mxu0 %v1423
        %7831 = vmatprep.subr.bf16.mxu0 %v1426
        %7832 = vmatpush1.bf16.msra.mxu0 %v1425
        %7833 = vmatprep.subr.bf16.mxu0 %v1428
        %7834 = vmatpush1.bf16.msra.mxu0 %v1427
        %7835 = vmatprep.subr.bf16.mxu0 %v1430
        %7836 = vmatpush1.bf16.msra.mxu0 %v1429
        %7837 = vmatprep.subr.bf16.mxu0 %v1432
        %7838 = vmatpush1.bf16.msra.mxu0 %v1431
        %7839 = vmatprep.mubr.bf16.mxu0 %v7534
        %7840 = vmatmul.mubr.bf16.gmra.mrb[0].mxu0 %v7533
        %v7841 = vpop.f32.mrb[0].mxu0
        %v7842 = vadd.f32 0.0, %v7841
        %v7843 = vpop.f32.mrb[0].mxu0
        %v7844 = vadd.f32 0.0, %v7843
        %v7845 = vpop.f32.mrb[0].mxu0
        %v7846 = vadd.f32 0.0, %v7845
        %v7847 = vpop.f32.mrb[0].mxu0
        %v7848 = vadd.f32 0.0, %v7847
        %7849 = vmatprep.mubr.bf16.mxu0 %v7537
        %7850 = vmatmul.mubr.bf16.gmra.mrb[0].mxu0 %v7536
        %v7851 = vpop.f32.mrb[0].mxu0
        %v7852 = vadd.f32 0.0, %v7851
        %v7853 = vpop.f32.mrb[0].mxu0
        %v7854 = vadd.f32 0.0, %v7853
        %v7855 = vpop.f32.mrb[0].mxu0
        %v7856 = vadd.f32 0.0, %v7855
        %v7857 = vpop.f32.mrb[0].mxu0
        %v7858 = vadd.f32 0.0, %v7857
        %7859 = vmatprep.mubr.bf16.mxu0 %v7540
        %7860 = vmatmul.mubr.bf16.gmra.mrb[0].mxu0 %v7539
        %v7861 = vpop.f32.mrb[0].mxu0
        %v7862 = vadd.f32 0.0, %v7861
        %v7863 = vpop.f32.mrb[0].mxu0
        %v7864 = vadd.f32 0.0, %v7863
        %v7865 = vpop.f32.mrb[0].mxu0
        %v7866 = vadd.f32 0.0, %v7865
        %v7867 = vpop.f32.mrb[0].mxu0
        %v7868 = vadd.f32 0.0, %v7867
        %7869 = vmatprep.mubr.bf16.mxu0 %v7543
        %7870 = vmatmul.mubr.bf16.gmra.mrb[0].mxu0 %v7542
        %v7871 = vpop.f32.mrb[0].mxu0
        %v7872 = vadd.f32 0.0, %v7871
        %v7873 = vpop.f32.mrb[0].mxu0
        %v7874 = vadd.f32 0.0, %v7873
        %v7875 = vpop.f32.mrb[0].mxu0
        %v7876 = vadd.f32 0.0, %v7875
        %v7877 = vpop.f32.mrb[0].mxu0
        %v7878 = vadd.f32 0.0, %v7877
        %7879 = vmatprep.mubr.bf16.mxu0 %v7546
        %7880 = vmatmul.mubr.bf16.gmra.mrb[0].mxu0 %v7545
        %v7881 = vpop.f32.mrb[0].mxu0
        %v7882 = vadd.f32 0.0, %v7881
        %v7883 = vpop.f32.mrb[0].mxu0
        %v7884 = vadd.f32 0.0, %v7883
        %v7885 = vpop.f32.mrb[0].mxu0
        %v7886 = vadd.f32 0.0, %v7885
        %v7887 = vpop.f32.mrb[0].mxu0
        %v7888 = vadd.f32 0.0, %v7887
        %7889 = vmatprep.mubr.bf16.mxu0 %v7549
        %7890 = vmatmul.mubr.bf16.gmra.mrb[0].mxu0 %v7548
        %v7891 = vpop.f32.mrb[0].mxu0
        %v7892 = vadd.f32 0.0, %v7891
        %v7893 = vpop.f32.mrb[0].mxu0
        %v7894 = vadd.f32 0.0, %v7893
        %v7895 = vpop.f32.mrb[0].mxu0
        %v7896 = vadd.f32 0.0, %v7895
        %v7897 = vpop.f32.mrb[0].mxu0
        %v7898 = vadd.f32 0.0, %v7897
        %7899 = vmatprep.mubr.bf16.mxu0 %v7552
        %7900 = vmatmul.mubr.bf16.gmra.mrb[0].mxu0 %v7551
        %v7901 = vpop.f32.mrb[0].mxu0
        %v7902 = vadd.f32 0.0, %v7901
        %v7903 = vpop.f32.mrb[0].mxu0
        %v7904 = vadd.f32 0.0, %v7903
        %v7905 = vpop.f32.mrb[0].mxu0
        %v7906 = vadd.f32 0.0, %v7905
        %v7907 = vpop.f32.mrb[0].mxu0
        %v7908 = vadd.f32 0.0, %v7907
        %7909 = vmatprep.mubr.bf16.mxu0 %v7555
        %7910 = vmatmul.mubr.bf16.gmra.mrb[0].mxu0 %v7554
        %v7911 = vpop.f32.mrb[0].mxu0
        %v7912 = vadd.f32 0.0, %v7911
        %v7913 = vpop.f32.mrb[0].mxu0
        %v7914 = vadd.f32 0.0, %v7913
        %v7915 = vpop.f32.mrb[0].mxu0
        %v7916 = vadd.f32 0.0, %v7915
        %v7917 = vpop.f32.mrb[0].mxu0
        %v7918 = vadd.f32 0.0, %v7917
        %7919 = vdwg.mxu0
        %7920 = vmatprep.subr.bf16.mxu0 %v1434
        %7921 = vmatpush1.bf16.msra.mxu0 %v1433
        %7922 = vmatprep.subr.bf16.mxu0 %v1436
        %7923 = vmatpush1.bf16.msra.mxu0 %v1435
        %7924 = vmatprep.subr.bf16.mxu0 %v1438
        %7925 = vmatpush1.bf16.msra.mxu0 %v1437
        %7926 = vmatprep.subr.bf16.mxu0 %v1440
        %7927 = vmatpush1.bf16.msra.mxu0 %v1439
        %7928 = vmatprep.subr.bf16.mxu0 %v1442
        %7929 = vmatpush1.bf16.msra.mxu0 %v1441
        %7930 = vmatprep.subr.bf16.mxu0 %v1444
        %7931 = vmatpush1.bf16.msra.mxu0 %v1443
        %7932 = vmatprep.subr.bf16.mxu0 %v1446
        %7933 = vmatpush1.bf16.msra.mxu0 %v1445
        %7934 = vmatprep.subr.bf16.mxu0 %v1448
        %7935 = vmatpush1.bf16.msra.mxu0 %v1447
        %7936 = vmatprep.subr.bf16.mxu0 0
        %7937 = vmatpush1.bf16.msra.mxu0 0
        %7938 = vmatprep.subr.bf16.mxu0 0
        %7939 = vmatpush1.bf16.msra.mxu0 0
        %7940 = vmatprep.subr.bf16.mxu0 0
        %7941 = vmatpush1.bf16.msra.mxu0 0
        %7942 = vmatprep.subr.bf16.mxu0 0
        %7943 = vmatpush1.bf16.msra.mxu0 0
        %7944 = vmatprep.subr.bf16.mxu0 0
        %7945 = vmatpush1.bf16.msra.mxu0 0
        %7946 = vmatprep.subr.bf16.mxu0 0
        %7947 = vmatpush1.bf16.msra.mxu0 0
        %7948 = vmatprep.subr.bf16.mxu0 0
        %7949 = vmatpush1.bf16.msra.mxu0 0
        %7950 = vmatprep.subr.bf16.mxu0 0
        %7951 = vmatpush1.bf16.msra.mxu0 0
        %7952 = vmatprep.mubr.bf16.mxu0 0
        %7953 = vmatmul.mubr.bf16.gmra.mrb[0].mxu0 %v7535
        %v7954 = vpop.f32.mrb[0].mxu0
        %v7955 = vadd.f32 %v7842, %v7954
        %v7956 = vpop.f32.mrb[0].mxu0
        %v7957 = vadd.f32 %v7844, %v7956
        %v7958 = vpop.f32.mrb[0].mxu0
        %v7959 = vadd.f32 %v7846, %v7958
        %v7960 = vpop.f32.mrb[0].mxu0
        %v7961 = vadd.f32 %v7848, %v7960
        %7962 = vmatprep.mubr.bf16.mxu0 0
        %7963 = vmatmul.mubr.bf16.gmra.mrb[0].mxu0 %v7538
        %v7964 = vpop.f32.mrb[0].mxu0
        %v7965 = vadd.f32 %v7852, %v7964
        %v7966 = vpop.f32.mrb[0].mxu0
        %v7967 = vadd.f32 %v7854, %v7966
        %v7968 = vpop.f32.mrb[0].mxu0
        %v7969 = vadd.f32 %v7856, %v7968
        %v7970 = vpop.f32.mrb[0].mxu0
        %v7971 = vadd.f32 %v7858, %v7970
        %7972 = vmatprep.mubr.bf16.mxu0 0
        %7973 = vmatmul.mubr.bf16.gmra.mrb[0].mxu0 %v7541
        %v7974 = vpop.f32.mrb[0].mxu0
        %v7975 = vadd.f32 %v7862, %v7974
        %v7976 = vpop.f32.mrb[0].mxu0
        %v7977 = vadd.f32 %v7864, %v7976
        %v7978 = vpop.f32.mrb[0].mxu0
        %v7979 = vadd.f32 %v7866, %v7978
        %v7980 = vpop.f32.mrb[0].mxu0
        %v7981 = vadd.f32 %v7868, %v7980
        %7982 = vmatprep.mubr.bf16.mxu0 0
        %7983 = vmatmul.mubr.bf16.gmra.mrb[0].mxu0 %v7544
        %v7984 = vpop.f32.mrb[0].mxu0
        %v7985 = vadd.f32 %v7872, %v7984
        %v7986 = vpop.f32.mrb[0].mxu0
        %v7987 = vadd.f32 %v7874, %v7986
        %v7988 = vpop.f32.mrb[0].mxu0
        %v7989 = vadd.f32 %v7876, %v7988
        %v7990 = vpop.f32.mrb[0].mxu0
        %v7991 = vadd.f32 %v7878, %v7990
        %7992 = vmatprep.mubr.bf16.mxu0 0
        %7993 = vmatmul.mubr.bf16.gmra.mrb[0].mxu0 %v7547
        %v7994 = vpop.f32.mrb[0].mxu0
        %v7995 = vadd.f32 %v7882, %v7994
        %v7996 = vpop.f32.mrb[0].mxu0
        %v7997 = vadd.f32 %v7884, %v7996
        %v7998 = vpop.f32.mrb[0].mxu0
        %v7999 = vadd.f32 %v7886, %v7998
        %v8000 = vpop.f32.mrb[0].mxu0
        %v8001 = vadd.f32 %v7888, %v8000
        %8002 = vmatprep.mubr.bf16.mxu0 0
        %8003 = vmatmul.mubr.bf16.gmra.mrb[0].mxu0 %v7550
        %v8004 = vpop.f32.mrb[0].mxu0
        %v8005 = vadd.f32 %v7892, %v8004
        %v8006 = vpop.f32.mrb[0].mxu0
        %v8007 = vadd.f32 %v7894, %v8006
        %v8008 = vpop.f32.mrb[0].mxu0
        %v8009 = vadd.f32 %v7896, %v8008
        %v8010 = vpop.f32.mrb[0].mxu0
        %v8011 = vadd.f32 %v7898, %v8010
        %8012 = vmatprep.mubr.bf16.mxu0 0
        %8013 = vmatmul.mubr.bf16.gmra.mrb[0].mxu0 %v7553
        %v8014 = vpop.f32.mrb[0].mxu0
        %v8015 = vadd.f32 %v7902, %v8014
        %v8016 = vpop.f32.mrb[0].mxu0
        %v8017 = vadd.f32 %v7904, %v8016
        %v8018 = vpop.f32.mrb[0].mxu0
        %v8019 = vadd.f32 %v7906, %v8018
        %v8020 = vpop.f32.mrb[0].mxu0
        %v8021 = vadd.f32 %v7908, %v8020
        %8022 = vmatprep.mubr.bf16.mxu0 0
        %8023 = vmatmul.mubr.bf16.gmra.mrb[0].mxu0 %v7556
        %v8024 = vpop.f32.mrb[0].mxu0
        %v8025 = vadd.f32 %v7912, %v8024
        %v8026 = vpop.f32.mrb[0].mxu0
        %v8027 = vadd.f32 %v7914, %v8026
        %v8028 = vpop.f32.mrb[0].mxu0
        %v8029 = vadd.f32 %v7916, %v8028
        %v8030 = vpop.f32.mrb[0].mxu0
        %v8031 = vadd.f32 %v7918, %v8030
        %8032 = vdwg.mxu0
        %8033 = vmatprep.subr.bf16.mxu0 %v1868
        %8034 = vmatpush1.bf16.msra.mxu0 %v1867
        %8035 = vmatprep.subr.bf16.mxu0 %v1870
        %8036 = vmatpush1.bf16.msra.mxu0 %v1869
        %8037 = vmatprep.subr.bf16.mxu0 %v1872
        %8038 = vmatpush1.bf16.msra.mxu0 %v1871
        %8039 = vmatprep.subr.bf16.mxu0 %v1874
        %8040 = vmatpush1.bf16.msra.mxu0 %v1873
        %8041 = vmatprep.subr.bf16.mxu0 %v1876
        %8042 = vmatpush1.bf16.msra.mxu0 %v1875
        %8043 = vmatprep.subr.bf16.mxu0 %v1878
        %8044 = vmatpush1.bf16.msra.mxu0 %v1877
        %8045 = vmatprep.subr.bf16.mxu0 %v1880
        %8046 = vmatpush1.bf16.msra.mxu0 %v1879
        %8047 = vmatprep.subr.bf16.mxu0 %v1882
        %8048 = vmatpush1.bf16.msra.mxu0 %v1881
        %8049 = vmatprep.subr.bf16.mxu0 %v1884
        %8050 = vmatpush1.bf16.msra.mxu0 %v1883
        %8051 = vmatprep.subr.bf16.mxu0 %v1886
        %8052 = vmatpush1.bf16.msra.mxu0 %v1885
        %8053 = vmatprep.subr.bf16.mxu0 %v1888
        %8054 = vmatpush1.bf16.msra.mxu0 %v1887
        %8055 = vmatprep.subr.bf16.mxu0 %v1890
        %8056 = vmatpush1.bf16.msra.mxu0 %v1889
        %8057 = vmatprep.subr.bf16.mxu0 %v1892
        %8058 = vmatpush1.bf16.msra.mxu0 %v1891
        %8059 = vmatprep.subr.bf16.mxu0 %v1894
        %8060 = vmatpush1.bf16.msra.mxu0 %v1893
        %8061 = vmatprep.subr.bf16.mxu0 %v1896
        %8062 = vmatpush1.bf16.msra.mxu0 %v1895
        %8063 = vmatprep.subr.bf16.mxu0 %v1898
        %8064 = vmatpush1.bf16.msra.mxu0 %v1897
        %8065 = vmatprep.mubr.bf16.mxu0 %v7534
        %8066 = vmatmul.mubr.bf16.gmra.mrb[0].mxu0 %v7533
        %v8067 = vpop.f32.mrb[0].mxu0
        %v8068 = vadd.f32 0.0, %v8067
        %v8069 = vpop.f32.mrb[0].mxu0
        %v8070 = vadd.f32 0.0, %v8069
        %v8071 = vpop.f32.mrb[0].mxu0
        %v8072 = vadd.f32 0.0, %v8071
        %v8073 = vpop.f32.mrb[0].mxu0
        %v8074 = vadd.f32 0.0, %v8073
        %8075 = vmatprep.mubr.bf16.mxu0 %v7537
        %8076 = vmatmul.mubr.bf16.gmra.mrb[0].mxu0 %v7536
        %v8077 = vpop.f32.mrb[0].mxu0
        %v8078 = vadd.f32 0.0, %v8077
        %v8079 = vpop.f32.mrb[0].mxu0
        %v8080 = vadd.f32 0.0, %v8079
        %v8081 = vpop.f32.mrb[0].mxu0
        %v8082 = vadd.f32 0.0, %v8081
        %v8083 = vpop.f32.mrb[0].mxu0
        %v8084 = vadd.f32 0.0, %v8083
        %8085 = vmatprep.mubr.bf16.mxu0 %v7540
        %8086 = vmatmul.mubr.bf16.gmra.mrb[0].mxu0 %v7539
        %v8087 = vpop.f32.mrb[0].mxu0
        %v8088 = vadd.f32 0.0, %v8087
        %v8089 = vpop.f32.mrb[0].mxu0
        %v8090 = vadd.f32 0.0, %v8089
        %v8091 = vpop.f32.mrb[0].mxu0
        %v8092 = vadd.f32 0.0, %v8091
        %v8093 = vpop.f32.mrb[0].mxu0
        %v8094 = vadd.f32 0.0, %v8093
        %8095 = vmatprep.mubr.bf16.mxu0 %v7543
        %8096 = vmatmul.mubr.bf16.gmra.mrb[0].mxu0 %v7542
        %v8097 = vpop.f32.mrb[0].mxu0
        %v8098 = vadd.f32 0.0, %v8097
        %v8099 = vpop.f32.mrb[0].mxu0
        %v8100 = vadd.f32 0.0, %v8099
        %v8101 = vpop.f32.mrb[0].mxu0
        %v8102 = vadd.f32 0.0, %v8101
        %v8103 = vpop.f32.mrb[0].mxu0
        %v8104 = vadd.f32 0.0, %v8103
        %8105 = vmatprep.mubr.bf16.mxu0 %v7546
        %8106 = vmatmul.mubr.bf16.gmra.mrb[0].mxu0 %v7545
        %v8107 = vpop.f32.mrb[0].mxu0
        %v8108 = vadd.f32 0.0, %v8107
        %v8109 = vpop.f32.mrb[0].mxu0
        %v8110 = vadd.f32 0.0, %v8109
        %v8111 = vpop.f32.mrb[0].mxu0
        %v8112 = vadd.f32 0.0, %v8111
        %v8113 = vpop.f32.mrb[0].mxu0
        %v8114 = vadd.f32 0.0, %v8113
        %8115 = vmatprep.mubr.bf16.mxu0 %v7549
        %8116 = vmatmul.mubr.bf16.gmra.mrb[0].mxu0 %v7548
        %v8117 = vpop.f32.mrb[0].mxu0
        %v8118 = vadd.f32 0.0, %v8117
        %v8119 = vpop.f32.mrb[0].mxu0
        %v8120 = vadd.f32 0.0, %v8119
        %v8121 = vpop.f32.mrb[0].mxu0
        %v8122 = vadd.f32 0.0, %v8121
        %v8123 = vpop.f32.mrb[0].mxu0
        %v8124 = vadd.f32 0.0, %v8123
        %8125 = vmatprep.mubr.bf16.mxu0 %v7552
        %8126 = vmatmul.mubr.bf16.gmra.mrb[0].mxu0 %v7551
        %v8127 = vpop.f32.mrb[0].mxu0
        %v8128 = vadd.f32 0.0, %v8127
        %v8129 = vpop.f32.mrb[0].mxu0
        %v8130 = vadd.f32 0.0, %v8129
        %v8131 = vpop.f32.mrb[0].mxu0
        %v8132 = vadd.f32 0.0, %v8131
        %v8133 = vpop.f32.mrb[0].mxu0
        %v8134 = vadd.f32 0.0, %v8133
        %8135 = vmatprep.mubr.bf16.mxu0 %v7555
        %8136 = vmatmul.mubr.bf16.gmra.mrb[0].mxu0 %v7554
        %v8137 = vpop.f32.mrb[0].mxu0
        %v8138 = vadd.f32 0.0, %v8137
        %v8139 = vpop.f32.mrb[0].mxu0
        %v8140 = vadd.f32 0.0, %v8139
        %v8141 = vpop.f32.mrb[0].mxu0
        %v8142 = vadd.f32 0.0, %v8141
        %v8143 = vpop.f32.mrb[0].mxu0
        %v8144 = vadd.f32 0.0, %v8143
        %8145 = vdwg.mxu0
        %8146 = vmatprep.subr.bf16.mxu0 %v1900
        %8147 = vmatpush1.bf16.msra.mxu0 %v1899
        %8148 = vmatprep.subr.bf16.mxu0 %v1902
        %8149 = vmatpush1.bf16.msra.mxu0 %v1901
        %8150 = vmatprep.subr.bf16.mxu0 %v1904
        %8151 = vmatpush1.bf16.msra.mxu0 %v1903
        %8152 = vmatprep.subr.bf16.mxu0 %v1906
        %8153 = vmatpush1.bf16.msra.mxu0 %v1905
        %8154 = vmatprep.subr.bf16.mxu0 %v1908
        %8155 = vmatpush1.bf16.msra.mxu0 %v1907
        %8156 = vmatprep.subr.bf16.mxu0 %v1910
        %8157 = vmatpush1.bf16.msra.mxu0 %v1909
        %8158 = vmatprep.subr.bf16.mxu0 %v1912
        %8159 = vmatpush1.bf16.msra.mxu0 %v1911
        %8160 = vmatprep.subr.bf16.mxu0 %v1914
        %8161 = vmatpush1.bf16.msra.mxu0 %v1913
        %8162 = vmatprep.subr.bf16.mxu0 0
        %8163 = vmatpush1.bf16.msra.mxu0 0
        %8164 = vmatprep.subr.bf16.mxu0 0
        %8165 = vmatpush1.bf16.msra.mxu0 0
        %8166 = vmatprep.subr.bf16.mxu0 0
        %8167 = vmatpush1.bf16.msra.mxu0 0
        %8168 = vmatprep.subr.bf16.mxu0 0
        %8169 = vmatpush1.bf16.msra.mxu0 0
        %8170 = vmatprep.subr.bf16.mxu0 0
        %8171 = vmatpush1.bf16.msra.mxu0 0
        %8172 = vmatprep.subr.bf16.mxu0 0
        %8173 = vmatpush1.bf16.msra.mxu0 0
        %8174 = vmatprep.subr.bf16.mxu0 0
        %8175 = vmatpush1.bf16.msra.mxu0 0
        %8176 = vmatprep.subr.bf16.mxu0 0
        %8177 = vmatpush1.bf16.msra.mxu0 0
        %8178 = vmatprep.mubr.bf16.mxu0 0
        %8179 = vmatmul.mubr.bf16.gmra.mrb[0].mxu0 %v7535
        %v8180 = vpop.f32.mrb[0].mxu0
        %v8181 = vadd.f32 %v8068, %v8180
        %v8182 = vpop.f32.mrb[0].mxu0
        %v8183 = vadd.f32 %v8070, %v8182
        %v8184 = vpop.f32.mrb[0].mxu0
        %v8185 = vadd.f32 %v8072, %v8184
        %v8186 = vpop.f32.mrb[0].mxu0
        %v8187 = vadd.f32 %v8074, %v8186
        %8188 = vmatprep.mubr.bf16.mxu0 0
        %8189 = vmatmul.mubr.bf16.gmra.mrb[0].mxu0 %v7538
        %v8190 = vpop.f32.mrb[0].mxu0
        %v8191 = vadd.f32 %v8078, %v8190
        %v8192 = vpop.f32.mrb[0].mxu0
        %v8193 = vadd.f32 %v8080, %v8192
        %v8194 = vpop.f32.mrb[0].mxu0
        %v8195 = vadd.f32 %v8082, %v8194
        %v8196 = vpop.f32.mrb[0].mxu0
        %v8197 = vadd.f32 %v8084, %v8196
        %8198 = vmatprep.mubr.bf16.mxu0 0
        %8199 = vmatmul.mubr.bf16.gmra.mrb[0].mxu0 %v7541
        %v8200 = vpop.f32.mrb[0].mxu0
        %v8201 = vadd.f32 %v8088, %v8200
        %v8202 = vpop.f32.mrb[0].mxu0
        %v8203 = vadd.f32 %v8090, %v8202
        %v8204 = vpop.f32.mrb[0].mxu0
        %v8205 = vadd.f32 %v8092, %v8204
        %v8206 = vpop.f32.mrb[0].mxu0
        %v8207 = vadd.f32 %v8094, %v8206
        %8208 = vmatprep.mubr.bf16.mxu0 0
        %8209 = vmatmul.mubr.bf16.gmra.mrb[0].mxu0 %v7544
        %v8210 = vpop.f32.mrb[0].mxu0
        %v8211 = vadd.f32 %v8098, %v8210
        %v8212 = vpop.f32.mrb[0].mxu0
        %v8213 = vadd.f32 %v8100, %v8212
        %v8214 = vpop.f32.mrb[0].mxu0
        %v8215 = vadd.f32 %v8102, %v8214
        %v8216 = vpop.f32.mrb[0].mxu0
        %v8217 = vadd.f32 %v8104, %v8216
        %8218 = vmatprep.mubr.bf16.mxu0 0
        %8219 = vmatmul.mubr.bf16.gmra.mrb[0].mxu0 %v7547
        %v8220 = vpop.f32.mrb[0].mxu0
        %v8221 = vadd.f32 %v8108, %v8220
        %v8222 = vpop.f32.mrb[0].mxu0
        %v8223 = vadd.f32 %v8110, %v8222
        %v8224 = vpop.f32.mrb[0].mxu0
        %v8225 = vadd.f32 %v8112, %v8224
        %v8226 = vpop.f32.mrb[0].mxu0
        %v8227 = vadd.f32 %v8114, %v8226
        %8228 = vmatprep.mubr.bf16.mxu0 0
        %8229 = vmatmul.mubr.bf16.gmra.mrb[0].mxu0 %v7550
        %v8230 = vpop.f32.mrb[0].mxu0
        %v8231 = vadd.f32 %v8118, %v8230
        %v8232 = vpop.f32.mrb[0].mxu0
        %v8233 = vadd.f32 %v8120, %v8232
        %v8234 = vpop.f32.mrb[0].mxu0
        %v8235 = vadd.f32 %v8122, %v8234
        %v8236 = vpop.f32.mrb[0].mxu0
        %v8237 = vadd.f32 %v8124, %v8236
        %8238 = vmatprep.mubr.bf16.mxu0 0
        %8239 = vmatmul.mubr.bf16.gmra.mrb[0].mxu0 %v7553
        %v8240 = vpop.f32.mrb[0].mxu0
        %v8241 = vadd.f32 %v8128, %v8240
        %v8242 = vpop.f32.mrb[0].mxu0
        %v8243 = vadd.f32 %v8130, %v8242
        %v8244 = vpop.f32.mrb[0].mxu0
        %v8245 = vadd.f32 %v8132, %v8244
        %v8246 = vpop.f32.mrb[0].mxu0
        %v8247 = vadd.f32 %v8134, %v8246
        %8248 = vmatprep.mubr.bf16.mxu0 0
        %8249 = vmatmul.mubr.bf16.gmra.mrb[0].mxu0 %v7556
        %v8250 = vpop.f32.mrb[0].mxu0
        %v8251 = vadd.f32 %v8138, %v8250
        %v8252 = vpop.f32.mrb[0].mxu0
        %v8253 = vadd.f32 %v8140, %v8252
        %v8254 = vpop.f32.mrb[0].mxu0
        %v8255 = vadd.f32 %v8142, %v8254
        %v8256 = vpop.f32.mrb[0].mxu0
        %v8257 = vadd.f32 %v8144, %v8256
        %8258 = vdwg.mxu0
        %8259 = vmatprep.subr.bf16.mxu0 %v2334
        %8260 = vmatpush1.bf16.msra.mxu0 %v2333
        %8261 = vmatprep.subr.bf16.mxu0 %v2336
        %8262 = vmatpush1.bf16.msra.mxu0 %v2335
        %8263 = vmatprep.subr.bf16.mxu0 %v2338
        %8264 = vmatpush1.bf16.msra.mxu0 %v2337
        %8265 = vmatprep.subr.bf16.mxu0 %v2340
        %8266 = vmatpush1.bf16.msra.mxu0 %v2339
        %8267 = vmatprep.subr.bf16.mxu0 %v2342
        %8268 = vmatpush1.bf16.msra.mxu0 %v2341
        %8269 = vmatprep.subr.bf16.mxu0 %v2344
        %8270 = vmatpush1.bf16.msra.mxu0 %v2343
        %8271 = vmatprep.subr.bf16.mxu0 %v2346
        %8272 = vmatpush1.bf16.msra.mxu0 %v2345
        %8273 = vmatprep.subr.bf16.mxu0 %v2348
        %8274 = vmatpush1.bf16.msra.mxu0 %v2347
        %8275 = vmatprep.subr.bf16.mxu0 %v2350
        %8276 = vmatpush1.bf16.msra.mxu0 %v2349
        %8277 = vmatprep.subr.bf16.mxu0 %v2352
        %8278 = vmatpush1.bf16.msra.mxu0 %v2351
        %8279 = vmatprep.subr.bf16.mxu0 %v2354
        %8280 = vmatpush1.bf16.msra.mxu0 %v2353
        %8281 = vmatprep.subr.bf16.mxu0 %v2356
        %8282 = vmatpush1.bf16.msra.mxu0 %v2355
        %8283 = vmatprep.subr.bf16.mxu0 %v2358
        %8284 = vmatpush1.bf16.msra.mxu0 %v2357
        %8285 = vmatprep.subr.bf16.mxu0 %v2360
        %8286 = vmatpush1.bf16.msra.mxu0 %v2359
        %8287 = vmatprep.subr.bf16.mxu0 %v2362
        %8288 = vmatpush1.bf16.msra.mxu0 %v2361
        %8289 = vmatprep.subr.bf16.mxu0 %v2364
        %8290 = vmatpush1.bf16.msra.mxu0 %v2363
        %8291 = vmatprep.mubr.bf16.mxu0 %v7534
        %8292 = vmatmul.mubr.bf16.gmra.mrb[0].mxu0 %v7533
        %v8293 = vpop.f32.mrb[0].mxu0
        %v8294 = vadd.f32 0.0, %v8293
        %v8295 = vpop.f32.mrb[0].mxu0
        %v8296 = vadd.f32 0.0, %v8295
        %v8297 = vpop.f32.mrb[0].mxu0
        %v8298 = vadd.f32 0.0, %v8297
        %v8299 = vpop.f32.mrb[0].mxu0
        %v8300 = vadd.f32 0.0, %v8299
        %8301 = vmatprep.mubr.bf16.mxu0 %v7537
        %8302 = vmatmul.mubr.bf16.gmra.mrb[0].mxu0 %v7536
        %v8303 = vpop.f32.mrb[0].mxu0
        %v8304 = vadd.f32 0.0, %v8303
        %v8305 = vpop.f32.mrb[0].mxu0
        %v8306 = vadd.f32 0.0, %v8305
        %v8307 = vpop.f32.mrb[0].mxu0
        %v8308 = vadd.f32 0.0, %v8307
        %v8309 = vpop.f32.mrb[0].mxu0
        %v8310 = vadd.f32 0.0, %v8309
        %8311 = vmatprep.mubr.bf16.mxu0 %v7540
        %8312 = vmatmul.mubr.bf16.gmra.mrb[0].mxu0 %v7539
        %v8313 = vpop.f32.mrb[0].mxu0
        %v8314 = vadd.f32 0.0, %v8313
        %v8315 = vpop.f32.mrb[0].mxu0
        %v8316 = vadd.f32 0.0, %v8315
        %v8317 = vpop.f32.mrb[0].mxu0
        %v8318 = vadd.f32 0.0, %v8317
        %v8319 = vpop.f32.mrb[0].mxu0
        %v8320 = vadd.f32 0.0, %v8319
        %8321 = vmatprep.mubr.bf16.mxu0 %v7543
        %8322 = vmatmul.mubr.bf16.gmra.mrb[0].mxu0 %v7542
        %v8323 = vpop.f32.mrb[0].mxu0
        %v8324 = vadd.f32 0.0, %v8323
        %v8325 = vpop.f32.mrb[0].mxu0
        %v8326 = vadd.f32 0.0, %v8325
        %v8327 = vpop.f32.mrb[0].mxu0
        %v8328 = vadd.f32 0.0, %v8327
        %v8329 = vpop.f32.mrb[0].mxu0
        %v8330 = vadd.f32 0.0, %v8329
        %8331 = vmatprep.mubr.bf16.mxu0 %v7546
        %8332 = vmatmul.mubr.bf16.gmra.mrb[0].mxu0 %v7545
        %v8333 = vpop.f32.mrb[0].mxu0
        %v8334 = vadd.f32 0.0, %v8333
        %v8335 = vpop.f32.mrb[0].mxu0
        %v8336 = vadd.f32 0.0, %v8335
        %v8337 = vpop.f32.mrb[0].mxu0
        %v8338 = vadd.f32 0.0, %v8337
        %v8339 = vpop.f32.mrb[0].mxu0
        %v8340 = vadd.f32 0.0, %v8339
        %8341 = vmatprep.mubr.bf16.mxu0 %v7549
        %8342 = vmatmul.mubr.bf16.gmra.mrb[0].mxu0 %v7548
        %v8343 = vpop.f32.mrb[0].mxu0
        %v8344 = vadd.f32 0.0, %v8343
        %v8345 = vpop.f32.mrb[0].mxu0
        %v8346 = vadd.f32 0.0, %v8345
        %v8347 = vpop.f32.mrb[0].mxu0
        %v8348 = vadd.f32 0.0, %v8347
        %v8349 = vpop.f32.mrb[0].mxu0
        %v8350 = vadd.f32 0.0, %v8349
        %8351 = vmatprep.mubr.bf16.mxu0 %v7552
        %8352 = vmatmul.mubr.bf16.gmra.mrb[0].mxu0 %v7551
        %v8353 = vpop.f32.mrb[0].mxu0
        %v8354 = vadd.f32 0.0, %v8353
        %v8355 = vpop.f32.mrb[0].mxu0
        %v8356 = vadd.f32 0.0, %v8355
        %v8357 = vpop.f32.mrb[0].mxu0
        %v8358 = vadd.f32 0.0, %v8357
        %v8359 = vpop.f32.mrb[0].mxu0
        %v8360 = vadd.f32 0.0, %v8359
        %8361 = vmatprep.mubr.bf16.mxu0 %v7555
        %8362 = vmatmul.mubr.bf16.gmra.mrb[0].mxu0 %v7554
        %v8363 = vpop.f32.mrb[0].mxu0
        %v8364 = vadd.f32 0.0, %v8363
        %v8365 = vpop.f32.mrb[0].mxu0
        %v8366 = vadd.f32 0.0, %v8365
        %v8367 = vpop.f32.mrb[0].mxu0
        %v8368 = vadd.f32 0.0, %v8367
        %v8369 = vpop.f32.mrb[0].mxu0
        %v8370 = vadd.f32 0.0, %v8369
        %8371 = vdwg.mxu0
        %8372 = vmatprep.subr.bf16.mxu0 %v2366
        %8373 = vmatpush1.bf16.msra.mxu0 %v2365
        %8374 = vmatprep.subr.bf16.mxu0 %v2368
        %8375 = vmatpush1.bf16.msra.mxu0 %v2367
        %8376 = vmatprep.subr.bf16.mxu0 %v2370
        %8377 = vmatpush1.bf16.msra.mxu0 %v2369
        %8378 = vmatprep.subr.bf16.mxu0 %v2372
        %8379 = vmatpush1.bf16.msra.mxu0 %v2371
        %8380 = vmatprep.subr.bf16.mxu0 %v2374
        %8381 = vmatpush1.bf16.msra.mxu0 %v2373
        %8382 = vmatprep.subr.bf16.mxu0 %v2376
        %8383 = vmatpush1.bf16.msra.mxu0 %v2375
        %8384 = vmatprep.subr.bf16.mxu0 %v2378
        %8385 = vmatpush1.bf16.msra.mxu0 %v2377
        %8386 = vmatprep.subr.bf16.mxu0 %v2380
        %8387 = vmatpush1.bf16.msra.mxu0 %v2379
        %8388 = vmatprep.subr.bf16.mxu0 0
        %8389 = vmatpush1.bf16.msra.mxu0 0
        %8390 = vmatprep.subr.bf16.mxu0 0
        %8391 = vmatpush1.bf16.msra.mxu0 0
        %8392 = vmatprep.subr.bf16.mxu0 0
        %8393 = vmatpush1.bf16.msra.mxu0 0
        %8394 = vmatprep.subr.bf16.mxu0 0
        %8395 = vmatpush1.bf16.msra.mxu0 0
        %8396 = vmatprep.subr.bf16.mxu0 0
        %8397 = vmatpush1.bf16.msra.mxu0 0
        %8398 = vmatprep.subr.bf16.mxu0 0
        %8399 = vmatpush1.bf16.msra.mxu0 0
        %8400 = vmatprep.subr.bf16.mxu0 0
        %8401 = vmatpush1.bf16.msra.mxu0 0
        %8402 = vmatprep.subr.bf16.mxu0 0
        %8403 = vmatpush1.bf16.msra.mxu0 0
        %8404 = vmatprep.mubr.bf16.mxu0 0
        %8405 = vmatmul.mubr.bf16.gmra.mrb[0].mxu0 %v7535
        %v8406 = vpop.f32.mrb[0].mxu0
        %v8407 = vadd.f32 %v8294, %v8406
        %v8408 = vpop.f32.mrb[0].mxu0
        %v8409 = vadd.f32 %v8296, %v8408
        %v8410 = vpop.f32.mrb[0].mxu0
        %v8411 = vadd.f32 %v8298, %v8410
        %v8412 = vpop.f32.mrb[0].mxu0
        %v8413 = vadd.f32 %v8300, %v8412
        %8414 = vmatprep.mubr.bf16.mxu0 0
        %8415 = vmatmul.mubr.bf16.gmra.mrb[0].mxu0 %v7538
        %v8416 = vpop.f32.mrb[0].mxu0
        %v8417 = vadd.f32 %v8304, %v8416
        %v8418 = vpop.f32.mrb[0].mxu0
        %v8419 = vadd.f32 %v8306, %v8418
        %v8420 = vpop.f32.mrb[0].mxu0
        %v8421 = vadd.f32 %v8308, %v8420
        %v8422 = vpop.f32.mrb[0].mxu0
        %v8423 = vadd.f32 %v8310, %v8422
        %8424 = vmatprep.mubr.bf16.mxu0 0
        %8425 = vmatmul.mubr.bf16.gmra.mrb[0].mxu0 %v7541
        %v8426 = vpop.f32.mrb[0].mxu0
        %v8427 = vadd.f32 %v8314, %v8426
        %v8428 = vpop.f32.mrb[0].mxu0
        %v8429 = vadd.f32 %v8316, %v8428
        %v8430 = vpop.f32.mrb[0].mxu0
        %v8431 = vadd.f32 %v8318, %v8430
        %v8432 = vpop.f32.mrb[0].mxu0
        %v8433 = vadd.f32 %v8320, %v8432
        %8434 = vmatprep.mubr.bf16.mxu0 0
        %8435 = vmatmul.mubr.bf16.gmra.mrb[0].mxu0 %v7544
        %v8436 = vpop.f32.mrb[0].mxu0
        %v8437 = vadd.f32 %v8324, %v8436
        %v8438 = vpop.f32.mrb[0].mxu0
        %v8439 = vadd.f32 %v8326, %v8438
        %v8440 = vpop.f32.mrb[0].mxu0
        %v8441 = vadd.f32 %v8328, %v8440
        %v8442 = vpop.f32.mrb[0].mxu0
        %v8443 = vadd.f32 %v8330, %v8442
        %8444 = vmatprep.mubr.bf16.mxu0 0
        %8445 = vmatmul.mubr.bf16.gmra.mrb[0].mxu0 %v7547
        %v8446 = vpop.f32.mrb[0].mxu0
        %v8447 = vadd.f32 %v8334, %v8446
        %v8448 = vpop.f32.mrb[0].mxu0
        %v8449 = vadd.f32 %v8336, %v8448
        %v8450 = vpop.f32.mrb[0].mxu0
        %v8451 = vadd.f32 %v8338, %v8450
        %v8452 = vpop.f32.mrb[0].mxu0
        %v8453 = vadd.f32 %v8340, %v8452
        %8454 = vmatprep.mubr.bf16.mxu0 0
        %8455 = vmatmul.mubr.bf16.gmra.mrb[0].mxu0 %v7550
        %v8456 = vpop.f32.mrb[0].mxu0
        %v8457 = vadd.f32 %v8344, %v8456
        %v8458 = vpop.f32.mrb[0].mxu0
        %v8459 = vadd.f32 %v8346, %v8458
        %v8460 = vpop.f32.mrb[0].mxu0
        %v8461 = vadd.f32 %v8348, %v8460
        %v8462 = vpop.f32.mrb[0].mxu0
        %v8463 = vadd.f32 %v8350, %v8462
        %8464 = vmatprep.mubr.bf16.mxu0 0
        %8465 = vmatmul.mubr.bf16.gmra.mrb[0].mxu0 %v7553
        %v8466 = vpop.f32.mrb[0].mxu0
        %v8467 = vadd.f32 %v8354, %v8466
        %v8468 = vpop.f32.mrb[0].mxu0
        %v8469 = vadd.f32 %v8356, %v8468
        %v8470 = vpop.f32.mrb[0].mxu0
        %v8471 = vadd.f32 %v8358, %v8470
        %v8472 = vpop.f32.mrb[0].mxu0
        %v8473 = vadd.f32 %v8360, %v8472
        %8474 = vmatprep.mubr.bf16.mxu0 0
        %8475 = vmatmul.mubr.bf16.gmra.mrb[0].mxu0 %v7556
        %v8476 = vpop.f32.mrb[0].mxu0
        %v8477 = vadd.f32 %v8364, %v8476
        %v8478 = vpop.f32.mrb[0].mxu0
        %v8479 = vadd.f32 %v8366, %v8478
        %v8480 = vpop.f32.mrb[0].mxu0
        %v8481 = vadd.f32 %v8368, %v8480
        %v8482 = vpop.f32.mrb[0].mxu0
        %v8483 = vadd.f32 %v8370, %v8482
        %8484 = vdwg.mxu0
        %8485 = vmatprep.subr.bf16.mxu0 %v2800
        %8486 = vmatpush1.bf16.msra.mxu0 %v2799
        %8487 = vmatprep.subr.bf16.mxu0 %v2802
        %8488 = vmatpush1.bf16.msra.mxu0 %v2801
        %8489 = vmatprep.subr.bf16.mxu0 %v2804
        %8490 = vmatpush1.bf16.msra.mxu0 %v2803
        %8491 = vmatprep.subr.bf16.mxu0 %v2806
        %8492 = vmatpush1.bf16.msra.mxu0 %v2805
        %8493 = vmatprep.subr.bf16.mxu0 %v2808
        %8494 = vmatpush1.bf16.msra.mxu0 %v2807
        %8495 = vmatprep.subr.bf16.mxu0 %v2810
        %8496 = vmatpush1.bf16.msra.mxu0 %v2809
        %8497 = vmatprep.subr.bf16.mxu0 %v2812
        %8498 = vmatpush1.bf16.msra.mxu0 %v2811
        %8499 = vmatprep.subr.bf16.mxu0 %v2814
        %8500 = vmatpush1.bf16.msra.mxu0 %v2813
        %8501 = vmatprep.subr.bf16.mxu0 %v2816
        %8502 = vmatpush1.bf16.msra.mxu0 %v2815
        %8503 = vmatprep.subr.bf16.mxu0 %v2818
        %8504 = vmatpush1.bf16.msra.mxu0 %v2817
        %8505 = vmatprep.subr.bf16.mxu0 %v2820
        %8506 = vmatpush1.bf16.msra.mxu0 %v2819
        %8507 = vmatprep.subr.bf16.mxu0 %v2822
        %8508 = vmatpush1.bf16.msra.mxu0 %v2821
        %8509 = vmatprep.subr.bf16.mxu0 %v2824
        %8510 = vmatpush1.bf16.msra.mxu0 %v2823
        %8511 = vmatprep.subr.bf16.mxu0 %v2826
        %8512 = vmatpush1.bf16.msra.mxu0 %v2825
        %8513 = vmatprep.subr.bf16.mxu0 %v2828
        %8514 = vmatpush1.bf16.msra.mxu0 %v2827
        %8515 = vmatprep.subr.bf16.mxu0 %v2830
        %8516 = vmatpush1.bf16.msra.mxu0 %v2829
        %8517 = vmatprep.mubr.bf16.mxu0 %v7534
        %8518 = vmatmul.mubr.bf16.gmra.mrb[0].mxu0 %v7533
        %v8519 = vpop.f32.mrb[0].mxu0
        %v8520 = vadd.f32 0.0, %v8519
        %v8521 = vpop.f32.mrb[0].mxu0
        %v8522 = vadd.f32 0.0, %v8521
        %v8523 = vpop.f32.mrb[0].mxu0
        %v8524 = vadd.f32 0.0, %v8523
        %v8525 = vpop.f32.mrb[0].mxu0
        %v8526 = vadd.f32 0.0, %v8525
        %8527 = vmatprep.mubr.bf16.mxu0 %v7537
        %8528 = vmatmul.mubr.bf16.gmra.mrb[0].mxu0 %v7536
        %v8529 = vpop.f32.mrb[0].mxu0
        %v8530 = vadd.f32 0.0, %v8529
        %v8531 = vpop.f32.mrb[0].mxu0
        %v8532 = vadd.f32 0.0, %v8531
        %v8533 = vpop.f32.mrb[0].mxu0
        %v8534 = vadd.f32 0.0, %v8533
        %v8535 = vpop.f32.mrb[0].mxu0
        %v8536 = vadd.f32 0.0, %v8535
        %8537 = vmatprep.mubr.bf16.mxu0 %v7540
        %8538 = vmatmul.mubr.bf16.gmra.mrb[0].mxu0 %v7539
        %v8539 = vpop.f32.mrb[0].mxu0
        %v8540 = vadd.f32 0.0, %v8539
        %v8541 = vpop.f32.mrb[0].mxu0
        %v8542 = vadd.f32 0.0, %v8541
        %v8543 = vpop.f32.mrb[0].mxu0
        %v8544 = vadd.f32 0.0, %v8543
        %v8545 = vpop.f32.mrb[0].mxu0
        %v8546 = vadd.f32 0.0, %v8545
        %8547 = vmatprep.mubr.bf16.mxu0 %v7543
        %8548 = vmatmul.mubr.bf16.gmra.mrb[0].mxu0 %v7542
        %v8549 = vpop.f32.mrb[0].mxu0
        %v8550 = vadd.f32 0.0, %v8549
        %v8551 = vpop.f32.mrb[0].mxu0
        %v8552 = vadd.f32 0.0, %v8551
        %v8553 = vpop.f32.mrb[0].mxu0
        %v8554 = vadd.f32 0.0, %v8553
        %v8555 = vpop.f32.mrb[0].mxu0
        %v8556 = vadd.f32 0.0, %v8555
        %8557 = vmatprep.mubr.bf16.mxu0 %v7546
        %8558 = vmatmul.mubr.bf16.gmra.mrb[0].mxu0 %v7545
        %v8559 = vpop.f32.mrb[0].mxu0
        %v8560 = vadd.f32 0.0, %v8559
        %v8561 = vpop.f32.mrb[0].mxu0
        %v8562 = vadd.f32 0.0, %v8561
        %v8563 = vpop.f32.mrb[0].mxu0
        %v8564 = vadd.f32 0.0, %v8563
        %v8565 = vpop.f32.mrb[0].mxu0
        %v8566 = vadd.f32 0.0, %v8565
        %8567 = vmatprep.mubr.bf16.mxu0 %v7549
        %8568 = vmatmul.mubr.bf16.gmra.mrb[0].mxu0 %v7548
        %v8569 = vpop.f32.mrb[0].mxu0
        %v8570 = vadd.f32 0.0, %v8569
        %v8571 = vpop.f32.mrb[0].mxu0
        %v8572 = vadd.f32 0.0, %v8571
        %v8573 = vpop.f32.mrb[0].mxu0
        %v8574 = vadd.f32 0.0, %v8573
        %v8575 = vpop.f32.mrb[0].mxu0
        %v8576 = vadd.f32 0.0, %v8575
        %8577 = vmatprep.mubr.bf16.mxu0 %v7552
        %8578 = vmatmul.mubr.bf16.gmra.mrb[0].mxu0 %v7551
        %v8579 = vpop.f32.mrb[0].mxu0
        %v8580 = vadd.f32 0.0, %v8579
        %v8581 = vpop.f32.mrb[0].mxu0
        %v8582 = vadd.f32 0.0, %v8581
        %v8583 = vpop.f32.mrb[0].mxu0
        %v8584 = vadd.f32 0.0, %v8583
        %v8585 = vpop.f32.mrb[0].mxu0
        %v8586 = vadd.f32 0.0, %v8585
        %8587 = vmatprep.mubr.bf16.mxu0 %v7555
        %8588 = vmatmul.mubr.bf16.gmra.mrb[0].mxu0 %v7554
        %v8589 = vpop.f32.mrb[0].mxu0
        %v8590 = vadd.f32 0.0, %v8589
        %v8591 = vpop.f32.mrb[0].mxu0
        %v8592 = vadd.f32 0.0, %v8591
        %v8593 = vpop.f32.mrb[0].mxu0
        %v8594 = vadd.f32 0.0, %v8593
        %v8595 = vpop.f32.mrb[0].mxu0
        %v8596 = vadd.f32 0.0, %v8595
        %8597 = vdwg.mxu0
        %8598 = vmatprep.subr.bf16.mxu0 %v2832
        %8599 = vmatpush1.bf16.msra.mxu0 %v2831
        %8600 = vmatprep.subr.bf16.mxu0 %v2834
        %8601 = vmatpush1.bf16.msra.mxu0 %v2833
        %8602 = vmatprep.subr.bf16.mxu0 %v2836
        %8603 = vmatpush1.bf16.msra.mxu0 %v2835
        %8604 = vmatprep.subr.bf16.mxu0 %v2838
        %8605 = vmatpush1.bf16.msra.mxu0 %v2837
        %8606 = vmatprep.subr.bf16.mxu0 %v2840
        %8607 = vmatpush1.bf16.msra.mxu0 %v2839
        %8608 = vmatprep.subr.bf16.mxu0 %v2842
        %8609 = vmatpush1.bf16.msra.mxu0 %v2841
        %8610 = vmatprep.subr.bf16.mxu0 %v2844
        %8611 = vmatpush1.bf16.msra.mxu0 %v2843
        %8612 = vmatprep.subr.bf16.mxu0 %v2846
        %8613 = vmatpush1.bf16.msra.mxu0 %v2845
        %8614 = vmatprep.subr.bf16.mxu0 0
        %8615 = vmatpush1.bf16.msra.mxu0 0
        %8616 = vmatprep.subr.bf16.mxu0 0
        %8617 = vmatpush1.bf16.msra.mxu0 0
        %8618 = vmatprep.subr.bf16.mxu0 0
        %8619 = vmatpush1.bf16.msra.mxu0 0
        %8620 = vmatprep.subr.bf16.mxu0 0
        %8621 = vmatpush1.bf16.msra.mxu0 0
        %8622 = vmatprep.subr.bf16.mxu0 0
        %8623 = vmatpush1.bf16.msra.mxu0 0
        %8624 = vmatprep.subr.bf16.mxu0 0
        %8625 = vmatpush1.bf16.msra.mxu0 0
        %8626 = vmatprep.subr.bf16.mxu0 0
        %8627 = vmatpush1.bf16.msra.mxu0 0
        %8628 = vmatprep.subr.bf16.mxu0 0
        %8629 = vmatpush1.bf16.msra.mxu0 0
        %8630 = vmatprep.mubr.bf16.mxu0 0
        %8631 = vmatmul.mubr.bf16.gmra.mrb[0].mxu0 %v7535
        %v8632 = vpop.f32.mrb[0].mxu0
        %v8633 = vadd.f32 %v8520, %v8632
        %v8634 = vpop.f32.mrb[0].mxu0
        %v8635 = vadd.f32 %v8522, %v8634
        %v8636 = vpop.f32.mrb[0].mxu0
        %v8637 = vadd.f32 %v8524, %v8636
        %v8638 = vpop.f32.mrb[0].mxu0
        %v8639 = vadd.f32 %v8526, %v8638
        %8640 = vmatprep.mubr.bf16.mxu0 0
        %8641 = vmatmul.mubr.bf16.gmra.mrb[0].mxu0 %v7538
        %v8642 = vpop.f32.mrb[0].mxu0
        %v8643 = vadd.f32 %v8530, %v8642
        %v8644 = vpop.f32.mrb[0].mxu0
        %v8645 = vadd.f32 %v8532, %v8644
        %v8646 = vpop.f32.mrb[0].mxu0
        %v8647 = vadd.f32 %v8534, %v8646
        %v8648 = vpop.f32.mrb[0].mxu0
        %v8649 = vadd.f32 %v8536, %v8648
        %8650 = vmatprep.mubr.bf16.mxu0 0
        %8651 = vmatmul.mubr.bf16.gmra.mrb[0].mxu0 %v7541
        %v8652 = vpop.f32.mrb[0].mxu0
        %v8653 = vadd.f32 %v8540, %v8652
        %v8654 = vpop.f32.mrb[0].mxu0
        %v8655 = vadd.f32 %v8542, %v8654
        %v8656 = vpop.f32.mrb[0].mxu0
        %v8657 = vadd.f32 %v8544, %v8656
        %v8658 = vpop.f32.mrb[0].mxu0
        %v8659 = vadd.f32 %v8546, %v8658
        %8660 = vmatprep.mubr.bf16.mxu0 0
        %8661 = vmatmul.mubr.bf16.gmra.mrb[0].mxu0 %v7544
        %v8662 = vpop.f32.mrb[0].mxu0
        %v8663 = vadd.f32 %v8550, %v8662
        %v8664 = vpop.f32.mrb[0].mxu0
        %v8665 = vadd.f32 %v8552, %v8664
        %v8666 = vpop.f32.mrb[0].mxu0
        %v8667 = vadd.f32 %v8554, %v8666
        %v8668 = vpop.f32.mrb[0].mxu0
        %v8669 = vadd.f32 %v8556, %v8668
        %8670 = vmatprep.mubr.bf16.mxu0 0
        %8671 = vmatmul.mubr.bf16.gmra.mrb[0].mxu0 %v7547
        %v8672 = vpop.f32.mrb[0].mxu0
        %v8673 = vadd.f32 %v8560, %v8672
        %v8674 = vpop.f32.mrb[0].mxu0
        %v8675 = vadd.f32 %v8562, %v8674
        %v8676 = vpop.f32.mrb[0].mxu0
        %v8677 = vadd.f32 %v8564, %v8676
        %v8678 = vpop.f32.mrb[0].mxu0
        %v8679 = vadd.f32 %v8566, %v8678
        %8680 = vmatprep.mubr.bf16.mxu0 0
        %8681 = vmatmul.mubr.bf16.gmra.mrb[0].mxu0 %v7550
        %v8682 = vpop.f32.mrb[0].mxu0
        %v8683 = vadd.f32 %v8570, %v8682
        %v8684 = vpop.f32.mrb[0].mxu0
        %v8685 = vadd.f32 %v8572, %v8684
        %v8686 = vpop.f32.mrb[0].mxu0
        %v8687 = vadd.f32 %v8574, %v8686
        %v8688 = vpop.f32.mrb[0].mxu0
        %v8689 = vadd.f32 %v8576, %v8688
        %8690 = vmatprep.mubr.bf16.mxu0 0
        %8691 = vmatmul.mubr.bf16.gmra.mrb[0].mxu0 %v7553
        %v8692 = vpop.f32.mrb[0].mxu0
        %v8693 = vadd.f32 %v8580, %v8692
        %v8694 = vpop.f32.mrb[0].mxu0
        %v8695 = vadd.f32 %v8582, %v8694
        %v8696 = vpop.f32.mrb[0].mxu0
        %v8697 = vadd.f32 %v8584, %v8696
        %v8698 = vpop.f32.mrb[0].mxu0
        %v8699 = vadd.f32 %v8586, %v8698
        %8700 = vmatprep.mubr.bf16.mxu0 0
        %8701 = vmatmul.mubr.bf16.gmra.mrb[0].mxu0 %v7556
        %v8702 = vpop.f32.mrb[0].mxu0
        %v8703 = vadd.f32 %v8590, %v8702
        %v8704 = vpop.f32.mrb[0].mxu0
        %v8705 = vadd.f32 %v8592, %v8704
        %v8706 = vpop.f32.mrb[0].mxu0
        %v8707 = vadd.f32 %v8594, %v8706
        %v8708 = vpop.f32.mrb[0].mxu0
        %v8709 = vadd.f32 %v8596, %v8708
        %8710 = vdwg.mxu0
        %8711 = vmatprep.subr.bf16.mxu0 %v3266
        %8712 = vmatpush1.bf16.msra.mxu0 %v3265
        %8713 = vmatprep.subr.bf16.mxu0 %v3268
        %8714 = vmatpush1.bf16.msra.mxu0 %v3267
        %8715 = vmatprep.subr.bf16.mxu0 %v3270
        %8716 = vmatpush1.bf16.msra.mxu0 %v3269
        %8717 = vmatprep.subr.bf16.mxu0 %v3272
        %8718 = vmatpush1.bf16.msra.mxu0 %v3271
        %8719 = vmatprep.subr.bf16.mxu0 %v3274
        %8720 = vmatpush1.bf16.msra.mxu0 %v3273
        %8721 = vmatprep.subr.bf16.mxu0 %v3276
        %8722 = vmatpush1.bf16.msra.mxu0 %v3275
        %8723 = vmatprep.subr.bf16.mxu0 %v3278
        %8724 = vmatpush1.bf16.msra.mxu0 %v3277
        %8725 = vmatprep.subr.bf16.mxu0 %v3280
        %8726 = vmatpush1.bf16.msra.mxu0 %v3279
        %8727 = vmatprep.subr.bf16.mxu0 %v3282
        %8728 = vmatpush1.bf16.msra.mxu0 %v3281
        %8729 = vmatprep.subr.bf16.mxu0 %v3284
        %8730 = vmatpush1.bf16.msra.mxu0 %v3283
        %8731 = vmatprep.subr.bf16.mxu0 %v3286
        %8732 = vmatpush1.bf16.msra.mxu0 %v3285
        %8733 = vmatprep.subr.bf16.mxu0 %v3288
        %8734 = vmatpush1.bf16.msra.mxu0 %v3287
        %8735 = vmatprep.subr.bf16.mxu0 %v3290
        %8736 = vmatpush1.bf16.msra.mxu0 %v3289
        %8737 = vmatprep.subr.bf16.mxu0 %v3292
        %8738 = vmatpush1.bf16.msra.mxu0 %v3291
        %8739 = vmatprep.subr.bf16.mxu0 %v3294
        %8740 = vmatpush1.bf16.msra.mxu0 %v3293
        %8741 = vmatprep.subr.bf16.mxu0 %v3296
        %8742 = vmatpush1.bf16.msra.mxu0 %v3295
        %8743 = vmatprep.mubr.bf16.mxu0 %v7534
        %8744 = vmatmul.mubr.bf16.gmra.mrb[0].mxu0 %v7533
        %v8745 = vpop.f32.mrb[0].mxu0
        %v8746 = vadd.f32 0.0, %v8745
        %v8747 = vpop.f32.mrb[0].mxu0
        %v8748 = vadd.f32 0.0, %v8747
        %v8749 = vpop.f32.mrb[0].mxu0
        %v8750 = vadd.f32 0.0, %v8749
        %v8751 = vpop.f32.mrb[0].mxu0
        %v8752 = vadd.f32 0.0, %v8751
        %8753 = vmatprep.mubr.bf16.mxu0 %v7537
        %8754 = vmatmul.mubr.bf16.gmra.mrb[0].mxu0 %v7536
        %v8755 = vpop.f32.mrb[0].mxu0
        %v8756 = vadd.f32 0.0, %v8755
        %v8757 = vpop.f32.mrb[0].mxu0
        %v8758 = vadd.f32 0.0, %v8757
        %v8759 = vpop.f32.mrb[0].mxu0
        %v8760 = vadd.f32 0.0, %v8759
        %v8761 = vpop.f32.mrb[0].mxu0
        %v8762 = vadd.f32 0.0, %v8761
        %8763 = vmatprep.mubr.bf16.mxu0 %v7540
        %8764 = vmatmul.mubr.bf16.gmra.mrb[0].mxu0 %v7539
        %v8765 = vpop.f32.mrb[0].mxu0
        %v8766 = vadd.f32 0.0, %v8765
        %v8767 = vpop.f32.mrb[0].mxu0
        %v8768 = vadd.f32 0.0, %v8767
        %v8769 = vpop.f32.mrb[0].mxu0
        %v8770 = vadd.f32 0.0, %v8769
        %v8771 = vpop.f32.mrb[0].mxu0
        %v8772 = vadd.f32 0.0, %v8771
        %8773 = vmatprep.mubr.bf16.mxu0 %v7543
        %8774 = vmatmul.mubr.bf16.gmra.mrb[0].mxu0 %v7542
        %v8775 = vpop.f32.mrb[0].mxu0
        %v8776 = vadd.f32 0.0, %v8775
        %v8777 = vpop.f32.mrb[0].mxu0
        %v8778 = vadd.f32 0.0, %v8777
        %v8779 = vpop.f32.mrb[0].mxu0
        %v8780 = vadd.f32 0.0, %v8779
        %v8781 = vpop.f32.mrb[0].mxu0
        %v8782 = vadd.f32 0.0, %v8781
        %8783 = vmatprep.mubr.bf16.mxu0 %v7546
        %8784 = vmatmul.mubr.bf16.gmra.mrb[0].mxu0 %v7545
        %v8785 = vpop.f32.mrb[0].mxu0
        %v8786 = vadd.f32 0.0, %v8785
        %v8787 = vpop.f32.mrb[0].mxu0
        %v8788 = vadd.f32 0.0, %v8787
        %v8789 = vpop.f32.mrb[0].mxu0
        %v8790 = vadd.f32 0.0, %v8789
        %v8791 = vpop.f32.mrb[0].mxu0
        %v8792 = vadd.f32 0.0, %v8791
        %8793 = vmatprep.mubr.bf16.mxu0 %v7549
        %8794 = vmatmul.mubr.bf16.gmra.mrb[0].mxu0 %v7548
        %v8795 = vpop.f32.mrb[0].mxu0
        %v8796 = vadd.f32 0.0, %v8795
        %v8797 = vpop.f32.mrb[0].mxu0
        %v8798 = vadd.f32 0.0, %v8797
        %v8799 = vpop.f32.mrb[0].mxu0
        %v8800 = vadd.f32 0.0, %v8799
        %v8801 = vpop.f32.mrb[0].mxu0
        %v8802 = vadd.f32 0.0, %v8801
        %8803 = vmatprep.mubr.bf16.mxu0 %v7552
        %8804 = vmatmul.mubr.bf16.gmra.mrb[0].mxu0 %v7551
        %v8805 = vpop.f32.mrb[0].mxu0
        %v8806 = vadd.f32 0.0, %v8805
        %v8807 = vpop.f32.mrb[0].mxu0
        %v8808 = vadd.f32 0.0, %v8807
        %v8809 = vpop.f32.mrb[0].mxu0
        %v8810 = vadd.f32 0.0, %v8809
        %v8811 = vpop.f32.mrb[0].mxu0
        %v8812 = vadd.f32 0.0, %v8811
        %8813 = vmatprep.mubr.bf16.mxu0 %v7555
        %8814 = vmatmul.mubr.bf16.gmra.mrb[0].mxu0 %v7554
        %v8815 = vpop.f32.mrb[0].mxu0
        %v8816 = vadd.f32 0.0, %v8815
        %v8817 = vpop.f32.mrb[0].mxu0
        %v8818 = vadd.f32 0.0, %v8817
        %v8819 = vpop.f32.mrb[0].mxu0
        %v8820 = vadd.f32 0.0, %v8819
        %v8821 = vpop.f32.mrb[0].mxu0
        %v8822 = vadd.f32 0.0, %v8821
        %8823 = vdwg.mxu0
        %8824 = vmatprep.subr.bf16.mxu0 %v3298
        %8825 = vmatpush1.bf16.msra.mxu0 %v3297
        %8826 = vmatprep.subr.bf16.mxu0 %v3300
        %8827 = vmatpush1.bf16.msra.mxu0 %v3299
        %8828 = vmatprep.subr.bf16.mxu0 %v3302
        %8829 = vmatpush1.bf16.msra.mxu0 %v3301
        %8830 = vmatprep.subr.bf16.mxu0 %v3304
        %8831 = vmatpush1.bf16.msra.mxu0 %v3303
        %8832 = vmatprep.subr.bf16.mxu0 %v3306
        %8833 = vmatpush1.bf16.msra.mxu0 %v3305
        %8834 = vmatprep.subr.bf16.mxu0 %v3308
        %8835 = vmatpush1.bf16.msra.mxu0 %v3307
        %8836 = vmatprep.subr.bf16.mxu0 %v3310
        %8837 = vmatpush1.bf16.msra.mxu0 %v3309
        %8838 = vmatprep.subr.bf16.mxu0 %v3312
        %8839 = vmatpush1.bf16.msra.mxu0 %v3311
        %8840 = vmatprep.subr.bf16.mxu0 0
        %8841 = vmatpush1.bf16.msra.mxu0 0
        %8842 = vmatprep.subr.bf16.mxu0 0
        %8843 = vmatpush1.bf16.msra.mxu0 0
        %8844 = vmatprep.subr.bf16.mxu0 0
        %8845 = vmatpush1.bf16.msra.mxu0 0
        %8846 = vmatprep.subr.bf16.mxu0 0
        %8847 = vmatpush1.bf16.msra.mxu0 0
        %8848 = vmatprep.subr.bf16.mxu0 0
        %8849 = vmatpush1.bf16.msra.mxu0 0
        %8850 = vmatprep.subr.bf16.mxu0 0
        %8851 = vmatpush1.bf16.msra.mxu0 0
        %8852 = vmatprep.subr.bf16.mxu0 0
        %8853 = vmatpush1.bf16.msra.mxu0 0
        %8854 = vmatprep.subr.bf16.mxu0 0
        %8855 = vmatpush1.bf16.msra.mxu0 0
        %8856 = vmatprep.mubr.bf16.mxu0 0
        %8857 = vmatmul.mubr.bf16.gmra.mrb[0].mxu0 %v7535
        %v8858 = vpop.f32.mrb[0].mxu0
        %v8859 = vadd.f32 %v8746, %v8858
        %v8860 = vpop.f32.mrb[0].mxu0
        %v8861 = vadd.f32 %v8748, %v8860
        %v8862 = vpop.f32.mrb[0].mxu0
        %v8863 = vadd.f32 %v8750, %v8862
        %v8864 = vpop.f32.mrb[0].mxu0
        %v8865 = vadd.f32 %v8752, %v8864
        %8866 = vmatprep.mubr.bf16.mxu0 0
        %8867 = vmatmul.mubr.bf16.gmra.mrb[0].mxu0 %v7538
        %v8868 = vpop.f32.mrb[0].mxu0
        %v8869 = vadd.f32 %v8756, %v8868
        %v8870 = vpop.f32.mrb[0].mxu0
        %v8871 = vadd.f32 %v8758, %v8870
        %v8872 = vpop.f32.mrb[0].mxu0
        %v8873 = vadd.f32 %v8760, %v8872
        %v8874 = vpop.f32.mrb[0].mxu0
        %v8875 = vadd.f32 %v8762, %v8874
        %8876 = vmatprep.mubr.bf16.mxu0 0
        %8877 = vmatmul.mubr.bf16.gmra.mrb[0].mxu0 %v7541
        %v8878 = vpop.f32.mrb[0].mxu0
        %v8879 = vadd.f32 %v8766, %v8878
        %v8880 = vpop.f32.mrb[0].mxu0
        %v8881 = vadd.f32 %v8768, %v8880
        %v8882 = vpop.f32.mrb[0].mxu0
        %v8883 = vadd.f32 %v8770, %v8882
        %v8884 = vpop.f32.mrb[0].mxu0
        %v8885 = vadd.f32 %v8772, %v8884
        %8886 = vmatprep.mubr.bf16.mxu0 0
        %8887 = vmatmul.mubr.bf16.gmra.mrb[0].mxu0 %v7544
        %v8888 = vpop.f32.mrb[0].mxu0
        %v8889 = vadd.f32 %v8776, %v8888
        %v8890 = vpop.f32.mrb[0].mxu0
        %v8891 = vadd.f32 %v8778, %v8890
        %v8892 = vpop.f32.mrb[0].mxu0
        %v8893 = vadd.f32 %v8780, %v8892
        %v8894 = vpop.f32.mrb[0].mxu0
        %v8895 = vadd.f32 %v8782, %v8894
        %8896 = vmatprep.mubr.bf16.mxu0 0
        %8897 = vmatmul.mubr.bf16.gmra.mrb[0].mxu0 %v7547
        %v8898 = vpop.f32.mrb[0].mxu0
        %v8899 = vadd.f32 %v8786, %v8898
        %v8900 = vpop.f32.mrb[0].mxu0
        %v8901 = vadd.f32 %v8788, %v8900
        %v8902 = vpop.f32.mrb[0].mxu0
        %v8903 = vadd.f32 %v8790, %v8902
        %v8904 = vpop.f32.mrb[0].mxu0
        %v8905 = vadd.f32 %v8792, %v8904
        %8906 = vmatprep.mubr.bf16.mxu0 0
        %8907 = vmatmul.mubr.bf16.gmra.mrb[0].mxu0 %v7550
        %v8908 = vpop.f32.mrb[0].mxu0
        %v8909 = vadd.f32 %v8796, %v8908
        %v8910 = vpop.f32.mrb[0].mxu0
        %v8911 = vadd.f32 %v8798, %v8910
        %v8912 = vpop.f32.mrb[0].mxu0
        %v8913 = vadd.f32 %v8800, %v8912
        %v8914 = vpop.f32.mrb[0].mxu0
        %v8915 = vadd.f32 %v8802, %v8914
        %8916 = vmatprep.mubr.bf16.mxu0 0
        %8917 = vmatmul.mubr.bf16.gmra.mrb[0].mxu0 %v7553
        %v8918 = vpop.f32.mrb[0].mxu0
        %v8919 = vadd.f32 %v8806, %v8918
        %v8920 = vpop.f32.mrb[0].mxu0
        %v8921 = vadd.f32 %v8808, %v8920
        %v8922 = vpop.f32.mrb[0].mxu0
        %v8923 = vadd.f32 %v8810, %v8922
        %v8924 = vpop.f32.mrb[0].mxu0
        %v8925 = vadd.f32 %v8812, %v8924
        %8926 = vmatprep.mubr.bf16.mxu0 0
        %8927 = vmatmul.mubr.bf16.gmra.mrb[0].mxu0 %v7556
        %v8928 = vpop.f32.mrb[0].mxu0
        %v8929 = vadd.f32 %v8816, %v8928
        %v8930 = vpop.f32.mrb[0].mxu0
        %v8931 = vadd.f32 %v8818, %v8930
        %v8932 = vpop.f32.mrb[0].mxu0
        %v8933 = vadd.f32 %v8820, %v8932
        %v8934 = vpop.f32.mrb[0].mxu0
        %v8935 = vadd.f32 %v8822, %v8934
        %8936 = vdwg.mxu0
        %v8937 = vpack.c.bf16 %v7733, %v7729
        %v8938 = vpack.c.bf16 %v7735, %v7731
        %v8939 = vpack.c.bf16 %v7743, %v7739
        %v8940 = vpack.c.bf16 %v7745, %v7741
        %v8941 = vpack.c.bf16 %v7753, %v7749
        %v8942 = vpack.c.bf16 %v7755, %v7751
        %v8943 = vpack.c.bf16 %v7763, %v7759
        %v8944 = vpack.c.bf16 %v7765, %v7761
        %v8945 = vpack.c.bf16 %v7773, %v7769
        %v8946 = vpack.c.bf16 %v7775, %v7771
        %v8947 = vpack.c.bf16 %v7783, %v7779
        %v8948 = vpack.c.bf16 %v7785, %v7781
        %v8949 = vpack.c.bf16 %v7793, %v7789
        %v8950 = vpack.c.bf16 %v7795, %v7791
        %v8951 = vpack.c.bf16 %v7803, %v7799
        %v8952 = vpack.c.bf16 %v7805, %v7801
        %v8953 = vpack.c.bf16 %v7959, %v7955
        %v8954 = vpack.c.bf16 %v7961, %v7957
        %v8955 = vpack.c.bf16 %v7969, %v7965
        %v8956 = vpack.c.bf16 %v7971, %v7967
        %v8957 = vpack.c.bf16 %v7979, %v7975
        %v8958 = vpack.c.bf16 %v7981, %v7977
        %v8959 = vpack.c.bf16 %v7989, %v7985
        %v8960 = vpack.c.bf16 %v7991, %v7987
        %v8961 = vpack.c.bf16 %v7999, %v7995
        %v8962 = vpack.c.bf16 %v8001, %v7997
        %v8963 = vpack.c.bf16 %v8009, %v8005
        %v8964 = vpack.c.bf16 %v8011, %v8007
        %v8965 = vpack.c.bf16 %v8019, %v8015
        %v8966 = vpack.c.bf16 %v8021, %v8017
        %v8967 = vpack.c.bf16 %v8029, %v8025
        %v8968 = vpack.c.bf16 %v8031, %v8027
        %v8969 = vpack.c.bf16 %v8185, %v8181
        %v8970 = vpack.c.bf16 %v8187, %v8183
        %v8971 = vpack.c.bf16 %v8195, %v8191
        %v8972 = vpack.c.bf16 %v8197, %v8193
        %v8973 = vpack.c.bf16 %v8205, %v8201
        %v8974 = vpack.c.bf16 %v8207, %v8203
        %v8975 = vpack.c.bf16 %v8215, %v8211
        %v8976 = vpack.c.bf16 %v8217, %v8213
        %v8977 = vpack.c.bf16 %v8225, %v8221
        %v8978 = vpack.c.bf16 %v8227, %v8223
        %v8979 = vpack.c.bf16 %v8235, %v8231
        %v8980 = vpack.c.bf16 %v8237, %v8233
        %v8981 = vpack.c.bf16 %v8245, %v8241
        %v8982 = vpack.c.bf16 %v8247, %v8243
        %v8983 = vpack.c.bf16 %v8255, %v8251
        %v8984 = vpack.c.bf16 %v8257, %v8253
        %v8985 = vpack.c.bf16 %v8411, %v8407
        %v8986 = vpack.c.bf16 %v8413, %v8409
        %v8987 = vpack.c.bf16 %v8421, %v8417
        %v8988 = vpack.c.bf16 %v8423, %v8419
        %v8989 = vpack.c.bf16 %v8431, %v8427
        %v8990 = vpack.c.bf16 %v8433, %v8429
        %v8991 = vpack.c.bf16 %v8441, %v8437
        %v8992 = vpack.c.bf16 %v8443, %v8439
        %v8993 = vpack.c.bf16 %v8451, %v8447
        %v8994 = vpack.c.bf16 %v8453, %v8449
        %v8995 = vpack.c.bf16 %v8461, %v8457
        %v8996 = vpack.c.bf16 %v8463, %v8459
        %v8997 = vpack.c.bf16 %v8471, %v8467
        %v8998 = vpack.c.bf16 %v8473, %v8469
        %v8999 = vpack.c.bf16 %v8481, %v8477
        %v9000 = vpack.c.bf16 %v8483, %v8479
        %v9001 = vpack.c.bf16 %v8637, %v8633
        %v9002 = vpack.c.bf16 %v8639, %v8635
        %v9003 = vpack.c.bf16 %v8647, %v8643
        %v9004 = vpack.c.bf16 %v8649, %v8645
        %v9005 = vpack.c.bf16 %v8657, %v8653
        %v9006 = vpack.c.bf16 %v8659, %v8655
        %v9007 = vpack.c.bf16 %v8667, %v8663
        %v9008 = vpack.c.bf16 %v8669, %v8665
        %v9009 = vpack.c.bf16 %v8677, %v8673
        %v9010 = vpack.c.bf16 %v8679, %v8675
        %v9011 = vpack.c.bf16 %v8687, %v8683
        %v9012 = vpack.c.bf16 %v8689, %v8685
        %v9013 = vpack.c.bf16 %v8697, %v8693
        %v9014 = vpack.c.bf16 %v8699, %v8695
        %v9015 = vpack.c.bf16 %v8707, %v8703
        %v9016 = vpack.c.bf16 %v8709, %v8705
        %v9017 = vpack.c.bf16 %v8863, %v8859
        %v9018 = vpack.c.bf16 %v8865, %v8861
        %v9019 = vpack.c.bf16 %v8873, %v8869
        %v9020 = vpack.c.bf16 %v8875, %v8871
        %v9021 = vpack.c.bf16 %v8883, %v8879
        %v9022 = vpack.c.bf16 %v8885, %v8881
        %v9023 = vpack.c.bf16 %v8893, %v8889
        %v9024 = vpack.c.bf16 %v8895, %v8891
        %v9025 = vpack.c.bf16 %v8903, %v8899
        %v9026 = vpack.c.bf16 %v8905, %v8901
        %v9027 = vpack.c.bf16 %v8913, %v8909
        %v9028 = vpack.c.bf16 %v8915, %v8911
        %v9029 = vpack.c.bf16 %v8923, %v8919
        %v9030 = vpack.c.bf16 %v8925, %v8921
        %v9031 = vpack.c.bf16 %v8933, %v8929
        %v9032 = vpack.c.bf16 %v8935, %v8931
        %9041 = vrot.lane.b32.xlu0 %v8937, 64
        %v9042 = vpop.permute.xlu0 %9041
        %9043 = vrot.lane.b32.xlu0 %v8939, 64
        %v9044 = vpop.permute.xlu0 %9043
        %9045 = vrot.lane.b32.xlu0 %v8941, 64
        %v9046 = vpop.permute.xlu0 %9045
        %9047 = vrot.lane.b32.xlu0 %v8943, 64
        %v9048 = vpop.permute.xlu0 %9047
        %9049 = vrot.lane.b32.xlu0 %v8945, 64
        %v9050 = vpop.permute.xlu0 %9049
        %9051 = vrot.lane.b32.xlu0 %v8947, 64
        %v9052 = vpop.permute.xlu0 %9051
        %9053 = vrot.lane.b32.xlu0 %v8949, 64
        %v9054 = vpop.permute.xlu0 %9053
        %9055 = vrot.lane.b32.xlu0 %v8951, 64
        %v9056 = vpop.permute.xlu0 %9055
        %v9058 = vsel %vm3707, %v8937, 0
        %v9061 = vsel %vm3707, %v8939, 0
        %v9064 = vsel %vm3707, %v8941, 0
        %v9067 = vsel %vm3707, %v8943, 0
        %v9070 = vsel %vm3707, %v8945, 0
        %v9073 = vsel %vm3707, %v8947, 0
        %v9076 = vsel %vm3707, %v8949, 0
        %v9079 = vsel %vm3707, %v8951, 0
        %v9082 = vsel %vm3707, %v9042, 0
        %v9085 = vsel %vm3707, %v9044, 0
        %v9088 = vsel %vm3707, %v9046, 0
        %v9091 = vsel %vm3707, %v9048, 0
        %v9094 = vsel %vm3707, %v9050, 0
        %v9097 = vsel %vm3707, %v9052, 0
        %v9100 = vsel %vm3707, %v9054, 0
        %v9103 = vsel %vm3707, %v9056, 0
        %9105 = vmatprep.subr.bf16.mxu0 0
        %9106 = vmatpush1.bf16.xpose.msra.mxu0 %v9082
        %9107 = vmatprep.subr.bf16.mxu0 0
        %9108 = vmatpush1.bf16.xpose.msra.mxu0 %v9085
        %9109 = vmatprep.subr.bf16.mxu0 0
        %9110 = vmatpush1.bf16.xpose.msra.mxu0 %v9088
        %9111 = vmatprep.subr.bf16.mxu0 0
        %9112 = vmatpush1.bf16.xpose.msra.mxu0 %v9091
        %9113 = vmatprep.subr.bf16.mxu0 0
        %9114 = vmatpush1.bf16.xpose.msra.mxu0 %v9094
        %9115 = vmatprep.subr.bf16.mxu0 0
        %9116 = vmatpush1.bf16.xpose.msra.mxu0 %v9097
        %9117 = vmatprep.subr.bf16.mxu0 0
        %9118 = vmatpush1.bf16.xpose.msra.mxu0 %v9100
        %9119 = vmatprep.subr.bf16.mxu0 0
        %9120 = vmatpush1.bf16.xpose.msra.mxu0 %v9103
        %9121 = vmatprep.subr.bf16.mxu0 0
        %9122 = vmatpush1.bf16.xpose.msra.mxu0 0
        %9123 = vmatprep.subr.bf16.mxu0 0
        %9124 = vmatpush1.bf16.xpose.msra.mxu0 0
        %9125 = vmatprep.subr.bf16.mxu0 0
        %9126 = vmatpush1.bf16.xpose.msra.mxu0 0
        %9127 = vmatprep.subr.bf16.mxu0 0
        %9128 = vmatpush1.bf16.xpose.msra.mxu0 0
        %9129 = vmatprep.subr.bf16.mxu0 0
        %9130 = vmatpush1.bf16.xpose.msra.mxu0 0
        %9131 = vmatprep.subr.bf16.mxu0 0
        %9132 = vmatpush1.bf16.xpose.msra.mxu0 0
        %9133 = vmatprep.subr.bf16.mxu0 0
        %9134 = vmatpush1.bf16.xpose.msra.mxu0 0
        %9135 = vmatprep.subr.bf16.mxu0 0
        %9136 = vmatpush1.bf16.xpose.msra.mxu0 0
        %9137 = vmatprep.mubr.bf16.mxu0 0
        %9138 = vmatmul.mubr.bf16.gmra.mrb[0].mxu0 %v9058
        %v9139 = vpop.f32.mrb[0].mxu0
        %v9140 = vadd.f32 %v615, %v9139
        %v9141 = vpop.f32.mrb[0].mxu0
        %v9142 = vpop.f32.mrb[0].mxu0
        %v9143 = vadd.f32 %v616, %v9142
        %v9144 = vpop.f32.mrb[0].mxu0
        %9145 = vmatprep.mubr.bf16.mxu0 0
        %9146 = vmatmul.mubr.bf16.gmra.mrb[0].mxu0 %v9061
        %v9147 = vpop.f32.mrb[0].mxu0
        %v9148 = vadd.f32 %v617, %v9147
        %v9149 = vpop.f32.mrb[0].mxu0
        %v9150 = vpop.f32.mrb[0].mxu0
        %v9151 = vadd.f32 %v618, %v9150
        %v9152 = vpop.f32.mrb[0].mxu0
        %9153 = vmatprep.mubr.bf16.mxu0 0
        %9154 = vmatmul.mubr.bf16.gmra.mrb[0].mxu0 %v9064
        %v9155 = vpop.f32.mrb[0].mxu0
        %v9156 = vadd.f32 %v619, %v9155
        %v9157 = vpop.f32.mrb[0].mxu0
        %v9158 = vpop.f32.mrb[0].mxu0
        %v9159 = vadd.f32 %v620, %v9158
        %v9160 = vpop.f32.mrb[0].mxu0
        %9161 = vmatprep.mubr.bf16.mxu0 0
        %9162 = vmatmul.mubr.bf16.gmra.mrb[0].mxu0 %v9067
        %v9163 = vpop.f32.mrb[0].mxu0
        %v9164 = vadd.f32 %v621, %v9163
        %v9165 = vpop.f32.mrb[0].mxu0
        %v9166 = vpop.f32.mrb[0].mxu0
        %v9167 = vadd.f32 %v622, %v9166
        %v9168 = vpop.f32.mrb[0].mxu0
        %9169 = vmatprep.mubr.bf16.mxu0 0
        %9170 = vmatmul.mubr.bf16.gmra.mrb[0].mxu0 %v9070
        %v9171 = vpop.f32.mrb[0].mxu0
        %v9172 = vadd.f32 %v623, %v9171
        %v9173 = vpop.f32.mrb[0].mxu0
        %v9174 = vpop.f32.mrb[0].mxu0
        %v9175 = vadd.f32 %v624, %v9174
        %v9176 = vpop.f32.mrb[0].mxu0
        %9177 = vmatprep.mubr.bf16.mxu0 0
        %9178 = vmatmul.mubr.bf16.gmra.mrb[0].mxu0 %v9073
        %v9179 = vpop.f32.mrb[0].mxu0
        %v9180 = vadd.f32 %v625, %v9179
        %v9181 = vpop.f32.mrb[0].mxu0
        %v9182 = vpop.f32.mrb[0].mxu0
        %v9183 = vadd.f32 %v626, %v9182
        %v9184 = vpop.f32.mrb[0].mxu0
        %9185 = vmatprep.mubr.bf16.mxu0 0
        %9186 = vmatmul.mubr.bf16.gmra.mrb[0].mxu0 %v9076
        %v9187 = vpop.f32.mrb[0].mxu0
        %v9188 = vadd.f32 %v627, %v9187
        %v9189 = vpop.f32.mrb[0].mxu0
        %v9190 = vpop.f32.mrb[0].mxu0
        %v9191 = vadd.f32 %v628, %v9190
        %v9192 = vpop.f32.mrb[0].mxu0
        %9193 = vmatprep.mubr.bf16.mxu0 0
        %9194 = vmatmul.mubr.bf16.gmra.mrb[0].mxu0 %v9079
        %v9195 = vpop.f32.mrb[0].mxu0
        %v9196 = vadd.f32 %v629, %v9195
        %v9197 = vpop.f32.mrb[0].mxu0
        %v9198 = vpop.f32.mrb[0].mxu0
        %v9199 = vadd.f32 %v630, %v9198
        %v9200 = vpop.f32.mrb[0].mxu0
        %9201 = vdwg.mxu0
        %9210 = vrot.lane.b32.xlu0 %v8953, 64
        %v9211 = vpop.permute.xlu0 %9210
        %9212 = vrot.lane.b32.xlu0 %v8955, 64
        %v9213 = vpop.permute.xlu0 %9212
        %9214 = vrot.lane.b32.xlu0 %v8957, 64
        %v9215 = vpop.permute.xlu0 %9214
        %9216 = vrot.lane.b32.xlu0 %v8959, 64
        %v9217 = vpop.permute.xlu0 %9216
        %9218 = vrot.lane.b32.xlu0 %v8961, 64
        %v9219 = vpop.permute.xlu0 %9218
        %9220 = vrot.lane.b32.xlu0 %v8963, 64
        %v9221 = vpop.permute.xlu0 %9220
        %9222 = vrot.lane.b32.xlu0 %v8965, 64
        %v9223 = vpop.permute.xlu0 %9222
        %9224 = vrot.lane.b32.xlu0 %v8967, 64
        %v9225 = vpop.permute.xlu0 %9224
        %v9227 = vsel %vm3707, %v8953, 0
        %v9230 = vsel %vm3707, %v8955, 0
        %v9233 = vsel %vm3707, %v8957, 0
        %v9236 = vsel %vm3707, %v8959, 0
        %v9239 = vsel %vm3707, %v8961, 0
        %v9242 = vsel %vm3707, %v8963, 0
        %v9245 = vsel %vm3707, %v8965, 0
        %v9248 = vsel %vm3707, %v8967, 0
        %v9251 = vsel %vm3707, %v9211, 0
        %v9254 = vsel %vm3707, %v9213, 0
        %v9257 = vsel %vm3707, %v9215, 0
        %v9260 = vsel %vm3707, %v9217, 0
        %v9263 = vsel %vm3707, %v9219, 0
        %v9266 = vsel %vm3707, %v9221, 0
        %v9269 = vsel %vm3707, %v9223, 0
        %v9272 = vsel %vm3707, %v9225, 0
        %9274 = vmatprep.subr.bf16.mxu0 0
        %9275 = vmatpush1.bf16.xpose.msra.mxu0 %v9251
        %9276 = vmatprep.subr.bf16.mxu0 0
        %9277 = vmatpush1.bf16.xpose.msra.mxu0 %v9254
        %9278 = vmatprep.subr.bf16.mxu0 0
        %9279 = vmatpush1.bf16.xpose.msra.mxu0 %v9257
        %9280 = vmatprep.subr.bf16.mxu0 0
        %9281 = vmatpush1.bf16.xpose.msra.mxu0 %v9260
        %9282 = vmatprep.subr.bf16.mxu0 0
        %9283 = vmatpush1.bf16.xpose.msra.mxu0 %v9263
        %9284 = vmatprep.subr.bf16.mxu0 0
        %9285 = vmatpush1.bf16.xpose.msra.mxu0 %v9266
        %9286 = vmatprep.subr.bf16.mxu0 0
        %9287 = vmatpush1.bf16.xpose.msra.mxu0 %v9269
        %9288 = vmatprep.subr.bf16.mxu0 0
        %9289 = vmatpush1.bf16.xpose.msra.mxu0 %v9272
        %9290 = vmatprep.subr.bf16.mxu0 0
        %9291 = vmatpush1.bf16.xpose.msra.mxu0 0
        %9292 = vmatprep.subr.bf16.mxu0 0
        %9293 = vmatpush1.bf16.xpose.msra.mxu0 0
        %9294 = vmatprep.subr.bf16.mxu0 0
        %9295 = vmatpush1.bf16.xpose.msra.mxu0 0
        %9296 = vmatprep.subr.bf16.mxu0 0
        %9297 = vmatpush1.bf16.xpose.msra.mxu0 0
        %9298 = vmatprep.subr.bf16.mxu0 0
        %9299 = vmatpush1.bf16.xpose.msra.mxu0 0
        %9300 = vmatprep.subr.bf16.mxu0 0
        %9301 = vmatpush1.bf16.xpose.msra.mxu0 0
        %9302 = vmatprep.subr.bf16.mxu0 0
        %9303 = vmatpush1.bf16.xpose.msra.mxu0 0
        %9304 = vmatprep.subr.bf16.mxu0 0
        %9305 = vmatpush1.bf16.xpose.msra.mxu0 0
        %9306 = vmatprep.mubr.bf16.mxu0 0
        %9307 = vmatmul.mubr.bf16.gmra.mrb[0].mxu0 %v9227
        %v9308 = vpop.f32.mrb[0].mxu0
        %v9309 = vadd.f32 %v615, %v9308
        %v9310 = vpop.f32.mrb[0].mxu0
        %v9311 = vpop.f32.mrb[0].mxu0
        %v9312 = vadd.f32 %v616, %v9311
        %v9313 = vpop.f32.mrb[0].mxu0
        %9314 = vmatprep.mubr.bf16.mxu0 0
        %9315 = vmatmul.mubr.bf16.gmra.mrb[0].mxu0 %v9230
        %v9316 = vpop.f32.mrb[0].mxu0
        %v9317 = vadd.f32 %v617, %v9316
        %v9318 = vpop.f32.mrb[0].mxu0
        %v9319 = vpop.f32.mrb[0].mxu0
        %v9320 = vadd.f32 %v618, %v9319
        %v9321 = vpop.f32.mrb[0].mxu0
        %9322 = vmatprep.mubr.bf16.mxu0 0
        %9323 = vmatmul.mubr.bf16.gmra.mrb[0].mxu0 %v9233
        %v9324 = vpop.f32.mrb[0].mxu0
        %v9325 = vadd.f32 %v619, %v9324
        %v9326 = vpop.f32.mrb[0].mxu0
        %v9327 = vpop.f32.mrb[0].mxu0
        %v9328 = vadd.f32 %v620, %v9327
        %v9329 = vpop.f32.mrb[0].mxu0
        %9330 = vmatprep.mubr.bf16.mxu0 0
        %9331 = vmatmul.mubr.bf16.gmra.mrb[0].mxu0 %v9236
        %v9332 = vpop.f32.mrb[0].mxu0
        %v9333 = vadd.f32 %v621, %v9332
        %v9334 = vpop.f32.mrb[0].mxu0
        %v9335 = vpop.f32.mrb[0].mxu0
        %v9336 = vadd.f32 %v622, %v9335
        %v9337 = vpop.f32.mrb[0].mxu0
        %9338 = vmatprep.mubr.bf16.mxu0 0
        %9339 = vmatmul.mubr.bf16.gmra.mrb[0].mxu0 %v9239
        %v9340 = vpop.f32.mrb[0].mxu0
        %v9341 = vadd.f32 %v623, %v9340
        %v9342 = vpop.f32.mrb[0].mxu0
        %v9343 = vpop.f32.mrb[0].mxu0
        %v9344 = vadd.f32 %v624, %v9343
        %v9345 = vpop.f32.mrb[0].mxu0
        %9346 = vmatprep.mubr.bf16.mxu0 0
        %9347 = vmatmul.mubr.bf16.gmra.mrb[0].mxu0 %v9242
        %v9348 = vpop.f32.mrb[0].mxu0
        %v9349 = vadd.f32 %v625, %v9348
        %v9350 = vpop.f32.mrb[0].mxu0
        %v9351 = vpop.f32.mrb[0].mxu0
        %v9352 = vadd.f32 %v626, %v9351
        %v9353 = vpop.f32.mrb[0].mxu0
        %9354 = vmatprep.mubr.bf16.mxu0 0
        %9355 = vmatmul.mubr.bf16.gmra.mrb[0].mxu0 %v9245
        %v9356 = vpop.f32.mrb[0].mxu0
        %v9357 = vadd.f32 %v627, %v9356
        %v9358 = vpop.f32.mrb[0].mxu0
        %v9359 = vpop.f32.mrb[0].mxu0
        %v9360 = vadd.f32 %v628, %v9359
        %v9361 = vpop.f32.mrb[0].mxu0
        %9362 = vmatprep.mubr.bf16.mxu0 0
        %9363 = vmatmul.mubr.bf16.gmra.mrb[0].mxu0 %v9248
        %v9364 = vpop.f32.mrb[0].mxu0
        %v9365 = vadd.f32 %v629, %v9364
        %v9366 = vpop.f32.mrb[0].mxu0
        %v9367 = vpop.f32.mrb[0].mxu0
        %v9368 = vadd.f32 %v630, %v9367
        %v9369 = vpop.f32.mrb[0].mxu0
        %9370 = vdwg.mxu0
        %9379 = vrot.lane.b32.xlu0 %v8969, 64
        %v9380 = vpop.permute.xlu0 %9379
        %9381 = vrot.lane.b32.xlu0 %v8971, 64
        %v9382 = vpop.permute.xlu0 %9381
        %9383 = vrot.lane.b32.xlu0 %v8973, 64
        %v9384 = vpop.permute.xlu0 %9383
        %9385 = vrot.lane.b32.xlu0 %v8975, 64
        %v9386 = vpop.permute.xlu0 %9385
        %9387 = vrot.lane.b32.xlu0 %v8977, 64
        %v9388 = vpop.permute.xlu0 %9387
        %9389 = vrot.lane.b32.xlu0 %v8979, 64
        %v9390 = vpop.permute.xlu0 %9389
        %9391 = vrot.lane.b32.xlu0 %v8981, 64
        %v9392 = vpop.permute.xlu0 %9391
        %9393 = vrot.lane.b32.xlu0 %v8983, 64
        %v9394 = vpop.permute.xlu0 %9393
        %v9396 = vsel %vm3707, %v8969, 0
        %v9399 = vsel %vm3707, %v8971, 0
        %v9402 = vsel %vm3707, %v8973, 0
        %v9405 = vsel %vm3707, %v8975, 0
        %v9408 = vsel %vm3707, %v8977, 0
        %v9411 = vsel %vm3707, %v8979, 0
        %v9414 = vsel %vm3707, %v8981, 0
        %v9417 = vsel %vm3707, %v8983, 0
        %v9420 = vsel %vm3707, %v9380, 0
        %v9423 = vsel %vm3707, %v9382, 0
        %v9426 = vsel %vm3707, %v9384, 0
        %v9429 = vsel %vm3707, %v9386, 0
        %v9432 = vsel %vm3707, %v9388, 0
        %v9435 = vsel %vm3707, %v9390, 0
        %v9438 = vsel %vm3707, %v9392, 0
        %v9441 = vsel %vm3707, %v9394, 0
        %9443 = vmatprep.subr.bf16.mxu0 0
        %9444 = vmatpush1.bf16.xpose.msra.mxu0 %v9420
        %9445 = vmatprep.subr.bf16.mxu0 0
        %9446 = vmatpush1.bf16.xpose.msra.mxu0 %v9423
        %9447 = vmatprep.subr.bf16.mxu0 0
        %9448 = vmatpush1.bf16.xpose.msra.mxu0 %v9426
        %9449 = vmatprep.subr.bf16.mxu0 0
        %9450 = vmatpush1.bf16.xpose.msra.mxu0 %v9429
        %9451 = vmatprep.subr.bf16.mxu0 0
        %9452 = vmatpush1.bf16.xpose.msra.mxu0 %v9432
        %9453 = vmatprep.subr.bf16.mxu0 0
        %9454 = vmatpush1.bf16.xpose.msra.mxu0 %v9435
        %9455 = vmatprep.subr.bf16.mxu0 0
        %9456 = vmatpush1.bf16.xpose.msra.mxu0 %v9438
        %9457 = vmatprep.subr.bf16.mxu0 0
        %9458 = vmatpush1.bf16.xpose.msra.mxu0 %v9441
        %9459 = vmatprep.subr.bf16.mxu0 0
        %9460 = vmatpush1.bf16.xpose.msra.mxu0 0
        %9461 = vmatprep.subr.bf16.mxu0 0
        %9462 = vmatpush1.bf16.xpose.msra.mxu0 0
        %9463 = vmatprep.subr.bf16.mxu0 0
        %9464 = vmatpush1.bf16.xpose.msra.mxu0 0
        %9465 = vmatprep.subr.bf16.mxu0 0
        %9466 = vmatpush1.bf16.xpose.msra.mxu0 0
        %9467 = vmatprep.subr.bf16.mxu0 0
        %9468 = vmatpush1.bf16.xpose.msra.mxu0 0
        %9469 = vmatprep.subr.bf16.mxu0 0
        %9470 = vmatpush1.bf16.xpose.msra.mxu0 0
        %9471 = vmatprep.subr.bf16.mxu0 0
        %9472 = vmatpush1.bf16.xpose.msra.mxu0 0
        %9473 = vmatprep.subr.bf16.mxu0 0
        %9474 = vmatpush1.bf16.xpose.msra.mxu0 0
        %9475 = vmatprep.mubr.bf16.mxu0 0
        %9476 = vmatmul.mubr.bf16.gmra.mrb[0].mxu0 %v9396
        %v9477 = vpop.f32.mrb[0].mxu0
        %v9478 = vadd.f32 %v615, %v9477
        %v9479 = vpop.f32.mrb[0].mxu0
        %v9480 = vpop.f32.mrb[0].mxu0
        %v9481 = vadd.f32 %v616, %v9480
        %v9482 = vpop.f32.mrb[0].mxu0
        %9483 = vmatprep.mubr.bf16.mxu0 0
        %9484 = vmatmul.mubr.bf16.gmra.mrb[0].mxu0 %v9399
        %v9485 = vpop.f32.mrb[0].mxu0
        %v9486 = vadd.f32 %v617, %v9485
        %v9487 = vpop.f32.mrb[0].mxu0
        %v9488 = vpop.f32.mrb[0].mxu0
        %v9489 = vadd.f32 %v618, %v9488
        %v9490 = vpop.f32.mrb[0].mxu0
        %9491 = vmatprep.mubr.bf16.mxu0 0
        %9492 = vmatmul.mubr.bf16.gmra.mrb[0].mxu0 %v9402
        %v9493 = vpop.f32.mrb[0].mxu0
        %v9494 = vadd.f32 %v619, %v9493
        %v9495 = vpop.f32.mrb[0].mxu0
        %v9496 = vpop.f32.mrb[0].mxu0
        %v9497 = vadd.f32 %v620, %v9496
        %v9498 = vpop.f32.mrb[0].mxu0
        %9499 = vmatprep.mubr.bf16.mxu0 0
        %9500 = vmatmul.mubr.bf16.gmra.mrb[0].mxu0 %v9405
        %v9501 = vpop.f32.mrb[0].mxu0
        %v9502 = vadd.f32 %v621, %v9501
        %v9503 = vpop.f32.mrb[0].mxu0
        %v9504 = vpop.f32.mrb[0].mxu0
        %v9505 = vadd.f32 %v622, %v9504
        %v9506 = vpop.f32.mrb[0].mxu0
        %9507 = vmatprep.mubr.bf16.mxu0 0
        %9508 = vmatmul.mubr.bf16.gmra.mrb[0].mxu0 %v9408
        %v9509 = vpop.f32.mrb[0].mxu0
        %v9510 = vadd.f32 %v623, %v9509
        %v9511 = vpop.f32.mrb[0].mxu0
        %v9512 = vpop.f32.mrb[0].mxu0
        %v9513 = vadd.f32 %v624, %v9512
        %v9514 = vpop.f32.mrb[0].mxu0
        %9515 = vmatprep.mubr.bf16.mxu0 0
        %9516 = vmatmul.mubr.bf16.gmra.mrb[0].mxu0 %v9411
        %v9517 = vpop.f32.mrb[0].mxu0
        %v9518 = vadd.f32 %v625, %v9517
        %v9519 = vpop.f32.mrb[0].mxu0
        %v9520 = vpop.f32.mrb[0].mxu0
        %v9521 = vadd.f32 %v626, %v9520
        %v9522 = vpop.f32.mrb[0].mxu0
        %9523 = vmatprep.mubr.bf16.mxu0 0
        %9524 = vmatmul.mubr.bf16.gmra.mrb[0].mxu0 %v9414
        %v9525 = vpop.f32.mrb[0].mxu0
        %v9526 = vadd.f32 %v627, %v9525
        %v9527 = vpop.f32.mrb[0].mxu0
        %v9528 = vpop.f32.mrb[0].mxu0
        %v9529 = vadd.f32 %v628, %v9528
        %v9530 = vpop.f32.mrb[0].mxu0
        %9531 = vmatprep.mubr.bf16.mxu0 0
        %9532 = vmatmul.mubr.bf16.gmra.mrb[0].mxu0 %v9417
        %v9533 = vpop.f32.mrb[0].mxu0
        %v9534 = vadd.f32 %v629, %v9533
        %v9535 = vpop.f32.mrb[0].mxu0
        %v9536 = vpop.f32.mrb[0].mxu0
        %v9537 = vadd.f32 %v630, %v9536
        %v9538 = vpop.f32.mrb[0].mxu0
        %9539 = vdwg.mxu0
        %9548 = vrot.lane.b32.xlu0 %v8985, 64
        %v9549 = vpop.permute.xlu0 %9548
        %9550 = vrot.lane.b32.xlu0 %v8987, 64
        %v9551 = vpop.permute.xlu0 %9550
        %9552 = vrot.lane.b32.xlu0 %v8989, 64
        %v9553 = vpop.permute.xlu0 %9552
        %9554 = vrot.lane.b32.xlu0 %v8991, 64
        %v9555 = vpop.permute.xlu0 %9554
        %9556 = vrot.lane.b32.xlu0 %v8993, 64
        %v9557 = vpop.permute.xlu0 %9556
        %9558 = vrot.lane.b32.xlu0 %v8995, 64
        %v9559 = vpop.permute.xlu0 %9558
        %9560 = vrot.lane.b32.xlu0 %v8997, 64
        %v9561 = vpop.permute.xlu0 %9560
        %9562 = vrot.lane.b32.xlu0 %v8999, 64
        %v9563 = vpop.permute.xlu0 %9562
        %v9565 = vsel %vm3707, %v8985, 0
        %v9568 = vsel %vm3707, %v8987, 0
        %v9571 = vsel %vm3707, %v8989, 0
        %v9574 = vsel %vm3707, %v8991, 0
        %v9577 = vsel %vm3707, %v8993, 0
        %v9580 = vsel %vm3707, %v8995, 0
        %v9583 = vsel %vm3707, %v8997, 0
        %v9586 = vsel %vm3707, %v8999, 0
        %v9589 = vsel %vm3707, %v9549, 0
        %v9592 = vsel %vm3707, %v9551, 0
        %v9595 = vsel %vm3707, %v9553, 0
        %v9598 = vsel %vm3707, %v9555, 0
        %v9601 = vsel %vm3707, %v9557, 0
        %v9604 = vsel %vm3707, %v9559, 0
        %v9607 = vsel %vm3707, %v9561, 0
        %v9610 = vsel %vm3707, %v9563, 0
        %9612 = vmatprep.subr.bf16.mxu0 0
        %9613 = vmatpush1.bf16.xpose.msra.mxu0 %v9589
        %9614 = vmatprep.subr.bf16.mxu0 0
        %9615 = vmatpush1.bf16.xpose.msra.mxu0 %v9592
        %9616 = vmatprep.subr.bf16.mxu0 0
        %9617 = vmatpush1.bf16.xpose.msra.mxu0 %v9595
        %9618 = vmatprep.subr.bf16.mxu0 0
        %9619 = vmatpush1.bf16.xpose.msra.mxu0 %v9598
        %9620 = vmatprep.subr.bf16.mxu0 0
        %9621 = vmatpush1.bf16.xpose.msra.mxu0 %v9601
        %9622 = vmatprep.subr.bf16.mxu0 0
        %9623 = vmatpush1.bf16.xpose.msra.mxu0 %v9604
        %9624 = vmatprep.subr.bf16.mxu0 0
        %9625 = vmatpush1.bf16.xpose.msra.mxu0 %v9607
        %9626 = vmatprep.subr.bf16.mxu0 0
        %9627 = vmatpush1.bf16.xpose.msra.mxu0 %v9610
        %9628 = vmatprep.subr.bf16.mxu0 0
        %9629 = vmatpush1.bf16.xpose.msra.mxu0 0
        %9630 = vmatprep.subr.bf16.mxu0 0
        %9631 = vmatpush1.bf16.xpose.msra.mxu0 0
        %9632 = vmatprep.subr.bf16.mxu0 0
        %9633 = vmatpush1.bf16.xpose.msra.mxu0 0
        %9634 = vmatprep.subr.bf16.mxu0 0
        %9635 = vmatpush1.bf16.xpose.msra.mxu0 0
        %9636 = vmatprep.subr.bf16.mxu0 0
        %9637 = vmatpush1.bf16.xpose.msra.mxu0 0
        %9638 = vmatprep.subr.bf16.mxu0 0
        %9639 = vmatpush1.bf16.xpose.msra.mxu0 0
        %9640 = vmatprep.subr.bf16.mxu0 0
        %9641 = vmatpush1.bf16.xpose.msra.mxu0 0
        %9642 = vmatprep.subr.bf16.mxu0 0
        %9643 = vmatpush1.bf16.xpose.msra.mxu0 0
        %9644 = vmatprep.mubr.bf16.mxu0 0
        %9645 = vmatmul.mubr.bf16.gmra.mrb[0].mxu0 %v9565
        %v9646 = vpop.f32.mrb[0].mxu0
        %v9647 = vadd.f32 %v615, %v9646
        %v9648 = vpop.f32.mrb[0].mxu0
        %v9649 = vpop.f32.mrb[0].mxu0
        %v9650 = vadd.f32 %v616, %v9649
        %v9651 = vpop.f32.mrb[0].mxu0
        %9652 = vmatprep.mubr.bf16.mxu0 0
        %9653 = vmatmul.mubr.bf16.gmra.mrb[0].mxu0 %v9568
        %v9654 = vpop.f32.mrb[0].mxu0
        %v9655 = vadd.f32 %v617, %v9654
        %v9656 = vpop.f32.mrb[0].mxu0
        %v9657 = vpop.f32.mrb[0].mxu0
        %v9658 = vadd.f32 %v618, %v9657
        %v9659 = vpop.f32.mrb[0].mxu0
        %9660 = vmatprep.mubr.bf16.mxu0 0
        %9661 = vmatmul.mubr.bf16.gmra.mrb[0].mxu0 %v9571
        %v9662 = vpop.f32.mrb[0].mxu0
        %v9663 = vadd.f32 %v619, %v9662
        %v9664 = vpop.f32.mrb[0].mxu0
        %v9665 = vpop.f32.mrb[0].mxu0
        %v9666 = vadd.f32 %v620, %v9665
        %v9667 = vpop.f32.mrb[0].mxu0
        %9668 = vmatprep.mubr.bf16.mxu0 0
        %9669 = vmatmul.mubr.bf16.gmra.mrb[0].mxu0 %v9574
        %v9670 = vpop.f32.mrb[0].mxu0
        %v9671 = vadd.f32 %v621, %v9670
        %v9672 = vpop.f32.mrb[0].mxu0
        %v9673 = vpop.f32.mrb[0].mxu0
        %v9674 = vadd.f32 %v622, %v9673
        %v9675 = vpop.f32.mrb[0].mxu0
        %9676 = vmatprep.mubr.bf16.mxu0 0
        %9677 = vmatmul.mubr.bf16.gmra.mrb[0].mxu0 %v9577
        %v9678 = vpop.f32.mrb[0].mxu0
        %v9679 = vadd.f32 %v623, %v9678
        %v9680 = vpop.f32.mrb[0].mxu0
        %v9681 = vpop.f32.mrb[0].mxu0
        %v9682 = vadd.f32 %v624, %v9681
        %v9683 = vpop.f32.mrb[0].mxu0
        %9684 = vmatprep.mubr.bf16.mxu0 0
        %9685 = vmatmul.mubr.bf16.gmra.mrb[0].mxu0 %v9580
        %v9686 = vpop.f32.mrb[0].mxu0
        %v9687 = vadd.f32 %v625, %v9686
        %v9688 = vpop.f32.mrb[0].mxu0
        %v9689 = vpop.f32.mrb[0].mxu0
        %v9690 = vadd.f32 %v626, %v9689
        %v9691 = vpop.f32.mrb[0].mxu0
        %9692 = vmatprep.mubr.bf16.mxu0 0
        %9693 = vmatmul.mubr.bf16.gmra.mrb[0].mxu0 %v9583
        %v9694 = vpop.f32.mrb[0].mxu0
        %v9695 = vadd.f32 %v627, %v9694
        %v9696 = vpop.f32.mrb[0].mxu0
        %v9697 = vpop.f32.mrb[0].mxu0
        %v9698 = vadd.f32 %v628, %v9697
        %v9699 = vpop.f32.mrb[0].mxu0
        %9700 = vmatprep.mubr.bf16.mxu0 0
        %9701 = vmatmul.mubr.bf16.gmra.mrb[0].mxu0 %v9586
        %v9702 = vpop.f32.mrb[0].mxu0
        %v9703 = vadd.f32 %v629, %v9702
        %v9704 = vpop.f32.mrb[0].mxu0
        %v9705 = vpop.f32.mrb[0].mxu0
        %v9706 = vadd.f32 %v630, %v9705
        %v9707 = vpop.f32.mrb[0].mxu0
        %9708 = vdwg.mxu0
        %9717 = vrot.lane.b32.xlu0 %v9001, 64
        %v9718 = vpop.permute.xlu0 %9717
        %9719 = vrot.lane.b32.xlu0 %v9003, 64
        %v9720 = vpop.permute.xlu0 %9719
        %9721 = vrot.lane.b32.xlu0 %v9005, 64
        %v9722 = vpop.permute.xlu0 %9721
        %9723 = vrot.lane.b32.xlu0 %v9007, 64
        %v9724 = vpop.permute.xlu0 %9723
        %9725 = vrot.lane.b32.xlu0 %v9009, 64
        %v9726 = vpop.permute.xlu0 %9725
        %9727 = vrot.lane.b32.xlu0 %v9011, 64
        %v9728 = vpop.permute.xlu0 %9727
        %9729 = vrot.lane.b32.xlu0 %v9013, 64
        %v9730 = vpop.permute.xlu0 %9729
        %9731 = vrot.lane.b32.xlu0 %v9015, 64
        %v9732 = vpop.permute.xlu0 %9731
        %v9734 = vsel %vm3707, %v9001, 0
        %v9737 = vsel %vm3707, %v9003, 0
        %v9740 = vsel %vm3707, %v9005, 0
        %v9743 = vsel %vm3707, %v9007, 0
        %v9746 = vsel %vm3707, %v9009, 0
        %v9749 = vsel %vm3707, %v9011, 0
        %v9752 = vsel %vm3707, %v9013, 0
        %v9755 = vsel %vm3707, %v9015, 0
        %v9758 = vsel %vm3707, %v9718, 0
        %v9761 = vsel %vm3707, %v9720, 0
        %v9764 = vsel %vm3707, %v9722, 0
        %v9767 = vsel %vm3707, %v9724, 0
        %v9770 = vsel %vm3707, %v9726, 0
        %v9773 = vsel %vm3707, %v9728, 0
        %v9776 = vsel %vm3707, %v9730, 0
        %v9779 = vsel %vm3707, %v9732, 0
        %9781 = vmatprep.subr.bf16.mxu0 0
        %9782 = vmatpush1.bf16.xpose.msra.mxu0 %v9758
        %9783 = vmatprep.subr.bf16.mxu0 0
        %9784 = vmatpush1.bf16.xpose.msra.mxu0 %v9761
        %9785 = vmatprep.subr.bf16.mxu0 0
        %9786 = vmatpush1.bf16.xpose.msra.mxu0 %v9764
        %9787 = vmatprep.subr.bf16.mxu0 0
        %9788 = vmatpush1.bf16.xpose.msra.mxu0 %v9767
        %9789 = vmatprep.subr.bf16.mxu0 0
        %9790 = vmatpush1.bf16.xpose.msra.mxu0 %v9770
        %9791 = vmatprep.subr.bf16.mxu0 0
        %9792 = vmatpush1.bf16.xpose.msra.mxu0 %v9773
        %9793 = vmatprep.subr.bf16.mxu0 0
        %9794 = vmatpush1.bf16.xpose.msra.mxu0 %v9776
        %9795 = vmatprep.subr.bf16.mxu0 0
        %9796 = vmatpush1.bf16.xpose.msra.mxu0 %v9779
        %9797 = vmatprep.subr.bf16.mxu0 0
        %9798 = vmatpush1.bf16.xpose.msra.mxu0 0
        %9799 = vmatprep.subr.bf16.mxu0 0
        %9800 = vmatpush1.bf16.xpose.msra.mxu0 0
        %9801 = vmatprep.subr.bf16.mxu0 0
        %9802 = vmatpush1.bf16.xpose.msra.mxu0 0
        %9803 = vmatprep.subr.bf16.mxu0 0
        %9804 = vmatpush1.bf16.xpose.msra.mxu0 0
        %9805 = vmatprep.subr.bf16.mxu0 0
        %9806 = vmatpush1.bf16.xpose.msra.mxu0 0
        %9807 = vmatprep.subr.bf16.mxu0 0
        %9808 = vmatpush1.bf16.xpose.msra.mxu0 0
        %9809 = vmatprep.subr.bf16.mxu0 0
        %9810 = vmatpush1.bf16.xpose.msra.mxu0 0
        %9811 = vmatprep.subr.bf16.mxu0 0
        %9812 = vmatpush1.bf16.xpose.msra.mxu0 0
        %9813 = vmatprep.mubr.bf16.mxu0 0
        %9814 = vmatmul.mubr.bf16.gmra.mrb[0].mxu0 %v9734
        %v9815 = vpop.f32.mrb[0].mxu0
        %v9816 = vadd.f32 %v615, %v9815
        %v9817 = vpop.f32.mrb[0].mxu0
        %v9818 = vpop.f32.mrb[0].mxu0
        %v9819 = vadd.f32 %v616, %v9818
        %v9820 = vpop.f32.mrb[0].mxu0
        %9821 = vmatprep.mubr.bf16.mxu0 0
        %9822 = vmatmul.mubr.bf16.gmra.mrb[0].mxu0 %v9737
        %v9823 = vpop.f32.mrb[0].mxu0
        %v9824 = vadd.f32 %v617, %v9823
        %v9825 = vpop.f32.mrb[0].mxu0
        %v9826 = vpop.f32.mrb[0].mxu0
        %v9827 = vadd.f32 %v618, %v9826
        %v9828 = vpop.f32.mrb[0].mxu0
        %9829 = vmatprep.mubr.bf16.mxu0 0
        %9830 = vmatmul.mubr.bf16.gmra.mrb[0].mxu0 %v9740
        %v9831 = vpop.f32.mrb[0].mxu0
        %v9832 = vadd.f32 %v619, %v9831
        %v9833 = vpop.f32.mrb[0].mxu0
        %v9834 = vpop.f32.mrb[0].mxu0
        %v9835 = vadd.f32 %v620, %v9834
        %v9836 = vpop.f32.mrb[0].mxu0
        %9837 = vmatprep.mubr.bf16.mxu0 0
        %9838 = vmatmul.mubr.bf16.gmra.mrb[0].mxu0 %v9743
        %v9839 = vpop.f32.mrb[0].mxu0
        %v9840 = vadd.f32 %v621, %v9839
        %v9841 = vpop.f32.mrb[0].mxu0
        %v9842 = vpop.f32.mrb[0].mxu0
        %v9843 = vadd.f32 %v622, %v9842
        %v9844 = vpop.f32.mrb[0].mxu0
        %9845 = vmatprep.mubr.bf16.mxu0 0
        %9846 = vmatmul.mubr.bf16.gmra.mrb[0].mxu0 %v9746
        %v9847 = vpop.f32.mrb[0].mxu0
        %v9848 = vadd.f32 %v623, %v9847
        %v9849 = vpop.f32.mrb[0].mxu0
        %v9850 = vpop.f32.mrb[0].mxu0
        %v9851 = vadd.f32 %v624, %v9850
        %v9852 = vpop.f32.mrb[0].mxu0
        %9853 = vmatprep.mubr.bf16.mxu0 0
        %9854 = vmatmul.mubr.bf16.gmra.mrb[0].mxu0 %v9749
        %v9855 = vpop.f32.mrb[0].mxu0
        %v9856 = vadd.f32 %v625, %v9855
        %v9857 = vpop.f32.mrb[0].mxu0
        %v9858 = vpop.f32.mrb[0].mxu0
        %v9859 = vadd.f32 %v626, %v9858
        %v9860 = vpop.f32.mrb[0].mxu0
        %9861 = vmatprep.mubr.bf16.mxu0 0
        %9862 = vmatmul.mubr.bf16.gmra.mrb[0].mxu0 %v9752
        %v9863 = vpop.f32.mrb[0].mxu0
        %v9864 = vadd.f32 %v627, %v9863
        %v9865 = vpop.f32.mrb[0].mxu0
        %v9866 = vpop.f32.mrb[0].mxu0
        %v9867 = vadd.f32 %v628, %v9866
        %v9868 = vpop.f32.mrb[0].mxu0
        %9869 = vmatprep.mubr.bf16.mxu0 0
        %9870 = vmatmul.mubr.bf16.gmra.mrb[0].mxu0 %v9755
        %v9871 = vpop.f32.mrb[0].mxu0
        %v9872 = vadd.f32 %v629, %v9871
        %v9873 = vpop.f32.mrb[0].mxu0
        %v9874 = vpop.f32.mrb[0].mxu0
        %v9875 = vadd.f32 %v630, %v9874
        %v9876 = vpop.f32.mrb[0].mxu0
        %9877 = vdwg.mxu0
        %9886 = vrot.lane.b32.xlu0 %v9017, 64
        %v9887 = vpop.permute.xlu0 %9886
        %9888 = vrot.lane.b32.xlu0 %v9019, 64
        %v9889 = vpop.permute.xlu0 %9888
        %9890 = vrot.lane.b32.xlu0 %v9021, 64
        %v9891 = vpop.permute.xlu0 %9890
        %9892 = vrot.lane.b32.xlu0 %v9023, 64
        %v9893 = vpop.permute.xlu0 %9892
        %9894 = vrot.lane.b32.xlu0 %v9025, 64
        %v9895 = vpop.permute.xlu0 %9894
        %9896 = vrot.lane.b32.xlu0 %v9027, 64
        %v9897 = vpop.permute.xlu0 %9896
        %9898 = vrot.lane.b32.xlu0 %v9029, 64
        %v9899 = vpop.permute.xlu0 %9898
        %9900 = vrot.lane.b32.xlu0 %v9031, 64
        %v9901 = vpop.permute.xlu0 %9900
        %v9903 = vsel %vm3707, %v9017, 0
        %v9906 = vsel %vm3707, %v9019, 0
        %v9909 = vsel %vm3707, %v9021, 0
        %v9912 = vsel %vm3707, %v9023, 0
        %v9915 = vsel %vm3707, %v9025, 0
        %v9918 = vsel %vm3707, %v9027, 0
        %v9921 = vsel %vm3707, %v9029, 0
        %v9924 = vsel %vm3707, %v9031, 0
        %v9927 = vsel %vm3707, %v9887, 0
        %v9930 = vsel %vm3707, %v9889, 0
        %v9933 = vsel %vm3707, %v9891, 0
        %v9936 = vsel %vm3707, %v9893, 0
        %v9939 = vsel %vm3707, %v9895, 0
        %v9942 = vsel %vm3707, %v9897, 0
        %v9945 = vsel %vm3707, %v9899, 0
        %v9948 = vsel %vm3707, %v9901, 0
        %9950 = vmatprep.subr.bf16.mxu0 0
        %9951 = vmatpush1.bf16.xpose.msra.mxu0 %v9927
        %9952 = vmatprep.subr.bf16.mxu0 0
        %9953 = vmatpush1.bf16.xpose.msra.mxu0 %v9930
        %9954 = vmatprep.subr.bf16.mxu0 0
        %9955 = vmatpush1.bf16.xpose.msra.mxu0 %v9933
        %9956 = vmatprep.subr.bf16.mxu0 0
        %9957 = vmatpush1.bf16.xpose.msra.mxu0 %v9936
        %9958 = vmatprep.subr.bf16.mxu0 0
        %9959 = vmatpush1.bf16.xpose.msra.mxu0 %v9939
        %9960 = vmatprep.subr.bf16.mxu0 0
        %9961 = vmatpush1.bf16.xpose.msra.mxu0 %v9942
        %9962 = vmatprep.subr.bf16.mxu0 0
        %9963 = vmatpush1.bf16.xpose.msra.mxu0 %v9945
        %9964 = vmatprep.subr.bf16.mxu0 0
        %9965 = vmatpush1.bf16.xpose.msra.mxu0 %v9948
        %9966 = vmatprep.subr.bf16.mxu0 0
        %9967 = vmatpush1.bf16.xpose.msra.mxu0 0
        %9968 = vmatprep.subr.bf16.mxu0 0
        %9969 = vmatpush1.bf16.xpose.msra.mxu0 0
        %9970 = vmatprep.subr.bf16.mxu0 0
        %9971 = vmatpush1.bf16.xpose.msra.mxu0 0
        %9972 = vmatprep.subr.bf16.mxu0 0
        %9973 = vmatpush1.bf16.xpose.msra.mxu0 0
        %9974 = vmatprep.subr.bf16.mxu0 0
        %9975 = vmatpush1.bf16.xpose.msra.mxu0 0
        %9976 = vmatprep.subr.bf16.mxu0 0
        %9977 = vmatpush1.bf16.xpose.msra.mxu0 0
        %9978 = vmatprep.subr.bf16.mxu0 0
        %9979 = vmatpush1.bf16.xpose.msra.mxu0 0
        %9980 = vmatprep.subr.bf16.mxu0 0
        %9981 = vmatpush1.bf16.xpose.msra.mxu0 0
        %9982 = vmatprep.mubr.bf16.mxu0 0
        %9983 = vmatmul.mubr.bf16.gmra.mrb[0].mxu0 %v9903
        %v9984 = vpop.f32.mrb[0].mxu0
        %v9985 = vadd.f32 %v615, %v9984
        %v9986 = vpop.f32.mrb[0].mxu0
        %v9987 = vpop.f32.mrb[0].mxu0
        %v9988 = vadd.f32 %v616, %v9987
        %v9989 = vpop.f32.mrb[0].mxu0
        %9990 = vmatprep.mubr.bf16.mxu0 0
        %9991 = vmatmul.mubr.bf16.gmra.mrb[0].mxu0 %v9906
        %v9992 = vpop.f32.mrb[0].mxu0
        %v9993 = vadd.f32 %v617, %v9992
        %v9994 = vpop.f32.mrb[0].mxu0
        %v9995 = vpop.f32.mrb[0].mxu0
        %v9996 = vadd.f32 %v618, %v9995
        %v9997 = vpop.f32.mrb[0].mxu0
        %9998 = vmatprep.mubr.bf16.mxu0 0
        %9999 = vmatmul.mubr.bf16.gmra.mrb[0].mxu0 %v9909
        %v10000 = vpop.f32.mrb[0].mxu0
        %v10001 = vadd.f32 %v619, %v10000
        %v10002 = vpop.f32.mrb[0].mxu0
        %v10003 = vpop.f32.mrb[0].mxu0
        %v10004 = vadd.f32 %v620, %v10003
        %v10005 = vpop.f32.mrb[0].mxu0
        %10006 = vmatprep.mubr.bf16.mxu0 0
        %10007 = vmatmul.mubr.bf16.gmra.mrb[0].mxu0 %v9912
        %v10008 = vpop.f32.mrb[0].mxu0
        %v10009 = vadd.f32 %v621, %v10008
        %v10010 = vpop.f32.mrb[0].mxu0
        %v10011 = vpop.f32.mrb[0].mxu0
        %v10012 = vadd.f32 %v622, %v10011
        %v10013 = vpop.f32.mrb[0].mxu0
        %10014 = vmatprep.mubr.bf16.mxu0 0
        %10015 = vmatmul.mubr.bf16.gmra.mrb[0].mxu0 %v9915
        %v10016 = vpop.f32.mrb[0].mxu0
        %v10017 = vadd.f32 %v623, %v10016
        %v10018 = vpop.f32.mrb[0].mxu0
        %v10019 = vpop.f32.mrb[0].mxu0
        %v10020 = vadd.f32 %v624, %v10019
        %v10021 = vpop.f32.mrb[0].mxu0
        %10022 = vmatprep.mubr.bf16.mxu0 0
        %10023 = vmatmul.mubr.bf16.gmra.mrb[0].mxu0 %v9918
        %v10024 = vpop.f32.mrb[0].mxu0
        %v10025 = vadd.f32 %v625, %v10024
        %v10026 = vpop.f32.mrb[0].mxu0
        %v10027 = vpop.f32.mrb[0].mxu0
        %v10028 = vadd.f32 %v626, %v10027
        %v10029 = vpop.f32.mrb[0].mxu0
        %10030 = vmatprep.mubr.bf16.mxu0 0
        %10031 = vmatmul.mubr.bf16.gmra.mrb[0].mxu0 %v9921
        %v10032 = vpop.f32.mrb[0].mxu0
        %v10033 = vadd.f32 %v627, %v10032
        %v10034 = vpop.f32.mrb[0].mxu0
        %v10035 = vpop.f32.mrb[0].mxu0
        %v10036 = vadd.f32 %v628, %v10035
        %v10037 = vpop.f32.mrb[0].mxu0
        %10038 = vmatprep.mubr.bf16.mxu0 0
        %10039 = vmatmul.mubr.bf16.gmra.mrb[0].mxu0 %v9924
        %v10040 = vpop.f32.mrb[0].mxu0
        %v10041 = vadd.f32 %v629, %v10040
        %v10042 = vpop.f32.mrb[0].mxu0
        %v10043 = vpop.f32.mrb[0].mxu0
        %v10044 = vadd.f32 %v630, %v10043
        %v10045 = vpop.f32.mrb[0].mxu0
        %10046 = vdwg.mxu0
        %10047 = vmax.xlane.f32.xlu0 %v9140
        %v10048 = vpop.xlane.xlu0 %10047
        %10049 = vmax.xlane.f32.xlu0 %v9143
        %v10050 = vpop.xlane.xlu0 %10049
        %10051 = vmax.xlane.f32.xlu0 %v9148
        %v10052 = vpop.xlane.xlu0 %10051
        %10053 = vmax.xlane.f32.xlu0 %v9151
        %v10054 = vpop.xlane.xlu0 %10053
        %10055 = vmax.xlane.f32.xlu0 %v9156
        %v10056 = vpop.xlane.xlu0 %10055
        %10057 = vmax.xlane.f32.xlu0 %v9159
        %v10058 = vpop.xlane.xlu0 %10057
        %10059 = vmax.xlane.f32.xlu0 %v9164
        %v10060 = vpop.xlane.xlu0 %10059
        %10061 = vmax.xlane.f32.xlu0 %v9167
        %v10062 = vpop.xlane.xlu0 %10061
        %10063 = vmax.xlane.f32.xlu0 %v9172
        %v10064 = vpop.xlane.xlu0 %10063
        %10065 = vmax.xlane.f32.xlu0 %v9175
        %v10066 = vpop.xlane.xlu0 %10065
        %10067 = vmax.xlane.f32.xlu0 %v9180
        %v10068 = vpop.xlane.xlu0 %10067
        %10069 = vmax.xlane.f32.xlu0 %v9183
        %v10070 = vpop.xlane.xlu0 %10069
        %10071 = vmax.xlane.f32.xlu0 %v9188
        %v10072 = vpop.xlane.xlu0 %10071
        %10073 = vmax.xlane.f32.xlu0 %v9191
        %v10074 = vpop.xlane.xlu0 %10073
        %10075 = vmax.xlane.f32.xlu0 %v9196
        %v10076 = vpop.xlane.xlu0 %10075
        %10077 = vmax.xlane.f32.xlu0 %v9199
        %v10078 = vpop.xlane.xlu0 %10077
        %10079 = vmax.xlane.f32.xlu0 %v9309
        %v10080 = vpop.xlane.xlu0 %10079
        %10081 = vmax.xlane.f32.xlu0 %v9312
        %v10082 = vpop.xlane.xlu0 %10081
        %10083 = vmax.xlane.f32.xlu0 %v9317
        %v10084 = vpop.xlane.xlu0 %10083
        %10085 = vmax.xlane.f32.xlu0 %v9320
        %v10086 = vpop.xlane.xlu0 %10085
        %10087 = vmax.xlane.f32.xlu0 %v9325
        %v10088 = vpop.xlane.xlu0 %10087
        %10089 = vmax.xlane.f32.xlu0 %v9328
        %v10090 = vpop.xlane.xlu0 %10089
        %10091 = vmax.xlane.f32.xlu0 %v9333
        %v10092 = vpop.xlane.xlu0 %10091
        %10093 = vmax.xlane.f32.xlu0 %v9336
        %v10094 = vpop.xlane.xlu0 %10093
        %10095 = vmax.xlane.f32.xlu0 %v9341
        %v10096 = vpop.xlane.xlu0 %10095
        %10097 = vmax.xlane.f32.xlu0 %v9344
        %v10098 = vpop.xlane.xlu0 %10097
        %10099 = vmax.xlane.f32.xlu0 %v9349
        %v10100 = vpop.xlane.xlu0 %10099
        %10101 = vmax.xlane.f32.xlu0 %v9352
        %v10102 = vpop.xlane.xlu0 %10101
        %10103 = vmax.xlane.f32.xlu0 %v9357
        %v10104 = vpop.xlane.xlu0 %10103
        %10105 = vmax.xlane.f32.xlu0 %v9360
        %v10106 = vpop.xlane.xlu0 %10105
        %10107 = vmax.xlane.f32.xlu0 %v9365
        %v10108 = vpop.xlane.xlu0 %10107
        %10109 = vmax.xlane.f32.xlu0 %v9368
        %v10110 = vpop.xlane.xlu0 %10109
        %10111 = vmax.xlane.f32.xlu0 %v9478
        %v10112 = vpop.xlane.xlu0 %10111
        %10113 = vmax.xlane.f32.xlu0 %v9481
        %v10114 = vpop.xlane.xlu0 %10113
        %10115 = vmax.xlane.f32.xlu0 %v9486
        %v10116 = vpop.xlane.xlu0 %10115
        %10117 = vmax.xlane.f32.xlu0 %v9489
        %v10118 = vpop.xlane.xlu0 %10117
        %10119 = vmax.xlane.f32.xlu0 %v9494
        %v10120 = vpop.xlane.xlu0 %10119
        %10121 = vmax.xlane.f32.xlu0 %v9497
        %v10122 = vpop.xlane.xlu0 %10121
        %10123 = vmax.xlane.f32.xlu0 %v9502
        %v10124 = vpop.xlane.xlu0 %10123
        %10125 = vmax.xlane.f32.xlu0 %v9505
        %v10126 = vpop.xlane.xlu0 %10125
        %10127 = vmax.xlane.f32.xlu0 %v9510
        %v10128 = vpop.xlane.xlu0 %10127
        %10129 = vmax.xlane.f32.xlu0 %v9513
        %v10130 = vpop.xlane.xlu0 %10129
        %10131 = vmax.xlane.f32.xlu0 %v9518
        %v10132 = vpop.xlane.xlu0 %10131
        %10133 = vmax.xlane.f32.xlu0 %v9521
        %v10134 = vpop.xlane.xlu0 %10133
        %10135 = vmax.xlane.f32.xlu0 %v9526
        %v10136 = vpop.xlane.xlu0 %10135
        %10137 = vmax.xlane.f32.xlu0 %v9529
        %v10138 = vpop.xlane.xlu0 %10137
        %10139 = vmax.xlane.f32.xlu0 %v9534
        %v10140 = vpop.xlane.xlu0 %10139
        %10141 = vmax.xlane.f32.xlu0 %v9537
        %v10142 = vpop.xlane.xlu0 %10141
        %10143 = vmax.xlane.f32.xlu0 %v9647
        %v10144 = vpop.xlane.xlu0 %10143
        %10145 = vmax.xlane.f32.xlu0 %v9650
        %v10146 = vpop.xlane.xlu0 %10145
        %10147 = vmax.xlane.f32.xlu0 %v9655
        %v10148 = vpop.xlane.xlu0 %10147
        %10149 = vmax.xlane.f32.xlu0 %v9658
        %v10150 = vpop.xlane.xlu0 %10149
        %10151 = vmax.xlane.f32.xlu0 %v9663
        %v10152 = vpop.xlane.xlu0 %10151
        %10153 = vmax.xlane.f32.xlu0 %v9666
        %v10154 = vpop.xlane.xlu0 %10153
        %10155 = vmax.xlane.f32.xlu0 %v9671
        %v10156 = vpop.xlane.xlu0 %10155
        %10157 = vmax.xlane.f32.xlu0 %v9674
        %v10158 = vpop.xlane.xlu0 %10157
        %10159 = vmax.xlane.f32.xlu0 %v9679
        %v10160 = vpop.xlane.xlu0 %10159
        %10161 = vmax.xlane.f32.xlu0 %v9682
        %v10162 = vpop.xlane.xlu0 %10161
        %10163 = vmax.xlane.f32.xlu0 %v9687
        %v10164 = vpop.xlane.xlu0 %10163
        %10165 = vmax.xlane.f32.xlu0 %v9690
        %v10166 = vpop.xlane.xlu0 %10165
        %10167 = vmax.xlane.f32.xlu0 %v9695
        %v10168 = vpop.xlane.xlu0 %10167
        %10169 = vmax.xlane.f32.xlu0 %v9698
        %v10170 = vpop.xlane.xlu0 %10169
        %10171 = vmax.xlane.f32.xlu0 %v9703
        %v10172 = vpop.xlane.xlu0 %10171
        %10173 = vmax.xlane.f32.xlu0 %v9706
        %v10174 = vpop.xlane.xlu0 %10173
        %10175 = vmax.xlane.f32.xlu0 %v9816
        %v10176 = vpop.xlane.xlu0 %10175
        %10177 = vmax.xlane.f32.xlu0 %v9819
        %v10178 = vpop.xlane.xlu0 %10177
        %10179 = vmax.xlane.f32.xlu0 %v9824
        %v10180 = vpop.xlane.xlu0 %10179
        %10181 = vmax.xlane.f32.xlu0 %v9827
        %v10182 = vpop.xlane.xlu0 %10181
        %10183 = vmax.xlane.f32.xlu0 %v9832
        %v10184 = vpop.xlane.xlu0 %10183
        %10185 = vmax.xlane.f32.xlu0 %v9835
        %v10186 = vpop.xlane.xlu0 %10185
        %10187 = vmax.xlane.f32.xlu0 %v9840
        %v10188 = vpop.xlane.xlu0 %10187
        %10189 = vmax.xlane.f32.xlu0 %v9843
        %v10190 = vpop.xlane.xlu0 %10189
        %10191 = vmax.xlane.f32.xlu0 %v9848
        %v10192 = vpop.xlane.xlu0 %10191
        %10193 = vmax.xlane.f32.xlu0 %v9851
        %v10194 = vpop.xlane.xlu0 %10193
        %10195 = vmax.xlane.f32.xlu0 %v9856
        %v10196 = vpop.xlane.xlu0 %10195
        %10197 = vmax.xlane.f32.xlu0 %v9859
        %v10198 = vpop.xlane.xlu0 %10197
        %10199 = vmax.xlane.f32.xlu0 %v9864
        %v10200 = vpop.xlane.xlu0 %10199
        %10201 = vmax.xlane.f32.xlu0 %v9867
        %v10202 = vpop.xlane.xlu0 %10201
        %10203 = vmax.xlane.f32.xlu0 %v9872
        %v10204 = vpop.xlane.xlu0 %10203
        %10205 = vmax.xlane.f32.xlu0 %v9875
        %v10206 = vpop.xlane.xlu0 %10205
        %10207 = vmax.xlane.f32.xlu0 %v9985
        %v10208 = vpop.xlane.xlu0 %10207
        %10209 = vmax.xlane.f32.xlu0 %v9988
        %v10210 = vpop.xlane.xlu0 %10209
        %10211 = vmax.xlane.f32.xlu0 %v9993
        %v10212 = vpop.xlane.xlu0 %10211
        %10213 = vmax.xlane.f32.xlu0 %v9996
        %v10214 = vpop.xlane.xlu0 %10213
        %10215 = vmax.xlane.f32.xlu0 %v10001
        %v10216 = vpop.xlane.xlu0 %10215
        %10217 = vmax.xlane.f32.xlu0 %v10004
        %v10218 = vpop.xlane.xlu0 %10217
        %10219 = vmax.xlane.f32.xlu0 %v10009
        %v10220 = vpop.xlane.xlu0 %10219
        %10221 = vmax.xlane.f32.xlu0 %v10012
        %v10222 = vpop.xlane.xlu0 %10221
        %10223 = vmax.xlane.f32.xlu0 %v10017
        %v10224 = vpop.xlane.xlu0 %10223
        %10225 = vmax.xlane.f32.xlu0 %v10020
        %v10226 = vpop.xlane.xlu0 %10225
        %10227 = vmax.xlane.f32.xlu0 %v10025
        %v10228 = vpop.xlane.xlu0 %10227
        %10229 = vmax.xlane.f32.xlu0 %v10028
        %v10230 = vpop.xlane.xlu0 %10229
        %10231 = vmax.xlane.f32.xlu0 %v10033
        %v10232 = vpop.xlane.xlu0 %10231
        %10233 = vmax.xlane.f32.xlu0 %v10036
        %v10234 = vpop.xlane.xlu0 %10233
        %10235 = vmax.xlane.f32.xlu0 %v10041
        %v10236 = vpop.xlane.xlu0 %10235
        %10237 = vmax.xlane.f32.xlu0 %v10044
        %v10238 = vpop.xlane.xlu0 %10237
        %v10239 = vsub.f32 %v9140, %v10048
        %v10240 = vsub.f32 %v9143, %v10050
        %v10241 = vsub.f32 %v9148, %v10052
        %v10242 = vsub.f32 %v9151, %v10054
        %v10243 = vsub.f32 %v9156, %v10056
        %v10244 = vsub.f32 %v9159, %v10058
        %v10245 = vsub.f32 %v9164, %v10060
        %v10246 = vsub.f32 %v9167, %v10062
        %v10247 = vsub.f32 %v9172, %v10064
        %v10248 = vsub.f32 %v9175, %v10066
        %v10249 = vsub.f32 %v9180, %v10068
        %v10250 = vsub.f32 %v9183, %v10070
        %v10251 = vsub.f32 %v9188, %v10072
        %v10252 = vsub.f32 %v9191, %v10074
        %v10253 = vsub.f32 %v9196, %v10076
        %v10254 = vsub.f32 %v9199, %v10078
        %v10255 = vsub.f32 %v9309, %v10080
        %v10256 = vsub.f32 %v9312, %v10082
        %v10257 = vsub.f32 %v9317, %v10084
        %v10258 = vsub.f32 %v9320, %v10086
        %v10259 = vsub.f32 %v9325, %v10088
        %v10260 = vsub.f32 %v9328, %v10090
        %v10261 = vsub.f32 %v9333, %v10092
        %v10262 = vsub.f32 %v9336, %v10094
        %v10263 = vsub.f32 %v9341, %v10096
        %v10264 = vsub.f32 %v9344, %v10098
        %v10265 = vsub.f32 %v9349, %v10100
        %v10266 = vsub.f32 %v9352, %v10102
        %v10267 = vsub.f32 %v9357, %v10104
        %v10268 = vsub.f32 %v9360, %v10106
        %v10269 = vsub.f32 %v9365, %v10108
        %v10270 = vsub.f32 %v9368, %v10110
        %v10271 = vsub.f32 %v9478, %v10112
        %v10272 = vsub.f32 %v9481, %v10114
        %v10273 = vsub.f32 %v9486, %v10116
        %v10274 = vsub.f32 %v9489, %v10118
        %v10275 = vsub.f32 %v9494, %v10120
        %v10276 = vsub.f32 %v9497, %v10122
        %v10277 = vsub.f32 %v9502, %v10124
        %v10278 = vsub.f32 %v9505, %v10126
        %v10279 = vsub.f32 %v9510, %v10128
        %v10280 = vsub.f32 %v9513, %v10130
        %v10281 = vsub.f32 %v9518, %v10132
        %v10282 = vsub.f32 %v9521, %v10134
        %v10283 = vsub.f32 %v9526, %v10136
        %v10284 = vsub.f32 %v9529, %v10138
        %v10285 = vsub.f32 %v9534, %v10140
        %v10286 = vsub.f32 %v9537, %v10142
        %v10287 = vsub.f32 %v9647, %v10144
        %v10288 = vsub.f32 %v9650, %v10146
        %v10289 = vsub.f32 %v9655, %v10148
        %v10290 = vsub.f32 %v9658, %v10150
        %v10291 = vsub.f32 %v9663, %v10152
        %v10292 = vsub.f32 %v9666, %v10154
        %v10293 = vsub.f32 %v9671, %v10156
        %v10294 = vsub.f32 %v9674, %v10158
        %v10295 = vsub.f32 %v9679, %v10160
        %v10296 = vsub.f32 %v9682, %v10162
        %v10297 = vsub.f32 %v9687, %v10164
        %v10298 = vsub.f32 %v9690, %v10166
        %v10299 = vsub.f32 %v9695, %v10168
        %v10300 = vsub.f32 %v9698, %v10170
        %v10301 = vsub.f32 %v9703, %v10172
        %v10302 = vsub.f32 %v9706, %v10174
        %v10303 = vsub.f32 %v9816, %v10176
        %v10304 = vsub.f32 %v9819, %v10178
        %v10305 = vsub.f32 %v9824, %v10180
        %v10306 = vsub.f32 %v9827, %v10182
        %v10307 = vsub.f32 %v9832, %v10184
        %v10308 = vsub.f32 %v9835, %v10186
        %v10309 = vsub.f32 %v9840, %v10188
        %v10310 = vsub.f32 %v9843, %v10190
        %v10311 = vsub.f32 %v9848, %v10192
        %v10312 = vsub.f32 %v9851, %v10194
        %v10313 = vsub.f32 %v9856, %v10196
        %v10314 = vsub.f32 %v9859, %v10198
        %v10315 = vsub.f32 %v9864, %v10200
        %v10316 = vsub.f32 %v9867, %v10202
        %v10317 = vsub.f32 %v9872, %v10204
        %v10318 = vsub.f32 %v9875, %v10206
        %v10319 = vsub.f32 %v9985, %v10208
        %v10320 = vsub.f32 %v9988, %v10210
        %v10321 = vsub.f32 %v9993, %v10212
        %v10322 = vsub.f32 %v9996, %v10214
        %v10323 = vsub.f32 %v10001, %v10216
        %v10324 = vsub.f32 %v10004, %v10218
        %v10325 = vsub.f32 %v10009, %v10220
        %v10326 = vsub.f32 %v10012, %v10222
        %v10327 = vsub.f32 %v10017, %v10224
        %v10328 = vsub.f32 %v10020, %v10226
        %v10329 = vsub.f32 %v10025, %v10228
        %v10330 = vsub.f32 %v10028, %v10230
        %v10331 = vsub.f32 %v10033, %v10232
        %v10332 = vsub.f32 %v10036, %v10234
        %v10333 = vsub.f32 %v10041, %v10236
        %v10334 = vsub.f32 %v10044, %v10238
        %v10335 = vmul.f32 %v10239, 1.442695
        %v10336 = vpow.pop %v10335
        %v10337 = vmul.f32 %v10240, 1.442695
        %v10338 = vpow.pop %v10337
        %v10339 = vmul.f32 %v10241, 1.442695
        %v10340 = vpow.pop %v10339
        %v10341 = vmul.f32 %v10242, 1.442695
        %v10342 = vpow.pop %v10341
        %v10343 = vmul.f32 %v10243, 1.442695
        %v10344 = vpow.pop %v10343
        %v10345 = vmul.f32 %v10244, 1.442695
        %v10346 = vpow.pop %v10345
        %v10347 = vmul.f32 %v10245, 1.442695
        %v10348 = vpow.pop %v10347
        %v10349 = vmul.f32 %v10246, 1.442695
        %v10350 = vpow.pop %v10349
        %v10351 = vmul.f32 %v10247, 1.442695
        %v10352 = vpow.pop %v10351
        %v10353 = vmul.f32 %v10248, 1.442695
        %v10354 = vpow.pop %v10353
        %v10355 = vmul.f32 %v10249, 1.442695
        %v10356 = vpow.pop %v10355
        %v10357 = vmul.f32 %v10250, 1.442695
        %v10358 = vpow.pop %v10357
        %v10359 = vmul.f32 %v10251, 1.442695
        %v10360 = vpow.pop %v10359
        %v10361 = vmul.f32 %v10252, 1.442695
        %v10362 = vpow.pop %v10361
        %v10363 = vmul.f32 %v10253, 1.442695
        %v10364 = vpow.pop %v10363
        %v10365 = vmul.f32 %v10254, 1.442695
        %v10366 = vpow.pop %v10365
        %v10367 = vmul.f32 %v10255, 1.442695
        %v10368 = vpow.pop %v10367
        %v10369 = vmul.f32 %v10256, 1.442695
        %v10370 = vpow.pop %v10369
        %v10371 = vmul.f32 %v10257, 1.442695
        %v10372 = vpow.pop %v10371
        %v10373 = vmul.f32 %v10258, 1.442695
        %v10374 = vpow.pop %v10373
        %v10375 = vmul.f32 %v10259, 1.442695
        %v10376 = vpow.pop %v10375
        %v10377 = vmul.f32 %v10260, 1.442695
        %v10378 = vpow.pop %v10377
        %v10379 = vmul.f32 %v10261, 1.442695
        %v10380 = vpow.pop %v10379
        %v10381 = vmul.f32 %v10262, 1.442695
        %v10382 = vpow.pop %v10381
        %v10383 = vmul.f32 %v10263, 1.442695
        %v10384 = vpow.pop %v10383
        %v10385 = vmul.f32 %v10264, 1.442695
        %v10386 = vpow.pop %v10385
        %v10387 = vmul.f32 %v10265, 1.442695
        %v10388 = vpow.pop %v10387
        %v10389 = vmul.f32 %v10266, 1.442695
        %v10390 = vpow.pop %v10389
        %v10391 = vmul.f32 %v10267, 1.442695
        %v10392 = vpow.pop %v10391
        %v10393 = vmul.f32 %v10268, 1.442695
        %v10394 = vpow.pop %v10393
        %v10395 = vmul.f32 %v10269, 1.442695
        %v10396 = vpow.pop %v10395
        %v10397 = vmul.f32 %v10270, 1.442695
        %v10398 = vpow.pop %v10397
        %v10399 = vmul.f32 %v10271, 1.442695
        %v10400 = vpow.pop %v10399
        %v10401 = vmul.f32 %v10272, 1.442695
        %v10402 = vpow.pop %v10401
        %v10403 = vmul.f32 %v10273, 1.442695
        %v10404 = vpow.pop %v10403
        %v10405 = vmul.f32 %v10274, 1.442695
        %v10406 = vpow.pop %v10405
        %v10407 = vmul.f32 %v10275, 1.442695
        %v10408 = vpow.pop %v10407
        %v10409 = vmul.f32 %v10276, 1.442695
        %v10410 = vpow.pop %v10409
        %v10411 = vmul.f32 %v10277, 1.442695
        %v10412 = vpow.pop %v10411
        %v10413 = vmul.f32 %v10278, 1.442695
        %v10414 = vpow.pop %v10413
        %v10415 = vmul.f32 %v10279, 1.442695
        %v10416 = vpow.pop %v10415
        %v10417 = vmul.f32 %v10280, 1.442695
        %v10418 = vpow.pop %v10417
        %v10419 = vmul.f32 %v10281, 1.442695
        %v10420 = vpow.pop %v10419
        %v10421 = vmul.f32 %v10282, 1.442695
        %v10422 = vpow.pop %v10421
        %v10423 = vmul.f32 %v10283, 1.442695
        %v10424 = vpow.pop %v10423
        %v10425 = vmul.f32 %v10284, 1.442695
        %v10426 = vpow.pop %v10425
        %v10427 = vmul.f32 %v10285, 1.442695
        %v10428 = vpow.pop %v10427
        %v10429 = vmul.f32 %v10286, 1.442695
        %v10430 = vpow.pop %v10429
        %v10431 = vmul.f32 %v10287, 1.442695
        %v10432 = vpow.pop %v10431
        %v10433 = vmul.f32 %v10288, 1.442695
        %v10434 = vpow.pop %v10433
        %v10435 = vmul.f32 %v10289, 1.442695
        %v10436 = vpow.pop %v10435
        %v10437 = vmul.f32 %v10290, 1.442695
        %v10438 = vpow.pop %v10437
        %v10439 = vmul.f32 %v10291, 1.442695
        %v10440 = vpow.pop %v10439
        %v10441 = vmul.f32 %v10292, 1.442695
        %v10442 = vpow.pop %v10441
        %v10443 = vmul.f32 %v10293, 1.442695
        %v10444 = vpow.pop %v10443
        %v10445 = vmul.f32 %v10294, 1.442695
        %v10446 = vpow.pop %v10445
        %v10447 = vmul.f32 %v10295, 1.442695
        %v10448 = vpow.pop %v10447
        %v10449 = vmul.f32 %v10296, 1.442695
        %v10450 = vpow.pop %v10449
        %v10451 = vmul.f32 %v10297, 1.442695
        %v10452 = vpow.pop %v10451
        %v10453 = vmul.f32 %v10298, 1.442695
        %v10454 = vpow.pop %v10453
        %v10455 = vmul.f32 %v10299, 1.442695
        %v10456 = vpow.pop %v10455
        %v10457 = vmul.f32 %v10300, 1.442695
        %v10458 = vpow.pop %v10457
        %v10459 = vmul.f32 %v10301, 1.442695
        %v10460 = vpow.pop %v10459
        %v10461 = vmul.f32 %v10302, 1.442695
        %v10462 = vpow.pop %v10461
        %v10463 = vmul.f32 %v10303, 1.442695
        %v10464 = vpow.pop %v10463
        %v10465 = vmul.f32 %v10304, 1.442695
        %v10466 = vpow.pop %v10465
        %v10467 = vmul.f32 %v10305, 1.442695
        %v10468 = vpow.pop %v10467
        %v10469 = vmul.f32 %v10306, 1.442695
        %v10470 = vpow.pop %v10469
        %v10471 = vmul.f32 %v10307, 1.442695
        %v10472 = vpow.pop %v10471
        %v10473 = vmul.f32 %v10308, 1.442695
        %v10474 = vpow.pop %v10473
        %v10475 = vmul.f32 %v10309, 1.442695
        %v10476 = vpow.pop %v10475
        %v10477 = vmul.f32 %v10310, 1.442695
        %v10478 = vpow.pop %v10477
        %v10479 = vmul.f32 %v10311, 1.442695
        %v10480 = vpow.pop %v10479
        %v10481 = vmul.f32 %v10312, 1.442695
        %v10482 = vpow.pop %v10481
        %v10483 = vmul.f32 %v10313, 1.442695
        %v10484 = vpow.pop %v10483
        %v10485 = vmul.f32 %v10314, 1.442695
        %v10486 = vpow.pop %v10485
        %v10487 = vmul.f32 %v10315, 1.442695
        %v10488 = vpow.pop %v10487
        %v10489 = vmul.f32 %v10316, 1.442695
        %v10490 = vpow.pop %v10489
        %v10491 = vmul.f32 %v10317, 1.442695
        %v10492 = vpow.pop %v10491
        %v10493 = vmul.f32 %v10318, 1.442695
        %v10494 = vpow.pop %v10493
        %v10495 = vmul.f32 %v10319, 1.442695
        %v10496 = vpow.pop %v10495
        %v10497 = vmul.f32 %v10320, 1.442695
        %v10498 = vpow.pop %v10497
        %v10499 = vmul.f32 %v10321, 1.442695
        %v10500 = vpow.pop %v10499
        %v10501 = vmul.f32 %v10322, 1.442695
        %v10502 = vpow.pop %v10501
        %v10503 = vmul.f32 %v10323, 1.442695
        %v10504 = vpow.pop %v10503
        %v10505 = vmul.f32 %v10324, 1.442695
        %v10506 = vpow.pop %v10505
        %v10507 = vmul.f32 %v10325, 1.442695
        %v10508 = vpow.pop %v10507
        %v10509 = vmul.f32 %v10326, 1.442695
        %v10510 = vpow.pop %v10509
        %v10511 = vmul.f32 %v10327, 1.442695
        %v10512 = vpow.pop %v10511
        %v10513 = vmul.f32 %v10328, 1.442695
        %v10514 = vpow.pop %v10513
        %v10515 = vmul.f32 %v10329, 1.442695
        %v10516 = vpow.pop %v10515
        %v10517 = vmul.f32 %v10330, 1.442695
        %v10518 = vpow.pop %v10517
        %v10519 = vmul.f32 %v10331, 1.442695
        %v10520 = vpow.pop %v10519
        %v10521 = vmul.f32 %v10332, 1.442695
        %v10522 = vpow.pop %v10521
        %v10523 = vmul.f32 %v10333, 1.442695
        %v10524 = vpow.pop %v10523
        %v10525 = vmul.f32 %v10334, 1.442695
        %v10526 = vpow.pop %v10525
        %10527 = vadd.xlane.f32.xlu0 %v10336
        %v10528 = vpop.xlane.xlu0 %10527
        %10529 = vadd.xlane.f32.xlu0 %v10338
        %v10530 = vpop.xlane.xlu0 %10529
        %10531 = vadd.xlane.f32.xlu0 %v10340
        %v10532 = vpop.xlane.xlu0 %10531
        %10533 = vadd.xlane.f32.xlu0 %v10342
        %v10534 = vpop.xlane.xlu0 %10533
        %10535 = vadd.xlane.f32.xlu0 %v10344
        %v10536 = vpop.xlane.xlu0 %10535
        %10537 = vadd.xlane.f32.xlu0 %v10346
        %v10538 = vpop.xlane.xlu0 %10537
        %10539 = vadd.xlane.f32.xlu0 %v10348
        %v10540 = vpop.xlane.xlu0 %10539
        %10541 = vadd.xlane.f32.xlu0 %v10350
        %v10542 = vpop.xlane.xlu0 %10541
        %10543 = vadd.xlane.f32.xlu0 %v10352
        %v10544 = vpop.xlane.xlu0 %10543
        %10545 = vadd.xlane.f32.xlu0 %v10354
        %v10546 = vpop.xlane.xlu0 %10545
        %10547 = vadd.xlane.f32.xlu0 %v10356
        %v10548 = vpop.xlane.xlu0 %10547
        %10549 = vadd.xlane.f32.xlu0 %v10358
        %v10550 = vpop.xlane.xlu0 %10549
        %10551 = vadd.xlane.f32.xlu0 %v10360
        %v10552 = vpop.xlane.xlu0 %10551
        %10553 = vadd.xlane.f32.xlu0 %v10362
        %v10554 = vpop.xlane.xlu0 %10553
        %10555 = vadd.xlane.f32.xlu0 %v10364
        %v10556 = vpop.xlane.xlu0 %10555
        %10557 = vadd.xlane.f32.xlu0 %v10366
        %v10558 = vpop.xlane.xlu0 %10557
        %10559 = vadd.xlane.f32.xlu0 %v10368
        %v10560 = vpop.xlane.xlu0 %10559
        %10561 = vadd.xlane.f32.xlu0 %v10370
        %v10562 = vpop.xlane.xlu0 %10561
        %10563 = vadd.xlane.f32.xlu0 %v10372
        %v10564 = vpop.xlane.xlu0 %10563
        %10565 = vadd.xlane.f32.xlu0 %v10374
        %v10566 = vpop.xlane.xlu0 %10565
        %10567 = vadd.xlane.f32.xlu0 %v10376
        %v10568 = vpop.xlane.xlu0 %10567
        %10569 = vadd.xlane.f32.xlu0 %v10378
        %v10570 = vpop.xlane.xlu0 %10569
        %10571 = vadd.xlane.f32.xlu0 %v10380
        %v10572 = vpop.xlane.xlu0 %10571
        %10573 = vadd.xlane.f32.xlu0 %v10382
        %v10574 = vpop.xlane.xlu0 %10573
        %10575 = vadd.xlane.f32.xlu0 %v10384
        %v10576 = vpop.xlane.xlu0 %10575
        %10577 = vadd.xlane.f32.xlu0 %v10386
        %v10578 = vpop.xlane.xlu0 %10577
        %10579 = vadd.xlane.f32.xlu0 %v10388
        %v10580 = vpop.xlane.xlu0 %10579
        %10581 = vadd.xlane.f32.xlu0 %v10390
        %v10582 = vpop.xlane.xlu0 %10581
        %10583 = vadd.xlane.f32.xlu0 %v10392
        %v10584 = vpop.xlane.xlu0 %10583
        %10585 = vadd.xlane.f32.xlu0 %v10394
        %v10586 = vpop.xlane.xlu0 %10585
        %10587 = vadd.xlane.f32.xlu0 %v10396
        %v10588 = vpop.xlane.xlu0 %10587
        %10589 = vadd.xlane.f32.xlu0 %v10398
        %v10590 = vpop.xlane.xlu0 %10589
        %10591 = vadd.xlane.f32.xlu0 %v10400
        %v10592 = vpop.xlane.xlu0 %10591
        %10593 = vadd.xlane.f32.xlu0 %v10402
        %v10594 = vpop.xlane.xlu0 %10593
        %10595 = vadd.xlane.f32.xlu0 %v10404
        %v10596 = vpop.xlane.xlu0 %10595
        %10597 = vadd.xlane.f32.xlu0 %v10406
        %v10598 = vpop.xlane.xlu0 %10597
        %10599 = vadd.xlane.f32.xlu0 %v10408
        %v10600 = vpop.xlane.xlu0 %10599
        %10601 = vadd.xlane.f32.xlu0 %v10410
        %v10602 = vpop.xlane.xlu0 %10601
        %10603 = vadd.xlane.f32.xlu0 %v10412
        %v10604 = vpop.xlane.xlu0 %10603
        %10605 = vadd.xlane.f32.xlu0 %v10414
        %v10606 = vpop.xlane.xlu0 %10605
        %10607 = vadd.xlane.f32.xlu0 %v10416
        %v10608 = vpop.xlane.xlu0 %10607
        %10609 = vadd.xlane.f32.xlu0 %v10418
        %v10610 = vpop.xlane.xlu0 %10609
        %10611 = vadd.xlane.f32.xlu0 %v10420
        %v10612 = vpop.xlane.xlu0 %10611
        %10613 = vadd.xlane.f32.xlu0 %v10422
        %v10614 = vpop.xlane.xlu0 %10613
        %10615 = vadd.xlane.f32.xlu0 %v10424
        %v10616 = vpop.xlane.xlu0 %10615
        %10617 = vadd.xlane.f32.xlu0 %v10426
        %v10618 = vpop.xlane.xlu0 %10617
        %10619 = vadd.xlane.f32.xlu0 %v10428
        %v10620 = vpop.xlane.xlu0 %10619
        %10621 = vadd.xlane.f32.xlu0 %v10430
        %v10622 = vpop.xlane.xlu0 %10621
        %10623 = vadd.xlane.f32.xlu0 %v10432
        %v10624 = vpop.xlane.xlu0 %10623
        %10625 = vadd.xlane.f32.xlu0 %v10434
        %v10626 = vpop.xlane.xlu0 %10625
        %10627 = vadd.xlane.f32.xlu0 %v10436
        %v10628 = vpop.xlane.xlu0 %10627
        %10629 = vadd.xlane.f32.xlu0 %v10438
        %v10630 = vpop.xlane.xlu0 %10629
        %10631 = vadd.xlane.f32.xlu0 %v10440
        %v10632 = vpop.xlane.xlu0 %10631
        %10633 = vadd.xlane.f32.xlu0 %v10442
        %v10634 = vpop.xlane.xlu0 %10633
        %10635 = vadd.xlane.f32.xlu0 %v10444
        %v10636 = vpop.xlane.xlu0 %10635
        %10637 = vadd.xlane.f32.xlu0 %v10446
        %v10638 = vpop.xlane.xlu0 %10637
        %10639 = vadd.xlane.f32.xlu0 %v10448
        %v10640 = vpop.xlane.xlu0 %10639
        %10641 = vadd.xlane.f32.xlu0 %v10450
        %v10642 = vpop.xlane.xlu0 %10641
        %10643 = vadd.xlane.f32.xlu0 %v10452
        %v10644 = vpop.xlane.xlu0 %10643
        %10645 = vadd.xlane.f32.xlu0 %v10454
        %v10646 = vpop.xlane.xlu0 %10645
        %10647 = vadd.xlane.f32.xlu0 %v10456
        %v10648 = vpop.xlane.xlu0 %10647
        %10649 = vadd.xlane.f32.xlu0 %v10458
        %v10650 = vpop.xlane.xlu0 %10649
        %10651 = vadd.xlane.f32.xlu0 %v10460
        %v10652 = vpop.xlane.xlu0 %10651
        %10653 = vadd.xlane.f32.xlu0 %v10462
        %v10654 = vpop.xlane.xlu0 %10653
        %10655 = vadd.xlane.f32.xlu0 %v10464
        %v10656 = vpop.xlane.xlu0 %10655
        %10657 = vadd.xlane.f32.xlu0 %v10466
        %v10658 = vpop.xlane.xlu0 %10657
        %10659 = vadd.xlane.f32.xlu0 %v10468
        %v10660 = vpop.xlane.xlu0 %10659
        %10661 = vadd.xlane.f32.xlu0 %v10470
        %v10662 = vpop.xlane.xlu0 %10661
        %10663 = vadd.xlane.f32.xlu0 %v10472
        %v10664 = vpop.xlane.xlu0 %10663
        %10665 = vadd.xlane.f32.xlu0 %v10474
        %v10666 = vpop.xlane.xlu0 %10665
        %10667 = vadd.xlane.f32.xlu0 %v10476
        %v10668 = vpop.xlane.xlu0 %10667
        %10669 = vadd.xlane.f32.xlu0 %v10478
        %v10670 = vpop.xlane.xlu0 %10669
        %10671 = vadd.xlane.f32.xlu0 %v10480
        %v10672 = vpop.xlane.xlu0 %10671
        %10673 = vadd.xlane.f32.xlu0 %v10482
        %v10674 = vpop.xlane.xlu0 %10673
        %10675 = vadd.xlane.f32.xlu0 %v10484
        %v10676 = vpop.xlane.xlu0 %10675
        %10677 = vadd.xlane.f32.xlu0 %v10486
        %v10678 = vpop.xlane.xlu0 %10677
        %10679 = vadd.xlane.f32.xlu0 %v10488
        %v10680 = vpop.xlane.xlu0 %10679
        %10681 = vadd.xlane.f32.xlu0 %v10490
        %v10682 = vpop.xlane.xlu0 %10681
        %10683 = vadd.xlane.f32.xlu0 %v10492
        %v10684 = vpop.xlane.xlu0 %10683
        %10685 = vadd.xlane.f32.xlu0 %v10494
        %v10686 = vpop.xlane.xlu0 %10685
        %10687 = vadd.xlane.f32.xlu0 %v10496
        %v10688 = vpop.xlane.xlu0 %10687
        %10689 = vadd.xlane.f32.xlu0 %v10498
        %v10690 = vpop.xlane.xlu0 %10689
        %10691 = vadd.xlane.f32.xlu0 %v10500
        %v10692 = vpop.xlane.xlu0 %10691
        %10693 = vadd.xlane.f32.xlu0 %v10502
        %v10694 = vpop.xlane.xlu0 %10693
        %10695 = vadd.xlane.f32.xlu0 %v10504
        %v10696 = vpop.xlane.xlu0 %10695
        %10697 = vadd.xlane.f32.xlu0 %v10506
        %v10698 = vpop.xlane.xlu0 %10697
        %10699 = vadd.xlane.f32.xlu0 %v10508
        %v10700 = vpop.xlane.xlu0 %10699
        %10701 = vadd.xlane.f32.xlu0 %v10510
        %v10702 = vpop.xlane.xlu0 %10701
        %10703 = vadd.xlane.f32.xlu0 %v10512
        %v10704 = vpop.xlane.xlu0 %10703
        %10705 = vadd.xlane.f32.xlu0 %v10514
        %v10706 = vpop.xlane.xlu0 %10705
        %10707 = vadd.xlane.f32.xlu0 %v10516
        %v10708 = vpop.xlane.xlu0 %10707
        %10709 = vadd.xlane.f32.xlu0 %v10518
        %v10710 = vpop.xlane.xlu0 %10709
        %10711 = vadd.xlane.f32.xlu0 %v10520
        %v10712 = vpop.xlane.xlu0 %10711
        %10713 = vadd.xlane.f32.xlu0 %v10522
        %v10714 = vpop.xlane.xlu0 %10713
        %10715 = vadd.xlane.f32.xlu0 %v10524
        %v10716 = vpop.xlane.xlu0 %10715
        %10717 = vadd.xlane.f32.xlu0 %v10526
        %v10718 = vpop.xlane.xlu0 %10717
        %v10719 = vrcp.pop %v10528
        %v10720 = vrcp.pop %v10530
        %v10721 = vrcp.pop %v10532
        %v10722 = vrcp.pop %v10534
        %v10723 = vrcp.pop %v10536
        %v10724 = vrcp.pop %v10538
        %v10725 = vrcp.pop %v10540
        %v10726 = vrcp.pop %v10542
        %v10727 = vrcp.pop %v10544
        %v10728 = vrcp.pop %v10546
        %v10729 = vrcp.pop %v10548
        %v10730 = vrcp.pop %v10550
        %v10731 = vrcp.pop %v10552
        %v10732 = vrcp.pop %v10554
        %v10733 = vrcp.pop %v10556
        %v10734 = vrcp.pop %v10558
        %v10735 = vrcp.pop %v10560
        %v10736 = vrcp.pop %v10562
        %v10737 = vrcp.pop %v10564
        %v10738 = vrcp.pop %v10566
        %v10739 = vrcp.pop %v10568
        %v10740 = vrcp.pop %v10570
        %v10741 = vrcp.pop %v10572
        %v10742 = vrcp.pop %v10574
        %v10743 = vrcp.pop %v10576
        %v10744 = vrcp.pop %v10578
        %v10745 = vrcp.pop %v10580
        %v10746 = vrcp.pop %v10582
        %v10747 = vrcp.pop %v10584
        %v10748 = vrcp.pop %v10586
        %v10749 = vrcp.pop %v10588
        %v10750 = vrcp.pop %v10590
        %v10751 = vrcp.pop %v10592
        %v10752 = vrcp.pop %v10594
        %v10753 = vrcp.pop %v10596
        %v10754 = vrcp.pop %v10598
        %v10755 = vrcp.pop %v10600
        %v10756 = vrcp.pop %v10602
        %v10757 = vrcp.pop %v10604
        %v10758 = vrcp.pop %v10606
        %v10759 = vrcp.pop %v10608
        %v10760 = vrcp.pop %v10610
        %v10761 = vrcp.pop %v10612
        %v10762 = vrcp.pop %v10614
        %v10763 = vrcp.pop %v10616
        %v10764 = vrcp.pop %v10618
        %v10765 = vrcp.pop %v10620
        %v10766 = vrcp.pop %v10622
        %v10767 = vrcp.pop %v10624
        %v10768 = vrcp.pop %v10626
        %v10769 = vrcp.pop %v10628
        %v10770 = vrcp.pop %v10630
        %v10771 = vrcp.pop %v10632
        %v10772 = vrcp.pop %v10634
        %v10773 = vrcp.pop %v10636
        %v10774 = vrcp.pop %v10638
        %v10775 = vrcp.pop %v10640
        %v10776 = vrcp.pop %v10642
        %v10777 = vrcp.pop %v10644
        %v10778 = vrcp.pop %v10646
        %v10779 = vrcp.pop %v10648
        %v10780 = vrcp.pop %v10650
        %v10781 = vrcp.pop %v10652
        %v10782 = vrcp.pop %v10654
        %v10783 = vrcp.pop %v10656
        %v10784 = vrcp.pop %v10658
        %v10785 = vrcp.pop %v10660
        %v10786 = vrcp.pop %v10662
        %v10787 = vrcp.pop %v10664
        %v10788 = vrcp.pop %v10666
        %v10789 = vrcp.pop %v10668
        %v10790 = vrcp.pop %v10670
        %v10791 = vrcp.pop %v10672
        %v10792 = vrcp.pop %v10674
        %v10793 = vrcp.pop %v10676
        %v10794 = vrcp.pop %v10678
        %v10795 = vrcp.pop %v10680
        %v10796 = vrcp.pop %v10682
        %v10797 = vrcp.pop %v10684
        %v10798 = vrcp.pop %v10686
        %v10799 = vrcp.pop %v10688
        %v10800 = vrcp.pop %v10690
        %v10801 = vrcp.pop %v10692
        %v10802 = vrcp.pop %v10694
        %v10803 = vrcp.pop %v10696
        %v10804 = vrcp.pop %v10698
        %v10805 = vrcp.pop %v10700
        %v10806 = vrcp.pop %v10702
        %v10807 = vrcp.pop %v10704
        %v10808 = vrcp.pop %v10706
        %v10809 = vrcp.pop %v10708
        %v10810 = vrcp.pop %v10710
        %v10811 = vrcp.pop %v10712
        %v10812 = vrcp.pop %v10714
        %v10813 = vrcp.pop %v10716
        %v10814 = vrcp.pop %v10718
        %v10815 = vpack.c.bf16 %v10338, %v10336
        %v10816 = vpack.c.bf16 %v10342, %v10340
        %v10817 = vpack.c.bf16 %v10346, %v10344
        %v10818 = vpack.c.bf16 %v10350, %v10348
        %v10819 = vpack.c.bf16 %v10354, %v10352
        %v10820 = vpack.c.bf16 %v10358, %v10356
        %v10821 = vpack.c.bf16 %v10362, %v10360
        %v10822 = vpack.c.bf16 %v10366, %v10364
        %v10823 = vpack.c.bf16 %v10370, %v10368
        %v10824 = vpack.c.bf16 %v10374, %v10372
        %v10825 = vpack.c.bf16 %v10378, %v10376
        %v10826 = vpack.c.bf16 %v10382, %v10380
        %v10827 = vpack.c.bf16 %v10386, %v10384
        %v10828 = vpack.c.bf16 %v10390, %v10388
        %v10829 = vpack.c.bf16 %v10394, %v10392
        %v10830 = vpack.c.bf16 %v10398, %v10396
        %v10831 = vpack.c.bf16 %v10402, %v10400
        %v10832 = vpack.c.bf16 %v10406, %v10404
        %v10833 = vpack.c.bf16 %v10410, %v10408
        %v10834 = vpack.c.bf16 %v10414, %v10412
        %v10835 = vpack.c.bf16 %v10418, %v10416
        %v10836 = vpack.c.bf16 %v10422, %v10420
        %v10837 = vpack.c.bf16 %v10426, %v10424
        %v10838 = vpack.c.bf16 %v10430, %v10428
        %v10839 = vpack.c.bf16 %v10434, %v10432
        %v10840 = vpack.c.bf16 %v10438, %v10436
        %v10841 = vpack.c.bf16 %v10442, %v10440
        %v10842 = vpack.c.bf16 %v10446, %v10444
        %v10843 = vpack.c.bf16 %v10450, %v10448
        %v10844 = vpack.c.bf16 %v10454, %v10452
        %v10845 = vpack.c.bf16 %v10458, %v10456
        %v10846 = vpack.c.bf16 %v10462, %v10460
        %v10847 = vpack.c.bf16 %v10466, %v10464
        %v10848 = vpack.c.bf16 %v10470, %v10468
        %v10849 = vpack.c.bf16 %v10474, %v10472
        %v10850 = vpack.c.bf16 %v10478, %v10476
        %v10851 = vpack.c.bf16 %v10482, %v10480
        %v10852 = vpack.c.bf16 %v10486, %v10484
        %v10853 = vpack.c.bf16 %v10490, %v10488
        %v10854 = vpack.c.bf16 %v10494, %v10492
        %v10855 = vpack.c.bf16 %v10498, %v10496
        %v10856 = vpack.c.bf16 %v10502, %v10500
        %v10857 = vpack.c.bf16 %v10506, %v10504
        %v10858 = vpack.c.bf16 %v10510, %v10508
        %v10859 = vpack.c.bf16 %v10514, %v10512
        %v10860 = vpack.c.bf16 %v10518, %v10516
        %v10861 = vpack.c.bf16 %v10522, %v10520
        %v10862 = vpack.c.bf16 %v10526, %v10524
        %10863 = vmatprep.subr.bf16.mxu0 0
        %10864 = vmatpush1.bf16.msra.mxu0 %v8938
        %10865 = vmatprep.subr.bf16.mxu0 0
        %10866 = vmatpush1.bf16.msra.mxu0 %v8940
        %10867 = vmatprep.subr.bf16.mxu0 0
        %10868 = vmatpush1.bf16.msra.mxu0 %v8942
        %10869 = vmatprep.subr.bf16.mxu0 0
        %10870 = vmatpush1.bf16.msra.mxu0 %v8944
        %10871 = vmatprep.subr.bf16.mxu0 0
        %10872 = vmatpush1.bf16.msra.mxu0 %v8946
        %10873 = vmatprep.subr.bf16.mxu0 0
        %10874 = vmatpush1.bf16.msra.mxu0 %v8948
        %10875 = vmatprep.subr.bf16.mxu0 0
        %10876 = vmatpush1.bf16.msra.mxu0 %v8950
        %10877 = vmatprep.subr.bf16.mxu0 0
        %10878 = vmatpush1.bf16.msra.mxu0 %v8952
        %10879 = vmatprep.subr.bf16.mxu0 0
        %10880 = vmatpush1.bf16.msra.mxu0 0
        %10881 = vmatprep.subr.bf16.mxu0 0
        %10882 = vmatpush1.bf16.msra.mxu0 0
        %10883 = vmatprep.subr.bf16.mxu0 0
        %10884 = vmatpush1.bf16.msra.mxu0 0
        %10885 = vmatprep.subr.bf16.mxu0 0
        %10886 = vmatpush1.bf16.msra.mxu0 0
        %10887 = vmatprep.subr.bf16.mxu0 0
        %10888 = vmatpush1.bf16.msra.mxu0 0
        %10889 = vmatprep.subr.bf16.mxu0 0
        %10890 = vmatpush1.bf16.msra.mxu0 0
        %10891 = vmatprep.subr.bf16.mxu0 0
        %10892 = vmatpush1.bf16.msra.mxu0 0
        %10893 = vmatprep.subr.bf16.mxu0 0
        %10894 = vmatpush1.bf16.msra.mxu0 0
        %10895 = vmatprep.mubr.bf16.mxu0 0
        %10896 = vmatmul.mubr.bf16.gmra.mrb[0].mxu0 %v10815
        %v10897 = vpop.f32.mrb[0].mxu0
        %v10898 = vadd.f32 0.0, %v10897
        %v10899 = vpop.f32.mrb[0].mxu0
        %v10900 = vpop.f32.mrb[0].mxu0
        %v10901 = vadd.f32 0.0, %v10900
        %v10902 = vpop.f32.mrb[0].mxu0
        %10903 = vmatprep.mubr.bf16.mxu0 0
        %10904 = vmatmul.mubr.bf16.gmra.mrb[0].mxu0 %v10816
        %v10905 = vpop.f32.mrb[0].mxu0
        %v10906 = vadd.f32 0.0, %v10905
        %v10907 = vpop.f32.mrb[0].mxu0
        %v10908 = vpop.f32.mrb[0].mxu0
        %v10909 = vadd.f32 0.0, %v10908
        %v10910 = vpop.f32.mrb[0].mxu0
        %10911 = vmatprep.mubr.bf16.mxu0 0
        %10912 = vmatmul.mubr.bf16.gmra.mrb[0].mxu0 %v10817
        %v10913 = vpop.f32.mrb[0].mxu0
        %v10914 = vadd.f32 0.0, %v10913
        %v10915 = vpop.f32.mrb[0].mxu0
        %v10916 = vpop.f32.mrb[0].mxu0
        %v10917 = vadd.f32 0.0, %v10916
        %v10918 = vpop.f32.mrb[0].mxu0
        %10919 = vmatprep.mubr.bf16.mxu0 0
        %10920 = vmatmul.mubr.bf16.gmra.mrb[0].mxu0 %v10818
        %v10921 = vpop.f32.mrb[0].mxu0
        %v10922 = vadd.f32 0.0, %v10921
        %v10923 = vpop.f32.mrb[0].mxu0
        %v10924 = vpop.f32.mrb[0].mxu0
        %v10925 = vadd.f32 0.0, %v10924
        %v10926 = vpop.f32.mrb[0].mxu0
        %10927 = vmatprep.mubr.bf16.mxu0 0
        %10928 = vmatmul.mubr.bf16.gmra.mrb[0].mxu0 %v10819
        %v10929 = vpop.f32.mrb[0].mxu0
        %v10930 = vadd.f32 0.0, %v10929
        %v10931 = vpop.f32.mrb[0].mxu0
        %v10932 = vpop.f32.mrb[0].mxu0
        %v10933 = vadd.f32 0.0, %v10932
        %v10934 = vpop.f32.mrb[0].mxu0
        %10935 = vmatprep.mubr.bf16.mxu0 0
        %10936 = vmatmul.mubr.bf16.gmra.mrb[0].mxu0 %v10820
        %v10937 = vpop.f32.mrb[0].mxu0
        %v10938 = vadd.f32 0.0, %v10937
        %v10939 = vpop.f32.mrb[0].mxu0
        %v10940 = vpop.f32.mrb[0].mxu0
        %v10941 = vadd.f32 0.0, %v10940
        %v10942 = vpop.f32.mrb[0].mxu0
        %10943 = vmatprep.mubr.bf16.mxu0 0
        %10944 = vmatmul.mubr.bf16.gmra.mrb[0].mxu0 %v10821
        %v10945 = vpop.f32.mrb[0].mxu0
        %v10946 = vadd.f32 0.0, %v10945
        %v10947 = vpop.f32.mrb[0].mxu0
        %v10948 = vpop.f32.mrb[0].mxu0
        %v10949 = vadd.f32 0.0, %v10948
        %v10950 = vpop.f32.mrb[0].mxu0
        %10951 = vmatprep.mubr.bf16.mxu0 0
        %10952 = vmatmul.mubr.bf16.gmra.mrb[0].mxu0 %v10822
        %v10953 = vpop.f32.mrb[0].mxu0
        %v10954 = vadd.f32 0.0, %v10953
        %v10955 = vpop.f32.mrb[0].mxu0
        %v10956 = vpop.f32.mrb[0].mxu0
        %v10957 = vadd.f32 0.0, %v10956
        %v10958 = vpop.f32.mrb[0].mxu0
        %10959 = vdwg.mxu0
        %10960 = vmatprep.subr.bf16.mxu0 0
        %10961 = vmatpush1.bf16.msra.mxu0 %v8954
        %10962 = vmatprep.subr.bf16.mxu0 0
        %10963 = vmatpush1.bf16.msra.mxu0 %v8956
        %10964 = vmatprep.subr.bf16.mxu0 0
        %10965 = vmatpush1.bf16.msra.mxu0 %v8958
        %10966 = vmatprep.subr.bf16.mxu0 0
        %10967 = vmatpush1.bf16.msra.mxu0 %v8960
        %10968 = vmatprep.subr.bf16.mxu0 0
        %10969 = vmatpush1.bf16.msra.mxu0 %v8962
        %10970 = vmatprep.subr.bf16.mxu0 0
        %10971 = vmatpush1.bf16.msra.mxu0 %v8964
        %10972 = vmatprep.subr.bf16.mxu0 0
        %10973 = vmatpush1.bf16.msra.mxu0 %v8966
        %10974 = vmatprep.subr.bf16.mxu0 0
        %10975 = vmatpush1.bf16.msra.mxu0 %v8968
        %10976 = vmatprep.subr.bf16.mxu0 0
        %10977 = vmatpush1.bf16.msra.mxu0 0
        %10978 = vmatprep.subr.bf16.mxu0 0
        %10979 = vmatpush1.bf16.msra.mxu0 0
        %10980 = vmatprep.subr.bf16.mxu0 0
        %10981 = vmatpush1.bf16.msra.mxu0 0
        %10982 = vmatprep.subr.bf16.mxu0 0
        %10983 = vmatpush1.bf16.msra.mxu0 0
        %10984 = vmatprep.subr.bf16.mxu0 0
        %10985 = vmatpush1.bf16.msra.mxu0 0
        %10986 = vmatprep.subr.bf16.mxu0 0
        %10987 = vmatpush1.bf16.msra.mxu0 0
        %10988 = vmatprep.subr.bf16.mxu0 0
        %10989 = vmatpush1.bf16.msra.mxu0 0
        %10990 = vmatprep.subr.bf16.mxu0 0
        %10991 = vmatpush1.bf16.msra.mxu0 0
        %10992 = vmatprep.mubr.bf16.mxu0 0
        %10993 = vmatmul.mubr.bf16.gmra.mrb[0].mxu0 %v10823
        %v10994 = vpop.f32.mrb[0].mxu0
        %v10995 = vadd.f32 0.0, %v10994
        %v10996 = vpop.f32.mrb[0].mxu0
        %v10997 = vpop.f32.mrb[0].mxu0
        %v10998 = vadd.f32 0.0, %v10997
        %v10999 = vpop.f32.mrb[0].mxu0
        %11000 = vmatprep.mubr.bf16.mxu0 0
        %11001 = vmatmul.mubr.bf16.gmra.mrb[0].mxu0 %v10824
        %v11002 = vpop.f32.mrb[0].mxu0
        %v11003 = vadd.f32 0.0, %v11002
        %v11004 = vpop.f32.mrb[0].mxu0
        %v11005 = vpop.f32.mrb[0].mxu0
        %v11006 = vadd.f32 0.0, %v11005
        %v11007 = vpop.f32.mrb[0].mxu0
        %11008 = vmatprep.mubr.bf16.mxu0 0
        %11009 = vmatmul.mubr.bf16.gmra.mrb[0].mxu0 %v10825
        %v11010 = vpop.f32.mrb[0].mxu0
        %v11011 = vadd.f32 0.0, %v11010
        %v11012 = vpop.f32.mrb[0].mxu0
        %v11013 = vpop.f32.mrb[0].mxu0
        %v11014 = vadd.f32 0.0, %v11013
        %v11015 = vpop.f32.mrb[0].mxu0
        %11016 = vmatprep.mubr.bf16.mxu0 0
        %11017 = vmatmul.mubr.bf16.gmra.mrb[0].mxu0 %v10826
        %v11018 = vpop.f32.mrb[0].mxu0
        %v11019 = vadd.f32 0.0, %v11018
        %v11020 = vpop.f32.mrb[0].mxu0
        %v11021 = vpop.f32.mrb[0].mxu0
        %v11022 = vadd.f32 0.0, %v11021
        %v11023 = vpop.f32.mrb[0].mxu0
        %11024 = vmatprep.mubr.bf16.mxu0 0
        %11025 = vmatmul.mubr.bf16.gmra.mrb[0].mxu0 %v10827
        %v11026 = vpop.f32.mrb[0].mxu0
        %v11027 = vadd.f32 0.0, %v11026
        %v11028 = vpop.f32.mrb[0].mxu0
        %v11029 = vpop.f32.mrb[0].mxu0
        %v11030 = vadd.f32 0.0, %v11029
        %v11031 = vpop.f32.mrb[0].mxu0
        %11032 = vmatprep.mubr.bf16.mxu0 0
        %11033 = vmatmul.mubr.bf16.gmra.mrb[0].mxu0 %v10828
        %v11034 = vpop.f32.mrb[0].mxu0
        %v11035 = vadd.f32 0.0, %v11034
        %v11036 = vpop.f32.mrb[0].mxu0
        %v11037 = vpop.f32.mrb[0].mxu0
        %v11038 = vadd.f32 0.0, %v11037
        %v11039 = vpop.f32.mrb[0].mxu0
        %11040 = vmatprep.mubr.bf16.mxu0 0
        %11041 = vmatmul.mubr.bf16.gmra.mrb[0].mxu0 %v10829
        %v11042 = vpop.f32.mrb[0].mxu0
        %v11043 = vadd.f32 0.0, %v11042
        %v11044 = vpop.f32.mrb[0].mxu0
        %v11045 = vpop.f32.mrb[0].mxu0
        %v11046 = vadd.f32 0.0, %v11045
        %v11047 = vpop.f32.mrb[0].mxu0
        %11048 = vmatprep.mubr.bf16.mxu0 0
        %11049 = vmatmul.mubr.bf16.gmra.mrb[0].mxu0 %v10830
        %v11050 = vpop.f32.mrb[0].mxu0
        %v11051 = vadd.f32 0.0, %v11050
        %v11052 = vpop.f32.mrb[0].mxu0
        %v11053 = vpop.f32.mrb[0].mxu0
        %v11054 = vadd.f32 0.0, %v11053
        %v11055 = vpop.f32.mrb[0].mxu0
        %11056 = vdwg.mxu0
        %11057 = vmatprep.subr.bf16.mxu0 0
        %11058 = vmatpush1.bf16.msra.mxu0 %v8970
        %11059 = vmatprep.subr.bf16.mxu0 0
        %11060 = vmatpush1.bf16.msra.mxu0 %v8972
        %11061 = vmatprep.subr.bf16.mxu0 0
        %11062 = vmatpush1.bf16.msra.mxu0 %v8974
        %11063 = vmatprep.subr.bf16.mxu0 0
        %11064 = vmatpush1.bf16.msra.mxu0 %v8976
        %11065 = vmatprep.subr.bf16.mxu0 0
        %11066 = vmatpush1.bf16.msra.mxu0 %v8978
        %11067 = vmatprep.subr.bf16.mxu0 0
        %11068 = vmatpush1.bf16.msra.mxu0 %v8980
        %11069 = vmatprep.subr.bf16.mxu0 0
        %11070 = vmatpush1.bf16.msra.mxu0 %v8982
        %11071 = vmatprep.subr.bf16.mxu0 0
        %11072 = vmatpush1.bf16.msra.mxu0 %v8984
        %11073 = vmatprep.subr.bf16.mxu0 0
        %11074 = vmatpush1.bf16.msra.mxu0 0
        %11075 = vmatprep.subr.bf16.mxu0 0
        %11076 = vmatpush1.bf16.msra.mxu0 0
        %11077 = vmatprep.subr.bf16.mxu0 0
        %11078 = vmatpush1.bf16.msra.mxu0 0
        %11079 = vmatprep.subr.bf16.mxu0 0
        %11080 = vmatpush1.bf16.msra.mxu0 0
        %11081 = vmatprep.subr.bf16.mxu0 0
        %11082 = vmatpush1.bf16.msra.mxu0 0
        %11083 = vmatprep.subr.bf16.mxu0 0
        %11084 = vmatpush1.bf16.msra.mxu0 0
        %11085 = vmatprep.subr.bf16.mxu0 0
        %11086 = vmatpush1.bf16.msra.mxu0 0
        %11087 = vmatprep.subr.bf16.mxu0 0
        %11088 = vmatpush1.bf16.msra.mxu0 0
        %11089 = vmatprep.mubr.bf16.mxu0 0
        %11090 = vmatmul.mubr.bf16.gmra.mrb[0].mxu0 %v10831
        %v11091 = vpop.f32.mrb[0].mxu0
        %v11092 = vadd.f32 0.0, %v11091
        %v11093 = vpop.f32.mrb[0].mxu0
        %v11094 = vpop.f32.mrb[0].mxu0
        %v11095 = vadd.f32 0.0, %v11094
        %v11096 = vpop.f32.mrb[0].mxu0
        %11097 = vmatprep.mubr.bf16.mxu0 0
        %11098 = vmatmul.mubr.bf16.gmra.mrb[0].mxu0 %v10832
        %v11099 = vpop.f32.mrb[0].mxu0
        %v11100 = vadd.f32 0.0, %v11099
        %v11101 = vpop.f32.mrb[0].mxu0
        %v11102 = vpop.f32.mrb[0].mxu0
        %v11103 = vadd.f32 0.0, %v11102
        %v11104 = vpop.f32.mrb[0].mxu0
        %11105 = vmatprep.mubr.bf16.mxu0 0
        %11106 = vmatmul.mubr.bf16.gmra.mrb[0].mxu0 %v10833
        %v11107 = vpop.f32.mrb[0].mxu0
        %v11108 = vadd.f32 0.0, %v11107
        %v11109 = vpop.f32.mrb[0].mxu0
        %v11110 = vpop.f32.mrb[0].mxu0
        %v11111 = vadd.f32 0.0, %v11110
        %v11112 = vpop.f32.mrb[0].mxu0
        %11113 = vmatprep.mubr.bf16.mxu0 0
        %11114 = vmatmul.mubr.bf16.gmra.mrb[0].mxu0 %v10834
        %v11115 = vpop.f32.mrb[0].mxu0
        %v11116 = vadd.f32 0.0, %v11115
        %v11117 = vpop.f32.mrb[0].mxu0
        %v11118 = vpop.f32.mrb[0].mxu0
        %v11119 = vadd.f32 0.0, %v11118
        %v11120 = vpop.f32.mrb[0].mxu0
        %11121 = vmatprep.mubr.bf16.mxu0 0
        %11122 = vmatmul.mubr.bf16.gmra.mrb[0].mxu0 %v10835
        %v11123 = vpop.f32.mrb[0].mxu0
        %v11124 = vadd.f32 0.0, %v11123
        %v11125 = vpop.f32.mrb[0].mxu0
        %v11126 = vpop.f32.mrb[0].mxu0
        %v11127 = vadd.f32 0.0, %v11126
        %v11128 = vpop.f32.mrb[0].mxu0
        %11129 = vmatprep.mubr.bf16.mxu0 0
        %11130 = vmatmul.mubr.bf16.gmra.mrb[0].mxu0 %v10836
        %v11131 = vpop.f32.mrb[0].mxu0
        %v11132 = vadd.f32 0.0, %v11131
        %v11133 = vpop.f32.mrb[0].mxu0
        %v11134 = vpop.f32.mrb[0].mxu0
        %v11135 = vadd.f32 0.0, %v11134
        %v11136 = vpop.f32.mrb[0].mxu0
        %11137 = vmatprep.mubr.bf16.mxu0 0
        %11138 = vmatmul.mubr.bf16.gmra.mrb[0].mxu0 %v10837
        %v11139 = vpop.f32.mrb[0].mxu0
        %v11140 = vadd.f32 0.0, %v11139
        %v11141 = vpop.f32.mrb[0].mxu0
        %v11142 = vpop.f32.mrb[0].mxu0
        %v11143 = vadd.f32 0.0, %v11142
        %v11144 = vpop.f32.mrb[0].mxu0
        %11145 = vmatprep.mubr.bf16.mxu0 0
        %11146 = vmatmul.mubr.bf16.gmra.mrb[0].mxu0 %v10838
        %v11147 = vpop.f32.mrb[0].mxu0
        %v11148 = vadd.f32 0.0, %v11147
        %v11149 = vpop.f32.mrb[0].mxu0
        %v11150 = vpop.f32.mrb[0].mxu0
        %v11151 = vadd.f32 0.0, %v11150
        %v11152 = vpop.f32.mrb[0].mxu0
        %11153 = vdwg.mxu0
        %11154 = vmatprep.subr.bf16.mxu0 0
        %11155 = vmatpush1.bf16.msra.mxu0 %v8986
        %11156 = vmatprep.subr.bf16.mxu0 0
        %11157 = vmatpush1.bf16.msra.mxu0 %v8988
        %11158 = vmatprep.subr.bf16.mxu0 0
        %11159 = vmatpush1.bf16.msra.mxu0 %v8990
        %11160 = vmatprep.subr.bf16.mxu0 0
        %11161 = vmatpush1.bf16.msra.mxu0 %v8992
        %11162 = vmatprep.subr.bf16.mxu0 0
        %11163 = vmatpush1.bf16.msra.mxu0 %v8994
        %11164 = vmatprep.subr.bf16.mxu0 0
        %11165 = vmatpush1.bf16.msra.mxu0 %v8996
        %11166 = vmatprep.subr.bf16.mxu0 0
        %11167 = vmatpush1.bf16.msra.mxu0 %v8998
        %11168 = vmatprep.subr.bf16.mxu0 0
        %11169 = vmatpush1.bf16.msra.mxu0 %v9000
        %11170 = vmatprep.subr.bf16.mxu0 0
        %11171 = vmatpush1.bf16.msra.mxu0 0
        %11172 = vmatprep.subr.bf16.mxu0 0
        %11173 = vmatpush1.bf16.msra.mxu0 0
        %11174 = vmatprep.subr.bf16.mxu0 0
        %11175 = vmatpush1.bf16.msra.mxu0 0
        %11176 = vmatprep.subr.bf16.mxu0 0
        %11177 = vmatpush1.bf16.msra.mxu0 0
        %11178 = vmatprep.subr.bf16.mxu0 0
        %11179 = vmatpush1.bf16.msra.mxu0 0
        %11180 = vmatprep.subr.bf16.mxu0 0
        %11181 = vmatpush1.bf16.msra.mxu0 0
        %11182 = vmatprep.subr.bf16.mxu0 0
        %11183 = vmatpush1.bf16.msra.mxu0 0
        %11184 = vmatprep.subr.bf16.mxu0 0
        %11185 = vmatpush1.bf16.msra.mxu0 0
        %11186 = vmatprep.mubr.bf16.mxu0 0
        %11187 = vmatmul.mubr.bf16.gmra.mrb[0].mxu0 %v10839
        %v11188 = vpop.f32.mrb[0].mxu0
        %v11189 = vadd.f32 0.0, %v11188
        %v11190 = vpop.f32.mrb[0].mxu0
        %v11191 = vpop.f32.mrb[0].mxu0
        %v11192 = vadd.f32 0.0, %v11191
        %v11193 = vpop.f32.mrb[0].mxu0
        %11194 = vmatprep.mubr.bf16.mxu0 0
        %11195 = vmatmul.mubr.bf16.gmra.mrb[0].mxu0 %v10840
        %v11196 = vpop.f32.mrb[0].mxu0
        %v11197 = vadd.f32 0.0, %v11196
        %v11198 = vpop.f32.mrb[0].mxu0
        %v11199 = vpop.f32.mrb[0].mxu0
        %v11200 = vadd.f32 0.0, %v11199
        %v11201 = vpop.f32.mrb[0].mxu0
        %11202 = vmatprep.mubr.bf16.mxu0 0
        %11203 = vmatmul.mubr.bf16.gmra.mrb[0].mxu0 %v10841
        %v11204 = vpop.f32.mrb[0].mxu0
        %v11205 = vadd.f32 0.0, %v11204
        %v11206 = vpop.f32.mrb[0].mxu0
        %v11207 = vpop.f32.mrb[0].mxu0
        %v11208 = vadd.f32 0.0, %v11207
        %v11209 = vpop.f32.mrb[0].mxu0
        %11210 = vmatprep.mubr.bf16.mxu0 0
        %11211 = vmatmul.mubr.bf16.gmra.mrb[0].mxu0 %v10842
        %v11212 = vpop.f32.mrb[0].mxu0
        %v11213 = vadd.f32 0.0, %v11212
        %v11214 = vpop.f32.mrb[0].mxu0
        %v11215 = vpop.f32.mrb[0].mxu0
        %v11216 = vadd.f32 0.0, %v11215
        %v11217 = vpop.f32.mrb[0].mxu0
        %11218 = vmatprep.mubr.bf16.mxu0 0
        %11219 = vmatmul.mubr.bf16.gmra.mrb[0].mxu0 %v10843
        %v11220 = vpop.f32.mrb[0].mxu0
        %v11221 = vadd.f32 0.0, %v11220
        %v11222 = vpop.f32.mrb[0].mxu0
        %v11223 = vpop.f32.mrb[0].mxu0
        %v11224 = vadd.f32 0.0, %v11223
        %v11225 = vpop.f32.mrb[0].mxu0
        %11226 = vmatprep.mubr.bf16.mxu0 0
        %11227 = vmatmul.mubr.bf16.gmra.mrb[0].mxu0 %v10844
        %v11228 = vpop.f32.mrb[0].mxu0
        %v11229 = vadd.f32 0.0, %v11228
        %v11230 = vpop.f32.mrb[0].mxu0
        %v11231 = vpop.f32.mrb[0].mxu0
        %v11232 = vadd.f32 0.0, %v11231
        %v11233 = vpop.f32.mrb[0].mxu0
        %11234 = vmatprep.mubr.bf16.mxu0 0
        %11235 = vmatmul.mubr.bf16.gmra.mrb[0].mxu0 %v10845
        %v11236 = vpop.f32.mrb[0].mxu0
        %v11237 = vadd.f32 0.0, %v11236
        %v11238 = vpop.f32.mrb[0].mxu0
        %v11239 = vpop.f32.mrb[0].mxu0
        %v11240 = vadd.f32 0.0, %v11239
        %v11241 = vpop.f32.mrb[0].mxu0
        %11242 = vmatprep.mubr.bf16.mxu0 0
        %11243 = vmatmul.mubr.bf16.gmra.mrb[0].mxu0 %v10846
        %v11244 = vpop.f32.mrb[0].mxu0
        %v11245 = vadd.f32 0.0, %v11244
        %v11246 = vpop.f32.mrb[0].mxu0
        %v11247 = vpop.f32.mrb[0].mxu0
        %v11248 = vadd.f32 0.0, %v11247
        %v11249 = vpop.f32.mrb[0].mxu0
        %11250 = vdwg.mxu0
        %11251 = vmatprep.subr.bf16.mxu0 0
        %11252 = vmatpush1.bf16.msra.mxu0 %v9002
        %11253 = vmatprep.subr.bf16.mxu0 0
        %11254 = vmatpush1.bf16.msra.mxu0 %v9004
        %11255 = vmatprep.subr.bf16.mxu0 0
        %11256 = vmatpush1.bf16.msra.mxu0 %v9006
        %11257 = vmatprep.subr.bf16.mxu0 0
        %11258 = vmatpush1.bf16.msra.mxu0 %v9008
        %11259 = vmatprep.subr.bf16.mxu0 0
        %11260 = vmatpush1.bf16.msra.mxu0 %v9010
        %11261 = vmatprep.subr.bf16.mxu0 0
        %11262 = vmatpush1.bf16.msra.mxu0 %v9012
        %11263 = vmatprep.subr.bf16.mxu0 0
        %11264 = vmatpush1.bf16.msra.mxu0 %v9014
        %11265 = vmatprep.subr.bf16.mxu0 0
        %11266 = vmatpush1.bf16.msra.mxu0 %v9016
        %11267 = vmatprep.subr.bf16.mxu0 0
        %11268 = vmatpush1.bf16.msra.mxu0 0
        %11269 = vmatprep.subr.bf16.mxu0 0
        %11270 = vmatpush1.bf16.msra.mxu0 0
        %11271 = vmatprep.subr.bf16.mxu0 0
        %11272 = vmatpush1.bf16.msra.mxu0 0
        %11273 = vmatprep.subr.bf16.mxu0 0
        %11274 = vmatpush1.bf16.msra.mxu0 0
        %11275 = vmatprep.subr.bf16.mxu0 0
        %11276 = vmatpush1.bf16.msra.mxu0 0
        %11277 = vmatprep.subr.bf16.mxu0 0
        %11278 = vmatpush1.bf16.msra.mxu0 0
        %11279 = vmatprep.subr.bf16.mxu0 0
        %11280 = vmatpush1.bf16.msra.mxu0 0
        %11281 = vmatprep.subr.bf16.mxu0 0
        %11282 = vmatpush1.bf16.msra.mxu0 0
        %11283 = vmatprep.mubr.bf16.mxu0 0
        %11284 = vmatmul.mubr.bf16.gmra.mrb[0].mxu0 %v10847
        %v11285 = vpop.f32.mrb[0].mxu0
        %v11286 = vadd.f32 0.0, %v11285
        %v11287 = vpop.f32.mrb[0].mxu0
        %v11288 = vpop.f32.mrb[0].mxu0
        %v11289 = vadd.f32 0.0, %v11288
        %v11290 = vpop.f32.mrb[0].mxu0
        %11291 = vmatprep.mubr.bf16.mxu0 0
        %11292 = vmatmul.mubr.bf16.gmra.mrb[0].mxu0 %v10848
        %v11293 = vpop.f32.mrb[0].mxu0
        %v11294 = vadd.f32 0.0, %v11293
        %v11295 = vpop.f32.mrb[0].mxu0
        %v11296 = vpop.f32.mrb[0].mxu0
        %v11297 = vadd.f32 0.0, %v11296
        %v11298 = vpop.f32.mrb[0].mxu0
        %11299 = vmatprep.mubr.bf16.mxu0 0
        %11300 = vmatmul.mubr.bf16.gmra.mrb[0].mxu0 %v10849
        %v11301 = vpop.f32.mrb[0].mxu0
        %v11302 = vadd.f32 0.0, %v11301
        %v11303 = vpop.f32.mrb[0].mxu0
        %v11304 = vpop.f32.mrb[0].mxu0
        %v11305 = vadd.f32 0.0, %v11304
        %v11306 = vpop.f32.mrb[0].mxu0
        %11307 = vmatprep.mubr.bf16.mxu0 0
        %11308 = vmatmul.mubr.bf16.gmra.mrb[0].mxu0 %v10850
        %v11309 = vpop.f32.mrb[0].mxu0
        %v11310 = vadd.f32 0.0, %v11309
        %v11311 = vpop.f32.mrb[0].mxu0
        %v11312 = vpop.f32.mrb[0].mxu0
        %v11313 = vadd.f32 0.0, %v11312
        %v11314 = vpop.f32.mrb[0].mxu0
        %11315 = vmatprep.mubr.bf16.mxu0 0
        %11316 = vmatmul.mubr.bf16.gmra.mrb[0].mxu0 %v10851
        %v11317 = vpop.f32.mrb[0].mxu0
        %v11318 = vadd.f32 0.0, %v11317
        %v11319 = vpop.f32.mrb[0].mxu0
        %v11320 = vpop.f32.mrb[0].mxu0
        %v11321 = vadd.f32 0.0, %v11320
        %v11322 = vpop.f32.mrb[0].mxu0
        %11323 = vmatprep.mubr.bf16.mxu0 0
        %11324 = vmatmul.mubr.bf16.gmra.mrb[0].mxu0 %v10852
        %v11325 = vpop.f32.mrb[0].mxu0
        %v11326 = vadd.f32 0.0, %v11325
        %v11327 = vpop.f32.mrb[0].mxu0
        %v11328 = vpop.f32.mrb[0].mxu0
        %v11329 = vadd.f32 0.0, %v11328
        %v11330 = vpop.f32.mrb[0].mxu0
        %11331 = vmatprep.mubr.bf16.mxu0 0
        %11332 = vmatmul.mubr.bf16.gmra.mrb[0].mxu0 %v10853
        %v11333 = vpop.f32.mrb[0].mxu0
        %v11334 = vadd.f32 0.0, %v11333
        %v11335 = vpop.f32.mrb[0].mxu0
        %v11336 = vpop.f32.mrb[0].mxu0
        %v11337 = vadd.f32 0.0, %v11336
        %v11338 = vpop.f32.mrb[0].mxu0
        %11339 = vmatprep.mubr.bf16.mxu0 0
        %11340 = vmatmul.mubr.bf16.gmra.mrb[0].mxu0 %v10854
        %v11341 = vpop.f32.mrb[0].mxu0
        %v11342 = vadd.f32 0.0, %v11341
        %v11343 = vpop.f32.mrb[0].mxu0
        %v11344 = vpop.f32.mrb[0].mxu0
        %v11345 = vadd.f32 0.0, %v11344
        %v11346 = vpop.f32.mrb[0].mxu0
        %11347 = vdwg.mxu0
        %11348 = vmatprep.subr.bf16.mxu0 0
        %11349 = vmatpush1.bf16.msra.mxu0 %v9018
        %11350 = vmatprep.subr.bf16.mxu0 0
        %11351 = vmatpush1.bf16.msra.mxu0 %v9020
        %11352 = vmatprep.subr.bf16.mxu0 0
        %11353 = vmatpush1.bf16.msra.mxu0 %v9022
        %11354 = vmatprep.subr.bf16.mxu0 0
        %11355 = vmatpush1.bf16.msra.mxu0 %v9024
        %11356 = vmatprep.subr.bf16.mxu0 0
        %11357 = vmatpush1.bf16.msra.mxu0 %v9026
        %11358 = vmatprep.subr.bf16.mxu0 0
        %11359 = vmatpush1.bf16.msra.mxu0 %v9028
        %11360 = vmatprep.subr.bf16.mxu0 0
        %11361 = vmatpush1.bf16.msra.mxu0 %v9030
        %11362 = vmatprep.subr.bf16.mxu0 0
        %11363 = vmatpush1.bf16.msra.mxu0 %v9032
        %11364 = vmatprep.subr.bf16.mxu0 0
        %11365 = vmatpush1.bf16.msra.mxu0 0
        %11366 = vmatprep.subr.bf16.mxu0 0
        %11367 = vmatpush1.bf16.msra.mxu0 0
        %11368 = vmatprep.subr.bf16.mxu0 0
        %11369 = vmatpush1.bf16.msra.mxu0 0
        %11370 = vmatprep.subr.bf16.mxu0 0
        %11371 = vmatpush1.bf16.msra.mxu0 0
        %11372 = vmatprep.subr.bf16.mxu0 0
        %11373 = vmatpush1.bf16.msra.mxu0 0
        %11374 = vmatprep.subr.bf16.mxu0 0
        %11375 = vmatpush1.bf16.msra.mxu0 0
        %11376 = vmatprep.subr.bf16.mxu0 0
        %11377 = vmatpush1.bf16.msra.mxu0 0
        %11378 = vmatprep.subr.bf16.mxu0 0
        %11379 = vmatpush1.bf16.msra.mxu0 0
        %11380 = vmatprep.mubr.bf16.mxu0 0
        %11381 = vmatmul.mubr.bf16.gmra.mrb[0].mxu0 %v10855
        %v11382 = vpop.f32.mrb[0].mxu0
        %v11383 = vadd.f32 0.0, %v11382
        %v11384 = vpop.f32.mrb[0].mxu0
        %v11385 = vpop.f32.mrb[0].mxu0
        %v11386 = vadd.f32 0.0, %v11385
        %v11387 = vpop.f32.mrb[0].mxu0
        %11388 = vmatprep.mubr.bf16.mxu0 0
        %11389 = vmatmul.mubr.bf16.gmra.mrb[0].mxu0 %v10856
        %v11390 = vpop.f32.mrb[0].mxu0
        %v11391 = vadd.f32 0.0, %v11390
        %v11392 = vpop.f32.mrb[0].mxu0
        %v11393 = vpop.f32.mrb[0].mxu0
        %v11394 = vadd.f32 0.0, %v11393
        %v11395 = vpop.f32.mrb[0].mxu0
        %11396 = vmatprep.mubr.bf16.mxu0 0
        %11397 = vmatmul.mubr.bf16.gmra.mrb[0].mxu0 %v10857
        %v11398 = vpop.f32.mrb[0].mxu0
        %v11399 = vadd.f32 0.0, %v11398
        %v11400 = vpop.f32.mrb[0].mxu0
        %v11401 = vpop.f32.mrb[0].mxu0
        %v11402 = vadd.f32 0.0, %v11401
        %v11403 = vpop.f32.mrb[0].mxu0
        %11404 = vmatprep.mubr.bf16.mxu0 0
        %11405 = vmatmul.mubr.bf16.gmra.mrb[0].mxu0 %v10858
        %v11406 = vpop.f32.mrb[0].mxu0
        %v11407 = vadd.f32 0.0, %v11406
        %v11408 = vpop.f32.mrb[0].mxu0
        %v11409 = vpop.f32.mrb[0].mxu0
        %v11410 = vadd.f32 0.0, %v11409
        %v11411 = vpop.f32.mrb[0].mxu0
        %11412 = vmatprep.mubr.bf16.mxu0 0
        %11413 = vmatmul.mubr.bf16.gmra.mrb[0].mxu0 %v10859
        %v11414 = vpop.f32.mrb[0].mxu0
        %v11415 = vadd.f32 0.0, %v11414
        %v11416 = vpop.f32.mrb[0].mxu0
        %v11417 = vpop.f32.mrb[0].mxu0
        %v11418 = vadd.f32 0.0, %v11417
        %v11419 = vpop.f32.mrb[0].mxu0
        %11420 = vmatprep.mubr.bf16.mxu0 0
        %11421 = vmatmul.mubr.bf16.gmra.mrb[0].mxu0 %v10860
        %v11422 = vpop.f32.mrb[0].mxu0
        %v11423 = vadd.f32 0.0, %v11422
        %v11424 = vpop.f32.mrb[0].mxu0
        %v11425 = vpop.f32.mrb[0].mxu0
        %v11426 = vadd.f32 0.0, %v11425
        %v11427 = vpop.f32.mrb[0].mxu0
        %11428 = vmatprep.mubr.bf16.mxu0 0
        %11429 = vmatmul.mubr.bf16.gmra.mrb[0].mxu0 %v10861
        %v11430 = vpop.f32.mrb[0].mxu0
        %v11431 = vadd.f32 0.0, %v11430
        %v11432 = vpop.f32.mrb[0].mxu0
        %v11433 = vpop.f32.mrb[0].mxu0
        %v11434 = vadd.f32 0.0, %v11433
        %v11435 = vpop.f32.mrb[0].mxu0
        %11436 = vmatprep.mubr.bf16.mxu0 0
        %11437 = vmatmul.mubr.bf16.gmra.mrb[0].mxu0 %v10862
        %v11438 = vpop.f32.mrb[0].mxu0
        %v11439 = vadd.f32 0.0, %v11438
        %v11440 = vpop.f32.mrb[0].mxu0
        %v11441 = vpop.f32.mrb[0].mxu0
        %v11442 = vadd.f32 0.0, %v11441
        %v11443 = vpop.f32.mrb[0].mxu0
        %11444 = vdwg.mxu0
        %v11445 = vmul.f32 %v10898, %v10719
        %v11446 = vmul.f32 %v10901, %v10720
        %v11447 = vmul.f32 %v10906, %v10721
        %v11448 = vmul.f32 %v10909, %v10722
        %v11449 = vmul.f32 %v10914, %v10723
        %v11450 = vmul.f32 %v10917, %v10724
        %v11451 = vmul.f32 %v10922, %v10725
        %v11452 = vmul.f32 %v10925, %v10726
        %v11453 = vmul.f32 %v10930, %v10727
        %v11454 = vmul.f32 %v10933, %v10728
        %v11455 = vmul.f32 %v10938, %v10729
        %v11456 = vmul.f32 %v10941, %v10730
        %v11457 = vmul.f32 %v10946, %v10731
        %v11458 = vmul.f32 %v10949, %v10732
        %v11459 = vmul.f32 %v10954, %v10733
        %v11460 = vmul.f32 %v10957, %v10734
        %v11461 = vmul.f32 %v10995, %v10735
        %v11462 = vmul.f32 %v10998, %v10736
        %v11463 = vmul.f32 %v11003, %v10737
        %v11464 = vmul.f32 %v11006, %v10738
        %v11465 = vmul.f32 %v11011, %v10739
        %v11466 = vmul.f32 %v11014, %v10740
        %v11467 = vmul.f32 %v11019, %v10741
        %v11468 = vmul.f32 %v11022, %v10742
        %v11469 = vmul.f32 %v11027, %v10743
        %v11470 = vmul.f32 %v11030, %v10744
        %v11471 = vmul.f32 %v11035, %v10745
        %v11472 = vmul.f32 %v11038, %v10746
        %v11473 = vmul.f32 %v11043, %v10747
        %v11474 = vmul.f32 %v11046, %v10748
        %v11475 = vmul.f32 %v11051, %v10749
        %v11476 = vmul.f32 %v11054, %v10750
        %v11477 = vmul.f32 %v11092, %v10751
        %v11478 = vmul.f32 %v11095, %v10752
        %v11479 = vmul.f32 %v11100, %v10753
        %v11480 = vmul.f32 %v11103, %v10754
        %v11481 = vmul.f32 %v11108, %v10755
        %v11482 = vmul.f32 %v11111, %v10756
        %v11483 = vmul.f32 %v11116, %v10757
        %v11484 = vmul.f32 %v11119, %v10758
        %v11485 = vmul.f32 %v11124, %v10759
        %v11486 = vmul.f32 %v11127, %v10760
        %v11487 = vmul.f32 %v11132, %v10761
        %v11488 = vmul.f32 %v11135, %v10762
        %v11489 = vmul.f32 %v11140, %v10763
        %v11490 = vmul.f32 %v11143, %v10764
        %v11491 = vmul.f32 %v11148, %v10765
        %v11492 = vmul.f32 %v11151, %v10766
        %v11493 = vmul.f32 %v11189, %v10767
        %v11494 = vmul.f32 %v11192, %v10768
        %v11495 = vmul.f32 %v11197, %v10769
        %v11496 = vmul.f32 %v11200, %v10770
        %v11497 = vmul.f32 %v11205, %v10771
        %v11498 = vmul.f32 %v11208, %v10772
        %v11499 = vmul.f32 %v11213, %v10773
        %v11500 = vmul.f32 %v11216, %v10774
        %v11501 = vmul.f32 %v11221, %v10775
        %v11502 = vmul.f32 %v11224, %v10776
        %v11503 = vmul.f32 %v11229, %v10777
        %v11504 = vmul.f32 %v11232, %v10778
        %v11505 = vmul.f32 %v11237, %v10779
        %v11506 = vmul.f32 %v11240, %v10780
        %v11507 = vmul.f32 %v11245, %v10781
        %v11508 = vmul.f32 %v11248, %v10782
        %v11509 = vmul.f32 %v11286, %v10783
        %v11510 = vmul.f32 %v11289, %v10784
        %v11511 = vmul.f32 %v11294, %v10785
        %v11512 = vmul.f32 %v11297, %v10786
        %v11513 = vmul.f32 %v11302, %v10787
        %v11514 = vmul.f32 %v11305, %v10788
        %v11515 = vmul.f32 %v11310, %v10789
        %v11516 = vmul.f32 %v11313, %v10790
        %v11517 = vmul.f32 %v11318, %v10791
        %v11518 = vmul.f32 %v11321, %v10792
        %v11519 = vmul.f32 %v11326, %v10793
        %v11520 = vmul.f32 %v11329, %v10794
        %v11521 = vmul.f32 %v11334, %v10795
        %v11522 = vmul.f32 %v11337, %v10796
        %v11523 = vmul.f32 %v11342, %v10797
        %v11524 = vmul.f32 %v11345, %v10798
        %v11525 = vmul.f32 %v11383, %v10799
        %v11526 = vmul.f32 %v11386, %v10800
        %v11527 = vmul.f32 %v11391, %v10801
        %v11528 = vmul.f32 %v11394, %v10802
        %v11529 = vmul.f32 %v11399, %v10803
        %v11530 = vmul.f32 %v11402, %v10804
        %v11531 = vmul.f32 %v11407, %v10805
        %v11532 = vmul.f32 %v11410, %v10806
        %v11533 = vmul.f32 %v11415, %v10807
        %v11534 = vmul.f32 %v11418, %v10808
        %v11535 = vmul.f32 %v11423, %v10809
        %v11536 = vmul.f32 %v11426, %v10810
        %v11537 = vmul.f32 %v11431, %v10811
        %v11538 = vmul.f32 %v11434, %v10812
        %v11539 = vmul.f32 %v11439, %v10813
        %v11540 = vmul.f32 %v11442, %v10814
        %v11541 = vpack.c.bf16 %v11446, %v11445
        %v11542 = vpack.c.bf16 %v11448, %v11447
        %v11543 = vpack.c.bf16 %v11450, %v11449
        %v11544 = vpack.c.bf16 %v11452, %v11451
        %v11545 = vpack.c.bf16 %v11454, %v11453
        %v11546 = vpack.c.bf16 %v11456, %v11455
        %v11547 = vpack.c.bf16 %v11458, %v11457
        %v11548 = vpack.c.bf16 %v11460, %v11459
        %v11549 = vpack.c.bf16 %v11462, %v11461
        %v11550 = vpack.c.bf16 %v11464, %v11463
        %v11551 = vpack.c.bf16 %v11466, %v11465
        %v11552 = vpack.c.bf16 %v11468, %v11467
        %v11553 = vpack.c.bf16 %v11470, %v11469
        %v11554 = vpack.c.bf16 %v11472, %v11471
        %v11555 = vpack.c.bf16 %v11474, %v11473
        %v11556 = vpack.c.bf16 %v11476, %v11475
        %v11557 = vpack.c.bf16 %v11478, %v11477
        %v11558 = vpack.c.bf16 %v11480, %v11479
        %v11559 = vpack.c.bf16 %v11482, %v11481
        %v11560 = vpack.c.bf16 %v11484, %v11483
        %v11561 = vpack.c.bf16 %v11486, %v11485
        %v11562 = vpack.c.bf16 %v11488, %v11487
        %v11563 = vpack.c.bf16 %v11490, %v11489
        %v11564 = vpack.c.bf16 %v11492, %v11491
        %v11565 = vpack.c.bf16 %v11494, %v11493
        %v11566 = vpack.c.bf16 %v11496, %v11495
        %v11567 = vpack.c.bf16 %v11498, %v11497
        %v11568 = vpack.c.bf16 %v11500, %v11499
        %v11569 = vpack.c.bf16 %v11502, %v11501
        %v11570 = vpack.c.bf16 %v11504, %v11503
        %v11571 = vpack.c.bf16 %v11506, %v11505
        %v11572 = vpack.c.bf16 %v11508, %v11507
        %v11573 = vpack.c.bf16 %v11510, %v11509
        %v11574 = vpack.c.bf16 %v11512, %v11511
        %v11575 = vpack.c.bf16 %v11514, %v11513
        %v11576 = vpack.c.bf16 %v11516, %v11515
        %v11577 = vpack.c.bf16 %v11518, %v11517
        %v11578 = vpack.c.bf16 %v11520, %v11519
        %v11579 = vpack.c.bf16 %v11522, %v11521
        %v11580 = vpack.c.bf16 %v11524, %v11523
        %v11581 = vpack.c.bf16 %v11526, %v11525
        %v11582 = vpack.c.bf16 %v11528, %v11527
        %v11583 = vpack.c.bf16 %v11530, %v11529
        %v11584 = vpack.c.bf16 %v11532, %v11531
        %v11585 = vpack.c.bf16 %v11534, %v11533
        %v11586 = vpack.c.bf16 %v11536, %v11535
        %v11587 = vpack.c.bf16 %v11538, %v11537
        %v11588 = vpack.c.bf16 %v11540, %v11539
        %11597 = vrot.lane.b32.xlu0 %v11549, 64
        %v11598 = vpop.permute.xlu0 %11597
        %11599 = vrot.lane.b32.xlu0 %v11550, 64
        %v11600 = vpop.permute.xlu0 %11599
        %11601 = vrot.lane.b32.xlu0 %v11551, 64
        %v11602 = vpop.permute.xlu0 %11601
        %11603 = vrot.lane.b32.xlu0 %v11552, 64
        %v11604 = vpop.permute.xlu0 %11603
        %11605 = vrot.lane.b32.xlu0 %v11553, 64
        %v11606 = vpop.permute.xlu0 %11605
        %11607 = vrot.lane.b32.xlu0 %v11554, 64
        %v11608 = vpop.permute.xlu0 %11607
        %11609 = vrot.lane.b32.xlu0 %v11555, 64
        %v11610 = vpop.permute.xlu0 %11609
        %11611 = vrot.lane.b32.xlu0 %v11556, 64
        %v11612 = vpop.permute.xlu0 %11611
        %11621 = vrot.lane.b32.xlu0 %v11565, 64
        %v11622 = vpop.permute.xlu0 %11621
        %11623 = vrot.lane.b32.xlu0 %v11566, 64
        %v11624 = vpop.permute.xlu0 %11623
        %11625 = vrot.lane.b32.xlu0 %v11567, 64
        %v11626 = vpop.permute.xlu0 %11625
        %11627 = vrot.lane.b32.xlu0 %v11568, 64
        %v11628 = vpop.permute.xlu0 %11627
        %11629 = vrot.lane.b32.xlu0 %v11569, 64
        %v11630 = vpop.permute.xlu0 %11629
        %11631 = vrot.lane.b32.xlu0 %v11570, 64
        %v11632 = vpop.permute.xlu0 %11631
        %11633 = vrot.lane.b32.xlu0 %v11571, 64
        %v11634 = vpop.permute.xlu0 %11633
        %11635 = vrot.lane.b32.xlu0 %v11572, 64
        %v11636 = vpop.permute.xlu0 %11635
        %11645 = vrot.lane.b32.xlu0 %v11581, 64
        %v11646 = vpop.permute.xlu0 %11645
        %11647 = vrot.lane.b32.xlu0 %v11582, 64
        %v11648 = vpop.permute.xlu0 %11647
        %11649 = vrot.lane.b32.xlu0 %v11583, 64
        %v11650 = vpop.permute.xlu0 %11649
        %11651 = vrot.lane.b32.xlu0 %v11584, 64
        %v11652 = vpop.permute.xlu0 %11651
        %11653 = vrot.lane.b32.xlu0 %v11585, 64
        %v11654 = vpop.permute.xlu0 %11653
        %11655 = vrot.lane.b32.xlu0 %v11586, 64
        %v11656 = vpop.permute.xlu0 %11655
        %11657 = vrot.lane.b32.xlu0 %v11587, 64
        %v11658 = vpop.permute.xlu0 %11657
        %11659 = vrot.lane.b32.xlu0 %v11588, 64
        %v11660 = vpop.permute.xlu0 %11659
        %v11663 = vsel %vm3707, %v11541, %v11598
        %v11667 = vsel %vm3707, %v11542, %v11600
        %v11671 = vsel %vm3707, %v11543, %v11602
        %v11675 = vsel %vm3707, %v11544, %v11604
        %v11679 = vsel %vm3707, %v11545, %v11606
        %v11683 = vsel %vm3707, %v11546, %v11608
        %v11687 = vsel %vm3707, %v11547, %v11610
        %v11691 = vsel %vm3707, %v11548, %v11612
        %v11695 = vsel %vm3707, %v11557, %v11622
        %v11699 = vsel %vm3707, %v11558, %v11624
        %v11703 = vsel %vm3707, %v11559, %v11626
        %v11707 = vsel %vm3707, %v11560, %v11628
        %v11711 = vsel %vm3707, %v11561, %v11630
        %v11715 = vsel %vm3707, %v11562, %v11632
        %v11719 = vsel %vm3707, %v11563, %v11634
        %v11723 = vsel %vm3707, %v11564, %v11636
        %v11727 = vsel %vm3707, %v11573, %v11646
        %v11731 = vsel %vm3707, %v11574, %v11648
        %v11735 = vsel %vm3707, %v11575, %v11650
        %v11739 = vsel %vm3707, %v11576, %v11652
        %v11743 = vsel %vm3707, %v11577, %v11654
        %v11747 = vsel %vm3707, %v11578, %v11656
        %v11751 = vsel %vm3707, %v11579, %v11658
        %v11755 = vsel %vm3707, %v11580, %v11660
        %11757 = vmatprep.subr.bf16.mxu0 %v6665
        %11758 = vmatpush1.bf16.msra.mxu0 %v6664
        %11759 = vmatprep.subr.bf16.mxu0 %v6668
        %11760 = vmatpush1.bf16.msra.mxu0 %v6667
        %11761 = vmatprep.subr.bf16.mxu0 %v6671
        %11762 = vmatpush1.bf16.msra.mxu0 %v6670
        %11763 = vmatprep.subr.bf16.mxu0 %v6674
        %11764 = vmatpush1.bf16.msra.mxu0 %v6673
        %11765 = vmatprep.subr.bf16.mxu0 %v6677
        %11766 = vmatpush1.bf16.msra.mxu0 %v6676
        %11767 = vmatprep.subr.bf16.mxu0 %v6680
        %11768 = vmatpush1.bf16.msra.mxu0 %v6679
        %11769 = vmatprep.subr.bf16.mxu0 %v6683
        %11770 = vmatpush1.bf16.msra.mxu0 %v6682
        %11771 = vmatprep.subr.bf16.mxu0 %v6686
        %11772 = vmatpush1.bf16.msra.mxu0 %v6685
        %11773 = vmatprep.subr.bf16.mxu0 %v6689
        %11774 = vmatpush1.bf16.msra.mxu0 %v6688
        %11775 = vmatprep.subr.bf16.mxu0 %v6692
        %11776 = vmatpush1.bf16.msra.mxu0 %v6691
        %11777 = vmatprep.subr.bf16.mxu0 %v6695
        %11778 = vmatpush1.bf16.msra.mxu0 %v6694
        %11779 = vmatprep.subr.bf16.mxu0 %v6698
        %11780 = vmatpush1.bf16.msra.mxu0 %v6697
        %11781 = vmatprep.subr.bf16.mxu0 %v6701
        %11782 = vmatpush1.bf16.msra.mxu0 %v6700
        %11783 = vmatprep.subr.bf16.mxu0 %v6704
        %11784 = vmatpush1.bf16.msra.mxu0 %v6703
        %11785 = vmatprep.subr.bf16.mxu0 %v6707
        %11786 = vmatpush1.bf16.msra.mxu0 %v6706
        %11787 = vmatprep.subr.bf16.mxu0 %v6710
        %11788 = vmatpush1.bf16.msra.mxu0 %v6709
        %11789 = vmatprep.mubr.bf16.mxu0 %v11695
        %11790 = vmatmul.mubr.bf16.gmra.mrb[0].mxu0 %v11663
        %v11791 = vpop.f32.mrb[0].mxu0
        %v11792 = vadd.f32 %v6412, %v11791
        %v11793 = vpop.f32.mrb[0].mxu0
        %v11794 = vadd.f32 %v6416, %v11793
        %v11795 = vpop.f32.mrb[0].mxu0
        %v11796 = vadd.f32 %v6412, %v11795
        %v11797 = vpop.f32.mrb[0].mxu0
        %v11798 = vadd.f32 %v6416, %v11797
        %11799 = vmatprep.mubr.bf16.mxu0 %v11699
        %11800 = vmatmul.mubr.bf16.gmra.mrb[0].mxu0 %v11667
        %v11801 = vpop.f32.mrb[0].mxu0
        %v11802 = vadd.f32 %v6412, %v11801
        %v11803 = vpop.f32.mrb[0].mxu0
        %v11804 = vadd.f32 %v6416, %v11803
        %v11805 = vpop.f32.mrb[0].mxu0
        %v11806 = vadd.f32 %v6412, %v11805
        %v11807 = vpop.f32.mrb[0].mxu0
        %v11808 = vadd.f32 %v6416, %v11807
        %11809 = vmatprep.mubr.bf16.mxu0 %v11703
        %11810 = vmatmul.mubr.bf16.gmra.mrb[0].mxu0 %v11671
        %v11811 = vpop.f32.mrb[0].mxu0
        %v11812 = vadd.f32 %v6412, %v11811
        %v11813 = vpop.f32.mrb[0].mxu0
        %v11814 = vadd.f32 %v6416, %v11813
        %v11815 = vpop.f32.mrb[0].mxu0
        %v11816 = vadd.f32 %v6412, %v11815
        %v11817 = vpop.f32.mrb[0].mxu0
        %v11818 = vadd.f32 %v6416, %v11817
        %11819 = vmatprep.mubr.bf16.mxu0 %v11707
        %11820 = vmatmul.mubr.bf16.gmra.mrb[0].mxu0 %v11675
        %v11821 = vpop.f32.mrb[0].mxu0
        %v11822 = vadd.f32 %v6412, %v11821
        %v11823 = vpop.f32.mrb[0].mxu0
        %v11824 = vadd.f32 %v6416, %v11823
        %v11825 = vpop.f32.mrb[0].mxu0
        %v11826 = vadd.f32 %v6412, %v11825
        %v11827 = vpop.f32.mrb[0].mxu0
        %v11828 = vadd.f32 %v6416, %v11827
        %11829 = vmatprep.mubr.bf16.mxu0 %v11711
        %11830 = vmatmul.mubr.bf16.gmra.mrb[0].mxu0 %v11679
        %v11831 = vpop.f32.mrb[0].mxu0
        %v11832 = vadd.f32 %v6412, %v11831
        %v11833 = vpop.f32.mrb[0].mxu0
        %v11834 = vadd.f32 %v6416, %v11833
        %v11835 = vpop.f32.mrb[0].mxu0
        %v11836 = vadd.f32 %v6412, %v11835
        %v11837 = vpop.f32.mrb[0].mxu0
        %v11838 = vadd.f32 %v6416, %v11837
        %11839 = vmatprep.mubr.bf16.mxu0 %v11715
        %11840 = vmatmul.mubr.bf16.gmra.mrb[0].mxu0 %v11683
        %v11841 = vpop.f32.mrb[0].mxu0
        %v11842 = vadd.f32 %v6412, %v11841
        %v11843 = vpop.f32.mrb[0].mxu0
        %v11844 = vadd.f32 %v6416, %v11843
        %v11845 = vpop.f32.mrb[0].mxu0
        %v11846 = vadd.f32 %v6412, %v11845
        %v11847 = vpop.f32.mrb[0].mxu0
        %v11848 = vadd.f32 %v6416, %v11847
        %11849 = vmatprep.mubr.bf16.mxu0 %v11719
        %11850 = vmatmul.mubr.bf16.gmra.mrb[0].mxu0 %v11687
        %v11851 = vpop.f32.mrb[0].mxu0
        %v11852 = vadd.f32 %v6412, %v11851
        %v11853 = vpop.f32.mrb[0].mxu0
        %v11854 = vadd.f32 %v6416, %v11853
        %v11855 = vpop.f32.mrb[0].mxu0
        %v11856 = vadd.f32 %v6412, %v11855
        %v11857 = vpop.f32.mrb[0].mxu0
        %v11858 = vadd.f32 %v6416, %v11857
        %11859 = vmatprep.mubr.bf16.mxu0 %v11723
        %11860 = vmatmul.mubr.bf16.gmra.mrb[0].mxu0 %v11691
        %v11861 = vpop.f32.mrb[0].mxu0
        %v11862 = vadd.f32 %v6412, %v11861
        %v11863 = vpop.f32.mrb[0].mxu0
        %v11864 = vadd.f32 %v6416, %v11863
        %v11865 = vpop.f32.mrb[0].mxu0
        %v11866 = vadd.f32 %v6412, %v11865
        %v11867 = vpop.f32.mrb[0].mxu0
        %v11868 = vadd.f32 %v6416, %v11867
        %11869 = vdwg.mxu0
        %11870 = vmatprep.subr.bf16.mxu0 %v6713
        %11871 = vmatpush1.bf16.msra.mxu0 %v6712
        %11872 = vmatprep.subr.bf16.mxu0 %v6716
        %11873 = vmatpush1.bf16.msra.mxu0 %v6715
        %11874 = vmatprep.subr.bf16.mxu0 %v6719
        %11875 = vmatpush1.bf16.msra.mxu0 %v6718
        %11876 = vmatprep.subr.bf16.mxu0 %v6722
        %11877 = vmatpush1.bf16.msra.mxu0 %v6721
        %11878 = vmatprep.subr.bf16.mxu0 %v6725
        %11879 = vmatpush1.bf16.msra.mxu0 %v6724
        %11880 = vmatprep.subr.bf16.mxu0 %v6728
        %11881 = vmatpush1.bf16.msra.mxu0 %v6727
        %11882 = vmatprep.subr.bf16.mxu0 %v6731
        %11883 = vmatpush1.bf16.msra.mxu0 %v6730
        %11884 = vmatprep.subr.bf16.mxu0 %v6734
        %11885 = vmatpush1.bf16.msra.mxu0 %v6733
        %11886 = vmatprep.subr.bf16.mxu0 0
        %11887 = vmatpush1.bf16.msra.mxu0 0
        %11888 = vmatprep.subr.bf16.mxu0 0
        %11889 = vmatpush1.bf16.msra.mxu0 0
        %11890 = vmatprep.subr.bf16.mxu0 0
        %11891 = vmatpush1.bf16.msra.mxu0 0
        %11892 = vmatprep.subr.bf16.mxu0 0
        %11893 = vmatpush1.bf16.msra.mxu0 0
        %11894 = vmatprep.subr.bf16.mxu0 0
        %11895 = vmatpush1.bf16.msra.mxu0 0
        %11896 = vmatprep.subr.bf16.mxu0 0
        %11897 = vmatpush1.bf16.msra.mxu0 0
        %11898 = vmatprep.subr.bf16.mxu0 0
        %11899 = vmatpush1.bf16.msra.mxu0 0
        %11900 = vmatprep.subr.bf16.mxu0 0
        %11901 = vmatpush1.bf16.msra.mxu0 0
        %11902 = vmatprep.mubr.bf16.mxu0 0
        %11903 = vmatmul.mubr.bf16.gmra.mrb[0].mxu0 %v11727
        %v11904 = vpop.f32.mrb[0].mxu0
        %v11905 = vadd.f32 %v11792, %v11904
        %v11906 = vpop.f32.mrb[0].mxu0
        %v11907 = vadd.f32 %v11794, %v11906
        %v11908 = vpop.f32.mrb[0].mxu0
        %v11909 = vadd.f32 %v11796, %v11908
        %v11910 = vpop.f32.mrb[0].mxu0
        %v11911 = vadd.f32 %v11798, %v11910
        %11912 = vmatprep.mubr.bf16.mxu0 0
        %11913 = vmatmul.mubr.bf16.gmra.mrb[0].mxu0 %v11731
        %v11914 = vpop.f32.mrb[0].mxu0
        %v11915 = vadd.f32 %v11802, %v11914
        %v11916 = vpop.f32.mrb[0].mxu0
        %v11917 = vadd.f32 %v11804, %v11916
        %v11918 = vpop.f32.mrb[0].mxu0
        %v11919 = vadd.f32 %v11806, %v11918
        %v11920 = vpop.f32.mrb[0].mxu0
        %v11921 = vadd.f32 %v11808, %v11920
        %11922 = vmatprep.mubr.bf16.mxu0 0
        %11923 = vmatmul.mubr.bf16.gmra.mrb[0].mxu0 %v11735
        %v11924 = vpop.f32.mrb[0].mxu0
        %v11925 = vadd.f32 %v11812, %v11924
        %v11926 = vpop.f32.mrb[0].mxu0
        %v11927 = vadd.f32 %v11814, %v11926
        %v11928 = vpop.f32.mrb[0].mxu0
        %v11929 = vadd.f32 %v11816, %v11928
        %v11930 = vpop.f32.mrb[0].mxu0
        %v11931 = vadd.f32 %v11818, %v11930
        %11932 = vmatprep.mubr.bf16.mxu0 0
        %11933 = vmatmul.mubr.bf16.gmra.mrb[0].mxu0 %v11739
        %v11934 = vpop.f32.mrb[0].mxu0
        %v11935 = vadd.f32 %v11822, %v11934
        %v11936 = vpop.f32.mrb[0].mxu0
        %v11937 = vadd.f32 %v11824, %v11936
        %v11938 = vpop.f32.mrb[0].mxu0
        %v11939 = vadd.f32 %v11826, %v11938
        %v11940 = vpop.f32.mrb[0].mxu0
        %v11941 = vadd.f32 %v11828, %v11940
        %11942 = vmatprep.mubr.bf16.mxu0 0
        %11943 = vmatmul.mubr.bf16.gmra.mrb[0].mxu0 %v11743
        %v11944 = vpop.f32.mrb[0].mxu0
        %v11945 = vadd.f32 %v11832, %v11944
        %v11946 = vpop.f32.mrb[0].mxu0
        %v11947 = vadd.f32 %v11834, %v11946
        %v11948 = vpop.f32.mrb[0].mxu0
        %v11949 = vadd.f32 %v11836, %v11948
        %v11950 = vpop.f32.mrb[0].mxu0
        %v11951 = vadd.f32 %v11838, %v11950
        %11952 = vmatprep.mubr.bf16.mxu0 0
        %11953 = vmatmul.mubr.bf16.gmra.mrb[0].mxu0 %v11747
        %v11954 = vpop.f32.mrb[0].mxu0
        %v11955 = vadd.f32 %v11842, %v11954
        %v11956 = vpop.f32.mrb[0].mxu0
        %v11957 = vadd.f32 %v11844, %v11956
        %v11958 = vpop.f32.mrb[0].mxu0
        %v11959 = vadd.f32 %v11846, %v11958
        %v11960 = vpop.f32.mrb[0].mxu0
        %v11961 = vadd.f32 %v11848, %v11960
        %11962 = vmatprep.mubr.bf16.mxu0 0
        %11963 = vmatmul.mubr.bf16.gmra.mrb[0].mxu0 %v11751
        %v11964 = vpop.f32.mrb[0].mxu0
        %v11965 = vadd.f32 %v11852, %v11964
        %v11966 = vpop.f32.mrb[0].mxu0
        %v11967 = vadd.f32 %v11854, %v11966
        %v11968 = vpop.f32.mrb[0].mxu0
        %v11969 = vadd.f32 %v11856, %v11968
        %v11970 = vpop.f32.mrb[0].mxu0
        %v11971 = vadd.f32 %v11858, %v11970
        %11972 = vmatprep.mubr.bf16.mxu0 0
        %11973 = vmatmul.mubr.bf16.gmra.mrb[0].mxu0 %v11755
        %v11974 = vpop.f32.mrb[0].mxu0
        %v11975 = vadd.f32 %v11862, %v11974
        %v11976 = vpop.f32.mrb[0].mxu0
        %v11977 = vadd.f32 %v11864, %v11976
        %v11978 = vpop.f32.mrb[0].mxu0
        %v11979 = vadd.f32 %v11866, %v11978
        %v11980 = vpop.f32.mrb[0].mxu0
        %v11981 = vadd.f32 %v11868, %v11980
        %11982 = vdwg.mxu0
        %11983 = vmatprep.subr.bf16.mxu0 0
        %11984 = vmatpush1.bf16.msra.mxu0 %v6666
        %11985 = vmatprep.subr.bf16.mxu0 0
        %11986 = vmatpush1.bf16.msra.mxu0 %v6669
        %11987 = vmatprep.subr.bf16.mxu0 0
        %11988 = vmatpush1.bf16.msra.mxu0 %v6672
        %11989 = vmatprep.subr.bf16.mxu0 0
        %11990 = vmatpush1.bf16.msra.mxu0 %v6675
        %11991 = vmatprep.subr.bf16.mxu0 0
        %11992 = vmatpush1.bf16.msra.mxu0 %v6678
        %11993 = vmatprep.subr.bf16.mxu0 0
        %11994 = vmatpush1.bf16.msra.mxu0 %v6681
        %11995 = vmatprep.subr.bf16.mxu0 0
        %11996 = vmatpush1.bf16.msra.mxu0 %v6684
        %11997 = vmatprep.subr.bf16.mxu0 0
        %11998 = vmatpush1.bf16.msra.mxu0 %v6687
        %11999 = vmatprep.subr.bf16.mxu0 0
        %12000 = vmatpush1.bf16.msra.mxu0 %v6690
        %12001 = vmatprep.subr.bf16.mxu0 0
        %12002 = vmatpush1.bf16.msra.mxu0 %v6693
        %12003 = vmatprep.subr.bf16.mxu0 0
        %12004 = vmatpush1.bf16.msra.mxu0 %v6696
        %12005 = vmatprep.subr.bf16.mxu0 0
        %12006 = vmatpush1.bf16.msra.mxu0 %v6699
        %12007 = vmatprep.subr.bf16.mxu0 0
        %12008 = vmatpush1.bf16.msra.mxu0 %v6702
        %12009 = vmatprep.subr.bf16.mxu0 0
        %12010 = vmatpush1.bf16.msra.mxu0 %v6705
        %12011 = vmatprep.subr.bf16.mxu0 0
        %12012 = vmatpush1.bf16.msra.mxu0 %v6708
        %12013 = vmatprep.subr.bf16.mxu0 0
        %12014 = vmatpush1.bf16.msra.mxu0 %v6711
        %12015 = vmatprep.mubr.bf16.mxu0 %v11695
        %12016 = vmatmul.mubr.bf16.gmra.mrb[0].mxu0 %v11663
        %v12017 = vpop.f32.mrb[0].mxu0
        %v12018 = vadd.f32 %v6420, %v12017
        %v12019 = vpop.f32.mrb[0].mxu0
        %v12020 = vpop.f32.mrb[0].mxu0
        %v12021 = vadd.f32 %v6420, %v12020
        %v12022 = vpop.f32.mrb[0].mxu0
        %12023 = vmatprep.mubr.bf16.mxu0 %v11699
        %12024 = vmatmul.mubr.bf16.gmra.mrb[0].mxu0 %v11667
        %v12025 = vpop.f32.mrb[0].mxu0
        %v12026 = vadd.f32 %v6420, %v12025
        %v12027 = vpop.f32.mrb[0].mxu0
        %v12028 = vpop.f32.mrb[0].mxu0
        %v12029 = vadd.f32 %v6420, %v12028
        %v12030 = vpop.f32.mrb[0].mxu0
        %12031 = vmatprep.mubr.bf16.mxu0 %v11703
        %12032 = vmatmul.mubr.bf16.gmra.mrb[0].mxu0 %v11671
        %v12033 = vpop.f32.mrb[0].mxu0
        %v12034 = vadd.f32 %v6420, %v12033
        %v12035 = vpop.f32.mrb[0].mxu0
        %v12036 = vpop.f32.mrb[0].mxu0
        %v12037 = vadd.f32 %v6420, %v12036
        %v12038 = vpop.f32.mrb[0].mxu0
        %12039 = vmatprep.mubr.bf16.mxu0 %v11707
        %12040 = vmatmul.mubr.bf16.gmra.mrb[0].mxu0 %v11675
        %v12041 = vpop.f32.mrb[0].mxu0
        %v12042 = vadd.f32 %v6420, %v12041
        %v12043 = vpop.f32.mrb[0].mxu0
        %v12044 = vpop.f32.mrb[0].mxu0
        %v12045 = vadd.f32 %v6420, %v12044
        %v12046 = vpop.f32.mrb[0].mxu0
        %12047 = vmatprep.mubr.bf16.mxu0 %v11711
        %12048 = vmatmul.mubr.bf16.gmra.mrb[0].mxu0 %v11679
        %v12049 = vpop.f32.mrb[0].mxu0
        %v12050 = vadd.f32 %v6420, %v12049
        %v12051 = vpop.f32.mrb[0].mxu0
        %v12052 = vpop.f32.mrb[0].mxu0
        %v12053 = vadd.f32 %v6420, %v12052
        %v12054 = vpop.f32.mrb[0].mxu0
        %12055 = vmatprep.mubr.bf16.mxu0 %v11715
        %12056 = vmatmul.mubr.bf16.gmra.mrb[0].mxu0 %v11683
        %v12057 = vpop.f32.mrb[0].mxu0
        %v12058 = vadd.f32 %v6420, %v12057
        %v12059 = vpop.f32.mrb[0].mxu0
        %v12060 = vpop.f32.mrb[0].mxu0
        %v12061 = vadd.f32 %v6420, %v12060
        %v12062 = vpop.f32.mrb[0].mxu0
        %12063 = vmatprep.mubr.bf16.mxu0 %v11719
        %12064 = vmatmul.mubr.bf16.gmra.mrb[0].mxu0 %v11687
        %v12065 = vpop.f32.mrb[0].mxu0
        %v12066 = vadd.f32 %v6420, %v12065
        %v12067 = vpop.f32.mrb[0].mxu0
        %v12068 = vpop.f32.mrb[0].mxu0
        %v12069 = vadd.f32 %v6420, %v12068
        %v12070 = vpop.f32.mrb[0].mxu0
        %12071 = vmatprep.mubr.bf16.mxu0 %v11723
        %12072 = vmatmul.mubr.bf16.gmra.mrb[0].mxu0 %v11691
        %v12073 = vpop.f32.mrb[0].mxu0
        %v12074 = vadd.f32 %v6420, %v12073
        %v12075 = vpop.f32.mrb[0].mxu0
        %v12076 = vpop.f32.mrb[0].mxu0
        %v12077 = vadd.f32 %v6420, %v12076
        %v12078 = vpop.f32.mrb[0].mxu0
        %12079 = vdwg.mxu0
        %12080 = vmatprep.subr.bf16.mxu0 0
        %12081 = vmatpush1.bf16.msra.mxu0 %v6714
        %12082 = vmatprep.subr.bf16.mxu0 0
        %12083 = vmatpush1.bf16.msra.mxu0 %v6717
        %12084 = vmatprep.subr.bf16.mxu0 0
        %12085 = vmatpush1.bf16.msra.mxu0 %v6720
        %12086 = vmatprep.subr.bf16.mxu0 0
        %12087 = vmatpush1.bf16.msra.mxu0 %v6723
        %12088 = vmatprep.subr.bf16.mxu0 0
        %12089 = vmatpush1.bf16.msra.mxu0 %v6726
        %12090 = vmatprep.subr.bf16.mxu0 0
        %12091 = vmatpush1.bf16.msra.mxu0 %v6729
        %12092 = vmatprep.subr.bf16.mxu0 0
        %12093 = vmatpush1.bf16.msra.mxu0 %v6732
        %12094 = vmatprep.subr.bf16.mxu0 0
        %12095 = vmatpush1.bf16.msra.mxu0 %v6735
        %12096 = vmatprep.subr.bf16.mxu0 0
        %12097 = vmatpush1.bf16.msra.mxu0 0
        %12098 = vmatprep.subr.bf16.mxu0 0
        %12099 = vmatpush1.bf16.msra.mxu0 0
        %12100 = vmatprep.subr.bf16.mxu0 0
        %12101 = vmatpush1.bf16.msra.mxu0 0
        %12102 = vmatprep.subr.bf16.mxu0 0
        %12103 = vmatpush1.bf16.msra.mxu0 0
        %12104 = vmatprep.subr.bf16.mxu0 0
        %12105 = vmatpush1.bf16.msra.mxu0 0
        %12106 = vmatprep.subr.bf16.mxu0 0
        %12107 = vmatpush1.bf16.msra.mxu0 0
        %12108 = vmatprep.subr.bf16.mxu0 0
        %12109 = vmatpush1.bf16.msra.mxu0 0
        %12110 = vmatprep.subr.bf16.mxu0 0
        %12111 = vmatpush1.bf16.msra.mxu0 0
        %12112 = vmatprep.mubr.bf16.mxu0 0
        %12113 = vmatmul.mubr.bf16.gmra.mrb[0].mxu0 %v11727
        %v12114 = vpop.f32.mrb[0].mxu0
        %v12115 = vadd.f32 %v12018, %v12114
        %v12116 = vpop.f32.mrb[0].mxu0
        %v12117 = vpop.f32.mrb[0].mxu0
        %v12118 = vadd.f32 %v12021, %v12117
        %v12119 = vpop.f32.mrb[0].mxu0
        %12120 = vmatprep.mubr.bf16.mxu0 0
        %12121 = vmatmul.mubr.bf16.gmra.mrb[0].mxu0 %v11731
        %v12122 = vpop.f32.mrb[0].mxu0
        %v12123 = vadd.f32 %v12026, %v12122
        %v12124 = vpop.f32.mrb[0].mxu0
        %v12125 = vpop.f32.mrb[0].mxu0
        %v12126 = vadd.f32 %v12029, %v12125
        %v12127 = vpop.f32.mrb[0].mxu0
        %12128 = vmatprep.mubr.bf16.mxu0 0
        %12129 = vmatmul.mubr.bf16.gmra.mrb[0].mxu0 %v11735
        %v12130 = vpop.f32.mrb[0].mxu0
        %v12131 = vadd.f32 %v12034, %v12130
        %v12132 = vpop.f32.mrb[0].mxu0
        %v12133 = vpop.f32.mrb[0].mxu0
        %v12134 = vadd.f32 %v12037, %v12133
        %v12135 = vpop.f32.mrb[0].mxu0
        %12136 = vmatprep.mubr.bf16.mxu0 0
        %12137 = vmatmul.mubr.bf16.gmra.mrb[0].mxu0 %v11739
        %v12138 = vpop.f32.mrb[0].mxu0
        %v12139 = vadd.f32 %v12042, %v12138
        %v12140 = vpop.f32.mrb[0].mxu0
        %v12141 = vpop.f32.mrb[0].mxu0
        %v12142 = vadd.f32 %v12045, %v12141
        %v12143 = vpop.f32.mrb[0].mxu0
        %12144 = vmatprep.mubr.bf16.mxu0 0
        %12145 = vmatmul.mubr.bf16.gmra.mrb[0].mxu0 %v11743
        %v12146 = vpop.f32.mrb[0].mxu0
        %v12147 = vadd.f32 %v12050, %v12146
        %v12148 = vpop.f32.mrb[0].mxu0
        %v12149 = vpop.f32.mrb[0].mxu0
        %v12150 = vadd.f32 %v12053, %v12149
        %v12151 = vpop.f32.mrb[0].mxu0
        %12152 = vmatprep.mubr.bf16.mxu0 0
        %12153 = vmatmul.mubr.bf16.gmra.mrb[0].mxu0 %v11747
        %v12154 = vpop.f32.mrb[0].mxu0
        %v12155 = vadd.f32 %v12058, %v12154
        %v12156 = vpop.f32.mrb[0].mxu0
        %v12157 = vpop.f32.mrb[0].mxu0
        %v12158 = vadd.f32 %v12061, %v12157
        %v12159 = vpop.f32.mrb[0].mxu0
        %12160 = vmatprep.mubr.bf16.mxu0 0
        %12161 = vmatmul.mubr.bf16.gmra.mrb[0].mxu0 %v11751
        %v12162 = vpop.f32.mrb[0].mxu0
        %v12163 = vadd.f32 %v12066, %v12162
        %v12164 = vpop.f32.mrb[0].mxu0
        %v12165 = vpop.f32.mrb[0].mxu0
        %v12166 = vadd.f32 %v12069, %v12165
        %v12167 = vpop.f32.mrb[0].mxu0
        %12168 = vmatprep.mubr.bf16.mxu0 0
        %12169 = vmatmul.mubr.bf16.gmra.mrb[0].mxu0 %v11755
        %v12170 = vpop.f32.mrb[0].mxu0
        %v12171 = vadd.f32 %v12074, %v12170
        %v12172 = vpop.f32.mrb[0].mxu0
        %v12173 = vpop.f32.mrb[0].mxu0
        %v12174 = vadd.f32 %v12077, %v12173
        %v12175 = vpop.f32.mrb[0].mxu0
        %12176 = vdwg.mxu0
        %v12177 = vpack.c.bf16 %v11909, %v11905
        %v12178 = vpack.c.bf16 %v11911, %v11907
        %v12179 = vpack.c.bf16 %v12118, %v12115
        %v12180 = vpack.c.bf16 %v11919, %v11915
        %v12181 = vpack.c.bf16 %v11921, %v11917
        %v12182 = vpack.c.bf16 %v12126, %v12123
        %v12183 = vpack.c.bf16 %v11929, %v11925
        %v12184 = vpack.c.bf16 %v11931, %v11927
        %v12185 = vpack.c.bf16 %v12134, %v12131
        %v12186 = vpack.c.bf16 %v11939, %v11935
        %v12187 = vpack.c.bf16 %v11941, %v11937
        %v12188 = vpack.c.bf16 %v12142, %v12139
        %v12189 = vpack.c.bf16 %v11949, %v11945
        %v12190 = vpack.c.bf16 %v11951, %v11947
        %v12191 = vpack.c.bf16 %v12150, %v12147
        %v12192 = vpack.c.bf16 %v11959, %v11955
        %v12193 = vpack.c.bf16 %v11961, %v11957
        %v12194 = vpack.c.bf16 %v12158, %v12155
        %v12195 = vpack.c.bf16 %v11969, %v11965
        %v12196 = vpack.c.bf16 %v11971, %v11967
        %v12197 = vpack.c.bf16 %v12166, %v12163
        %v12198 = vpack.c.bf16 %v11979, %v11975
        %v12199 = vpack.c.bf16 %v11981, %v11977
        %v12200 = vpack.c.bf16 %v12174, %v12171
        %v12225 = vunpack.c.l.b16 %v12177
        %v12226 = vunpack.c.l.b16 %v12178
        %v12227 = vunpack.c.l.b16 %v12179
        %v12228 = vunpack.c.h.b16 %v12177
        %v12229 = vunpack.c.h.b16 %v12178
        %v12230 = vunpack.c.h.b16 %v12179
        %v12231 = vunpack.c.l.b16 %v12180
        %v12232 = vunpack.c.l.b16 %v12181
        %v12233 = vunpack.c.l.b16 %v12182
        %v12234 = vunpack.c.h.b16 %v12180
        %v12235 = vunpack.c.h.b16 %v12181
        %v12236 = vunpack.c.h.b16 %v12182
        %v12237 = vunpack.c.l.b16 %v12183
        %v12238 = vunpack.c.l.b16 %v12184
        %v12239 = vunpack.c.l.b16 %v12185
        %v12240 = vunpack.c.h.b16 %v12183
        %v12241 = vunpack.c.h.b16 %v12184
        %v12242 = vunpack.c.h.b16 %v12185
        %v12243 = vunpack.c.l.b16 %v12186
        %v12244 = vunpack.c.l.b16 %v12187
        %v12245 = vunpack.c.l.b16 %v12188
        %v12246 = vunpack.c.h.b16 %v12186
        %v12247 = vunpack.c.h.b16 %v12187
        %v12248 = vunpack.c.h.b16 %v12188
        %v12249 = vunpack.c.l.b16 %v12189
        %v12250 = vunpack.c.l.b16 %v12190
        %v12251 = vunpack.c.l.b16 %v12191
        %v12252 = vunpack.c.h.b16 %v12189
        %v12253 = vunpack.c.h.b16 %v12190
        %v12254 = vunpack.c.h.b16 %v12191
        %v12255 = vunpack.c.l.b16 %v12192
        %v12256 = vunpack.c.l.b16 %v12193
        %v12257 = vunpack.c.l.b16 %v12194
        %v12258 = vunpack.c.h.b16 %v12192
        %v12259 = vunpack.c.h.b16 %v12193
        %v12260 = vunpack.c.h.b16 %v12194
        %v12261 = vunpack.c.l.b16 %v12195
        %v12262 = vunpack.c.l.b16 %v12196
        %v12263 = vunpack.c.l.b16 %v12197
        %v12264 = vunpack.c.h.b16 %v12195
        %v12265 = vunpack.c.h.b16 %v12196
        %v12266 = vunpack.c.h.b16 %v12197
        %v12267 = vunpack.c.l.b16 %v12198
        %v12268 = vunpack.c.l.b16 %v12199
        %v12269 = vunpack.c.l.b16 %v12200
        %v12270 = vunpack.c.h.b16 %v12198
        %v12271 = vunpack.c.h.b16 %v12199
        %v12272 = vunpack.c.h.b16 %v12200
        %v12273 = vpack.c.b16 %v12226, %v12225
        %v12274 = vpack.c.b16 %v12227, %v12227
        %v12275 = vpack.c.b16 %v12229, %v12228
        %v12276 = vpack.c.b16 %v12230, %v12230
        %v12277 = vpack.c.b16 %v12232, %v12231
        %v12278 = vpack.c.b16 %v12233, %v12233
        %v12279 = vpack.c.b16 %v12235, %v12234
        %v12280 = vpack.c.b16 %v12236, %v12236
        %v12281 = vpack.c.b16 %v12238, %v12237
        %v12282 = vpack.c.b16 %v12239, %v12239
        %v12283 = vpack.c.b16 %v12241, %v12240
        %v12284 = vpack.c.b16 %v12242, %v12242
        %v12285 = vpack.c.b16 %v12244, %v12243
        %v12286 = vpack.c.b16 %v12245, %v12245
        %v12287 = vpack.c.b16 %v12247, %v12246
        %v12288 = vpack.c.b16 %v12248, %v12248
        %v12289 = vpack.c.b16 %v12250, %v12249
        %v12290 = vpack.c.b16 %v12251, %v12251
        %v12291 = vpack.c.b16 %v12253, %v12252
        %v12292 = vpack.c.b16 %v12254, %v12254
        %v12293 = vpack.c.b16 %v12256, %v12255
        %v12294 = vpack.c.b16 %v12257, %v12257
        %v12295 = vpack.c.b16 %v12259, %v12258
        %v12296 = vpack.c.b16 %v12260, %v12260
        %v12297 = vpack.c.b16 %v12262, %v12261
        %v12298 = vpack.c.b16 %v12263, %v12263
        %v12299 = vpack.c.b16 %v12265, %v12264
        %v12300 = vpack.c.b16 %v12266, %v12266
        %v12301 = vpack.c.b16 %v12268, %v12267
        %v12302 = vpack.c.b16 %v12269, %v12269
        %v12303 = vpack.c.b16 %v12271, %v12270
        %v12304 = vpack.c.b16 %v12272, %v12272
        %s12337 = scalar_lea.vmem %s220, 192 [#allocation2]
        %12338 = vst [vmem:[%s12337] sm:$0xff] %v12273
        %12339 = vst [vmem:[%s12337 + $0x8] sm:$0xf] %v12274
        %12340 = vst [vmem:[%s12337 + $0xc] sm:$0xff] %v12275
        %12341 = vst [vmem:[%s12337 + $0x14] sm:$0xf] %v12276
        %12342 = vst [vmem:[%s12337 + $0x18] sm:$0xff] %v12277
        %12343 = vst [vmem:[%s12337 + $0x20] sm:$0xf] %v12278
        %12344 = vst [vmem:[%s12337 + $0x24] sm:$0xff] %v12279
        %12345 = vst [vmem:[%s12337 + $0x2c] sm:$0xf] %v12280
        %12346 = vst [vmem:[%s12337 + $0x30] sm:$0xff] %v12281
        %12347 = vst [vmem:[%s12337 + $0x38] sm:$0xf] %v12282
        %12348 = vst [vmem:[%s12337 + $0x3c] sm:$0xff] %v12283
        %12349 = vst [vmem:[%s12337 + $0x44] sm:$0xf] %v12284
        %12350 = vst [vmem:[%s12337 + $0x48] sm:$0xff] %v12285
        %12351 = vst [vmem:[%s12337 + $0x50] sm:$0xf] %v12286
        %12352 = vst [vmem:[%s12337 + $0x54] sm:$0xff] %v12287
        %12353 = vst [vmem:[%s12337 + $0x5c] sm:$0xf] %v12288
        %12354 = vst [vmem:[%s12337 + $0x60] sm:$0xff] %v12289
        %12355 = vst [vmem:[%s12337 + $0x68] sm:$0xf] %v12290
        %12356 = vst [vmem:[%s12337 + $0x6c] sm:$0xff] %v12291
        %12357 = vst [vmem:[%s12337 + $0x74] sm:$0xf] %v12292
        %12358 = vst [vmem:[%s12337 + $0x78] sm:$0xff] %v12293
        %12359 = vst [vmem:[%s12337 + $0x80] sm:$0xf] %v12294
        %12360 = vst [vmem:[%s12337 + $0x84] sm:$0xff] %v12295
        %12361 = vst [vmem:[%s12337 + $0x8c] sm:$0xf] %v12296
        %12362 = vst [vmem:[%s12337 + $0x90] sm:$0xff] %v12297
        %12363 = vst [vmem:[%s12337 + $0x98] sm:$0xf] %v12298
        %12364 = vst [vmem:[%s12337 + $0x9c] sm:$0xff] %v12299
        %12365 = vst [vmem:[%s12337 + $0xa4] sm:$0xf] %v12300
        %12366 = vst [vmem:[%s12337 + $0xa8] sm:$0xff] %v12301
        %12367 = vst [vmem:[%s12337 + $0xb0] sm:$0xf] %v12302
        %12368 = vst [vmem:[%s12337 + $0xb4] sm:$0xff] %v12303
        %12369 = vst [vmem:[%s12337 + $0xbc] sm:$0xf] %v12304
        %s12370 = sand.u32 %s137, 1
        %s12371 = scalar_lea.sflag [#allocation3], %s12370
        %s12372 = sand.u32 %s137, 1
        %s12373 = smul.addr %s12372, 384
        %s12374 = scalar_lea.vmem [#allocation2], %s12373
        // Predicated region
        $region41: #{tpu_custom_call.1} parent=39 // pred_check
          %p12375 = pneg %p147
        $region42: #{tpu_custom_call.1} parent=39 // pred_check_branch
          %12377 = sbr.rel (%p12375) target = $region44
        $region43: #{tpu_custom_call.1} parent=39 // pred_region
          %s12378 = smul.u32 2, %s19
          %s12380 = ssub.s32 6144, 6144
          %12381 = vsyncadd %s12371, %s12380
          %s12382 = smul.addr %s12378, 48
          %s12383 = smul.addr %s12382, 64
          %s12384 = scalar_lea.hbm %s5, %s12383
          %s12385 = sshll.u32 %s12374, 4
          %s12386 = int_to_ptr.vmem [resolvable:$true] %s12385
          %12391 = dma.vmem_to_hbm [thread:$0]  %s12386, 6144, %s12384, %s12371, 192, 192, 12
        $region44: #{tpu_custom_call.1} parent=39 // pred_fallthru
          _
      $region40: #{tpu_custom_call.1} parent=5 // pred_fallthru
        _
      %p12392 = scmp.le.s32.totalorder 2, %s14
      // Predicated region
      $region45: #{tpu_custom_call.1} parent=5 // pred_check
        %p12393 = pneg %p12392
      $region46: #{tpu_custom_call.1} parent=5 // pred_check_branch
        %12395 = sbr.rel (%p12393) target = $region48
      $region47: #{tpu_custom_call.1} parent=5 // pred_region
        %s12396 = ssub.s32 %s14, 2
        // Predicated region
        $region49: #{tpu_custom_call.1} parent=47 // pred_check
          %p12397 = pneg %p153
        $region50: #{tpu_custom_call.1} parent=47 // pred_check_branch
          %12399 = sbr.rel (%p12397) target = $region52
        $region51: #{tpu_custom_call.1} parent=47 // pred_region
          %s12400 = sand.u32 %s138, 1
          %s12401 = scalar_lea.sflag [#allocation3], %s12400
          %s12402 = sand.u32 %s138, 1
          %s12403 = smul.addr %s12402, 384
          %s12404 = scalar_lea.vmem [#allocation2], %s12403
          %12405 = dma.done %s12401, 6144
        $region52: #{tpu_custom_call.1} parent=47 // pred_fallthru
          _
      $region48: #{tpu_custom_call.1} parent=5 // pred_fallthru
        _
    $region6: #{tpu_custom_call.1} parent=1 // loop_footer
      %s18 = sadd.s32 1, %s14
    $region7: #{tpu_custom_call.1} parent=1 // loop_footer_branch
      %13 = sbr.rel target = $region3
    $region8: #{tpu_custom_call.1} parent=1 // loop_exit
      _
    %12406 = vsyncpa [#allocation3], 1
    %s12407 = scalar_lea.sflag [#allocation3], 1
    %12408 = vsyncpa %s12407, 1

</llo_original>
